<compile_context>
chip_gen: v6e
topology: v6e:2x2x1
jax: 0.10.0
libtpu: 0.0.40
codegen_flags: <defaults>
</compile_context>

<pallas_src>
import functools

import jax
import jax.numpy as jnp
from jax.experimental import pallas as pl
from jax.experimental.pallas import tpu as pltpu

EPS = 1e-5  # PyTorch BatchNorm2d default
_HI = jax.lax.Precision.HIGHEST


# ---------------------------------------------------------------------------
# Fused FPB kernel (one grid step == one batch element, channel-major layout)
# ---------------------------------------------------------------------------
def _fpb_kernel(x_ref, wm_ref, ws_ref, w1_ref, w2_ref, wfs_ref, wfm_ref,
                scm_ref, shm_ref, scs_ref, shs_ref, sc1_ref, sh1_ref,
                sc2_ref, sh2_ref, scf_ref, shf_ref, mskl_ref, mskr_ref,
                o_ref, *, width, pad):
    x = x_ref[0].astype(jnp.float32)                          # (Cin, N)
    n = x.shape[-1]

    def conv1x1_bn_relu(w, scale, shift, inp):
        y = jnp.dot(w, inp, preferred_element_type=jnp.float32, precision=_HI)
        return jnp.maximum(y * scale + shift, 0.0)            # folded BN + ReLU

    y_main = conv1x1_bn_relu(wm_ref[...], scm_ref[...], shm_ref[...], x)
    y_short = conv1x1_bn_relu(ws_ref[...], scs_ref[...], shs_ref[...], x)
    res = y_main
    y1 = conv1x1_bn_relu(w1_ref[...], sc1_ref[...], sh1_ref[...], y_main)

    # conv2: 3x3, stride 1, padding 1 -- nine shifted 1x1 matmuls on the
    # flattened spatial (lane) axis.  Vertical out-of-bounds taps land in the
    # zero padding; horizontal wrap-around taps are killed by the masks.
    mid = y1.shape[0]
    zpad = jnp.zeros((mid, pad), jnp.float32)
    y1p = jnp.concatenate([zpad, y1, zpad], axis=1)           # (mid, N + 2*pad)
    acc = jnp.zeros((mid, n), jnp.float32)
    for kh in range(3):
        for kw in range(3):
            off = pad + (kh - 1) * width + (kw - 1)
            tap = y1p[:, off:off + n]
            if kw == 0:
                tap = tap * mskl_ref[...]
            elif kw == 2:
                tap = tap * mskr_ref[...]
            acc = acc + jnp.dot(w2_ref[kh * 3 + kw], tap,
                                preferred_element_type=jnp.float32,
                                precision=_HI)
    y2 = jnp.maximum(acc * sc2_ref[...] + sh2_ref[...], 0.0)
    y_main = y2 + res

    # final_conv on cat([x_short, x_main], channels): weight is pre-split into
    # its short/main column blocks, so no concat is materialized.
    out = (jnp.dot(wfs_ref[...], y_short, preferred_element_type=jnp.float32,
                   precision=_HI)
           + jnp.dot(wfm_ref[...], y_main, preferred_element_type=jnp.float32,
                     precision=_HI))
    out = jnp.maximum(out * scf_ref[...] + shf_ref[...], 0.0)
    o_ref[0] = out.astype(o_ref.dtype)


# ---------------------------------------------------------------------------
# Wrapper
# ---------------------------------------------------------------------------
def _fold_bn(layer):
    scale = layer["g"] / jnp.sqrt(layer["rv"] + EPS)
    shift = (layer["b"] - layer["rm"]) * scale + layer["be"]
    return scale[:, None], shift[:, None]                     # (C, 1) columns


def fpb_forward(x_nchw, p):
    """FPB forward. x_nchw: (B, Cin, H, W) f32 -> (B, Cout, H, W)."""
    B, Cin, H, W = x_nchw.shape
    N = H * W
    mid = p["conv1"]["w"].shape[0]
    Cout = p["final"]["w"].shape[0]

    x_flat = x_nchw.reshape(B, Cin, N)                        # channel-major, free

    sc_m, sh_m = _fold_bn(p["main"])
    sc_s, sh_s = _fold_bn(p["short"])
    sc_1, sh_1 = _fold_bn(p["conv1"])
    sc_2, sh_2 = _fold_bn(p["conv2"])
    sc_f, sh_f = _fold_bn(p["final"])

    # (mid, mid, 3, 3) -> (9, mid, mid), tap index k = kh*3 + kw
    w2_taps = jnp.transpose(p["conv2"]["w"], (2, 3, 0, 1)).reshape(9, mid, mid)

    # final_conv weight split matching torch.cat([x_short, x_main], dim=1)
    wf_short = p["final"]["w"][:, :mid]
    wf_main = p["final"]["w"][:, mid:]

    # horizontal-boundary masks for the flattened 3x3 shifts
    col = jnp.arange(N, dtype=jnp.int32) % W
    mask_l = (col >= 1).astype(jnp.float32)[None, :]          # kw == 0 taps
    mask_r = (col <= W - 2).astype(jnp.float32)[None, :]      # kw == 2 taps

    pad = ((W + 1 + 127) // 128) * 128                        # lane-aligned pad

    def _full(a):
        return pl.BlockSpec(a.shape, lambda b, nd=a.ndim: (0,) * nd)

    out = pl.pallas_call(
        functools.partial(_fpb_kernel, width=W, pad=pad),
        out_shape=jax.ShapeDtypeStruct((B, Cout, N), x_nchw.dtype),
        grid=(B,),
        in_specs=[
            pl.BlockSpec((1, Cin, N), lambda b: (b, 0, 0)),
            _full(p["main"]["w"]), _full(p["short"]["w"]),
            _full(p["conv1"]["w"]), _full(w2_taps),
            _full(wf_short), _full(wf_main),
            _full(sc_m), _full(sh_m), _full(sc_s), _full(sh_s),
            _full(sc_1), _full(sh_1), _full(sc_2), _full(sh_2),
            _full(sc_f), _full(sh_f),
            _full(mask_l), _full(mask_r),
        ],
        out_specs=pl.BlockSpec((1, Cout, N), lambda b: (b, 0, 0)),
        compiler_params=pltpu.CompilerParams(
            dimension_semantics=("parallel",)),
    )(x_flat, p["main"]["w"], p["short"]["w"], p["conv1"]["w"], w2_taps,
      wf_short, wf_main, sc_m, sh_m, sc_s, sh_s, sc_1, sh_1, sc_2, sh_2,
      sc_f, sh_f, mask_l, mask_r)

    return out.reshape(B, Cout, H, W)


# ---------------------------------------------------------------------------
# Pure-JAX reference (mirrors the PyTorch graph, NCHW) for correctness check
# ---------------------------------------------------------------------------
def _conv_layer_ref(x, layer):
    w = layer["w"]
    if w.ndim == 2:                                            # 1x1 conv
        y = jnp.einsum("oc,bchw->bohw", w, x, precision=_HI)
    else:                                                      # 3x3 conv, pad=1
        y = jax.lax.conv_general_dilated(
            x, w, window_strides=(1, 1), padding=((1, 1), (1, 1)),
            dimension_numbers=("NCHW", "OIHW", "NCHW"), precision=_HI)
    y = y + layer["b"][None, :, None, None]
    y = (y - layer["rm"][None, :, None, None]) \
        / jnp.sqrt(layer["rv"][None, :, None, None] + EPS)
    y = y * layer["g"][None, :, None, None] + layer["be"][None, :, None, None]
    return jnp.maximum(y, 0.0)


def fpb_reference(x, p):
    x_main = _conv_layer_ref(x, p["main"])
    x_short = _conv_layer_ref(x, p["short"])
    res = x_main
    x_main = _conv_layer_ref(x_main, p["conv1"])
    x_main = _conv_layer_ref(x_main, p["conv2"])
    x_main = x_main + res
    xc = jnp.concatenate([x_short, x_main], axis=1)
    return _conv_layer_ref(xc, p["final"])


# ---------------------------------------------------------------------------
# main
# ---------------------------------------------------------------------------
def _make_conv_layer(key, cin, cout, k):
    ks = jax.random.split(key, 6)
    wshape = (cout, cin) if k == 1 else (cout, cin, k, k)
    fan_in = float(cin * k * k)
    return {
        "w": jax.random.normal(ks[0], wshape, jnp.float32) / (fan_in ** 0.5),
        "b": 0.1 * jax.random.normal(ks[1], (cout,), jnp.float32),
        "g": 1.0 + 0.1 * jax.random.normal(ks[2], (cout,), jnp.float32),
        "be": 0.1 * jax.random.normal(ks[3], (cout,), jnp.float32),
        "rm": 0.1 * jax.random.normal(ks[4], (cout,), jnp.float32),
        "rv": 0.5 + 0.5 * jnp.abs(jax.random.normal(ks[5], (cout,), jnp.float32)),
    }


if __name__ == "__main__":
    B, in_dim, out_dim, H, W = 2, 4, 8, 16, 16
    mid = int(out_dim * 0.5)

    root = jax.random.PRNGKey(0)
    kx, km, ks_, k1, k2, kf = jax.random.split(root, 6)
    x = jax.random.normal(kx, (B, in_dim, H, W), dtype=jnp.float32)

    params = {
        "main": _make_conv_layer(km, in_dim, mid, 1),
        "short": _make_conv_layer(ks_, in_dim, mid, 1),
        "conv1": _make_conv_layer(k1, mid, mid, 1),
        "conv2": _make_conv_layer(k2, mid, mid, 3),
        "final": _make_conv_layer(kf, 2 * mid, out_dim, 1),
    }

    out = jax.block_until_ready(fpb_forward(x, params))
    ref = jax.block_until_ready(fpb_reference(x, params))

    assert out.shape == (B, out_dim, H, W), out.shape
    max_err = float(jnp.max(jnp.abs(out - ref)))
    assert jnp.allclose(out, ref, atol=1e-4, rtol=1e-4), max_err

    print("KERNEL_OK")
</pallas_src>

<mosaic_0001>
module attributes {stable_mosaic.version = 11 : i64} {
  func.func @_fpb_kernel(%arg0: i32, %arg1: memref<1x4x256xf32, #tpu.memory_space<vmem>>, %arg2: memref<4x4xf32, #tpu.memory_space<vmem>>, %arg3: memref<4x4xf32, #tpu.memory_space<vmem>>, %arg4: memref<4x4xf32, #tpu.memory_space<vmem>>, %arg5: memref<9x4x4xf32, #tpu.memory_space<vmem>>, %arg6: memref<8x4xf32, #tpu.memory_space<vmem>>, %arg7: memref<8x4xf32, #tpu.memory_space<vmem>>, %arg8: memref<4x1xf32, #tpu.memory_space<vmem>>, %arg9: memref<4x1xf32, #tpu.memory_space<vmem>>, %arg10: memref<4x1xf32, #tpu.memory_space<vmem>>, %arg11: memref<4x1xf32, #tpu.memory_space<vmem>>, %arg12: memref<4x1xf32, #tpu.memory_space<vmem>>, %arg13: memref<4x1xf32, #tpu.memory_space<vmem>>, %arg14: memref<4x1xf32, #tpu.memory_space<vmem>>, %arg15: memref<4x1xf32, #tpu.memory_space<vmem>>, %arg16: memref<8x1xf32, #tpu.memory_space<vmem>>, %arg17: memref<8x1xf32, #tpu.memory_space<vmem>>, %arg18: memref<1x256xf32, #tpu.memory_space<vmem>>, %arg19: memref<1x256xf32, #tpu.memory_space<vmem>>, %arg20: memref<1x8x256xf32, #tpu.memory_space<vmem>>) attributes {dimension_semantics = [#tpu.dimension_semantics<parallel>], iteration_bounds = array<i64: 2>, scalar_prefetch = 0 : i64, scratch_operands = 0 : i64, tpu.core_type = #tpu.core_type<tc>, window_params = [{transform_indices = @transform_0, window_bounds = array<i64: 1, 4, 256>}, {pipeline_mode = #tpu.pipeline_mode<synchronous>, transform_indices = @transform_1, window_bounds = array<i64: 4, 4>}, {pipeline_mode = #tpu.pipeline_mode<synchronous>, transform_indices = @transform_2, window_bounds = array<i64: 4, 4>}, {pipeline_mode = #tpu.pipeline_mode<synchronous>, transform_indices = @transform_3, window_bounds = array<i64: 4, 4>}, {pipeline_mode = #tpu.pipeline_mode<synchronous>, transform_indices = @transform_4, window_bounds = array<i64: 9, 4, 4>}, {pipeline_mode = #tpu.pipeline_mode<synchronous>, transform_indices = @transform_5, window_bounds = array<i64: 8, 4>}, {pipeline_mode = #tpu.pipeline_mode<synchronous>, transform_indices = @transform_6, window_bounds = array<i64: 8, 4>}, {pipeline_mode = #tpu.pipeline_mode<synchronous>, transform_indices = @transform_7, window_bounds = array<i64: 4, 1>}, {pipeline_mode = #tpu.pipeline_mode<synchronous>, transform_indices = @transform_8, window_bounds = array<i64: 4, 1>}, {pipeline_mode = #tpu.pipeline_mode<synchronous>, transform_indices = @transform_9, window_bounds = array<i64: 4, 1>}, {pipeline_mode = #tpu.pipeline_mode<synchronous>, transform_indices = @transform_10, window_bounds = array<i64: 4, 1>}, {pipeline_mode = #tpu.pipeline_mode<synchronous>, transform_indices = @transform_11, window_bounds = array<i64: 4, 1>}, {pipeline_mode = #tpu.pipeline_mode<synchronous>, transform_indices = @transform_12, window_bounds = array<i64: 4, 1>}, {pipeline_mode = #tpu.pipeline_mode<synchronous>, transform_indices = @transform_13, window_bounds = array<i64: 4, 1>}, {pipeline_mode = #tpu.pipeline_mode<synchronous>, transform_indices = @transform_14, window_bounds = array<i64: 4, 1>}, {pipeline_mode = #tpu.pipeline_mode<synchronous>, transform_indices = @transform_15, window_bounds = array<i64: 8, 1>}, {pipeline_mode = #tpu.pipeline_mode<synchronous>, transform_indices = @transform_16, window_bounds = array<i64: 8, 1>}, {pipeline_mode = #tpu.pipeline_mode<synchronous>, transform_indices = @transform_17, window_bounds = array<i64: 1, 256>}, {pipeline_mode = #tpu.pipeline_mode<synchronous>, transform_indices = @transform_18, window_bounds = array<i64: 1, 256>}, {transform_indices = @transform_19, window_bounds = array<i64: 1, 8, 256>}]} {
    %c0 = arith.constant 0 : index
    %c0_0 = arith.constant 0 : index
    %c0_1 = arith.constant 0 : index
    %0 = vector.load %arg1[%c0, %c0_0, %c0_1] : memref<1x4x256xf32, #tpu.memory_space<vmem>>, vector<1x4x256xf32>
    %1 = vector.shape_cast %0 : vector<1x4x256xf32> to vector<4x256xf32>
    %c0_2 = arith.constant 0 : index
    %c0_3 = arith.constant 0 : index
    %2 = vector.load %arg2[%c0_2, %c0_3] : memref<4x4xf32, #tpu.memory_space<vmem>>, vector<4x4xf32>
    %c0_4 = arith.constant 0 : index
    %c0_5 = arith.constant 0 : index
    %3 = vector.load %arg8[%c0_4, %c0_5] : memref<4x1xf32, #tpu.memory_space<vmem>>, vector<4x1xf32>
    %c0_6 = arith.constant 0 : index
    %c0_7 = arith.constant 0 : index
    %4 = vector.load %arg9[%c0_6, %c0_7] : memref<4x1xf32, #tpu.memory_space<vmem>>, vector<4x1xf32>
    %cst = arith.constant dense<0.000000e+00> : vector<4x256xf32>
    %5 = tpu.matmul %2, %1, %cst {dimension_numbers = #tpu.dot_dimension_numbers<[1], [0], [0], [1], [0, 0, 1, 1], [], []>, precision = #tpu.contract_precision<fp32>} : vector<4x4xf32>, vector<4x256xf32>, vector<4x256xf32> -> vector<4x256xf32>
    %6 = vector.broadcast %3 : vector<4x1xf32> to vector<4x256xf32>
    %7 = arith.mulf %5, %6 : vector<4x256xf32>
    %8 = vector.broadcast %4 : vector<4x1xf32> to vector<4x256xf32>
    %9 = arith.addf %7, %8 : vector<4x256xf32>
    %cst_8 = arith.constant 0.000000e+00 : f32
    %10 = vector.broadcast %cst_8 : f32 to vector<4x256xf32>
    %11 = arith.maximumf %9, %10 : vector<4x256xf32>
    %c0_9 = arith.constant 0 : index
    %c0_10 = arith.constant 0 : index
    %12 = vector.load %arg3[%c0_9, %c0_10] : memref<4x4xf32, #tpu.memory_space<vmem>>, vector<4x4xf32>
    %c0_11 = arith.constant 0 : index
    %c0_12 = arith.constant 0 : index
    %13 = vector.load %arg10[%c0_11, %c0_12] : memref<4x1xf32, #tpu.memory_space<vmem>>, vector<4x1xf32>
    %c0_13 = arith.constant 0 : index
    %c0_14 = arith.constant 0 : index
    %14 = vector.load %arg11[%c0_13, %c0_14] : memref<4x1xf32, #tpu.memory_space<vmem>>, vector<4x1xf32>
    %cst_15 = arith.constant dense<0.000000e+00> : vector<4x256xf32>
    %15 = tpu.matmul %12, %1, %cst_15 {dimension_numbers = #tpu.dot_dimension_numbers<[1], [0], [0], [1], [0, 0, 1, 1], [], []>, precision = #tpu.contract_precision<fp32>} : vector<4x4xf32>, vector<4x256xf32>, vector<4x256xf32> -> vector<4x256xf32>
    %16 = vector.broadcast %13 : vector<4x1xf32> to vector<4x256xf32>
    %17 = arith.mulf %15, %16 : vector<4x256xf32>
    %18 = vector.broadcast %14 : vector<4x1xf32> to vector<4x256xf32>
    %19 = arith.addf %17, %18 : vector<4x256xf32>
    %cst_16 = arith.constant 0.000000e+00 : f32
    %20 = vector.broadcast %cst_16 : f32 to vector<4x256xf32>
    %21 = arith.maximumf %19, %20 : vector<4x256xf32>
    %c0_17 = arith.constant 0 : index
    %c0_18 = arith.constant 0 : index
    %22 = vector.load %arg4[%c0_17, %c0_18] : memref<4x4xf32, #tpu.memory_space<vmem>>, vector<4x4xf32>
    %c0_19 = arith.constant 0 : index
    %c0_20 = arith.constant 0 : index
    %23 = vector.load %arg12[%c0_19, %c0_20] : memref<4x1xf32, #tpu.memory_space<vmem>>, vector<4x1xf32>
    %c0_21 = arith.constant 0 : index
    %c0_22 = arith.constant 0 : index
    %24 = vector.load %arg13[%c0_21, %c0_22] : memref<4x1xf32, #tpu.memory_space<vmem>>, vector<4x1xf32>
    %cst_23 = arith.constant dense<0.000000e+00> : vector<4x256xf32>
    %25 = tpu.matmul %22, %11, %cst_23 {dimension_numbers = #tpu.dot_dimension_numbers<[1], [0], [0], [1], [0, 0, 1, 1], [], []>, precision = #tpu.contract_precision<fp32>} : vector<4x4xf32>, vector<4x256xf32>, vector<4x256xf32> -> vector<4x256xf32>
    %26 = vector.broadcast %23 : vector<4x1xf32> to vector<4x256xf32>
    %27 = arith.mulf %25, %26 : vector<4x256xf32>
    %28 = vector.broadcast %24 : vector<4x1xf32> to vector<4x256xf32>
    %29 = arith.addf %27, %28 : vector<4x256xf32>
    %cst_24 = arith.constant 0.000000e+00 : f32
    %30 = vector.broadcast %cst_24 : f32 to vector<4x256xf32>
    %31 = arith.maximumf %29, %30 : vector<4x256xf32>
    %cst_25 = arith.constant 0.000000e+00 : f32
    %32 = vector.broadcast %cst_25 : f32 to vector<4x128xf32>
    %33 = tpu.concatenate %32, %31, %32 in 1 : vector<4x128xf32>, vector<4x256xf32>, vector<4x128xf32> -> vector<4x512xf32>
    %cst_26 = arith.constant 0.000000e+00 : f32
    %34 = vector.broadcast %cst_26 : f32 to vector<4x256xf32>
    %35 = vector.extract_strided_slice %33 {offsets = [0, 111], sizes = [4, 256], strides = [1, 1]} : vector<4x512xf32> to vector<4x256xf32>
    %c0_27 = arith.constant 0 : index
    %c0_28 = arith.constant 0 : index
    %36 = vector.load %arg18[%c0_27, %c0_28] : memref<1x256xf32, #tpu.memory_space<vmem>>, vector<1x256xf32>
    %37 = vector.broadcast %36 : vector<1x256xf32> to vector<4x256xf32>
    %38 = arith.mulf %35, %37 : vector<4x256xf32>
    %c0_29 = arith.constant 0 : index
    %c0_30 = arith.constant 0 : index
    %c0_31 = arith.constant 0 : index
    %39 = vector.load %arg5[%c0_29, %c0_30, %c0_31] : memref<9x4x4xf32, #tpu.memory_space<vmem>>, vector<1x4x4xf32>
    %40 = vector.shape_cast %39 : vector<1x4x4xf32> to vector<4x4xf32>
    %cst_32 = arith.constant dense<0.000000e+00> : vector<4x256xf32>
    %41 = tpu.matmul %40, %38, %cst_32 {dimension_numbers = #tpu.dot_dimension_numbers<[1], [0], [0], [1], [0, 0, 1, 1], [], []>, precision = #tpu.contract_precision<fp32>} : vector<4x4xf32>, vector<4x256xf32>, vector<4x256xf32> -> vector<4x256xf32>
    %42 = arith.addf %34, %41 : vector<4x256xf32>
    %43 = vector.extract_strided_slice %33 {offsets = [0, 112], sizes = [4, 256], strides = [1, 1]} : vector<4x512xf32> to vector<4x256xf32>
    %c1 = arith.constant 1 : index
    %c0_33 = arith.constant 0 : index
    %c0_34 = arith.constant 0 : index
    %44 = vector.load %arg5[%c1, %c0_33, %c0_34] : memref<9x4x4xf32, #tpu.memory_space<vmem>>, vector<1x4x4xf32>
    %45 = vector.shape_cast %44 : vector<1x4x4xf32> to vector<4x4xf32>
    %cst_35 = arith.constant dense<0.000000e+00> : vector<4x256xf32>
    %46 = tpu.matmul %45, %43, %cst_35 {dimension_numbers = #tpu.dot_dimension_numbers<[1], [0], [0], [1], [0, 0, 1, 1], [], []>, precision = #tpu.contract_precision<fp32>} : vector<4x4xf32>, vector<4x256xf32>, vector<4x256xf32> -> vector<4x256xf32>
    %47 = arith.addf %42, %46 : vector<4x256xf32>
    %48 = vector.extract_strided_slice %33 {offsets = [0, 113], sizes = [4, 256], strides = [1, 1]} : vector<4x512xf32> to vector<4x256xf32>
    %c0_36 = arith.constant 0 : index
    %c0_37 = arith.constant 0 : index
    %49 = vector.load %arg19[%c0_36, %c0_37] : memref<1x256xf32, #tpu.memory_space<vmem>>, vector<1x256xf32>
    %50 = vector.broadcast %49 : vector<1x256xf32> to vector<4x256xf32>
    %51 = arith.mulf %48, %50 : vector<4x256xf32>
    %c2 = arith.constant 2 : index
    %c0_38 = arith.constant 0 : index
    %c0_39 = arith.constant 0 : index
    %52 = vector.load %arg5[%c2, %c0_38, %c0_39] : memref<9x4x4xf32, #tpu.memory_space<vmem>>, vector<1x4x4xf32>
    %53 = vector.shape_cast %52 : vector<1x4x4xf32> to vector<4x4xf32>
    %cst_40 = arith.constant dense<0.000000e+00> : vector<4x256xf32>
    %54 = tpu.matmul %53, %51, %cst_40 {dimension_numbers = #tpu.dot_dimension_numbers<[1], [0], [0], [1], [0, 0, 1, 1], [], []>, precision = #tpu.contract_precision<fp32>} : vector<4x4xf32>, vector<4x256xf32>, vector<4x256xf32> -> vector<4x256xf32>
    %55 = arith.addf %47, %54 : vector<4x256xf32>
    %56 = vector.extract_strided_slice %33 {offsets = [0, 127], sizes = [4, 256], strides = [1, 1]} : vector<4x512xf32> to vector<4x256xf32>
    %c0_41 = arith.constant 0 : index
    %c0_42 = arith.constant 0 : index
    %57 = vector.load %arg18[%c0_41, %c0_42] : memref<1x256xf32, #tpu.memory_space<vmem>>, vector<1x256xf32>
    %58 = vector.broadcast %57 : vector<1x256xf32> to vector<4x256xf32>
    %59 = arith.mulf %56, %58 : vector<4x256xf32>
    %c3 = arith.constant 3 : index
    %c0_43 = arith.constant 0 : index
    %c0_44 = arith.constant 0 : index
    %60 = vector.load %arg5[%c3, %c0_43, %c0_44] : memref<9x4x4xf32, #tpu.memory_space<vmem>>, vector<1x4x4xf32>
    %61 = vector.shape_cast %60 : vector<1x4x4xf32> to vector<4x4xf32>
    %cst_45 = arith.constant dense<0.000000e+00> : vector<4x256xf32>
    %62 = tpu.matmul %61, %59, %cst_45 {dimension_numbers = #tpu.dot_dimension_numbers<[1], [0], [0], [1], [0, 0, 1, 1], [], []>, precision = #tpu.contract_precision<fp32>} : vector<4x4xf32>, vector<4x256xf32>, vector<4x256xf32> -> vector<4x256xf32>
    %63 = arith.addf %55, %62 : vector<4x256xf32>
    %64 = vector.extract_strided_slice %33 {offsets = [0, 128], sizes = [4, 256], strides = [1, 1]} : vector<4x512xf32> to vector<4x256xf32>
    %c4 = arith.constant 4 : index
    %c0_46 = arith.constant 0 : index
    %c0_47 = arith.constant 0 : index
    %65 = vector.load %arg5[%c4, %c0_46, %c0_47] : memref<9x4x4xf32, #tpu.memory_space<vmem>>, vector<1x4x4xf32>
    %66 = vector.shape_cast %65 : vector<1x4x4xf32> to vector<4x4xf32>
    %cst_48 = arith.constant dense<0.000000e+00> : vector<4x256xf32>
    %67 = tpu.matmul %66, %64, %cst_48 {dimension_numbers = #tpu.dot_dimension_numbers<[1], [0], [0], [1], [0, 0, 1, 1], [], []>, precision = #tpu.contract_precision<fp32>} : vector<4x4xf32>, vector<4x256xf32>, vector<4x256xf32> -> vector<4x256xf32>
    %68 = arith.addf %63, %67 : vector<4x256xf32>
    %69 = vector.extract_strided_slice %33 {offsets = [0, 129], sizes = [4, 256], strides = [1, 1]} : vector<4x512xf32> to vector<4x256xf32>
    %c0_49 = arith.constant 0 : index
    %c0_50 = arith.constant 0 : index
    %70 = vector.load %arg19[%c0_49, %c0_50] : memref<1x256xf32, #tpu.memory_space<vmem>>, vector<1x256xf32>
    %71 = vector.broadcast %70 : vector<1x256xf32> to vector<4x256xf32>
    %72 = arith.mulf %69, %71 : vector<4x256xf32>
    %c5 = arith.constant 5 : index
    %c0_51 = arith.constant 0 : index
    %c0_52 = arith.constant 0 : index
    %73 = vector.load %arg5[%c5, %c0_51, %c0_52] : memref<9x4x4xf32, #tpu.memory_space<vmem>>, vector<1x4x4xf32>
    %74 = vector.shape_cast %73 : vector<1x4x4xf32> to vector<4x4xf32>
    %cst_53 = arith.constant dense<0.000000e+00> : vector<4x256xf32>
    %75 = tpu.matmul %74, %72, %cst_53 {dimension_numbers = #tpu.dot_dimension_numbers<[1], [0], [0], [1], [0, 0, 1, 1], [], []>, precision = #tpu.contract_precision<fp32>} : vector<4x4xf32>, vector<4x256xf32>, vector<4x256xf32> -> vector<4x256xf32>
    %76 = arith.addf %68, %75 : vector<4x256xf32>
    %77 = vector.extract_strided_slice %33 {offsets = [0, 143], sizes = [4, 256], strides = [1, 1]} : vector<4x512xf32> to vector<4x256xf32>
    %c0_54 = arith.constant 0 : index
    %c0_55 = arith.constant 0 : index
    %78 = vector.load %arg18[%c0_54, %c0_55] : memref<1x256xf32, #tpu.memory_space<vmem>>, vector<1x256xf32>
    %79 = vector.broadcast %78 : vector<1x256xf32> to vector<4x256xf32>
    %80 = arith.mulf %77, %79 : vector<4x256xf32>
    %c6 = arith.constant 6 : index
    %c0_56 = arith.constant 0 : index
    %c0_57 = arith.constant 0 : index
    %81 = vector.load %arg5[%c6, %c0_56, %c0_57] : memref<9x4x4xf32, #tpu.memory_space<vmem>>, vector<1x4x4xf32>
    %82 = vector.shape_cast %81 : vector<1x4x4xf32> to vector<4x4xf32>
    %cst_58 = arith.constant dense<0.000000e+00> : vector<4x256xf32>
    %83 = tpu.matmul %82, %80, %cst_58 {dimension_numbers = #tpu.dot_dimension_numbers<[1], [0], [0], [1], [0, 0, 1, 1], [], []>, precision = #tpu.contract_precision<fp32>} : vector<4x4xf32>, vector<4x256xf32>, vector<4x256xf32> -> vector<4x256xf32>
    %84 = arith.addf %76, %83 : vector<4x256xf32>
    %85 = vector.extract_strided_slice %33 {offsets = [0, 144], sizes = [4, 256], strides = [1, 1]} : vector<4x512xf32> to vector<4x256xf32>
    %c7 = arith.constant 7 : index
    %c0_59 = arith.constant 0 : index
    %c0_60 = arith.constant 0 : index
    %86 = vector.load %arg5[%c7, %c0_59, %c0_60] : memref<9x4x4xf32, #tpu.memory_space<vmem>>, vector<1x4x4xf32>
    %87 = vector.shape_cast %86 : vector<1x4x4xf32> to vector<4x4xf32>
    %cst_61 = arith.constant dense<0.000000e+00> : vector<4x256xf32>
    %88 = tpu.matmul %87, %85, %cst_61 {dimension_numbers = #tpu.dot_dimension_numbers<[1], [0], [0], [1], [0, 0, 1, 1], [], []>, precision = #tpu.contract_precision<fp32>} : vector<4x4xf32>, vector<4x256xf32>, vector<4x256xf32> -> vector<4x256xf32>
    %89 = arith.addf %84, %88 : vector<4x256xf32>
    %90 = vector.extract_strided_slice %33 {offsets = [0, 145], sizes = [4, 256], strides = [1, 1]} : vector<4x512xf32> to vector<4x256xf32>
    %c0_62 = arith.constant 0 : index
    %c0_63 = arith.constant 0 : index
    %91 = vector.load %arg19[%c0_62, %c0_63] : memref<1x256xf32, #tpu.memory_space<vmem>>, vector<1x256xf32>
    %92 = vector.broadcast %91 : vector<1x256xf32> to vector<4x256xf32>
    %93 = arith.mulf %90, %92 : vector<4x256xf32>
    %c8 = arith.constant 8 : index
    %c0_64 = arith.constant 0 : index
    %c0_65 = arith.constant 0 : index
    %94 = vector.load %arg5[%c8, %c0_64, %c0_65] : memref<9x4x4xf32, #tpu.memory_space<vmem>>, vector<1x4x4xf32>
    %95 = vector.shape_cast %94 : vector<1x4x4xf32> to vector<4x4xf32>
    %cst_66 = arith.constant dense<0.000000e+00> : vector<4x256xf32>
    %96 = tpu.matmul %95, %93, %cst_66 {dimension_numbers = #tpu.dot_dimension_numbers<[1], [0], [0], [1], [0, 0, 1, 1], [], []>, precision = #tpu.contract_precision<fp32>} : vector<4x4xf32>, vector<4x256xf32>, vector<4x256xf32> -> vector<4x256xf32>
    %97 = arith.addf %89, %96 : vector<4x256xf32>
    %c0_67 = arith.constant 0 : index
    %c0_68 = arith.constant 0 : index
    %98 = vector.load %arg14[%c0_67, %c0_68] : memref<4x1xf32, #tpu.memory_space<vmem>>, vector<4x1xf32>
    %99 = vector.broadcast %98 : vector<4x1xf32> to vector<4x256xf32>
    %100 = arith.mulf %97, %99 : vector<4x256xf32>
    %c0_69 = arith.constant 0 : index
    %c0_70 = arith.constant 0 : index
    %101 = vector.load %arg15[%c0_69, %c0_70] : memref<4x1xf32, #tpu.memory_space<vmem>>, vector<4x1xf32>
    %102 = vector.broadcast %101 : vector<4x1xf32> to vector<4x256xf32>
    %103 = arith.addf %100, %102 : vector<4x256xf32>
    %cst_71 = arith.constant 0.000000e+00 : f32
    %104 = vector.broadcast %cst_71 : f32 to vector<4x256xf32>
    %105 = arith.maximumf %103, %104 : vector<4x256xf32>
    %106 = arith.addf %105, %11 : vector<4x256xf32>
    %c0_72 = arith.constant 0 : index
    %c0_73 = arith.constant 0 : index
    %107 = vector.load %arg6[%c0_72, %c0_73] : memref<8x4xf32, #tpu.memory_space<vmem>>, vector<8x4xf32>
    %cst_74 = arith.constant dense<0.000000e+00> : vector<8x256xf32>
    %108 = tpu.matmul %107, %21, %cst_74 {dimension_numbers = #tpu.dot_dimension_numbers<[1], [0], [0], [1], [0, 0, 1, 1], [], []>, precision = #tpu.contract_precision<fp32>} : vector<8x4xf32>, vector<4x256xf32>, vector<8x256xf32> -> vector<8x256xf32>
    %c0_75 = arith.constant 0 : index
    %c0_76 = arith.constant 0 : index
    %109 = vector.load %arg7[%c0_75, %c0_76] : memref<8x4xf32, #tpu.memory_space<vmem>>, vector<8x4xf32>
    %cst_77 = arith.constant dense<0.000000e+00> : vector<8x256xf32>
    %110 = tpu.matmul %109, %106, %cst_77 {dimension_numbers = #tpu.dot_dimension_numbers<[1], [0], [0], [1], [0, 0, 1, 1], [], []>, precision = #tpu.contract_precision<fp32>} : vector<8x4xf32>, vector<4x256xf32>, vector<8x256xf32> -> vector<8x256xf32>
    %111 = arith.addf %108, %110 : vector<8x256xf32>
    %c0_78 = arith.constant 0 : index
    %c0_79 = arith.constant 0 : index
    %112 = vector.load %arg16[%c0_78, %c0_79] : memref<8x1xf32, #tpu.memory_space<vmem>>, vector<8x1xf32>
    %113 = vector.broadcast %112 : vector<8x1xf32> to vector<8x256xf32>
    %114 = arith.mulf %111, %113 : vector<8x256xf32>
    %c0_80 = arith.constant 0 : index
    %c0_81 = arith.constant 0 : index
    %115 = vector.load %arg17[%c0_80, %c0_81] : memref<8x1xf32, #tpu.memory_space<vmem>>, vector<8x1xf32>
    %116 = vector.broadcast %115 : vector<8x1xf32> to vector<8x256xf32>
    %117 = arith.addf %114, %116 : vector<8x256xf32>
    %cst_82 = arith.constant 0.000000e+00 : f32
    %118 = vector.broadcast %cst_82 : f32 to vector<8x256xf32>
    %119 = arith.maximumf %117, %118 : vector<8x256xf32>
    %c0_83 = arith.constant 0 : index
    %c0_84 = arith.constant 0 : index
    %c0_85 = arith.constant 0 : index
    %120 = vector.load %arg20[%c0_83, %c0_84, %c0_85] : memref<1x8x256xf32, #tpu.memory_space<vmem>>, vector<1x8x256xf32>
    %121 = vector.shape_cast %120 : vector<1x8x256xf32> to vector<8x256xf32>
    %122 = vector.shape_cast %119 : vector<8x256xf32> to vector<1x8x256xf32>
    tpu.vector_store %arg20[%c0_83, %c0_84, %c0_85], %122 {strides = array<i32>} : memref<1x8x256xf32, #tpu.memory_space<vmem>>, vector<1x8x256xf32>,
    return
  }
  func.func @transform_0(%arg0: i32) -> (i32, i32, i32) {
    %c0_i32 = arith.constant 0 : i32
    %c0_i32_0 = arith.constant 0 : i32
    %c0_i32_1 = arith.constant 0 : i32
    return %arg0, %c0_i32, %c0_i32_0 : i32, i32, i32
  }
  func.func @transform_1(%arg0: i32) -> (i32, i32) {
    %c0_i32 = arith.constant 0 : i32
    %c0_i32_0 = arith.constant 0 : i32
    %c0_i32_1 = arith.constant 0 : i32
    return %c0_i32, %c0_i32_0 : i32, i32
  }
  func.func @transform_2(%arg0: i32) -> (i32, i32) {
    %c0_i32 = arith.constant 0 : i32
    %c0_i32_0 = arith.constant 0 : i32
    %c0_i32_1 = arith.constant 0 : i32
    return %c0_i32, %c0_i32_0 : i32, i32
  }
  func.func @transform_3(%arg0: i32) -> (i32, i32) {
    %c0_i32 = arith.constant 0 : i32
    %c0_i32_0 = arith.constant 0 : i32
    %c0_i32_1 = arith.constant 0 : i32
    return %c0_i32, %c0_i32_0 : i32, i32
  }
  func.func @transform_4(%arg0: i32) -> (i32, i32, i32) {
    %c0_i32 = arith.constant 0 : i32
    %c0_i32_0 = arith.constant 0 : i32
    %c0_i32_1 = arith.constant 0 : i32
    %c0_i32_2 = arith.constant 0 : i32
    return %c0_i32, %c0_i32_0, %c0_i32_1 : i32, i32, i32
  }
  func.func @transform_5(%arg0: i32) -> (i32, i32) {
    %c0_i32 = arith.constant 0 : i32
    %c0_i32_0 = arith.constant 0 : i32
    %c0_i32_1 = arith.constant 0 : i32
    return %c0_i32, %c0_i32_0 : i32, i32
  }
  func.func @transform_6(%arg0: i32) -> (i32, i32) {
    %c0_i32 = arith.constant 0 : i32
    %c0_i32_0 = arith.constant 0 : i32
    %c0_i32_1 = arith.constant 0 : i32
    return %c0_i32, %c0_i32_0 : i32, i32
  }
  func.func @transform_7(%arg0: i32) -> (i32, i32) {
    %c0_i32 = arith.constant 0 : i32
    %c0_i32_0 = arith.constant 0 : i32
    %c0_i32_1 = arith.constant 0 : i32
    return %c0_i32, %c0_i32_0 : i32, i32
  }
  func.func @transform_8(%arg0: i32) -> (i32, i32) {
    %c0_i32 = arith.constant 0 : i32
    %c0_i32_0 = arith.constant 0 : i32
    %c0_i32_1 = arith.constant 0 : i32
    return %c0_i32, %c0_i32_0 : i32, i32
  }
  func.func @transform_9(%arg0: i32) -> (i32, i32) {
    %c0_i32 = arith.constant 0 : i32
    %c0_i32_0 = arith.constant 0 : i32
    %c0_i32_1 = arith.constant 0 : i32
    return %c0_i32, %c0_i32_0 : i32, i32
  }
  func.func @transform_10(%arg0: i32) -> (i32, i32) {
    %c0_i32 = arith.constant 0 : i32
    %c0_i32_0 = arith.constant 0 : i32
    %c0_i32_1 = arith.constant 0 : i32
    return %c0_i32, %c0_i32_0 : i32, i32
  }
  func.func @transform_11(%arg0: i32) -> (i32, i32) {
    %c0_i32 = arith.constant 0 : i32
    %c0_i32_0 = arith.constant 0 : i32
    %c0_i32_1 = arith.constant 0 : i32
    return %c0_i32, %c0_i32_0 : i32, i32
  }
  func.func @transform_12(%arg0: i32) -> (i32, i32) {
    %c0_i32 = arith.constant 0 : i32
    %c0_i32_0 = arith.constant 0 : i32
    %c0_i32_1 = arith.constant 0 : i32
    return %c0_i32, %c0_i32_0 : i32, i32
  }
  func.func @transform_13(%arg0: i32) -> (i32, i32) {
    %c0_i32 = arith.constant 0 : i32
    %c0_i32_0 = arith.constant 0 : i32
    %c0_i32_1 = arith.constant 0 : i32
    return %c0_i32, %c0_i32_0 : i32, i32
  }
  func.func @transform_14(%arg0: i32) -> (i32, i32) {
    %c0_i32 = arith.constant 0 : i32
    %c0_i32_0 = arith.constant 0 : i32
    %c0_i32_1 = arith.constant 0 : i32
    return %c0_i32, %c0_i32_0 : i32, i32
  }
  func.func @transform_15(%arg0: i32) -> (i32, i32) {
    %c0_i32 = arith.constant 0 : i32
    %c0_i32_0 = arith.constant 0 : i32
    %c0_i32_1 = arith.constant 0 : i32
    return %c0_i32, %c0_i32_0 : i32, i32
  }
  func.func @transform_16(%arg0: i32) -> (i32, i32) {
    %c0_i32 = arith.constant 0 : i32
    %c0_i32_0 = arith.constant 0 : i32
    %c0_i32_1 = arith.constant 0 : i32
    return %c0_i32, %c0_i32_0 : i32, i32
  }
  func.func @transform_17(%arg0: i32) -> (i32, i32) {
    %c0_i32 = arith.constant 0 : i32
    %c0_i32_0 = arith.constant 0 : i32
    %c0_i32_1 = arith.constant 0 : i32
    return %c0_i32, %c0_i32_0 : i32, i32
  }
  func.func @transform_18(%arg0: i32) -> (i32, i32) {
    %c0_i32 = arith.constant 0 : i32
    %c0_i32_0 = arith.constant 0 : i32
    %c0_i32_1 = arith.constant 0 : i32
    return %c0_i32, %c0_i32_0 : i32, i32
  }
  func.func @transform_19(%arg0: i32) -> (i32, i32, i32) {
    %c0_i32 = arith.constant 0 : i32
    %c0_i32_0 = arith.constant 0 : i32
    %c0_i32_1 = arith.constant 0 : i32
    return %arg0, %c0_i32, %c0_i32_0 : i32, i32, i32
  }
}

</mosaic_0001>

<llo_original>
// kernel: tpu_custom_call.1
$region0: #{tpu_custom_call.1}
  #allocation0 [shape = 'u32[]', space=smem, size = 0x4, offset = 0x4, fixed_abs, tag = 'smem constant byte address 0x4 - core index']
  #allocation1 [shape = 'u32[144,128]{1,0:T(1,128)}', space=vmem, size = 0x12000, scoped, tag = 'internal scratch']
  %s0 = inlined_call_operand.vmem [shape: f32[2,4,256], index: 0, kind: input, shape index: {}]
  %s1 = inlined_call_operand.vmem [shape: f32[4,4], index: 1, kind: input, shape index: {}]
  %s2 = inlined_call_operand.vmem [shape: f32[4,4], index: 2, kind: input, shape index: {}]
  %s3 = inlined_call_operand.vmem [shape: f32[4,4], index: 3, kind: input, shape index: {}]
  %s4 = inlined_call_operand.vmem [shape: f32[9,4,4], index: 4, kind: input, shape index: {}]
  %s5 = inlined_call_operand.vmem [shape: f32[8,4], index: 5, kind: input, shape index: {}]
  %s6 = inlined_call_operand.vmem [shape: f32[8,4], index: 6, kind: input, shape index: {}]
  %s7 = inlined_call_operand.vmem [shape: f32[4,1], index: 7, kind: input, shape index: {}]
  %s8 = inlined_call_operand.vmem [shape: f32[4,1], index: 8, kind: input, shape index: {}]
  %s9 = inlined_call_operand.vmem [shape: f32[4,1], index: 9, kind: input, shape index: {}]
  %s10 = inlined_call_operand.vmem [shape: f32[4,1], index: 10, kind: input, shape index: {}]
  %s11 = inlined_call_operand.vmem [shape: f32[4,1], index: 11, kind: input, shape index: {}]
  %s12 = inlined_call_operand.vmem [shape: f32[4,1], index: 12, kind: input, shape index: {}]
  %s13 = inlined_call_operand.vmem [shape: f32[4,1], index: 13, kind: input, shape index: {}]
  %s14 = inlined_call_operand.vmem [shape: f32[4,1], index: 14, kind: input, shape index: {}]
  %s15 = inlined_call_operand.vmem [shape: f32[8,1], index: 15, kind: input, shape index: {}]
  %s16 = inlined_call_operand.vmem [shape: f32[8,1], index: 16, kind: input, shape index: {}]
  %s17 = inlined_call_operand.vmem [shape: f32[1,256], index: 17, kind: input, shape index: {}]
  %s18 = inlined_call_operand.vmem [shape: f32[1,256], index: 18, kind: input, shape index: {}]
  %s19 = inlined_call_operand.hbm [shape: f32[2,8,256], index: 19, kind: output, shape index: {}]
  %s20 = sld [smem:[#allocation0]]
  $region109: #{tpu_custom_call.1} parent=0
    _
  %s22 = ssub.s32 1, %s20
  %s23 = scalar_select 0, %s22, %s20
  $region1: #{tpu_custom_call.1} parent=0
    #allocation2 [shape = 'u8[16384]{0}', space=vmem, size = 0x4000, scoped, tag = 'output window, operand 0']
    #allocation3 [shape = 's32[2]{0}', space=sflag, size = 0x8, scoped, tag = 'scoped memory for tpu_custom_call.1']
    %24 = vsyncpa [#allocation3], 0
    %s25 = scalar_lea.sflag [#allocation3], 1
    %26 = vsyncpa %s25, 0
    loop: start=0, step=1, limit=4
    $region2: #{tpu_custom_call.1} parent=1 // loop_pre_header
      _
    $region3: #{tpu_custom_call.1} parent=1 // loop_header
      %s28 = sphi 0, %s32
      %p29 = scmp.ge.s32.totalorder %s28, 4
      %s38 = sphi 0, %s40
      %s41 = sphi 0, %s38
      %s42 = sphi 0, %s41
      %s58 = sphi 0, %s42
      %s62 = sphi 0, %s62
      %s64 = sphi 0, %s62
      %s65 = sphi 0, %s64
      %s79 = sphi 0, %s65
      %s83 = sphi 0, %s83
      %s85 = sphi 0, %s83
      %s86 = sphi 0, %s85
      %s100 = sphi 0, %s86
      %s104 = sphi 0, %s104
      %s106 = sphi 0, %s104
      %s107 = sphi 0, %s106
      %s121 = sphi 0, %s107
      %s125 = sphi 0, %s125
      %s127 = sphi 0, %s125
      %s128 = sphi 0, %s127
      %s142 = sphi 0, %s128
      %s146 = sphi 0, %s146
      %s148 = sphi 0, %s146
      %s149 = sphi 0, %s148
      %s163 = sphi 0, %s149
      %s167 = sphi 0, %s167
      %s169 = sphi 0, %s167
      %s170 = sphi 0, %s169
      %s184 = sphi 0, %s170
      %s188 = sphi 0, %s188
      %s190 = sphi 0, %s188
      %s191 = sphi 0, %s190
      %s205 = sphi 0, %s191
      %s209 = sphi 0, %s209
      %s211 = sphi 0, %s209
      %s212 = sphi 0, %s211
      %s226 = sphi 0, %s212
      %s230 = sphi 0, %s230
      %s232 = sphi 0, %s230
      %s233 = sphi 0, %s232
      %s247 = sphi 0, %s233
      %s251 = sphi 0, %s251
      %s253 = sphi 0, %s251
      %s254 = sphi 0, %s253
      %s268 = sphi 0, %s254
      %s272 = sphi 0, %s272
      %s274 = sphi 0, %s272
      %s275 = sphi 0, %s274
      %s289 = sphi 0, %s275
      %s293 = sphi 0, %s293
      %s295 = sphi 0, %s293
      %s296 = sphi 0, %s295
      %s310 = sphi 0, %s296
      %s314 = sphi 0, %s314
      %s316 = sphi 0, %s314
      %s317 = sphi 0, %s316
      %s331 = sphi 0, %s317
      %s335 = sphi 0, %s335
      %s337 = sphi 0, %s335
      %s338 = sphi 0, %s337
      %s352 = sphi 0, %s338
      %s356 = sphi 0, %s356
      %s358 = sphi 0, %s356
      %s359 = sphi 0, %s358
      %s373 = sphi 0, %s359
      %s377 = sphi 0, %s377
      %s379 = sphi 0, %s377
      %s380 = sphi 0, %s379
      %s394 = sphi 0, %s380
      %s398 = sphi 0, %s398
      %s400 = sphi 0, %s398
      %s401 = sphi 0, %s400
      %s415 = sphi 0, %s401
      %s419 = sphi 0, %s419
      %s421 = sphi 0, %s419
      %s422 = sphi 0, %s421
      %s436 = sphi 0, %s422
      %s442 = sphi 0, %s444
      %s445 = sphi 0, %s442
      %s446 = sphi 0, %s445
      %s462 = sphi 0, %s446
    $region4: #{tpu_custom_call.1} parent=1 // loop_header_branch
      %31 = sbr.rel (%p29) target = $region8
    $region5: #{tpu_custom_call.1} parent=1 // loop_body
      %s33 = ssub.s32 %s28, 1
      %s34 = ssub.s32 %s28, 2
      %s35 = sadd.s32 %s28, 1
      %s36 = ssub.s32 %s28, %s35
      %p37 = scmp.eq.s32.totalorder %s36, 0
      %s39 = sadd.s32 %s38, 1
      %s40 = scalar_select %p37, %s38, %s39
      %p43 = pneg %p37
      %p44 = scmp.eq.s32.totalorder %s28, 1
      %p45 = por %p43, %p44
      %p46 = scmp.ne.s32.totalorder %s38, %s41
      %p47 = scmp.eq.s32.totalorder %s28, 0
      %p48 = por %p46, %p47
      %p49 = scmp.ne.s32.totalorder %s38, %s41
      %p50 = scmp.eq.s32.totalorder %s33, 1
      %p51 = por %p49, %p50
      %p52 = scmp.ne.s32.totalorder %s41, %s42
      %p53 = scmp.eq.s32.totalorder %s33, 0
      %p54 = por %p52, %p53
      %p55 = scmp.ne.s32.totalorder %s41, %s42
      %p56 = scmp.eq.s32.totalorder %s34, 1
      %p57 = por %p55, %p56
      %p59 = scmp.ne.s32.totalorder %s42, %s58
      %p60 = scmp.eq.s32.totalorder %s34, 0
      %p61 = por %p59, %p60
      %s63 = sadd.s32 %s62, 1
      %p66 = scmp.eq.s32.totalorder %s28, 1
      %p67 = scmp.ne.s32.totalorder %s62, %s64
      %p68 = scmp.eq.s32.totalorder %s28, 0
      %p69 = por %p67, %p68
      %p70 = scmp.ne.s32.totalorder %s62, %s64
      %p71 = scmp.eq.s32.totalorder %s33, 1
      %p72 = por %p70, %p71
      %p73 = scmp.ne.s32.totalorder %s64, %s65
      %p74 = scmp.eq.s32.totalorder %s33, 0
      %p75 = por %p73, %p74
      %p76 = scmp.ne.s32.totalorder %s64, %s65
      %p77 = scmp.eq.s32.totalorder %s34, 1
      %p78 = por %p76, %p77
      %p80 = scmp.ne.s32.totalorder %s65, %s79
      %p81 = scmp.eq.s32.totalorder %s34, 0
      %p82 = por %p80, %p81
      %s84 = sadd.s32 %s83, 1
      %p87 = scmp.eq.s32.totalorder %s28, 1
      %p88 = scmp.ne.s32.totalorder %s83, %s85
      %p89 = scmp.eq.s32.totalorder %s28, 0
      %p90 = por %p88, %p89
      %p91 = scmp.ne.s32.totalorder %s83, %s85
      %p92 = scmp.eq.s32.totalorder %s33, 1
      %p93 = por %p91, %p92
      %p94 = scmp.ne.s32.totalorder %s85, %s86
      %p95 = scmp.eq.s32.totalorder %s33, 0
      %p96 = por %p94, %p95
      %p97 = scmp.ne.s32.totalorder %s85, %s86
      %p98 = scmp.eq.s32.totalorder %s34, 1
      %p99 = por %p97, %p98
      %p101 = scmp.ne.s32.totalorder %s86, %s100
      %p102 = scmp.eq.s32.totalorder %s34, 0
      %p103 = por %p101, %p102
      %s105 = sadd.s32 %s104, 1
      %p108 = scmp.eq.s32.totalorder %s28, 1
      %p109 = scmp.ne.s32.totalorder %s104, %s106
      %p110 = scmp.eq.s32.totalorder %s28, 0
      %p111 = por %p109, %p110
      %p112 = scmp.ne.s32.totalorder %s104, %s106
      %p113 = scmp.eq.s32.totalorder %s33, 1
      %p114 = por %p112, %p113
      %p115 = scmp.ne.s32.totalorder %s106, %s107
      %p116 = scmp.eq.s32.totalorder %s33, 0
      %p117 = por %p115, %p116
      %p118 = scmp.ne.s32.totalorder %s106, %s107
      %p119 = scmp.eq.s32.totalorder %s34, 1
      %p120 = por %p118, %p119
      %p122 = scmp.ne.s32.totalorder %s107, %s121
      %p123 = scmp.eq.s32.totalorder %s34, 0
      %p124 = por %p122, %p123
      %s126 = sadd.s32 %s125, 1
      %p129 = scmp.eq.s32.totalorder %s28, 1
      %p130 = scmp.ne.s32.totalorder %s125, %s127
      %p131 = scmp.eq.s32.totalorder %s28, 0
      %p132 = por %p130, %p131
      %p133 = scmp.ne.s32.totalorder %s125, %s127
      %p134 = scmp.eq.s32.totalorder %s33, 1
      %p135 = por %p133, %p134
      %p136 = scmp.ne.s32.totalorder %s127, %s128
      %p137 = scmp.eq.s32.totalorder %s33, 0
      %p138 = por %p136, %p137
      %p139 = scmp.ne.s32.totalorder %s127, %s128
      %p140 = scmp.eq.s32.totalorder %s34, 1
      %p141 = por %p139, %p140
      %p143 = scmp.ne.s32.totalorder %s128, %s142
      %p144 = scmp.eq.s32.totalorder %s34, 0
      %p145 = por %p143, %p144
      %s147 = sadd.s32 %s146, 1
      %p150 = scmp.eq.s32.totalorder %s28, 1
      %p151 = scmp.ne.s32.totalorder %s146, %s148
      %p152 = scmp.eq.s32.totalorder %s28, 0
      %p153 = por %p151, %p152
      %p154 = scmp.ne.s32.totalorder %s146, %s148
      %p155 = scmp.eq.s32.totalorder %s33, 1
      %p156 = por %p154, %p155
      %p157 = scmp.ne.s32.totalorder %s148, %s149
      %p158 = scmp.eq.s32.totalorder %s33, 0
      %p159 = por %p157, %p158
      %p160 = scmp.ne.s32.totalorder %s148, %s149
      %p161 = scmp.eq.s32.totalorder %s34, 1
      %p162 = por %p160, %p161
      %p164 = scmp.ne.s32.totalorder %s149, %s163
      %p165 = scmp.eq.s32.totalorder %s34, 0
      %p166 = por %p164, %p165
      %s168 = sadd.s32 %s167, 1
      %p171 = scmp.eq.s32.totalorder %s28, 1
      %p172 = scmp.ne.s32.totalorder %s167, %s169
      %p173 = scmp.eq.s32.totalorder %s28, 0
      %p174 = por %p172, %p173
      %p175 = scmp.ne.s32.totalorder %s167, %s169
      %p176 = scmp.eq.s32.totalorder %s33, 1
      %p177 = por %p175, %p176
      %p178 = scmp.ne.s32.totalorder %s169, %s170
      %p179 = scmp.eq.s32.totalorder %s33, 0
      %p180 = por %p178, %p179
      %p181 = scmp.ne.s32.totalorder %s169, %s170
      %p182 = scmp.eq.s32.totalorder %s34, 1
      %p183 = por %p181, %p182
      %p185 = scmp.ne.s32.totalorder %s170, %s184
      %p186 = scmp.eq.s32.totalorder %s34, 0
      %p187 = por %p185, %p186
      %s189 = sadd.s32 %s188, 1
      %p192 = scmp.eq.s32.totalorder %s28, 1
      %p193 = scmp.ne.s32.totalorder %s188, %s190
      %p194 = scmp.eq.s32.totalorder %s28, 0
      %p195 = por %p193, %p194
      %p196 = scmp.ne.s32.totalorder %s188, %s190
      %p197 = scmp.eq.s32.totalorder %s33, 1
      %p198 = por %p196, %p197
      %p199 = scmp.ne.s32.totalorder %s190, %s191
      %p200 = scmp.eq.s32.totalorder %s33, 0
      %p201 = por %p199, %p200
      %p202 = scmp.ne.s32.totalorder %s190, %s191
      %p203 = scmp.eq.s32.totalorder %s34, 1
      %p204 = por %p202, %p203
      %p206 = scmp.ne.s32.totalorder %s191, %s205
      %p207 = scmp.eq.s32.totalorder %s34, 0
      %p208 = por %p206, %p207
      %s210 = sadd.s32 %s209, 1
      %p213 = scmp.eq.s32.totalorder %s28, 1
      %p214 = scmp.ne.s32.totalorder %s209, %s211
      %p215 = scmp.eq.s32.totalorder %s28, 0
      %p216 = por %p214, %p215
      %p217 = scmp.ne.s32.totalorder %s209, %s211
      %p218 = scmp.eq.s32.totalorder %s33, 1
      %p219 = por %p217, %p218
      %p220 = scmp.ne.s32.totalorder %s211, %s212
      %p221 = scmp.eq.s32.totalorder %s33, 0
      %p222 = por %p220, %p221
      %p223 = scmp.ne.s32.totalorder %s211, %s212
      %p224 = scmp.eq.s32.totalorder %s34, 1
      %p225 = por %p223, %p224
      %p227 = scmp.ne.s32.totalorder %s212, %s226
      %p228 = scmp.eq.s32.totalorder %s34, 0
      %p229 = por %p227, %p228
      %s231 = sadd.s32 %s230, 1
      %p234 = scmp.eq.s32.totalorder %s28, 1
      %p235 = scmp.ne.s32.totalorder %s230, %s232
      %p236 = scmp.eq.s32.totalorder %s28, 0
      %p237 = por %p235, %p236
      %p238 = scmp.ne.s32.totalorder %s230, %s232
      %p239 = scmp.eq.s32.totalorder %s33, 1
      %p240 = por %p238, %p239
      %p241 = scmp.ne.s32.totalorder %s232, %s233
      %p242 = scmp.eq.s32.totalorder %s33, 0
      %p243 = por %p241, %p242
      %p244 = scmp.ne.s32.totalorder %s232, %s233
      %p245 = scmp.eq.s32.totalorder %s34, 1
      %p246 = por %p244, %p245
      %p248 = scmp.ne.s32.totalorder %s233, %s247
      %p249 = scmp.eq.s32.totalorder %s34, 0
      %p250 = por %p248, %p249
      %s252 = sadd.s32 %s251, 1
      %p255 = scmp.eq.s32.totalorder %s28, 1
      %p256 = scmp.ne.s32.totalorder %s251, %s253
      %p257 = scmp.eq.s32.totalorder %s28, 0
      %p258 = por %p256, %p257
      %p259 = scmp.ne.s32.totalorder %s251, %s253
      %p260 = scmp.eq.s32.totalorder %s33, 1
      %p261 = por %p259, %p260
      %p262 = scmp.ne.s32.totalorder %s253, %s254
      %p263 = scmp.eq.s32.totalorder %s33, 0
      %p264 = por %p262, %p263
      %p265 = scmp.ne.s32.totalorder %s253, %s254
      %p266 = scmp.eq.s32.totalorder %s34, 1
      %p267 = por %p265, %p266
      %p269 = scmp.ne.s32.totalorder %s254, %s268
      %p270 = scmp.eq.s32.totalorder %s34, 0
      %p271 = por %p269, %p270
      %s273 = sadd.s32 %s272, 1
      %p276 = scmp.eq.s32.totalorder %s28, 1
      %p277 = scmp.ne.s32.totalorder %s272, %s274
      %p278 = scmp.eq.s32.totalorder %s28, 0
      %p279 = por %p277, %p278
      %p280 = scmp.ne.s32.totalorder %s272, %s274
      %p281 = scmp.eq.s32.totalorder %s33, 1
      %p282 = por %p280, %p281
      %p283 = scmp.ne.s32.totalorder %s274, %s275
      %p284 = scmp.eq.s32.totalorder %s33, 0
      %p285 = por %p283, %p284
      %p286 = scmp.ne.s32.totalorder %s274, %s275
      %p287 = scmp.eq.s32.totalorder %s34, 1
      %p288 = por %p286, %p287
      %p290 = scmp.ne.s32.totalorder %s275, %s289
      %p291 = scmp.eq.s32.totalorder %s34, 0
      %p292 = por %p290, %p291
      %s294 = sadd.s32 %s293, 1
      %p297 = scmp.eq.s32.totalorder %s28, 1
      %p298 = scmp.ne.s32.totalorder %s293, %s295
      %p299 = scmp.eq.s32.totalorder %s28, 0
      %p300 = por %p298, %p299
      %p301 = scmp.ne.s32.totalorder %s293, %s295
      %p302 = scmp.eq.s32.totalorder %s33, 1
      %p303 = por %p301, %p302
      %p304 = scmp.ne.s32.totalorder %s295, %s296
      %p305 = scmp.eq.s32.totalorder %s33, 0
      %p306 = por %p304, %p305
      %p307 = scmp.ne.s32.totalorder %s295, %s296
      %p308 = scmp.eq.s32.totalorder %s34, 1
      %p309 = por %p307, %p308
      %p311 = scmp.ne.s32.totalorder %s296, %s310
      %p312 = scmp.eq.s32.totalorder %s34, 0
      %p313 = por %p311, %p312
      %s315 = sadd.s32 %s314, 1
      %p318 = scmp.eq.s32.totalorder %s28, 1
      %p319 = scmp.ne.s32.totalorder %s314, %s316
      %p320 = scmp.eq.s32.totalorder %s28, 0
      %p321 = por %p319, %p320
      %p322 = scmp.ne.s32.totalorder %s314, %s316
      %p323 = scmp.eq.s32.totalorder %s33, 1
      %p324 = por %p322, %p323
      %p325 = scmp.ne.s32.totalorder %s316, %s317
      %p326 = scmp.eq.s32.totalorder %s33, 0
      %p327 = por %p325, %p326
      %p328 = scmp.ne.s32.totalorder %s316, %s317
      %p329 = scmp.eq.s32.totalorder %s34, 1
      %p330 = por %p328, %p329
      %p332 = scmp.ne.s32.totalorder %s317, %s331
      %p333 = scmp.eq.s32.totalorder %s34, 0
      %p334 = por %p332, %p333
      %s336 = sadd.s32 %s335, 1
      %p339 = scmp.eq.s32.totalorder %s28, 1
      %p340 = scmp.ne.s32.totalorder %s335, %s337
      %p341 = scmp.eq.s32.totalorder %s28, 0
      %p342 = por %p340, %p341
      %p343 = scmp.ne.s32.totalorder %s335, %s337
      %p344 = scmp.eq.s32.totalorder %s33, 1
      %p345 = por %p343, %p344
      %p346 = scmp.ne.s32.totalorder %s337, %s338
      %p347 = scmp.eq.s32.totalorder %s33, 0
      %p348 = por %p346, %p347
      %p349 = scmp.ne.s32.totalorder %s337, %s338
      %p350 = scmp.eq.s32.totalorder %s34, 1
      %p351 = por %p349, %p350
      %p353 = scmp.ne.s32.totalorder %s338, %s352
      %p354 = scmp.eq.s32.totalorder %s34, 0
      %p355 = por %p353, %p354
      %s357 = sadd.s32 %s356, 1
      %p360 = scmp.eq.s32.totalorder %s28, 1
      %p361 = scmp.ne.s32.totalorder %s356, %s358
      %p362 = scmp.eq.s32.totalorder %s28, 0
      %p363 = por %p361, %p362
      %p364 = scmp.ne.s32.totalorder %s356, %s358
      %p365 = scmp.eq.s32.totalorder %s33, 1
      %p366 = por %p364, %p365
      %p367 = scmp.ne.s32.totalorder %s358, %s359
      %p368 = scmp.eq.s32.totalorder %s33, 0
      %p369 = por %p367, %p368
      %p370 = scmp.ne.s32.totalorder %s358, %s359
      %p371 = scmp.eq.s32.totalorder %s34, 1
      %p372 = por %p370, %p371
      %p374 = scmp.ne.s32.totalorder %s359, %s373
      %p375 = scmp.eq.s32.totalorder %s34, 0
      %p376 = por %p374, %p375
      %s378 = sadd.s32 %s377, 1
      %p381 = scmp.eq.s32.totalorder %s28, 1
      %p382 = scmp.ne.s32.totalorder %s377, %s379
      %p383 = scmp.eq.s32.totalorder %s28, 0
      %p384 = por %p382, %p383
      %p385 = scmp.ne.s32.totalorder %s377, %s379
      %p386 = scmp.eq.s32.totalorder %s33, 1
      %p387 = por %p385, %p386
      %p388 = scmp.ne.s32.totalorder %s379, %s380
      %p389 = scmp.eq.s32.totalorder %s33, 0
      %p390 = por %p388, %p389
      %p391 = scmp.ne.s32.totalorder %s379, %s380
      %p392 = scmp.eq.s32.totalorder %s34, 1
      %p393 = por %p391, %p392
      %p395 = scmp.ne.s32.totalorder %s380, %s394
      %p396 = scmp.eq.s32.totalorder %s34, 0
      %p397 = por %p395, %p396
      %s399 = sadd.s32 %s398, 1
      %p402 = scmp.eq.s32.totalorder %s28, 1
      %p403 = scmp.ne.s32.totalorder %s398, %s400
      %p404 = scmp.eq.s32.totalorder %s28, 0
      %p405 = por %p403, %p404
      %p406 = scmp.ne.s32.totalorder %s398, %s400
      %p407 = scmp.eq.s32.totalorder %s33, 1
      %p408 = por %p406, %p407
      %p409 = scmp.ne.s32.totalorder %s400, %s401
      %p410 = scmp.eq.s32.totalorder %s33, 0
      %p411 = por %p409, %p410
      %p412 = scmp.ne.s32.totalorder %s400, %s401
      %p413 = scmp.eq.s32.totalorder %s34, 1
      %p414 = por %p412, %p413
      %p416 = scmp.ne.s32.totalorder %s401, %s415
      %p417 = scmp.eq.s32.totalorder %s34, 0
      %p418 = por %p416, %p417
      %s420 = sadd.s32 %s419, 1
      %p423 = scmp.eq.s32.totalorder %s28, 1
      %p424 = scmp.ne.s32.totalorder %s419, %s421
      %p425 = scmp.eq.s32.totalorder %s28, 0
      %p426 = por %p424, %p425
      %p427 = scmp.ne.s32.totalorder %s419, %s421
      %p428 = scmp.eq.s32.totalorder %s33, 1
      %p429 = por %p427, %p428
      %p430 = scmp.ne.s32.totalorder %s421, %s422
      %p431 = scmp.eq.s32.totalorder %s33, 0
      %p432 = por %p430, %p431
      %p433 = scmp.ne.s32.totalorder %s421, %s422
      %p434 = scmp.eq.s32.totalorder %s34, 1
      %p435 = por %p433, %p434
      %p437 = scmp.ne.s32.totalorder %s422, %s436
      %p438 = scmp.eq.s32.totalorder %s34, 0
      %p439 = por %p437, %p438
      %s440 = ssub.s32 %s28, %s35
      %p441 = scmp.eq.s32.totalorder %s440, 0
      %s443 = sadd.s32 %s442, 1
      %s444 = scalar_select %p441, %s442, %s443
      %p447 = pneg %p441
      %p448 = scmp.eq.s32.totalorder %s28, 1
      %p449 = por %p447, %p448
      %p450 = scmp.ne.s32.totalorder %s442, %s445
      %p451 = scmp.eq.s32.totalorder %s28, 0
      %p452 = por %p450, %p451
      %p453 = scmp.ne.s32.totalorder %s442, %s445
      %p454 = scmp.eq.s32.totalorder %s33, 1
      %p455 = por %p453, %p454
      %p456 = scmp.ne.s32.totalorder %s445, %s446
      %p457 = scmp.eq.s32.totalorder %s33, 0
      %p458 = por %p456, %p457
      %p459 = scmp.ne.s32.totalorder %s445, %s446
      %p460 = scmp.eq.s32.totalorder %s34, 1
      %p461 = por %p459, %p460
      %p463 = scmp.ne.s32.totalorder %s446, %s462
      %p464 = scmp.eq.s32.totalorder %s34, 0
      %p465 = por %p463, %p464
      %p466 = scmp.le.s32.totalorder 1, %s28
      %p467 = scmp.lt.s32.totalorder %s28, 3
      %p468 = pnand %p466, %p467
      %p469 = pneg %p468
      // Predicated region
      $region9: #{tpu_custom_call.1} parent=5 // pred_check
        _
      $region10: #{tpu_custom_call.1} parent=5 // pred_check_branch
        %471 = sbr.rel (%p468) target = $region12
      $region11: #{tpu_custom_call.1} parent=5 // pred_region
        %s472 = ssub.s32 %s28, 1
        // Predicated region
        $region13: #{tpu_custom_call.1} parent=11 // pred_check
          %p473 = pneg %p75
        $region14: #{tpu_custom_call.1} parent=11 // pred_check_branch
          %475 = sbr.rel (%p473) target = $region16
        $region15: #{tpu_custom_call.1} parent=11 // pred_region
          _
        $region16: #{tpu_custom_call.1} parent=11 // pred_fallthru
          _
        // Predicated region
        $region17: #{tpu_custom_call.1} parent=11 // pred_check
          %p476 = pneg %p96
        $region18: #{tpu_custom_call.1} parent=11 // pred_check_branch
          %478 = sbr.rel (%p476) target = $region20
        $region19: #{tpu_custom_call.1} parent=11 // pred_region
          _
        $region20: #{tpu_custom_call.1} parent=11 // pred_fallthru
          _
        // Predicated region
        $region21: #{tpu_custom_call.1} parent=11 // pred_check
          %p479 = pneg %p117
        $region22: #{tpu_custom_call.1} parent=11 // pred_check_branch
          %481 = sbr.rel (%p479) target = $region24
        $region23: #{tpu_custom_call.1} parent=11 // pred_region
          _
        $region24: #{tpu_custom_call.1} parent=11 // pred_fallthru
          _
        // Predicated region
        $region25: #{tpu_custom_call.1} parent=11 // pred_check
          %p482 = pneg %p138
        $region26: #{tpu_custom_call.1} parent=11 // pred_check_branch
          %484 = sbr.rel (%p482) target = $region28
        $region27: #{tpu_custom_call.1} parent=11 // pred_region
          _
        $region28: #{tpu_custom_call.1} parent=11 // pred_fallthru
          _
        // Predicated region
        $region29: #{tpu_custom_call.1} parent=11 // pred_check
          %p485 = pneg %p159
        $region30: #{tpu_custom_call.1} parent=11 // pred_check_branch
          %487 = sbr.rel (%p485) target = $region32
        $region31: #{tpu_custom_call.1} parent=11 // pred_region
          _
        $region32: #{tpu_custom_call.1} parent=11 // pred_fallthru
          _
        // Predicated region
        $region33: #{tpu_custom_call.1} parent=11 // pred_check
          %p488 = pneg %p180
        $region34: #{tpu_custom_call.1} parent=11 // pred_check_branch
          %490 = sbr.rel (%p488) target = $region36
        $region35: #{tpu_custom_call.1} parent=11 // pred_region
          _
        $region36: #{tpu_custom_call.1} parent=11 // pred_fallthru
          _
        // Predicated region
        $region37: #{tpu_custom_call.1} parent=11 // pred_check
          %p491 = pneg %p201
        $region38: #{tpu_custom_call.1} parent=11 // pred_check_branch
          %493 = sbr.rel (%p491) target = $region40
        $region39: #{tpu_custom_call.1} parent=11 // pred_region
          _
        $region40: #{tpu_custom_call.1} parent=11 // pred_fallthru
          _
        // Predicated region
        $region41: #{tpu_custom_call.1} parent=11 // pred_check
          %p494 = pneg %p222
        $region42: #{tpu_custom_call.1} parent=11 // pred_check_branch
          %496 = sbr.rel (%p494) target = $region44
        $region43: #{tpu_custom_call.1} parent=11 // pred_region
          _
        $region44: #{tpu_custom_call.1} parent=11 // pred_fallthru
          _
        // Predicated region
        $region45: #{tpu_custom_call.1} parent=11 // pred_check
          %p497 = pneg %p243
        $region46: #{tpu_custom_call.1} parent=11 // pred_check_branch
          %499 = sbr.rel (%p497) target = $region48
        $region47: #{tpu_custom_call.1} parent=11 // pred_region
          _
        $region48: #{tpu_custom_call.1} parent=11 // pred_fallthru
          _
        // Predicated region
        $region49: #{tpu_custom_call.1} parent=11 // pred_check
          %p500 = pneg %p264
        $region50: #{tpu_custom_call.1} parent=11 // pred_check_branch
          %502 = sbr.rel (%p500) target = $region52
        $region51: #{tpu_custom_call.1} parent=11 // pred_region
          _
        $region52: #{tpu_custom_call.1} parent=11 // pred_fallthru
          _
        // Predicated region
        $region53: #{tpu_custom_call.1} parent=11 // pred_check
          %p503 = pneg %p285
        $region54: #{tpu_custom_call.1} parent=11 // pred_check_branch
          %505 = sbr.rel (%p503) target = $region56
        $region55: #{tpu_custom_call.1} parent=11 // pred_region
          _
        $region56: #{tpu_custom_call.1} parent=11 // pred_fallthru
          _
        // Predicated region
        $region57: #{tpu_custom_call.1} parent=11 // pred_check
          %p506 = pneg %p306
        $region58: #{tpu_custom_call.1} parent=11 // pred_check_branch
          %508 = sbr.rel (%p506) target = $region60
        $region59: #{tpu_custom_call.1} parent=11 // pred_region
          _
        $region60: #{tpu_custom_call.1} parent=11 // pred_fallthru
          _
        // Predicated region
        $region61: #{tpu_custom_call.1} parent=11 // pred_check
          %p509 = pneg %p327
        $region62: #{tpu_custom_call.1} parent=11 // pred_check_branch
          %511 = sbr.rel (%p509) target = $region64
        $region63: #{tpu_custom_call.1} parent=11 // pred_region
          _
        $region64: #{tpu_custom_call.1} parent=11 // pred_fallthru
          _
        // Predicated region
        $region65: #{tpu_custom_call.1} parent=11 // pred_check
          %p512 = pneg %p348
        $region66: #{tpu_custom_call.1} parent=11 // pred_check_branch
          %514 = sbr.rel (%p512) target = $region68
        $region67: #{tpu_custom_call.1} parent=11 // pred_region
          _
        $region68: #{tpu_custom_call.1} parent=11 // pred_fallthru
          _
        // Predicated region
        $region69: #{tpu_custom_call.1} parent=11 // pred_check
          %p515 = pneg %p369
        $region70: #{tpu_custom_call.1} parent=11 // pred_check_branch
          %517 = sbr.rel (%p515) target = $region72
        $region71: #{tpu_custom_call.1} parent=11 // pred_region
          _
        $region72: #{tpu_custom_call.1} parent=11 // pred_fallthru
          _
        // Predicated region
        $region73: #{tpu_custom_call.1} parent=11 // pred_check
          %p518 = pneg %p390
        $region74: #{tpu_custom_call.1} parent=11 // pred_check_branch
          %520 = sbr.rel (%p518) target = $region76
        $region75: #{tpu_custom_call.1} parent=11 // pred_region
          _
        $region76: #{tpu_custom_call.1} parent=11 // pred_fallthru
          _
        // Predicated region
        $region77: #{tpu_custom_call.1} parent=11 // pred_check
          %p521 = pneg %p411
        $region78: #{tpu_custom_call.1} parent=11 // pred_check_branch
          %523 = sbr.rel (%p521) target = $region80
        $region79: #{tpu_custom_call.1} parent=11 // pred_region
          _
        $region80: #{tpu_custom_call.1} parent=11 // pred_fallthru
          _
        // Predicated region
        $region81: #{tpu_custom_call.1} parent=11 // pred_check
          %p524 = pneg %p432
        $region82: #{tpu_custom_call.1} parent=11 // pred_check_branch
          %526 = sbr.rel (%p524) target = $region84
        $region83: #{tpu_custom_call.1} parent=11 // pred_region
          _
        $region84: #{tpu_custom_call.1} parent=11 // pred_fallthru
          _
      $region12: #{tpu_custom_call.1} parent=5 // pred_fallthru
        _
      %p527 = scmp.lt.s32.totalorder %s28, 2
      // Predicated region
      $region85: #{tpu_custom_call.1} parent=5 // pred_check
        %p528 = pneg %p527
      $region86: #{tpu_custom_call.1} parent=5 // pred_check_branch
        %530 = sbr.rel (%p528) target = $region88
      $region87: #{tpu_custom_call.1} parent=5 // pred_region
        // Predicated region
        $region89: #{tpu_custom_call.1} parent=87 // pred_check
          %p531 = pneg %p48
        $region90: #{tpu_custom_call.1} parent=87 // pred_check_branch
          %533 = sbr.rel (%p531) target = $region92
        $region91: #{tpu_custom_call.1} parent=87 // pred_region
          %p534 = scmp.lt.s32.totalorder %s28, 1
          %s535 = scalar_select %p534, %s28, 1
          %s536 = smul.addr %s535, 2
          %s537 = smul.addr %s536, 4
          %s538 = scalar_lea.vmem %s0, %s537
        $region92: #{tpu_custom_call.1} parent=87 // pred_fallthru
          _
      $region88: #{tpu_custom_call.1} parent=5 // pred_fallthru
        _
      %p539 = scmp.le.s32.totalorder 1, %s28
      %p540 = scmp.lt.s32.totalorder %s28, 3
      %p541 = pnand %p539, %p540
      %p542 = pneg %p541
      // Predicated region
      $region93: #{tpu_custom_call.1} parent=5 // pred_check
        _
      $region94: #{tpu_custom_call.1} parent=5 // pred_check_branch
        %544 = sbr.rel (%p541) target = $region96
      $region95: #{tpu_custom_call.1} parent=5 // pred_region
        %s545 = ssub.s32 %s28, 1
        %p546 = scmp.lt.s32.totalorder %s33, 1
        %s547 = scalar_select %p546, %s33, 1
        %s548 = smul.addr %s547, 2
        %s549 = smul.addr %s548, 4
        %s550 = scalar_lea.vmem %s0, %s549
        %p551 = pneg %p54
        %p552 = pneg %p51
        %p553 = pneg %p75
        %p554 = pneg %p72
        %p555 = pneg %p96
        %p556 = pneg %p93
        %p557 = pneg %p117
        %p558 = pneg %p114
        %p559 = pneg %p138
        %p560 = pneg %p135
        %p561 = pneg %p159
        %p562 = pneg %p156
        %p563 = pneg %p180
        %p564 = pneg %p177
        %p565 = pneg %p201
        %p566 = pneg %p198
        %p567 = pneg %p222
        %p568 = pneg %p219
        %p569 = pneg %p243
        %p570 = pneg %p240
        %p571 = pneg %p264
        %p572 = pneg %p261
        %p573 = pneg %p285
        %p574 = pneg %p282
        %p575 = pneg %p306
        %p576 = pneg %p303
        %p577 = pneg %p327
        %p578 = pneg %p324
        %p579 = pneg %p348
        %p580 = pneg %p345
        %p581 = pneg %p369
        %p582 = pneg %p366
        %p583 = pneg %p390
        %p584 = pneg %p387
        %p585 = pneg %p411
        %p586 = pneg %p408
        %p587 = pneg %p432
        %p588 = pneg %p429
        %p589 = pneg %p458
        %p590 = pneg %p455
        %s591 = sand.u32 %s445, 1
        %s592 = scalar_lea.sflag [#allocation3], %s591
        %s593 = sand.u32 %s445, 1
        %s594 = smul.addr %s593, 16
        %s595 = scalar_lea.vmem [#allocation2], %s594
        %p596 = scmp.lt.s32.totalorder %s33, 1
        %s597 = scalar_select %p596, %s33, 1
        %s598 = smul.addr %s597, 2
        %s599 = smul.addr %s598, 4
        %s600 = scalar_lea.vmem %s0, %s599
        %v601 = vld [vmem:[%s600] sm:$0xff]
        %v602 = vld [vmem:[%s1] sm:$0xf]
        %v603 = vld [vmem:[%s7] sm:$0xf]
        %v604 = vld [vmem:[%s8] sm:$0xf]
        %v606 = vcombine.high %v601, %v601
        %vm607 = vcmask 31744
        %v609 = vsel %vm607, %v602, 0
        %vm611 = vcmask 1043456
        %v612 = vsel %vm611, %v601, 0
        %v614 = vsel %vm611, %v606, 0
        %616 = vmatprep.subr.mxu0 0.0
        %617 = vmatpush1.msra.mxu0 0.0
        %618 = vmatprep.subr.mxu0 0.0
        %619 = vmatpush1.msra.mxu0 0.0
        %620 = vmatprep.subr.mxu0 0.0
        %621 = vmatpush1.msra.mxu0 0.0
        %622 = vmatprep.subr.mxu0 0.0
        %623 = vmatpush1.msra.mxu0 0.0
        %624 = vmatprep.subr.mxu0 0.0
        %625 = vmatpush1.msra.mxu0 0.0
        %626 = vmatprep.subr.mxu0 0.0
        %627 = vmatpush1.msra.mxu0 0.0
        %628 = vmatprep.subr.mxu0 0.0
        %629 = vmatpush1.msra.mxu0 0.0
        %630 = vmatprep.subr.mxu0 0.0
        %631 = vmatpush1.msra.mxu0 0.0
        %632 = vmatprep.subr.mxu0 0.0
        %633 = vmatpush1.msra.mxu0 0.0
        %634 = vmatprep.subr.mxu0 0.0
        %635 = vmatpush1.msra.mxu0 0.0
        %636 = vmatprep.subr.mxu0 0.0
        %637 = vmatpush1.msra.mxu0 0.0
        %638 = vmatprep.subr.mxu0 0.0
        %639 = vmatpush1.msra.mxu0 0.0
        %640 = vmatprep.subr.mxu0 0.0
        %641 = vmatpush1.msra.mxu0 0.0
        %642 = vmatprep.subr.mxu0 0.0
        %643 = vmatpush1.msra.mxu0 0.0
        %644 = vmatprep.subr.mxu0 0.0
        %645 = vmatpush1.msra.mxu0 0.0
        %v646 = vand.u32 %v614, 4294901760
        %647 = vmatprep.subr.mxu0 %v646
        %v648 = vand.u32 %v612, 4294901760
        %649 = vmatpush1.msra.mxu0 %v648
        %650 = vmatprep.subr.mxu0 0.0
        %651 = vmatpush2.msra.mxu0 0.0
        %652 = vmatprep.subr.mxu0 0.0
        %653 = vmatpush2.msra.mxu0 0.0
        %654 = vmatprep.subr.mxu0 0.0
        %655 = vmatpush2.msra.mxu0 0.0
        %656 = vmatprep.subr.mxu0 0.0
        %657 = vmatpush2.msra.mxu0 0.0
        %658 = vmatprep.subr.mxu0 0.0
        %659 = vmatpush2.msra.mxu0 0.0
        %660 = vmatprep.subr.mxu0 0.0
        %661 = vmatpush2.msra.mxu0 0.0
        %662 = vmatprep.subr.mxu0 0.0
        %663 = vmatpush2.msra.mxu0 0.0
        %664 = vmatprep.subr.mxu0 0.0
        %665 = vmatpush2.msra.mxu0 0.0
        %666 = vmatprep.subr.mxu0 0.0
        %667 = vmatpush2.msra.mxu0 0.0
        %668 = vmatprep.subr.mxu0 0.0
        %669 = vmatpush2.msra.mxu0 0.0
        %670 = vmatprep.subr.mxu0 0.0
        %671 = vmatpush2.msra.mxu0 0.0
        %672 = vmatprep.subr.mxu0 0.0
        %673 = vmatpush2.msra.mxu0 0.0
        %674 = vmatprep.subr.mxu0 0.0
        %675 = vmatpush2.msra.mxu0 0.0
        %676 = vmatprep.subr.mxu0 0.0
        %677 = vmatpush2.msra.mxu0 0.0
        %678 = vmatprep.subr.mxu0 0.0
        %679 = vmatpush2.msra.mxu0 0.0
        %680 = vmatprep.subr.mxu0 0.0
        %681 = vmatpush2.msra.mxu0 0.0
        %682 = vmatprep.mubr.f32.mxu0 0.0
        %v683 = vand.u32 %v609, 4294901760
        %v684 = vsub.f32 %v609, %v683
        %v685 = vand.u32 %v684, 4294901760
        %v686 = vsub.f32 %v684, %v685
        %v687 = vand.u32 %v686, 4294901760
        %688 = vmatmul.mubr.f32.gmra.mxu0 %v687
        %v689 = vpop.f32.mrf.mxu0
        %v690 = vadd.f32 0.0, %v689
        %v691 = vpop.f32.mrf.mxu0
        %v692 = vadd.f32 0.0, %v691
        %693 = vdwg.mxu0
        %694 = vmatprep.subr.mxu0 0.0
        %695 = vmatpush1.msra.mxu0 0.0
        %696 = vmatprep.subr.mxu0 0.0
        %697 = vmatpush1.msra.mxu0 0.0
        %698 = vmatprep.subr.mxu0 0.0
        %699 = vmatpush1.msra.mxu0 0.0
        %700 = vmatprep.subr.mxu0 0.0
        %701 = vmatpush1.msra.mxu0 0.0
        %702 = vmatprep.subr.mxu0 0.0
        %703 = vmatpush1.msra.mxu0 0.0
        %704 = vmatprep.subr.mxu0 0.0
        %705 = vmatpush1.msra.mxu0 0.0
        %706 = vmatprep.subr.mxu0 0.0
        %707 = vmatpush1.msra.mxu0 0.0
        %708 = vmatprep.subr.mxu0 0.0
        %709 = vmatpush1.msra.mxu0 0.0
        %710 = vmatprep.subr.mxu0 0.0
        %711 = vmatpush1.msra.mxu0 0.0
        %712 = vmatprep.subr.mxu0 0.0
        %713 = vmatpush1.msra.mxu0 0.0
        %714 = vmatprep.subr.mxu0 0.0
        %715 = vmatpush1.msra.mxu0 0.0
        %716 = vmatprep.subr.mxu0 0.0
        %717 = vmatpush1.msra.mxu0 0.0
        %718 = vmatprep.subr.mxu0 0.0
        %719 = vmatpush1.msra.mxu0 0.0
        %720 = vmatprep.subr.mxu0 0.0
        %721 = vmatpush1.msra.mxu0 0.0
        %722 = vmatprep.subr.mxu0 0.0
        %723 = vmatpush1.msra.mxu0 0.0
        %v724 = vand.u32 %v614, 4294901760
        %v725 = vsub.f32 %v614, %v724
        %v726 = vand.u32 %v725, 4294901760
        %v727 = vsub.f32 %v725, %v726
        %v728 = vand.u32 %v727, 4294901760
        %729 = vmatprep.subr.mxu0 %v728
        %v730 = vand.u32 %v612, 4294901760
        %v731 = vsub.f32 %v612, %v730
        %v732 = vand.u32 %v731, 4294901760
        %v733 = vsub.f32 %v731, %v732
        %v734 = vand.u32 %v733, 4294901760
        %735 = vmatpush1.msra.mxu0 %v734
        %736 = vmatprep.subr.mxu0 0.0
        %737 = vmatpush2.msra.mxu0 0.0
        %738 = vmatprep.subr.mxu0 0.0
        %739 = vmatpush2.msra.mxu0 0.0
        %740 = vmatprep.subr.mxu0 0.0
        %741 = vmatpush2.msra.mxu0 0.0
        %742 = vmatprep.subr.mxu0 0.0
        %743 = vmatpush2.msra.mxu0 0.0
        %744 = vmatprep.subr.mxu0 0.0
        %745 = vmatpush2.msra.mxu0 0.0
        %746 = vmatprep.subr.mxu0 0.0
        %747 = vmatpush2.msra.mxu0 0.0
        %748 = vmatprep.subr.mxu0 0.0
        %749 = vmatpush2.msra.mxu0 0.0
        %750 = vmatprep.subr.mxu0 0.0
        %751 = vmatpush2.msra.mxu0 0.0
        %752 = vmatprep.subr.mxu0 0.0
        %753 = vmatpush2.msra.mxu0 0.0
        %754 = vmatprep.subr.mxu0 0.0
        %755 = vmatpush2.msra.mxu0 0.0
        %756 = vmatprep.subr.mxu0 0.0
        %757 = vmatpush2.msra.mxu0 0.0
        %758 = vmatprep.subr.mxu0 0.0
        %759 = vmatpush2.msra.mxu0 0.0
        %760 = vmatprep.subr.mxu0 0.0
        %761 = vmatpush2.msra.mxu0 0.0
        %762 = vmatprep.subr.mxu0 0.0
        %763 = vmatpush2.msra.mxu0 0.0
        %764 = vmatprep.subr.mxu0 0.0
        %765 = vmatpush2.msra.mxu0 0.0
        %766 = vmatprep.subr.mxu0 0.0
        %767 = vmatpush2.msra.mxu0 0.0
        %768 = vmatprep.mubr.f32.mxu0 0.0
        %v769 = vand.u32 %v609, 4294901760
        %770 = vmatmul.mubr.f32.gmra.mxu0 %v769
        %v771 = vpop.f32.mrf.mxu0
        %v772 = vadd.f32 %v690, %v771
        %v773 = vpop.f32.mrf.mxu0
        %v774 = vadd.f32 %v692, %v773
        %775 = vdwg.mxu0
        %776 = vmatprep.subr.mxu0 0.0
        %777 = vmatpush1.msra.mxu0 0.0
        %778 = vmatprep.subr.mxu0 0.0
        %779 = vmatpush1.msra.mxu0 0.0
        %780 = vmatprep.subr.mxu0 0.0
        %781 = vmatpush1.msra.mxu0 0.0
        %782 = vmatprep.subr.mxu0 0.0
        %783 = vmatpush1.msra.mxu0 0.0
        %784 = vmatprep.subr.mxu0 0.0
        %785 = vmatpush1.msra.mxu0 0.0
        %786 = vmatprep.subr.mxu0 0.0
        %787 = vmatpush1.msra.mxu0 0.0
        %788 = vmatprep.subr.mxu0 0.0
        %789 = vmatpush1.msra.mxu0 0.0
        %790 = vmatprep.subr.mxu0 0.0
        %791 = vmatpush1.msra.mxu0 0.0
        %792 = vmatprep.subr.mxu0 0.0
        %793 = vmatpush1.msra.mxu0 0.0
        %794 = vmatprep.subr.mxu0 0.0
        %795 = vmatpush1.msra.mxu0 0.0
        %796 = vmatprep.subr.mxu0 0.0
        %797 = vmatpush1.msra.mxu0 0.0
        %798 = vmatprep.subr.mxu0 0.0
        %799 = vmatpush1.msra.mxu0 0.0
        %800 = vmatprep.subr.mxu0 0.0
        %801 = vmatpush1.msra.mxu0 0.0
        %802 = vmatprep.subr.mxu0 0.0
        %803 = vmatpush1.msra.mxu0 0.0
        %804 = vmatprep.subr.mxu0 0.0
        %805 = vmatpush1.msra.mxu0 0.0
        %v806 = vand.u32 %v614, 4294901760
        %v807 = vsub.f32 %v614, %v806
        %808 = vmatprep.subr.mxu0 %v807
        %v809 = vand.u32 %v612, 4294901760
        %v810 = vsub.f32 %v612, %v809
        %811 = vmatpush1.msra.mxu0 %v810
        %812 = vmatprep.subr.mxu0 0.0
        %813 = vmatpush2.msra.mxu0 0.0
        %814 = vmatprep.subr.mxu0 0.0
        %815 = vmatpush2.msra.mxu0 0.0
        %816 = vmatprep.subr.mxu0 0.0
        %817 = vmatpush2.msra.mxu0 0.0
        %818 = vmatprep.subr.mxu0 0.0
        %819 = vmatpush2.msra.mxu0 0.0
        %820 = vmatprep.subr.mxu0 0.0
        %821 = vmatpush2.msra.mxu0 0.0
        %822 = vmatprep.subr.mxu0 0.0
        %823 = vmatpush2.msra.mxu0 0.0
        %824 = vmatprep.subr.mxu0 0.0
        %825 = vmatpush2.msra.mxu0 0.0
        %826 = vmatprep.subr.mxu0 0.0
        %827 = vmatpush2.msra.mxu0 0.0
        %828 = vmatprep.subr.mxu0 0.0
        %829 = vmatpush2.msra.mxu0 0.0
        %830 = vmatprep.subr.mxu0 0.0
        %831 = vmatpush2.msra.mxu0 0.0
        %832 = vmatprep.subr.mxu0 0.0
        %833 = vmatpush2.msra.mxu0 0.0
        %834 = vmatprep.subr.mxu0 0.0
        %835 = vmatpush2.msra.mxu0 0.0
        %836 = vmatprep.subr.mxu0 0.0
        %837 = vmatpush2.msra.mxu0 0.0
        %838 = vmatprep.subr.mxu0 0.0
        %839 = vmatpush2.msra.mxu0 0.0
        %840 = vmatprep.subr.mxu0 0.0
        %841 = vmatpush2.msra.mxu0 0.0
        %842 = vmatprep.subr.mxu0 0.0
        %843 = vmatpush2.msra.mxu0 0.0
        %844 = vmatprep.mubr.f32.mxu0 0.0
        %v845 = vand.u32 %v609, 4294901760
        %v846 = vsub.f32 %v609, %v845
        %847 = vmatmul.mubr.f32.gmra.mxu0 %v846
        %v848 = vpop.f32.mrf.mxu0
        %v849 = vadd.f32 %v772, %v848
        %v850 = vpop.f32.mrf.mxu0
        %v851 = vadd.f32 %v774, %v850
        %852 = vdwg.mxu0
        %853 = vmatprep.subr.mxu0 0.0
        %854 = vmatpush1.msra.mxu0 0.0
        %855 = vmatprep.subr.mxu0 0.0
        %856 = vmatpush1.msra.mxu0 0.0
        %857 = vmatprep.subr.mxu0 0.0
        %858 = vmatpush1.msra.mxu0 0.0
        %859 = vmatprep.subr.mxu0 0.0
        %860 = vmatpush1.msra.mxu0 0.0
        %861 = vmatprep.subr.mxu0 0.0
        %862 = vmatpush1.msra.mxu0 0.0
        %863 = vmatprep.subr.mxu0 0.0
        %864 = vmatpush1.msra.mxu0 0.0
        %865 = vmatprep.subr.mxu0 0.0
        %866 = vmatpush1.msra.mxu0 0.0
        %867 = vmatprep.subr.mxu0 0.0
        %868 = vmatpush1.msra.mxu0 0.0
        %869 = vmatprep.subr.mxu0 0.0
        %870 = vmatpush1.msra.mxu0 0.0
        %871 = vmatprep.subr.mxu0 0.0
        %872 = vmatpush1.msra.mxu0 0.0
        %873 = vmatprep.subr.mxu0 0.0
        %874 = vmatpush1.msra.mxu0 0.0
        %875 = vmatprep.subr.mxu0 0.0
        %876 = vmatpush1.msra.mxu0 0.0
        %877 = vmatprep.subr.mxu0 0.0
        %878 = vmatpush1.msra.mxu0 0.0
        %879 = vmatprep.subr.mxu0 0.0
        %880 = vmatpush1.msra.mxu0 0.0
        %881 = vmatprep.subr.mxu0 0.0
        %882 = vmatpush1.msra.mxu0 0.0
        %v883 = vand.u32 %v614, 4294901760
        %884 = vmatprep.subr.mxu0 %v883
        %v885 = vand.u32 %v612, 4294901760
        %886 = vmatpush1.msra.mxu0 %v885
        %887 = vmatprep.subr.mxu0 0.0
        %888 = vmatpush2.msra.mxu0 0.0
        %889 = vmatprep.subr.mxu0 0.0
        %890 = vmatpush2.msra.mxu0 0.0
        %891 = vmatprep.subr.mxu0 0.0
        %892 = vmatpush2.msra.mxu0 0.0
        %893 = vmatprep.subr.mxu0 0.0
        %894 = vmatpush2.msra.mxu0 0.0
        %895 = vmatprep.subr.mxu0 0.0
        %896 = vmatpush2.msra.mxu0 0.0
        %897 = vmatprep.subr.mxu0 0.0
        %898 = vmatpush2.msra.mxu0 0.0
        %899 = vmatprep.subr.mxu0 0.0
        %900 = vmatpush2.msra.mxu0 0.0
        %901 = vmatprep.subr.mxu0 0.0
        %902 = vmatpush2.msra.mxu0 0.0
        %903 = vmatprep.subr.mxu0 0.0
        %904 = vmatpush2.msra.mxu0 0.0
        %905 = vmatprep.subr.mxu0 0.0
        %906 = vmatpush2.msra.mxu0 0.0
        %907 = vmatprep.subr.mxu0 0.0
        %908 = vmatpush2.msra.mxu0 0.0
        %909 = vmatprep.subr.mxu0 0.0
        %910 = vmatpush2.msra.mxu0 0.0
        %911 = vmatprep.subr.mxu0 0.0
        %912 = vmatpush2.msra.mxu0 0.0
        %913 = vmatprep.subr.mxu0 0.0
        %914 = vmatpush2.msra.mxu0 0.0
        %915 = vmatprep.subr.mxu0 0.0
        %916 = vmatpush2.msra.mxu0 0.0
        %917 = vmatprep.subr.mxu0 0.0
        %918 = vmatpush2.msra.mxu0 0.0
        %919 = vmatprep.mubr.f32.mxu0 0.0
        %v920 = vand.u32 %v609, 4294901760
        %v921 = vsub.f32 %v609, %v920
        %v922 = vand.u32 %v921, 4294901760
        %923 = vmatmul.mubr.f32.gmra.mxu0 %v922
        %v924 = vpop.f32.mrf.mxu0
        %v925 = vadd.f32 %v849, %v924
        %v926 = vpop.f32.mrf.mxu0
        %v927 = vadd.f32 %v851, %v926
        %928 = vdwg.mxu0
        %929 = vmatprep.subr.mxu0 0.0
        %930 = vmatpush1.msra.mxu0 0.0
        %931 = vmatprep.subr.mxu0 0.0
        %932 = vmatpush1.msra.mxu0 0.0
        %933 = vmatprep.subr.mxu0 0.0
        %934 = vmatpush1.msra.mxu0 0.0
        %935 = vmatprep.subr.mxu0 0.0
        %936 = vmatpush1.msra.mxu0 0.0
        %937 = vmatprep.subr.mxu0 0.0
        %938 = vmatpush1.msra.mxu0 0.0
        %939 = vmatprep.subr.mxu0 0.0
        %940 = vmatpush1.msra.mxu0 0.0
        %941 = vmatprep.subr.mxu0 0.0
        %942 = vmatpush1.msra.mxu0 0.0
        %943 = vmatprep.subr.mxu0 0.0
        %944 = vmatpush1.msra.mxu0 0.0
        %945 = vmatprep.subr.mxu0 0.0
        %946 = vmatpush1.msra.mxu0 0.0
        %947 = vmatprep.subr.mxu0 0.0
        %948 = vmatpush1.msra.mxu0 0.0
        %949 = vmatprep.subr.mxu0 0.0
        %950 = vmatpush1.msra.mxu0 0.0
        %951 = vmatprep.subr.mxu0 0.0
        %952 = vmatpush1.msra.mxu0 0.0
        %953 = vmatprep.subr.mxu0 0.0
        %954 = vmatpush1.msra.mxu0 0.0
        %955 = vmatprep.subr.mxu0 0.0
        %956 = vmatpush1.msra.mxu0 0.0
        %957 = vmatprep.subr.mxu0 0.0
        %958 = vmatpush1.msra.mxu0 0.0
        %v959 = vand.u32 %v614, 4294901760
        %v960 = vsub.f32 %v614, %v959
        %v961 = vand.u32 %v960, 4294901760
        %962 = vmatprep.subr.mxu0 %v961
        %v963 = vand.u32 %v612, 4294901760
        %v964 = vsub.f32 %v612, %v963
        %v965 = vand.u32 %v964, 4294901760
        %966 = vmatpush1.msra.mxu0 %v965
        %967 = vmatprep.subr.mxu0 0.0
        %968 = vmatpush2.msra.mxu0 0.0
        %969 = vmatprep.subr.mxu0 0.0
        %970 = vmatpush2.msra.mxu0 0.0
        %971 = vmatprep.subr.mxu0 0.0
        %972 = vmatpush2.msra.mxu0 0.0
        %973 = vmatprep.subr.mxu0 0.0
        %974 = vmatpush2.msra.mxu0 0.0
        %975 = vmatprep.subr.mxu0 0.0
        %976 = vmatpush2.msra.mxu0 0.0
        %977 = vmatprep.subr.mxu0 0.0
        %978 = vmatpush2.msra.mxu0 0.0
        %979 = vmatprep.subr.mxu0 0.0
        %980 = vmatpush2.msra.mxu0 0.0
        %981 = vmatprep.subr.mxu0 0.0
        %982 = vmatpush2.msra.mxu0 0.0
        %983 = vmatprep.subr.mxu0 0.0
        %984 = vmatpush2.msra.mxu0 0.0
        %985 = vmatprep.subr.mxu0 0.0
        %986 = vmatpush2.msra.mxu0 0.0
        %987 = vmatprep.subr.mxu0 0.0
        %988 = vmatpush2.msra.mxu0 0.0
        %989 = vmatprep.subr.mxu0 0.0
        %990 = vmatpush2.msra.mxu0 0.0
        %991 = vmatprep.subr.mxu0 0.0
        %992 = vmatpush2.msra.mxu0 0.0
        %993 = vmatprep.subr.mxu0 0.0
        %994 = vmatpush2.msra.mxu0 0.0
        %995 = vmatprep.subr.mxu0 0.0
        %996 = vmatpush2.msra.mxu0 0.0
        %997 = vmatprep.subr.mxu0 0.0
        %998 = vmatpush2.msra.mxu0 0.0
        %999 = vmatprep.mubr.f32.mxu0 0.0
        %v1000 = vand.u32 %v609, 4294901760
        %1001 = vmatmul.mubr.f32.gmra.mxu0 %v1000
        %v1002 = vpop.f32.mrf.mxu0
        %v1003 = vadd.f32 %v925, %v1002
        %v1004 = vpop.f32.mrf.mxu0
        %v1005 = vadd.f32 %v927, %v1004
        %1006 = vdwg.mxu0
        %1007 = vmatprep.subr.mxu0 0.0
        %1008 = vmatpush1.msra.mxu0 0.0
        %1009 = vmatprep.subr.mxu0 0.0
        %1010 = vmatpush1.msra.mxu0 0.0
        %1011 = vmatprep.subr.mxu0 0.0
        %1012 = vmatpush1.msra.mxu0 0.0
        %1013 = vmatprep.subr.mxu0 0.0
        %1014 = vmatpush1.msra.mxu0 0.0
        %1015 = vmatprep.subr.mxu0 0.0
        %1016 = vmatpush1.msra.mxu0 0.0
        %1017 = vmatprep.subr.mxu0 0.0
        %1018 = vmatpush1.msra.mxu0 0.0
        %1019 = vmatprep.subr.mxu0 0.0
        %1020 = vmatpush1.msra.mxu0 0.0
        %1021 = vmatprep.subr.mxu0 0.0
        %1022 = vmatpush1.msra.mxu0 0.0
        %1023 = vmatprep.subr.mxu0 0.0
        %1024 = vmatpush1.msra.mxu0 0.0
        %1025 = vmatprep.subr.mxu0 0.0
        %1026 = vmatpush1.msra.mxu0 0.0
        %1027 = vmatprep.subr.mxu0 0.0
        %1028 = vmatpush1.msra.mxu0 0.0
        %1029 = vmatprep.subr.mxu0 0.0
        %1030 = vmatpush1.msra.mxu0 0.0
        %1031 = vmatprep.subr.mxu0 0.0
        %1032 = vmatpush1.msra.mxu0 0.0
        %1033 = vmatprep.subr.mxu0 0.0
        %1034 = vmatpush1.msra.mxu0 0.0
        %1035 = vmatprep.subr.mxu0 0.0
        %1036 = vmatpush1.msra.mxu0 0.0
        %v1037 = vand.u32 %v614, 4294901760
        %1038 = vmatprep.subr.mxu0 %v1037
        %v1039 = vand.u32 %v612, 4294901760
        %1040 = vmatpush1.msra.mxu0 %v1039
        %1041 = vmatprep.subr.mxu0 0.0
        %1042 = vmatpush2.msra.mxu0 0.0
        %1043 = vmatprep.subr.mxu0 0.0
        %1044 = vmatpush2.msra.mxu0 0.0
        %1045 = vmatprep.subr.mxu0 0.0
        %1046 = vmatpush2.msra.mxu0 0.0
        %1047 = vmatprep.subr.mxu0 0.0
        %1048 = vmatpush2.msra.mxu0 0.0
        %1049 = vmatprep.subr.mxu0 0.0
        %1050 = vmatpush2.msra.mxu0 0.0
        %1051 = vmatprep.subr.mxu0 0.0
        %1052 = vmatpush2.msra.mxu0 0.0
        %1053 = vmatprep.subr.mxu0 0.0
        %1054 = vmatpush2.msra.mxu0 0.0
        %1055 = vmatprep.subr.mxu0 0.0
        %1056 = vmatpush2.msra.mxu0 0.0
        %1057 = vmatprep.subr.mxu0 0.0
        %1058 = vmatpush2.msra.mxu0 0.0
        %1059 = vmatprep.subr.mxu0 0.0
        %1060 = vmatpush2.msra.mxu0 0.0
        %1061 = vmatprep.subr.mxu0 0.0
        %1062 = vmatpush2.msra.mxu0 0.0
        %1063 = vmatprep.subr.mxu0 0.0
        %1064 = vmatpush2.msra.mxu0 0.0
        %1065 = vmatprep.subr.mxu0 0.0
        %1066 = vmatpush2.msra.mxu0 0.0
        %1067 = vmatprep.subr.mxu0 0.0
        %1068 = vmatpush2.msra.mxu0 0.0
        %1069 = vmatprep.subr.mxu0 0.0
        %1070 = vmatpush2.msra.mxu0 0.0
        %1071 = vmatprep.subr.mxu0 0.0
        %1072 = vmatpush2.msra.mxu0 0.0
        %1073 = vmatprep.mubr.f32.mxu0 0.0
        %v1074 = vand.u32 %v609, 4294901760
        %1075 = vmatmul.mubr.f32.gmra.mxu0 %v1074
        %v1076 = vpop.f32.mrf.mxu0
        %v1077 = vadd.f32 %v1003, %v1076
        %v1078 = vpop.f32.mrf.mxu0
        %v1079 = vadd.f32 %v1005, %v1078
        %1080 = vdwg.mxu0
        %1082 = vset.pattern.permute.xlu0 0
        %1083 = vperm.xlu0 %1082, %v603
        %v1084 = vpop.permute.xlu0 %1083
        %v1086 = vmul.f32 %v1077, %v1084
        %v1087 = vmul.f32 %v1079, %v1084
        %1089 = vset.pattern.permute.xlu0 0
        %1090 = vperm.xlu0 %1089, %v604
        %v1091 = vpop.permute.xlu0 %1090
        %v1093 = vadd.f32 %v1086, %v1091
        %v1094 = vadd.f32 %v1087, %v1091
        %v1095 = vmax.f32 %v1093, 0.0
        %v1096 = vmax.f32 %v1094, 0.0
        %v1097 = vld [vmem:[%s2] sm:$0xf]
        %v1098 = vld [vmem:[%s9] sm:$0xf]
        %v1099 = vld [vmem:[%s10] sm:$0xf]
        %v1101 = vsel %vm607, %v1097, 0
        %1103 = vmatprep.subr.mxu0 0.0
        %1104 = vmatpush1.msra.mxu0 0.0
        %1105 = vmatprep.subr.mxu0 0.0
        %1106 = vmatpush1.msra.mxu0 0.0
        %1107 = vmatprep.subr.mxu0 0.0
        %1108 = vmatpush1.msra.mxu0 0.0
        %1109 = vmatprep.subr.mxu0 0.0
        %1110 = vmatpush1.msra.mxu0 0.0
        %1111 = vmatprep.subr.mxu0 0.0
        %1112 = vmatpush1.msra.mxu0 0.0
        %1113 = vmatprep.subr.mxu0 0.0
        %1114 = vmatpush1.msra.mxu0 0.0
        %1115 = vmatprep.subr.mxu0 0.0
        %1116 = vmatpush1.msra.mxu0 0.0
        %1117 = vmatprep.subr.mxu0 0.0
        %1118 = vmatpush1.msra.mxu0 0.0
        %1119 = vmatprep.subr.mxu0 0.0
        %1120 = vmatpush1.msra.mxu0 0.0
        %1121 = vmatprep.subr.mxu0 0.0
        %1122 = vmatpush1.msra.mxu0 0.0
        %1123 = vmatprep.subr.mxu0 0.0
        %1124 = vmatpush1.msra.mxu0 0.0
        %1125 = vmatprep.subr.mxu0 0.0
        %1126 = vmatpush1.msra.mxu0 0.0
        %1127 = vmatprep.subr.mxu0 0.0
        %1128 = vmatpush1.msra.mxu0 0.0
        %1129 = vmatprep.subr.mxu0 0.0
        %1130 = vmatpush1.msra.mxu0 0.0
        %1131 = vmatprep.subr.mxu0 0.0
        %1132 = vmatpush1.msra.mxu0 0.0
        %v1133 = vand.u32 %v614, 4294901760
        %1134 = vmatprep.subr.mxu0 %v1133
        %v1135 = vand.u32 %v612, 4294901760
        %1136 = vmatpush1.msra.mxu0 %v1135
        %1137 = vmatprep.subr.mxu0 0.0
        %1138 = vmatpush2.msra.mxu0 0.0
        %1139 = vmatprep.subr.mxu0 0.0
        %1140 = vmatpush2.msra.mxu0 0.0
        %1141 = vmatprep.subr.mxu0 0.0
        %1142 = vmatpush2.msra.mxu0 0.0
        %1143 = vmatprep.subr.mxu0 0.0
        %1144 = vmatpush2.msra.mxu0 0.0
        %1145 = vmatprep.subr.mxu0 0.0
        %1146 = vmatpush2.msra.mxu0 0.0
        %1147 = vmatprep.subr.mxu0 0.0
        %1148 = vmatpush2.msra.mxu0 0.0
        %1149 = vmatprep.subr.mxu0 0.0
        %1150 = vmatpush2.msra.mxu0 0.0
        %1151 = vmatprep.subr.mxu0 0.0
        %1152 = vmatpush2.msra.mxu0 0.0
        %1153 = vmatprep.subr.mxu0 0.0
        %1154 = vmatpush2.msra.mxu0 0.0
        %1155 = vmatprep.subr.mxu0 0.0
        %1156 = vmatpush2.msra.mxu0 0.0
        %1157 = vmatprep.subr.mxu0 0.0
        %1158 = vmatpush2.msra.mxu0 0.0
        %1159 = vmatprep.subr.mxu0 0.0
        %1160 = vmatpush2.msra.mxu0 0.0
        %1161 = vmatprep.subr.mxu0 0.0
        %1162 = vmatpush2.msra.mxu0 0.0
        %1163 = vmatprep.subr.mxu0 0.0
        %1164 = vmatpush2.msra.mxu0 0.0
        %1165 = vmatprep.subr.mxu0 0.0
        %1166 = vmatpush2.msra.mxu0 0.0
        %1167 = vmatprep.subr.mxu0 0.0
        %1168 = vmatpush2.msra.mxu0 0.0
        %1169 = vmatprep.mubr.f32.mxu0 0.0
        %v1170 = vand.u32 %v1101, 4294901760
        %v1171 = vsub.f32 %v1101, %v1170
        %v1172 = vand.u32 %v1171, 4294901760
        %v1173 = vsub.f32 %v1171, %v1172
        %v1174 = vand.u32 %v1173, 4294901760
        %1175 = vmatmul.mubr.f32.gmra.mxu0 %v1174
        %v1176 = vpop.f32.mrf.mxu0
        %v1177 = vadd.f32 0.0, %v1176
        %v1178 = vpop.f32.mrf.mxu0
        %v1179 = vadd.f32 0.0, %v1178
        %1180 = vdwg.mxu0
        %1181 = vmatprep.subr.mxu0 0.0
        %1182 = vmatpush1.msra.mxu0 0.0
        %1183 = vmatprep.subr.mxu0 0.0
        %1184 = vmatpush1.msra.mxu0 0.0
        %1185 = vmatprep.subr.mxu0 0.0
        %1186 = vmatpush1.msra.mxu0 0.0
        %1187 = vmatprep.subr.mxu0 0.0
        %1188 = vmatpush1.msra.mxu0 0.0
        %1189 = vmatprep.subr.mxu0 0.0
        %1190 = vmatpush1.msra.mxu0 0.0
        %1191 = vmatprep.subr.mxu0 0.0
        %1192 = vmatpush1.msra.mxu0 0.0
        %1193 = vmatprep.subr.mxu0 0.0
        %1194 = vmatpush1.msra.mxu0 0.0
        %1195 = vmatprep.subr.mxu0 0.0
        %1196 = vmatpush1.msra.mxu0 0.0
        %1197 = vmatprep.subr.mxu0 0.0
        %1198 = vmatpush1.msra.mxu0 0.0
        %1199 = vmatprep.subr.mxu0 0.0
        %1200 = vmatpush1.msra.mxu0 0.0
        %1201 = vmatprep.subr.mxu0 0.0
        %1202 = vmatpush1.msra.mxu0 0.0
        %1203 = vmatprep.subr.mxu0 0.0
        %1204 = vmatpush1.msra.mxu0 0.0
        %1205 = vmatprep.subr.mxu0 0.0
        %1206 = vmatpush1.msra.mxu0 0.0
        %1207 = vmatprep.subr.mxu0 0.0
        %1208 = vmatpush1.msra.mxu0 0.0
        %1209 = vmatprep.subr.mxu0 0.0
        %1210 = vmatpush1.msra.mxu0 0.0
        %v1211 = vand.u32 %v614, 4294901760
        %v1212 = vsub.f32 %v614, %v1211
        %v1213 = vand.u32 %v1212, 4294901760
        %v1214 = vsub.f32 %v1212, %v1213
        %v1215 = vand.u32 %v1214, 4294901760
        %1216 = vmatprep.subr.mxu0 %v1215
        %v1217 = vand.u32 %v612, 4294901760
        %v1218 = vsub.f32 %v612, %v1217
        %v1219 = vand.u32 %v1218, 4294901760
        %v1220 = vsub.f32 %v1218, %v1219
        %v1221 = vand.u32 %v1220, 4294901760
        %1222 = vmatpush1.msra.mxu0 %v1221
        %1223 = vmatprep.subr.mxu0 0.0
        %1224 = vmatpush2.msra.mxu0 0.0
        %1225 = vmatprep.subr.mxu0 0.0
        %1226 = vmatpush2.msra.mxu0 0.0
        %1227 = vmatprep.subr.mxu0 0.0
        %1228 = vmatpush2.msra.mxu0 0.0
        %1229 = vmatprep.subr.mxu0 0.0
        %1230 = vmatpush2.msra.mxu0 0.0
        %1231 = vmatprep.subr.mxu0 0.0
        %1232 = vmatpush2.msra.mxu0 0.0
        %1233 = vmatprep.subr.mxu0 0.0
        %1234 = vmatpush2.msra.mxu0 0.0
        %1235 = vmatprep.subr.mxu0 0.0
        %1236 = vmatpush2.msra.mxu0 0.0
        %1237 = vmatprep.subr.mxu0 0.0
        %1238 = vmatpush2.msra.mxu0 0.0
        %1239 = vmatprep.subr.mxu0 0.0
        %1240 = vmatpush2.msra.mxu0 0.0
        %1241 = vmatprep.subr.mxu0 0.0
        %1242 = vmatpush2.msra.mxu0 0.0
        %1243 = vmatprep.subr.mxu0 0.0
        %1244 = vmatpush2.msra.mxu0 0.0
        %1245 = vmatprep.subr.mxu0 0.0
        %1246 = vmatpush2.msra.mxu0 0.0
        %1247 = vmatprep.subr.mxu0 0.0
        %1248 = vmatpush2.msra.mxu0 0.0
        %1249 = vmatprep.subr.mxu0 0.0
        %1250 = vmatpush2.msra.mxu0 0.0
        %1251 = vmatprep.subr.mxu0 0.0
        %1252 = vmatpush2.msra.mxu0 0.0
        %1253 = vmatprep.subr.mxu0 0.0
        %1254 = vmatpush2.msra.mxu0 0.0
        %1255 = vmatprep.mubr.f32.mxu0 0.0
        %v1256 = vand.u32 %v1101, 4294901760
        %1257 = vmatmul.mubr.f32.gmra.mxu0 %v1256
        %v1258 = vpop.f32.mrf.mxu0
        %v1259 = vadd.f32 %v1177, %v1258
        %v1260 = vpop.f32.mrf.mxu0
        %v1261 = vadd.f32 %v1179, %v1260
        %1262 = vdwg.mxu0
        %1263 = vmatprep.subr.mxu0 0.0
        %1264 = vmatpush1.msra.mxu0 0.0
        %1265 = vmatprep.subr.mxu0 0.0
        %1266 = vmatpush1.msra.mxu0 0.0
        %1267 = vmatprep.subr.mxu0 0.0
        %1268 = vmatpush1.msra.mxu0 0.0
        %1269 = vmatprep.subr.mxu0 0.0
        %1270 = vmatpush1.msra.mxu0 0.0
        %1271 = vmatprep.subr.mxu0 0.0
        %1272 = vmatpush1.msra.mxu0 0.0
        %1273 = vmatprep.subr.mxu0 0.0
        %1274 = vmatpush1.msra.mxu0 0.0
        %1275 = vmatprep.subr.mxu0 0.0
        %1276 = vmatpush1.msra.mxu0 0.0
        %1277 = vmatprep.subr.mxu0 0.0
        %1278 = vmatpush1.msra.mxu0 0.0
        %1279 = vmatprep.subr.mxu0 0.0
        %1280 = vmatpush1.msra.mxu0 0.0
        %1281 = vmatprep.subr.mxu0 0.0
        %1282 = vmatpush1.msra.mxu0 0.0
        %1283 = vmatprep.subr.mxu0 0.0
        %1284 = vmatpush1.msra.mxu0 0.0
        %1285 = vmatprep.subr.mxu0 0.0
        %1286 = vmatpush1.msra.mxu0 0.0
        %1287 = vmatprep.subr.mxu0 0.0
        %1288 = vmatpush1.msra.mxu0 0.0
        %1289 = vmatprep.subr.mxu0 0.0
        %1290 = vmatpush1.msra.mxu0 0.0
        %1291 = vmatprep.subr.mxu0 0.0
        %1292 = vmatpush1.msra.mxu0 0.0
        %v1293 = vand.u32 %v614, 4294901760
        %v1294 = vsub.f32 %v614, %v1293
        %1295 = vmatprep.subr.mxu0 %v1294
        %v1296 = vand.u32 %v612, 4294901760
        %v1297 = vsub.f32 %v612, %v1296
        %1298 = vmatpush1.msra.mxu0 %v1297
        %1299 = vmatprep.subr.mxu0 0.0
        %1300 = vmatpush2.msra.mxu0 0.0
        %1301 = vmatprep.subr.mxu0 0.0
        %1302 = vmatpush2.msra.mxu0 0.0
        %1303 = vmatprep.subr.mxu0 0.0
        %1304 = vmatpush2.msra.mxu0 0.0
        %1305 = vmatprep.subr.mxu0 0.0
        %1306 = vmatpush2.msra.mxu0 0.0
        %1307 = vmatprep.subr.mxu0 0.0
        %1308 = vmatpush2.msra.mxu0 0.0
        %1309 = vmatprep.subr.mxu0 0.0
        %1310 = vmatpush2.msra.mxu0 0.0
        %1311 = vmatprep.subr.mxu0 0.0
        %1312 = vmatpush2.msra.mxu0 0.0
        %1313 = vmatprep.subr.mxu0 0.0
        %1314 = vmatpush2.msra.mxu0 0.0
        %1315 = vmatprep.subr.mxu0 0.0
        %1316 = vmatpush2.msra.mxu0 0.0
        %1317 = vmatprep.subr.mxu0 0.0
        %1318 = vmatpush2.msra.mxu0 0.0
        %1319 = vmatprep.subr.mxu0 0.0
        %1320 = vmatpush2.msra.mxu0 0.0
        %1321 = vmatprep.subr.mxu0 0.0
        %1322 = vmatpush2.msra.mxu0 0.0
        %1323 = vmatprep.subr.mxu0 0.0
        %1324 = vmatpush2.msra.mxu0 0.0
        %1325 = vmatprep.subr.mxu0 0.0
        %1326 = vmatpush2.msra.mxu0 0.0
        %1327 = vmatprep.subr.mxu0 0.0
        %1328 = vmatpush2.msra.mxu0 0.0
        %1329 = vmatprep.subr.mxu0 0.0
        %1330 = vmatpush2.msra.mxu0 0.0
        %1331 = vmatprep.mubr.f32.mxu0 0.0
        %v1332 = vand.u32 %v1101, 4294901760
        %v1333 = vsub.f32 %v1101, %v1332
        %1334 = vmatmul.mubr.f32.gmra.mxu0 %v1333
        %v1335 = vpop.f32.mrf.mxu0
        %v1336 = vadd.f32 %v1259, %v1335
        %v1337 = vpop.f32.mrf.mxu0
        %v1338 = vadd.f32 %v1261, %v1337
        %1339 = vdwg.mxu0
        %1340 = vmatprep.subr.mxu0 0.0
        %1341 = vmatpush1.msra.mxu0 0.0
        %1342 = vmatprep.subr.mxu0 0.0
        %1343 = vmatpush1.msra.mxu0 0.0
        %1344 = vmatprep.subr.mxu0 0.0
        %1345 = vmatpush1.msra.mxu0 0.0
        %1346 = vmatprep.subr.mxu0 0.0
        %1347 = vmatpush1.msra.mxu0 0.0
        %1348 = vmatprep.subr.mxu0 0.0
        %1349 = vmatpush1.msra.mxu0 0.0
        %1350 = vmatprep.subr.mxu0 0.0
        %1351 = vmatpush1.msra.mxu0 0.0
        %1352 = vmatprep.subr.mxu0 0.0
        %1353 = vmatpush1.msra.mxu0 0.0
        %1354 = vmatprep.subr.mxu0 0.0
        %1355 = vmatpush1.msra.mxu0 0.0
        %1356 = vmatprep.subr.mxu0 0.0
        %1357 = vmatpush1.msra.mxu0 0.0
        %1358 = vmatprep.subr.mxu0 0.0
        %1359 = vmatpush1.msra.mxu0 0.0
        %1360 = vmatprep.subr.mxu0 0.0
        %1361 = vmatpush1.msra.mxu0 0.0
        %1362 = vmatprep.subr.mxu0 0.0
        %1363 = vmatpush1.msra.mxu0 0.0
        %1364 = vmatprep.subr.mxu0 0.0
        %1365 = vmatpush1.msra.mxu0 0.0
        %1366 = vmatprep.subr.mxu0 0.0
        %1367 = vmatpush1.msra.mxu0 0.0
        %1368 = vmatprep.subr.mxu0 0.0
        %1369 = vmatpush1.msra.mxu0 0.0
        %v1370 = vand.u32 %v614, 4294901760
        %1371 = vmatprep.subr.mxu0 %v1370
        %v1372 = vand.u32 %v612, 4294901760
        %1373 = vmatpush1.msra.mxu0 %v1372
        %1374 = vmatprep.subr.mxu0 0.0
        %1375 = vmatpush2.msra.mxu0 0.0
        %1376 = vmatprep.subr.mxu0 0.0
        %1377 = vmatpush2.msra.mxu0 0.0
        %1378 = vmatprep.subr.mxu0 0.0
        %1379 = vmatpush2.msra.mxu0 0.0
        %1380 = vmatprep.subr.mxu0 0.0
        %1381 = vmatpush2.msra.mxu0 0.0
        %1382 = vmatprep.subr.mxu0 0.0
        %1383 = vmatpush2.msra.mxu0 0.0
        %1384 = vmatprep.subr.mxu0 0.0
        %1385 = vmatpush2.msra.mxu0 0.0
        %1386 = vmatprep.subr.mxu0 0.0
        %1387 = vmatpush2.msra.mxu0 0.0
        %1388 = vmatprep.subr.mxu0 0.0
        %1389 = vmatpush2.msra.mxu0 0.0
        %1390 = vmatprep.subr.mxu0 0.0
        %1391 = vmatpush2.msra.mxu0 0.0
        %1392 = vmatprep.subr.mxu0 0.0
        %1393 = vmatpush2.msra.mxu0 0.0
        %1394 = vmatprep.subr.mxu0 0.0
        %1395 = vmatpush2.msra.mxu0 0.0
        %1396 = vmatprep.subr.mxu0 0.0
        %1397 = vmatpush2.msra.mxu0 0.0
        %1398 = vmatprep.subr.mxu0 0.0
        %1399 = vmatpush2.msra.mxu0 0.0
        %1400 = vmatprep.subr.mxu0 0.0
        %1401 = vmatpush2.msra.mxu0 0.0
        %1402 = vmatprep.subr.mxu0 0.0
        %1403 = vmatpush2.msra.mxu0 0.0
        %1404 = vmatprep.subr.mxu0 0.0
        %1405 = vmatpush2.msra.mxu0 0.0
        %1406 = vmatprep.mubr.f32.mxu0 0.0
        %v1407 = vand.u32 %v1101, 4294901760
        %v1408 = vsub.f32 %v1101, %v1407
        %v1409 = vand.u32 %v1408, 4294901760
        %1410 = vmatmul.mubr.f32.gmra.mxu0 %v1409
        %v1411 = vpop.f32.mrf.mxu0
        %v1412 = vadd.f32 %v1336, %v1411
        %v1413 = vpop.f32.mrf.mxu0
        %v1414 = vadd.f32 %v1338, %v1413
        %1415 = vdwg.mxu0
        %1416 = vmatprep.subr.mxu0 0.0
        %1417 = vmatpush1.msra.mxu0 0.0
        %1418 = vmatprep.subr.mxu0 0.0
        %1419 = vmatpush1.msra.mxu0 0.0
        %1420 = vmatprep.subr.mxu0 0.0
        %1421 = vmatpush1.msra.mxu0 0.0
        %1422 = vmatprep.subr.mxu0 0.0
        %1423 = vmatpush1.msra.mxu0 0.0
        %1424 = vmatprep.subr.mxu0 0.0
        %1425 = vmatpush1.msra.mxu0 0.0
        %1426 = vmatprep.subr.mxu0 0.0
        %1427 = vmatpush1.msra.mxu0 0.0
        %1428 = vmatprep.subr.mxu0 0.0
        %1429 = vmatpush1.msra.mxu0 0.0
        %1430 = vmatprep.subr.mxu0 0.0
        %1431 = vmatpush1.msra.mxu0 0.0
        %1432 = vmatprep.subr.mxu0 0.0
        %1433 = vmatpush1.msra.mxu0 0.0
        %1434 = vmatprep.subr.mxu0 0.0
        %1435 = vmatpush1.msra.mxu0 0.0
        %1436 = vmatprep.subr.mxu0 0.0
        %1437 = vmatpush1.msra.mxu0 0.0
        %1438 = vmatprep.subr.mxu0 0.0
        %1439 = vmatpush1.msra.mxu0 0.0
        %1440 = vmatprep.subr.mxu0 0.0
        %1441 = vmatpush1.msra.mxu0 0.0
        %1442 = vmatprep.subr.mxu0 0.0
        %1443 = vmatpush1.msra.mxu0 0.0
        %1444 = vmatprep.subr.mxu0 0.0
        %1445 = vmatpush1.msra.mxu0 0.0
        %v1446 = vand.u32 %v614, 4294901760
        %v1447 = vsub.f32 %v614, %v1446
        %v1448 = vand.u32 %v1447, 4294901760
        %1449 = vmatprep.subr.mxu0 %v1448
        %v1450 = vand.u32 %v612, 4294901760
        %v1451 = vsub.f32 %v612, %v1450
        %v1452 = vand.u32 %v1451, 4294901760
        %1453 = vmatpush1.msra.mxu0 %v1452
        %1454 = vmatprep.subr.mxu0 0.0
        %1455 = vmatpush2.msra.mxu0 0.0
        %1456 = vmatprep.subr.mxu0 0.0
        %1457 = vmatpush2.msra.mxu0 0.0
        %1458 = vmatprep.subr.mxu0 0.0
        %1459 = vmatpush2.msra.mxu0 0.0
        %1460 = vmatprep.subr.mxu0 0.0
        %1461 = vmatpush2.msra.mxu0 0.0
        %1462 = vmatprep.subr.mxu0 0.0
        %1463 = vmatpush2.msra.mxu0 0.0
        %1464 = vmatprep.subr.mxu0 0.0
        %1465 = vmatpush2.msra.mxu0 0.0
        %1466 = vmatprep.subr.mxu0 0.0
        %1467 = vmatpush2.msra.mxu0 0.0
        %1468 = vmatprep.subr.mxu0 0.0
        %1469 = vmatpush2.msra.mxu0 0.0
        %1470 = vmatprep.subr.mxu0 0.0
        %1471 = vmatpush2.msra.mxu0 0.0
        %1472 = vmatprep.subr.mxu0 0.0
        %1473 = vmatpush2.msra.mxu0 0.0
        %1474 = vmatprep.subr.mxu0 0.0
        %1475 = vmatpush2.msra.mxu0 0.0
        %1476 = vmatprep.subr.mxu0 0.0
        %1477 = vmatpush2.msra.mxu0 0.0
        %1478 = vmatprep.subr.mxu0 0.0
        %1479 = vmatpush2.msra.mxu0 0.0
        %1480 = vmatprep.subr.mxu0 0.0
        %1481 = vmatpush2.msra.mxu0 0.0
        %1482 = vmatprep.subr.mxu0 0.0
        %1483 = vmatpush2.msra.mxu0 0.0
        %1484 = vmatprep.subr.mxu0 0.0
        %1485 = vmatpush2.msra.mxu0 0.0
        %1486 = vmatprep.mubr.f32.mxu0 0.0
        %v1487 = vand.u32 %v1101, 4294901760
        %1488 = vmatmul.mubr.f32.gmra.mxu0 %v1487
        %v1489 = vpop.f32.mrf.mxu0
        %v1490 = vadd.f32 %v1412, %v1489
        %v1491 = vpop.f32.mrf.mxu0
        %v1492 = vadd.f32 %v1414, %v1491
        %1493 = vdwg.mxu0
        %1494 = vmatprep.subr.mxu0 0.0
        %1495 = vmatpush1.msra.mxu0 0.0
        %1496 = vmatprep.subr.mxu0 0.0
        %1497 = vmatpush1.msra.mxu0 0.0
        %1498 = vmatprep.subr.mxu0 0.0
        %1499 = vmatpush1.msra.mxu0 0.0
        %1500 = vmatprep.subr.mxu0 0.0
        %1501 = vmatpush1.msra.mxu0 0.0
        %1502 = vmatprep.subr.mxu0 0.0
        %1503 = vmatpush1.msra.mxu0 0.0
        %1504 = vmatprep.subr.mxu0 0.0
        %1505 = vmatpush1.msra.mxu0 0.0
        %1506 = vmatprep.subr.mxu0 0.0
        %1507 = vmatpush1.msra.mxu0 0.0
        %1508 = vmatprep.subr.mxu0 0.0
        %1509 = vmatpush1.msra.mxu0 0.0
        %1510 = vmatprep.subr.mxu0 0.0
        %1511 = vmatpush1.msra.mxu0 0.0
        %1512 = vmatprep.subr.mxu0 0.0
        %1513 = vmatpush1.msra.mxu0 0.0
        %1514 = vmatprep.subr.mxu0 0.0
        %1515 = vmatpush1.msra.mxu0 0.0
        %1516 = vmatprep.subr.mxu0 0.0
        %1517 = vmatpush1.msra.mxu0 0.0
        %1518 = vmatprep.subr.mxu0 0.0
        %1519 = vmatpush1.msra.mxu0 0.0
        %1520 = vmatprep.subr.mxu0 0.0
        %1521 = vmatpush1.msra.mxu0 0.0
        %1522 = vmatprep.subr.mxu0 0.0
        %1523 = vmatpush1.msra.mxu0 0.0
        %v1524 = vand.u32 %v614, 4294901760
        %1525 = vmatprep.subr.mxu0 %v1524
        %v1526 = vand.u32 %v612, 4294901760
        %1527 = vmatpush1.msra.mxu0 %v1526
        %1528 = vmatprep.subr.mxu0 0.0
        %1529 = vmatpush2.msra.mxu0 0.0
        %1530 = vmatprep.subr.mxu0 0.0
        %1531 = vmatpush2.msra.mxu0 0.0
        %1532 = vmatprep.subr.mxu0 0.0
        %1533 = vmatpush2.msra.mxu0 0.0
        %1534 = vmatprep.subr.mxu0 0.0
        %1535 = vmatpush2.msra.mxu0 0.0
        %1536 = vmatprep.subr.mxu0 0.0
        %1537 = vmatpush2.msra.mxu0 0.0
        %1538 = vmatprep.subr.mxu0 0.0
        %1539 = vmatpush2.msra.mxu0 0.0
        %1540 = vmatprep.subr.mxu0 0.0
        %1541 = vmatpush2.msra.mxu0 0.0
        %1542 = vmatprep.subr.mxu0 0.0
        %1543 = vmatpush2.msra.mxu0 0.0
        %1544 = vmatprep.subr.mxu0 0.0
        %1545 = vmatpush2.msra.mxu0 0.0
        %1546 = vmatprep.subr.mxu0 0.0
        %1547 = vmatpush2.msra.mxu0 0.0
        %1548 = vmatprep.subr.mxu0 0.0
        %1549 = vmatpush2.msra.mxu0 0.0
        %1550 = vmatprep.subr.mxu0 0.0
        %1551 = vmatpush2.msra.mxu0 0.0
        %1552 = vmatprep.subr.mxu0 0.0
        %1553 = vmatpush2.msra.mxu0 0.0
        %1554 = vmatprep.subr.mxu0 0.0
        %1555 = vmatpush2.msra.mxu0 0.0
        %1556 = vmatprep.subr.mxu0 0.0
        %1557 = vmatpush2.msra.mxu0 0.0
        %1558 = vmatprep.subr.mxu0 0.0
        %1559 = vmatpush2.msra.mxu0 0.0
        %1560 = vmatprep.mubr.f32.mxu0 0.0
        %v1561 = vand.u32 %v1101, 4294901760
        %1562 = vmatmul.mubr.f32.gmra.mxu0 %v1561
        %v1563 = vpop.f32.mrf.mxu0
        %v1564 = vadd.f32 %v1490, %v1563
        %v1565 = vpop.f32.mrf.mxu0
        %v1566 = vadd.f32 %v1492, %v1565
        %1567 = vdwg.mxu0
        %1569 = vset.pattern.permute.xlu0 0
        %1570 = vperm.xlu0 %1569, %v1098
        %v1571 = vpop.permute.xlu0 %1570
        %v1573 = vmul.f32 %v1564, %v1571
        %v1574 = vmul.f32 %v1566, %v1571
        %1576 = vset.pattern.permute.xlu0 0
        %1577 = vperm.xlu0 %1576, %v1099
        %v1578 = vpop.permute.xlu0 %1577
        %v1580 = vadd.f32 %v1573, %v1578
        %v1581 = vadd.f32 %v1574, %v1578
        %v1582 = vmax.f32 %v1580, 0.0
        %v1583 = vmax.f32 %v1581, 0.0
        %v1584 = vld [vmem:[%s3] sm:$0xf]
        %v1585 = vld [vmem:[%s11] sm:$0xf]
        %v1586 = vld [vmem:[%s12] sm:$0xf]
        %v1588 = vsel %vm607, %v1584, 0
        %v1591 = vsel %vm611, %v1095, 0
        %v1594 = vsel %vm611, %v1096, 0
        %1596 = vmatprep.subr.mxu0 0.0
        %1597 = vmatpush1.msra.mxu0 0.0
        %1598 = vmatprep.subr.mxu0 0.0
        %1599 = vmatpush1.msra.mxu0 0.0
        %1600 = vmatprep.subr.mxu0 0.0
        %1601 = vmatpush1.msra.mxu0 0.0
        %1602 = vmatprep.subr.mxu0 0.0
        %1603 = vmatpush1.msra.mxu0 0.0
        %1604 = vmatprep.subr.mxu0 0.0
        %1605 = vmatpush1.msra.mxu0 0.0
        %1606 = vmatprep.subr.mxu0 0.0
        %1607 = vmatpush1.msra.mxu0 0.0
        %1608 = vmatprep.subr.mxu0 0.0
        %1609 = vmatpush1.msra.mxu0 0.0
        %1610 = vmatprep.subr.mxu0 0.0
        %1611 = vmatpush1.msra.mxu0 0.0
        %1612 = vmatprep.subr.mxu0 0.0
        %1613 = vmatpush1.msra.mxu0 0.0
        %1614 = vmatprep.subr.mxu0 0.0
        %1615 = vmatpush1.msra.mxu0 0.0
        %1616 = vmatprep.subr.mxu0 0.0
        %1617 = vmatpush1.msra.mxu0 0.0
        %1618 = vmatprep.subr.mxu0 0.0
        %1619 = vmatpush1.msra.mxu0 0.0
        %1620 = vmatprep.subr.mxu0 0.0
        %1621 = vmatpush1.msra.mxu0 0.0
        %1622 = vmatprep.subr.mxu0 0.0
        %1623 = vmatpush1.msra.mxu0 0.0
        %1624 = vmatprep.subr.mxu0 0.0
        %1625 = vmatpush1.msra.mxu0 0.0
        %v1626 = vand.u32 %v1594, 4294901760
        %1627 = vmatprep.subr.mxu0 %v1626
        %v1628 = vand.u32 %v1591, 4294901760
        %1629 = vmatpush1.msra.mxu0 %v1628
        %1630 = vmatprep.subr.mxu0 0.0
        %1631 = vmatpush2.msra.mxu0 0.0
        %1632 = vmatprep.subr.mxu0 0.0
        %1633 = vmatpush2.msra.mxu0 0.0
        %1634 = vmatprep.subr.mxu0 0.0
        %1635 = vmatpush2.msra.mxu0 0.0
        %1636 = vmatprep.subr.mxu0 0.0
        %1637 = vmatpush2.msra.mxu0 0.0
        %1638 = vmatprep.subr.mxu0 0.0
        %1639 = vmatpush2.msra.mxu0 0.0
        %1640 = vmatprep.subr.mxu0 0.0
        %1641 = vmatpush2.msra.mxu0 0.0
        %1642 = vmatprep.subr.mxu0 0.0
        %1643 = vmatpush2.msra.mxu0 0.0
        %1644 = vmatprep.subr.mxu0 0.0
        %1645 = vmatpush2.msra.mxu0 0.0
        %1646 = vmatprep.subr.mxu0 0.0
        %1647 = vmatpush2.msra.mxu0 0.0
        %1648 = vmatprep.subr.mxu0 0.0
        %1649 = vmatpush2.msra.mxu0 0.0
        %1650 = vmatprep.subr.mxu0 0.0
        %1651 = vmatpush2.msra.mxu0 0.0
        %1652 = vmatprep.subr.mxu0 0.0
        %1653 = vmatpush2.msra.mxu0 0.0
        %1654 = vmatprep.subr.mxu0 0.0
        %1655 = vmatpush2.msra.mxu0 0.0
        %1656 = vmatprep.subr.mxu0 0.0
        %1657 = vmatpush2.msra.mxu0 0.0
        %1658 = vmatprep.subr.mxu0 0.0
        %1659 = vmatpush2.msra.mxu0 0.0
        %1660 = vmatprep.subr.mxu0 0.0
        %1661 = vmatpush2.msra.mxu0 0.0
        %1662 = vmatprep.mubr.f32.mxu0 0.0
        %v1663 = vand.u32 %v1588, 4294901760
        %v1664 = vsub.f32 %v1588, %v1663
        %v1665 = vand.u32 %v1664, 4294901760
        %v1666 = vsub.f32 %v1664, %v1665
        %v1667 = vand.u32 %v1666, 4294901760
        %1668 = vmatmul.mubr.f32.gmra.mxu0 %v1667
        %v1669 = vpop.f32.mrf.mxu0
        %v1670 = vadd.f32 0.0, %v1669
        %v1671 = vpop.f32.mrf.mxu0
        %v1672 = vadd.f32 0.0, %v1671
        %1673 = vdwg.mxu0
        %1674 = vmatprep.subr.mxu0 0.0
        %1675 = vmatpush1.msra.mxu0 0.0
        %1676 = vmatprep.subr.mxu0 0.0
        %1677 = vmatpush1.msra.mxu0 0.0
        %1678 = vmatprep.subr.mxu0 0.0
        %1679 = vmatpush1.msra.mxu0 0.0
        %1680 = vmatprep.subr.mxu0 0.0
        %1681 = vmatpush1.msra.mxu0 0.0
        %1682 = vmatprep.subr.mxu0 0.0
        %1683 = vmatpush1.msra.mxu0 0.0
        %1684 = vmatprep.subr.mxu0 0.0
        %1685 = vmatpush1.msra.mxu0 0.0
        %1686 = vmatprep.subr.mxu0 0.0
        %1687 = vmatpush1.msra.mxu0 0.0
        %1688 = vmatprep.subr.mxu0 0.0
        %1689 = vmatpush1.msra.mxu0 0.0
        %1690 = vmatprep.subr.mxu0 0.0
        %1691 = vmatpush1.msra.mxu0 0.0
        %1692 = vmatprep.subr.mxu0 0.0
        %1693 = vmatpush1.msra.mxu0 0.0
        %1694 = vmatprep.subr.mxu0 0.0
        %1695 = vmatpush1.msra.mxu0 0.0
        %1696 = vmatprep.subr.mxu0 0.0
        %1697 = vmatpush1.msra.mxu0 0.0
        %1698 = vmatprep.subr.mxu0 0.0
        %1699 = vmatpush1.msra.mxu0 0.0
        %1700 = vmatprep.subr.mxu0 0.0
        %1701 = vmatpush1.msra.mxu0 0.0
        %1702 = vmatprep.subr.mxu0 0.0
        %1703 = vmatpush1.msra.mxu0 0.0
        %v1704 = vand.u32 %v1594, 4294901760
        %v1705 = vsub.f32 %v1594, %v1704
        %v1706 = vand.u32 %v1705, 4294901760
        %v1707 = vsub.f32 %v1705, %v1706
        %v1708 = vand.u32 %v1707, 4294901760
        %1709 = vmatprep.subr.mxu0 %v1708
        %v1710 = vand.u32 %v1591, 4294901760
        %v1711 = vsub.f32 %v1591, %v1710
        %v1712 = vand.u32 %v1711, 4294901760
        %v1713 = vsub.f32 %v1711, %v1712
        %v1714 = vand.u32 %v1713, 4294901760
        %1715 = vmatpush1.msra.mxu0 %v1714
        %1716 = vmatprep.subr.mxu0 0.0
        %1717 = vmatpush2.msra.mxu0 0.0
        %1718 = vmatprep.subr.mxu0 0.0
        %1719 = vmatpush2.msra.mxu0 0.0
        %1720 = vmatprep.subr.mxu0 0.0
        %1721 = vmatpush2.msra.mxu0 0.0
        %1722 = vmatprep.subr.mxu0 0.0
        %1723 = vmatpush2.msra.mxu0 0.0
        %1724 = vmatprep.subr.mxu0 0.0
        %1725 = vmatpush2.msra.mxu0 0.0
        %1726 = vmatprep.subr.mxu0 0.0
        %1727 = vmatpush2.msra.mxu0 0.0
        %1728 = vmatprep.subr.mxu0 0.0
        %1729 = vmatpush2.msra.mxu0 0.0
        %1730 = vmatprep.subr.mxu0 0.0
        %1731 = vmatpush2.msra.mxu0 0.0
        %1732 = vmatprep.subr.mxu0 0.0
        %1733 = vmatpush2.msra.mxu0 0.0
        %1734 = vmatprep.subr.mxu0 0.0
        %1735 = vmatpush2.msra.mxu0 0.0
        %1736 = vmatprep.subr.mxu0 0.0
        %1737 = vmatpush2.msra.mxu0 0.0
        %1738 = vmatprep.subr.mxu0 0.0
        %1739 = vmatpush2.msra.mxu0 0.0
        %1740 = vmatprep.subr.mxu0 0.0
        %1741 = vmatpush2.msra.mxu0 0.0
        %1742 = vmatprep.subr.mxu0 0.0
        %1743 = vmatpush2.msra.mxu0 0.0
        %1744 = vmatprep.subr.mxu0 0.0
        %1745 = vmatpush2.msra.mxu0 0.0
        %1746 = vmatprep.subr.mxu0 0.0
        %1747 = vmatpush2.msra.mxu0 0.0
        %1748 = vmatprep.mubr.f32.mxu0 0.0
        %v1749 = vand.u32 %v1588, 4294901760
        %1750 = vmatmul.mubr.f32.gmra.mxu0 %v1749
        %v1751 = vpop.f32.mrf.mxu0
        %v1752 = vadd.f32 %v1670, %v1751
        %v1753 = vpop.f32.mrf.mxu0
        %v1754 = vadd.f32 %v1672, %v1753
        %1755 = vdwg.mxu0
        %1756 = vmatprep.subr.mxu0 0.0
        %1757 = vmatpush1.msra.mxu0 0.0
        %1758 = vmatprep.subr.mxu0 0.0
        %1759 = vmatpush1.msra.mxu0 0.0
        %1760 = vmatprep.subr.mxu0 0.0
        %1761 = vmatpush1.msra.mxu0 0.0
        %1762 = vmatprep.subr.mxu0 0.0
        %1763 = vmatpush1.msra.mxu0 0.0
        %1764 = vmatprep.subr.mxu0 0.0
        %1765 = vmatpush1.msra.mxu0 0.0
        %1766 = vmatprep.subr.mxu0 0.0
        %1767 = vmatpush1.msra.mxu0 0.0
        %1768 = vmatprep.subr.mxu0 0.0
        %1769 = vmatpush1.msra.mxu0 0.0
        %1770 = vmatprep.subr.mxu0 0.0
        %1771 = vmatpush1.msra.mxu0 0.0
        %1772 = vmatprep.subr.mxu0 0.0
        %1773 = vmatpush1.msra.mxu0 0.0
        %1774 = vmatprep.subr.mxu0 0.0
        %1775 = vmatpush1.msra.mxu0 0.0
        %1776 = vmatprep.subr.mxu0 0.0
        %1777 = vmatpush1.msra.mxu0 0.0
        %1778 = vmatprep.subr.mxu0 0.0
        %1779 = vmatpush1.msra.mxu0 0.0
        %1780 = vmatprep.subr.mxu0 0.0
        %1781 = vmatpush1.msra.mxu0 0.0
        %1782 = vmatprep.subr.mxu0 0.0
        %1783 = vmatpush1.msra.mxu0 0.0
        %1784 = vmatprep.subr.mxu0 0.0
        %1785 = vmatpush1.msra.mxu0 0.0
        %v1786 = vand.u32 %v1594, 4294901760
        %v1787 = vsub.f32 %v1594, %v1786
        %1788 = vmatprep.subr.mxu0 %v1787
        %v1789 = vand.u32 %v1591, 4294901760
        %v1790 = vsub.f32 %v1591, %v1789
        %1791 = vmatpush1.msra.mxu0 %v1790
        %1792 = vmatprep.subr.mxu0 0.0
        %1793 = vmatpush2.msra.mxu0 0.0
        %1794 = vmatprep.subr.mxu0 0.0
        %1795 = vmatpush2.msra.mxu0 0.0
        %1796 = vmatprep.subr.mxu0 0.0
        %1797 = vmatpush2.msra.mxu0 0.0
        %1798 = vmatprep.subr.mxu0 0.0
        %1799 = vmatpush2.msra.mxu0 0.0
        %1800 = vmatprep.subr.mxu0 0.0
        %1801 = vmatpush2.msra.mxu0 0.0
        %1802 = vmatprep.subr.mxu0 0.0
        %1803 = vmatpush2.msra.mxu0 0.0
        %1804 = vmatprep.subr.mxu0 0.0
        %1805 = vmatpush2.msra.mxu0 0.0
        %1806 = vmatprep.subr.mxu0 0.0
        %1807 = vmatpush2.msra.mxu0 0.0
        %1808 = vmatprep.subr.mxu0 0.0
        %1809 = vmatpush2.msra.mxu0 0.0
        %1810 = vmatprep.subr.mxu0 0.0
        %1811 = vmatpush2.msra.mxu0 0.0
        %1812 = vmatprep.subr.mxu0 0.0
        %1813 = vmatpush2.msra.mxu0 0.0
        %1814 = vmatprep.subr.mxu0 0.0
        %1815 = vmatpush2.msra.mxu0 0.0
        %1816 = vmatprep.subr.mxu0 0.0
        %1817 = vmatpush2.msra.mxu0 0.0
        %1818 = vmatprep.subr.mxu0 0.0
        %1819 = vmatpush2.msra.mxu0 0.0
        %1820 = vmatprep.subr.mxu0 0.0
        %1821 = vmatpush2.msra.mxu0 0.0
        %1822 = vmatprep.subr.mxu0 0.0
        %1823 = vmatpush2.msra.mxu0 0.0
        %1824 = vmatprep.mubr.f32.mxu0 0.0
        %v1825 = vand.u32 %v1588, 4294901760
        %v1826 = vsub.f32 %v1588, %v1825
        %1827 = vmatmul.mubr.f32.gmra.mxu0 %v1826
        %v1828 = vpop.f32.mrf.mxu0
        %v1829 = vadd.f32 %v1752, %v1828
        %v1830 = vpop.f32.mrf.mxu0
        %v1831 = vadd.f32 %v1754, %v1830
        %1832 = vdwg.mxu0
        %1833 = vmatprep.subr.mxu0 0.0
        %1834 = vmatpush1.msra.mxu0 0.0
        %1835 = vmatprep.subr.mxu0 0.0
        %1836 = vmatpush1.msra.mxu0 0.0
        %1837 = vmatprep.subr.mxu0 0.0
        %1838 = vmatpush1.msra.mxu0 0.0
        %1839 = vmatprep.subr.mxu0 0.0
        %1840 = vmatpush1.msra.mxu0 0.0
        %1841 = vmatprep.subr.mxu0 0.0
        %1842 = vmatpush1.msra.mxu0 0.0
        %1843 = vmatprep.subr.mxu0 0.0
        %1844 = vmatpush1.msra.mxu0 0.0
        %1845 = vmatprep.subr.mxu0 0.0
        %1846 = vmatpush1.msra.mxu0 0.0
        %1847 = vmatprep.subr.mxu0 0.0
        %1848 = vmatpush1.msra.mxu0 0.0
        %1849 = vmatprep.subr.mxu0 0.0
        %1850 = vmatpush1.msra.mxu0 0.0
        %1851 = vmatprep.subr.mxu0 0.0
        %1852 = vmatpush1.msra.mxu0 0.0
        %1853 = vmatprep.subr.mxu0 0.0
        %1854 = vmatpush1.msra.mxu0 0.0
        %1855 = vmatprep.subr.mxu0 0.0
        %1856 = vmatpush1.msra.mxu0 0.0
        %1857 = vmatprep.subr.mxu0 0.0
        %1858 = vmatpush1.msra.mxu0 0.0
        %1859 = vmatprep.subr.mxu0 0.0
        %1860 = vmatpush1.msra.mxu0 0.0
        %1861 = vmatprep.subr.mxu0 0.0
        %1862 = vmatpush1.msra.mxu0 0.0
        %v1863 = vand.u32 %v1594, 4294901760
        %1864 = vmatprep.subr.mxu0 %v1863
        %v1865 = vand.u32 %v1591, 4294901760
        %1866 = vmatpush1.msra.mxu0 %v1865
        %1867 = vmatprep.subr.mxu0 0.0
        %1868 = vmatpush2.msra.mxu0 0.0
        %1869 = vmatprep.subr.mxu0 0.0
        %1870 = vmatpush2.msra.mxu0 0.0
        %1871 = vmatprep.subr.mxu0 0.0
        %1872 = vmatpush2.msra.mxu0 0.0
        %1873 = vmatprep.subr.mxu0 0.0
        %1874 = vmatpush2.msra.mxu0 0.0
        %1875 = vmatprep.subr.mxu0 0.0
        %1876 = vmatpush2.msra.mxu0 0.0
        %1877 = vmatprep.subr.mxu0 0.0
        %1878 = vmatpush2.msra.mxu0 0.0
        %1879 = vmatprep.subr.mxu0 0.0
        %1880 = vmatpush2.msra.mxu0 0.0
        %1881 = vmatprep.subr.mxu0 0.0
        %1882 = vmatpush2.msra.mxu0 0.0
        %1883 = vmatprep.subr.mxu0 0.0
        %1884 = vmatpush2.msra.mxu0 0.0
        %1885 = vmatprep.subr.mxu0 0.0
        %1886 = vmatpush2.msra.mxu0 0.0
        %1887 = vmatprep.subr.mxu0 0.0
        %1888 = vmatpush2.msra.mxu0 0.0
        %1889 = vmatprep.subr.mxu0 0.0
        %1890 = vmatpush2.msra.mxu0 0.0
        %1891 = vmatprep.subr.mxu0 0.0
        %1892 = vmatpush2.msra.mxu0 0.0
        %1893 = vmatprep.subr.mxu0 0.0
        %1894 = vmatpush2.msra.mxu0 0.0
        %1895 = vmatprep.subr.mxu0 0.0
        %1896 = vmatpush2.msra.mxu0 0.0
        %1897 = vmatprep.subr.mxu0 0.0
        %1898 = vmatpush2.msra.mxu0 0.0
        %1899 = vmatprep.mubr.f32.mxu0 0.0
        %v1900 = vand.u32 %v1588, 4294901760
        %v1901 = vsub.f32 %v1588, %v1900
        %v1902 = vand.u32 %v1901, 4294901760
        %1903 = vmatmul.mubr.f32.gmra.mxu0 %v1902
        %v1904 = vpop.f32.mrf.mxu0
        %v1905 = vadd.f32 %v1829, %v1904
        %v1906 = vpop.f32.mrf.mxu0
        %v1907 = vadd.f32 %v1831, %v1906
        %1908 = vdwg.mxu0
        %1909 = vmatprep.subr.mxu0 0.0
        %1910 = vmatpush1.msra.mxu0 0.0
        %1911 = vmatprep.subr.mxu0 0.0
        %1912 = vmatpush1.msra.mxu0 0.0
        %1913 = vmatprep.subr.mxu0 0.0
        %1914 = vmatpush1.msra.mxu0 0.0
        %1915 = vmatprep.subr.mxu0 0.0
        %1916 = vmatpush1.msra.mxu0 0.0
        %1917 = vmatprep.subr.mxu0 0.0
        %1918 = vmatpush1.msra.mxu0 0.0
        %1919 = vmatprep.subr.mxu0 0.0
        %1920 = vmatpush1.msra.mxu0 0.0
        %1921 = vmatprep.subr.mxu0 0.0
        %1922 = vmatpush1.msra.mxu0 0.0
        %1923 = vmatprep.subr.mxu0 0.0
        %1924 = vmatpush1.msra.mxu0 0.0
        %1925 = vmatprep.subr.mxu0 0.0
        %1926 = vmatpush1.msra.mxu0 0.0
        %1927 = vmatprep.subr.mxu0 0.0
        %1928 = vmatpush1.msra.mxu0 0.0
        %1929 = vmatprep.subr.mxu0 0.0
        %1930 = vmatpush1.msra.mxu0 0.0
        %1931 = vmatprep.subr.mxu0 0.0
        %1932 = vmatpush1.msra.mxu0 0.0
        %1933 = vmatprep.subr.mxu0 0.0
        %1934 = vmatpush1.msra.mxu0 0.0
        %1935 = vmatprep.subr.mxu0 0.0
        %1936 = vmatpush1.msra.mxu0 0.0
        %1937 = vmatprep.subr.mxu0 0.0
        %1938 = vmatpush1.msra.mxu0 0.0
        %v1939 = vand.u32 %v1594, 4294901760
        %v1940 = vsub.f32 %v1594, %v1939
        %v1941 = vand.u32 %v1940, 4294901760
        %1942 = vmatprep.subr.mxu0 %v1941
        %v1943 = vand.u32 %v1591, 4294901760
        %v1944 = vsub.f32 %v1591, %v1943
        %v1945 = vand.u32 %v1944, 4294901760
        %1946 = vmatpush1.msra.mxu0 %v1945
        %1947 = vmatprep.subr.mxu0 0.0
        %1948 = vmatpush2.msra.mxu0 0.0
        %1949 = vmatprep.subr.mxu0 0.0
        %1950 = vmatpush2.msra.mxu0 0.0
        %1951 = vmatprep.subr.mxu0 0.0
        %1952 = vmatpush2.msra.mxu0 0.0
        %1953 = vmatprep.subr.mxu0 0.0
        %1954 = vmatpush2.msra.mxu0 0.0
        %1955 = vmatprep.subr.mxu0 0.0
        %1956 = vmatpush2.msra.mxu0 0.0
        %1957 = vmatprep.subr.mxu0 0.0
        %1958 = vmatpush2.msra.mxu0 0.0
        %1959 = vmatprep.subr.mxu0 0.0
        %1960 = vmatpush2.msra.mxu0 0.0
        %1961 = vmatprep.subr.mxu0 0.0
        %1962 = vmatpush2.msra.mxu0 0.0
        %1963 = vmatprep.subr.mxu0 0.0
        %1964 = vmatpush2.msra.mxu0 0.0
        %1965 = vmatprep.subr.mxu0 0.0
        %1966 = vmatpush2.msra.mxu0 0.0
        %1967 = vmatprep.subr.mxu0 0.0
        %1968 = vmatpush2.msra.mxu0 0.0
        %1969 = vmatprep.subr.mxu0 0.0
        %1970 = vmatpush2.msra.mxu0 0.0
        %1971 = vmatprep.subr.mxu0 0.0
        %1972 = vmatpush2.msra.mxu0 0.0
        %1973 = vmatprep.subr.mxu0 0.0
        %1974 = vmatpush2.msra.mxu0 0.0
        %1975 = vmatprep.subr.mxu0 0.0
        %1976 = vmatpush2.msra.mxu0 0.0
        %1977 = vmatprep.subr.mxu0 0.0
        %1978 = vmatpush2.msra.mxu0 0.0
        %1979 = vmatprep.mubr.f32.mxu0 0.0
        %v1980 = vand.u32 %v1588, 4294901760
        %1981 = vmatmul.mubr.f32.gmra.mxu0 %v1980
        %v1982 = vpop.f32.mrf.mxu0
        %v1983 = vadd.f32 %v1905, %v1982
        %v1984 = vpop.f32.mrf.mxu0
        %v1985 = vadd.f32 %v1907, %v1984
        %1986 = vdwg.mxu0
        %1987 = vmatprep.subr.mxu0 0.0
        %1988 = vmatpush1.msra.mxu0 0.0
        %1989 = vmatprep.subr.mxu0 0.0
        %1990 = vmatpush1.msra.mxu0 0.0
        %1991 = vmatprep.subr.mxu0 0.0
        %1992 = vmatpush1.msra.mxu0 0.0
        %1993 = vmatprep.subr.mxu0 0.0
        %1994 = vmatpush1.msra.mxu0 0.0
        %1995 = vmatprep.subr.mxu0 0.0
        %1996 = vmatpush1.msra.mxu0 0.0
        %1997 = vmatprep.subr.mxu0 0.0
        %1998 = vmatpush1.msra.mxu0 0.0
        %1999 = vmatprep.subr.mxu0 0.0
        %2000 = vmatpush1.msra.mxu0 0.0
        %2001 = vmatprep.subr.mxu0 0.0
        %2002 = vmatpush1.msra.mxu0 0.0
        %2003 = vmatprep.subr.mxu0 0.0
        %2004 = vmatpush1.msra.mxu0 0.0
        %2005 = vmatprep.subr.mxu0 0.0
        %2006 = vmatpush1.msra.mxu0 0.0
        %2007 = vmatprep.subr.mxu0 0.0
        %2008 = vmatpush1.msra.mxu0 0.0
        %2009 = vmatprep.subr.mxu0 0.0
        %2010 = vmatpush1.msra.mxu0 0.0
        %2011 = vmatprep.subr.mxu0 0.0
        %2012 = vmatpush1.msra.mxu0 0.0
        %2013 = vmatprep.subr.mxu0 0.0
        %2014 = vmatpush1.msra.mxu0 0.0
        %2015 = vmatprep.subr.mxu0 0.0
        %2016 = vmatpush1.msra.mxu0 0.0
        %v2017 = vand.u32 %v1594, 4294901760
        %2018 = vmatprep.subr.mxu0 %v2017
        %v2019 = vand.u32 %v1591, 4294901760
        %2020 = vmatpush1.msra.mxu0 %v2019
        %2021 = vmatprep.subr.mxu0 0.0
        %2022 = vmatpush2.msra.mxu0 0.0
        %2023 = vmatprep.subr.mxu0 0.0
        %2024 = vmatpush2.msra.mxu0 0.0
        %2025 = vmatprep.subr.mxu0 0.0
        %2026 = vmatpush2.msra.mxu0 0.0
        %2027 = vmatprep.subr.mxu0 0.0
        %2028 = vmatpush2.msra.mxu0 0.0
        %2029 = vmatprep.subr.mxu0 0.0
        %2030 = vmatpush2.msra.mxu0 0.0
        %2031 = vmatprep.subr.mxu0 0.0
        %2032 = vmatpush2.msra.mxu0 0.0
        %2033 = vmatprep.subr.mxu0 0.0
        %2034 = vmatpush2.msra.mxu0 0.0
        %2035 = vmatprep.subr.mxu0 0.0
        %2036 = vmatpush2.msra.mxu0 0.0
        %2037 = vmatprep.subr.mxu0 0.0
        %2038 = vmatpush2.msra.mxu0 0.0
        %2039 = vmatprep.subr.mxu0 0.0
        %2040 = vmatpush2.msra.mxu0 0.0
        %2041 = vmatprep.subr.mxu0 0.0
        %2042 = vmatpush2.msra.mxu0 0.0
        %2043 = vmatprep.subr.mxu0 0.0
        %2044 = vmatpush2.msra.mxu0 0.0
        %2045 = vmatprep.subr.mxu0 0.0
        %2046 = vmatpush2.msra.mxu0 0.0
        %2047 = vmatprep.subr.mxu0 0.0
        %2048 = vmatpush2.msra.mxu0 0.0
        %2049 = vmatprep.subr.mxu0 0.0
        %2050 = vmatpush2.msra.mxu0 0.0
        %2051 = vmatprep.subr.mxu0 0.0
        %2052 = vmatpush2.msra.mxu0 0.0
        %2053 = vmatprep.mubr.f32.mxu0 0.0
        %v2054 = vand.u32 %v1588, 4294901760
        %2055 = vmatmul.mubr.f32.gmra.mxu0 %v2054
        %v2056 = vpop.f32.mrf.mxu0
        %v2057 = vadd.f32 %v1983, %v2056
        %v2058 = vpop.f32.mrf.mxu0
        %v2059 = vadd.f32 %v1985, %v2058
        %2060 = vdwg.mxu0
        %2062 = vset.pattern.permute.xlu0 0
        %2063 = vperm.xlu0 %2062, %v1585
        %v2064 = vpop.permute.xlu0 %2063
        %v2066 = vmul.f32 %v2057, %v2064
        %v2067 = vmul.f32 %v2059, %v2064
        %2069 = vset.pattern.permute.xlu0 0
        %2070 = vperm.xlu0 %2069, %v1586
        %v2071 = vpop.permute.xlu0 %2070
        %v2073 = vadd.f32 %v2066, %v2071
        %v2074 = vadd.f32 %v2067, %v2071
        %v2075 = vmax.f32 %v2073, 0.0
        %v2076 = vmax.f32 %v2074, 0.0
        %v2077 = vld [vmem:[%s17] sm:$0x3]
        %v2079 = vlaneseq
        %v2080 = vshrl.u32 %v2079, 7
        %v2081 = vsub.s32 0, %v2080
        %v2082 = vrot.slane %v2077, %v2081
        %v2083 = vlaneseq
        %v2084 = vshrl.u32 %v2083, 7
        %v2085 = vsub.s32 1, %v2084
        %v2086 = vrot.slane %v2077, %v2085
        %2087 = vrot.lane.b32.xlu0 %v2082, 111
        %v2088 = vpop.permute.xlu0 %2087
        %2089 = vrot.lane.b32.xlu0 %v2086, 111
        %v2090 = vpop.permute.xlu0 %2089
        %vm2091 = vcmask 908288
        %v2092 = vsel %vm2091, %v2088, %v2090
        %v2096 = vmul.f32 %v2088, 0.0
        %v2097 = vmul.f32 %v2075, %v2092
        %v2098 = vmul.f32 %v2076, %v2090
        %v2099 = vld [vmem:[%s4] sm:$0xf]
        %s2100 = scalar_lea.vmem %s4, 4
        %v2101 = vld [vmem:[%s2100] sm:$0xf]
        %2105 = vrot.lane.b32.xlu0 0.0, 16
        %v2106 = vpop.permute.xlu0 %2105
        %2107 = vrot.lane.b32.xlu0 %v2075, 16
        %v2108 = vpop.permute.xlu0 %2107
        %2109 = vrot.lane.b32.xlu0 %v2076, 16
        %v2110 = vpop.permute.xlu0 %2109
        %vm2111 = vcmask 130048
        %v2112 = vsel %vm2111, %v2106, %v2108
        %v2113 = vsel %vm2111, %v2108, %v2110
        %v2115 = vsel %vm607, %v2101, 0
        %v2117 = vsel %vm611, %v2112, 0
        %v2119 = vsel %vm611, %v2113, 0
        %2121 = vmatprep.subr.mxu0 0.0
        %2122 = vmatpush1.msra.mxu0 0.0
        %2123 = vmatprep.subr.mxu0 0.0
        %2124 = vmatpush1.msra.mxu0 0.0
        %2125 = vmatprep.subr.mxu0 0.0
        %2126 = vmatpush1.msra.mxu0 0.0
        %2127 = vmatprep.subr.mxu0 0.0
        %2128 = vmatpush1.msra.mxu0 0.0
        %2129 = vmatprep.subr.mxu0 0.0
        %2130 = vmatpush1.msra.mxu0 0.0
        %2131 = vmatprep.subr.mxu0 0.0
        %2132 = vmatpush1.msra.mxu0 0.0
        %2133 = vmatprep.subr.mxu0 0.0
        %2134 = vmatpush1.msra.mxu0 0.0
        %2135 = vmatprep.subr.mxu0 0.0
        %2136 = vmatpush1.msra.mxu0 0.0
        %2137 = vmatprep.subr.mxu0 0.0
        %2138 = vmatpush1.msra.mxu0 0.0
        %2139 = vmatprep.subr.mxu0 0.0
        %2140 = vmatpush1.msra.mxu0 0.0
        %2141 = vmatprep.subr.mxu0 0.0
        %2142 = vmatpush1.msra.mxu0 0.0
        %2143 = vmatprep.subr.mxu0 0.0
        %2144 = vmatpush1.msra.mxu0 0.0
        %2145 = vmatprep.subr.mxu0 0.0
        %2146 = vmatpush1.msra.mxu0 0.0
        %2147 = vmatprep.subr.mxu0 0.0
        %2148 = vmatpush1.msra.mxu0 0.0
        %2149 = vmatprep.subr.mxu0 0.0
        %2150 = vmatpush1.msra.mxu0 0.0
        %v2151 = vand.u32 %v2119, 4294901760
        %2152 = vmatprep.subr.mxu0 %v2151
        %v2153 = vand.u32 %v2117, 4294901760
        %2154 = vmatpush1.msra.mxu0 %v2153
        %2155 = vmatprep.subr.mxu0 0.0
        %2156 = vmatpush2.msra.mxu0 0.0
        %2157 = vmatprep.subr.mxu0 0.0
        %2158 = vmatpush2.msra.mxu0 0.0
        %2159 = vmatprep.subr.mxu0 0.0
        %2160 = vmatpush2.msra.mxu0 0.0
        %2161 = vmatprep.subr.mxu0 0.0
        %2162 = vmatpush2.msra.mxu0 0.0
        %2163 = vmatprep.subr.mxu0 0.0
        %2164 = vmatpush2.msra.mxu0 0.0
        %2165 = vmatprep.subr.mxu0 0.0
        %2166 = vmatpush2.msra.mxu0 0.0
        %2167 = vmatprep.subr.mxu0 0.0
        %2168 = vmatpush2.msra.mxu0 0.0
        %2169 = vmatprep.subr.mxu0 0.0
        %2170 = vmatpush2.msra.mxu0 0.0
        %2171 = vmatprep.subr.mxu0 0.0
        %2172 = vmatpush2.msra.mxu0 0.0
        %2173 = vmatprep.subr.mxu0 0.0
        %2174 = vmatpush2.msra.mxu0 0.0
        %2175 = vmatprep.subr.mxu0 0.0
        %2176 = vmatpush2.msra.mxu0 0.0
        %2177 = vmatprep.subr.mxu0 0.0
        %2178 = vmatpush2.msra.mxu0 0.0
        %2179 = vmatprep.subr.mxu0 0.0
        %2180 = vmatpush2.msra.mxu0 0.0
        %2181 = vmatprep.subr.mxu0 0.0
        %2182 = vmatpush2.msra.mxu0 0.0
        %2183 = vmatprep.subr.mxu0 0.0
        %2184 = vmatpush2.msra.mxu0 0.0
        %2185 = vmatprep.subr.mxu0 0.0
        %2186 = vmatpush2.msra.mxu0 0.0
        %2187 = vmatprep.mubr.f32.mxu0 0.0
        %v2188 = vand.u32 %v2115, 4294901760
        %v2189 = vsub.f32 %v2115, %v2188
        %v2190 = vand.u32 %v2189, 4294901760
        %v2191 = vsub.f32 %v2189, %v2190
        %v2192 = vand.u32 %v2191, 4294901760
        %2193 = vmatmul.mubr.f32.gmra.mxu0 %v2192
        %v2194 = vpop.f32.mrf.mxu0
        %v2195 = vadd.f32 0.0, %v2194
        %v2196 = vpop.f32.mrf.mxu0
        %v2197 = vadd.f32 0.0, %v2196
        %2198 = vdwg.mxu0
        %2199 = vmatprep.subr.mxu0 0.0
        %2200 = vmatpush1.msra.mxu0 0.0
        %2201 = vmatprep.subr.mxu0 0.0
        %2202 = vmatpush1.msra.mxu0 0.0
        %2203 = vmatprep.subr.mxu0 0.0
        %2204 = vmatpush1.msra.mxu0 0.0
        %2205 = vmatprep.subr.mxu0 0.0
        %2206 = vmatpush1.msra.mxu0 0.0
        %2207 = vmatprep.subr.mxu0 0.0
        %2208 = vmatpush1.msra.mxu0 0.0
        %2209 = vmatprep.subr.mxu0 0.0
        %2210 = vmatpush1.msra.mxu0 0.0
        %2211 = vmatprep.subr.mxu0 0.0
        %2212 = vmatpush1.msra.mxu0 0.0
        %2213 = vmatprep.subr.mxu0 0.0
        %2214 = vmatpush1.msra.mxu0 0.0
        %2215 = vmatprep.subr.mxu0 0.0
        %2216 = vmatpush1.msra.mxu0 0.0
        %2217 = vmatprep.subr.mxu0 0.0
        %2218 = vmatpush1.msra.mxu0 0.0
        %2219 = vmatprep.subr.mxu0 0.0
        %2220 = vmatpush1.msra.mxu0 0.0
        %2221 = vmatprep.subr.mxu0 0.0
        %2222 = vmatpush1.msra.mxu0 0.0
        %2223 = vmatprep.subr.mxu0 0.0
        %2224 = vmatpush1.msra.mxu0 0.0
        %2225 = vmatprep.subr.mxu0 0.0
        %2226 = vmatpush1.msra.mxu0 0.0
        %2227 = vmatprep.subr.mxu0 0.0
        %2228 = vmatpush1.msra.mxu0 0.0
        %v2229 = vand.u32 %v2119, 4294901760
        %v2230 = vsub.f32 %v2119, %v2229
        %v2231 = vand.u32 %v2230, 4294901760
        %v2232 = vsub.f32 %v2230, %v2231
        %v2233 = vand.u32 %v2232, 4294901760
        %2234 = vmatprep.subr.mxu0 %v2233
        %v2235 = vand.u32 %v2117, 4294901760
        %v2236 = vsub.f32 %v2117, %v2235
        %v2237 = vand.u32 %v2236, 4294901760
        %v2238 = vsub.f32 %v2236, %v2237
        %v2239 = vand.u32 %v2238, 4294901760
        %2240 = vmatpush1.msra.mxu0 %v2239
        %2241 = vmatprep.subr.mxu0 0.0
        %2242 = vmatpush2.msra.mxu0 0.0
        %2243 = vmatprep.subr.mxu0 0.0
        %2244 = vmatpush2.msra.mxu0 0.0
        %2245 = vmatprep.subr.mxu0 0.0
        %2246 = vmatpush2.msra.mxu0 0.0
        %2247 = vmatprep.subr.mxu0 0.0
        %2248 = vmatpush2.msra.mxu0 0.0
        %2249 = vmatprep.subr.mxu0 0.0
        %2250 = vmatpush2.msra.mxu0 0.0
        %2251 = vmatprep.subr.mxu0 0.0
        %2252 = vmatpush2.msra.mxu0 0.0
        %2253 = vmatprep.subr.mxu0 0.0
        %2254 = vmatpush2.msra.mxu0 0.0
        %2255 = vmatprep.subr.mxu0 0.0
        %2256 = vmatpush2.msra.mxu0 0.0
        %2257 = vmatprep.subr.mxu0 0.0
        %2258 = vmatpush2.msra.mxu0 0.0
        %2259 = vmatprep.subr.mxu0 0.0
        %2260 = vmatpush2.msra.mxu0 0.0
        %2261 = vmatprep.subr.mxu0 0.0
        %2262 = vmatpush2.msra.mxu0 0.0
        %2263 = vmatprep.subr.mxu0 0.0
        %2264 = vmatpush2.msra.mxu0 0.0
        %2265 = vmatprep.subr.mxu0 0.0
        %2266 = vmatpush2.msra.mxu0 0.0
        %2267 = vmatprep.subr.mxu0 0.0
        %2268 = vmatpush2.msra.mxu0 0.0
        %2269 = vmatprep.subr.mxu0 0.0
        %2270 = vmatpush2.msra.mxu0 0.0
        %2271 = vmatprep.subr.mxu0 0.0
        %2272 = vmatpush2.msra.mxu0 0.0
        %2273 = vmatprep.mubr.f32.mxu0 0.0
        %v2274 = vand.u32 %v2115, 4294901760
        %2275 = vmatmul.mubr.f32.gmra.mxu0 %v2274
        %v2276 = vpop.f32.mrf.mxu0
        %v2277 = vadd.f32 %v2195, %v2276
        %v2278 = vpop.f32.mrf.mxu0
        %v2279 = vadd.f32 %v2197, %v2278
        %2280 = vdwg.mxu0
        %2281 = vmatprep.subr.mxu0 0.0
        %2282 = vmatpush1.msra.mxu0 0.0
        %2283 = vmatprep.subr.mxu0 0.0
        %2284 = vmatpush1.msra.mxu0 0.0
        %2285 = vmatprep.subr.mxu0 0.0
        %2286 = vmatpush1.msra.mxu0 0.0
        %2287 = vmatprep.subr.mxu0 0.0
        %2288 = vmatpush1.msra.mxu0 0.0
        %2289 = vmatprep.subr.mxu0 0.0
        %2290 = vmatpush1.msra.mxu0 0.0
        %2291 = vmatprep.subr.mxu0 0.0
        %2292 = vmatpush1.msra.mxu0 0.0
        %2293 = vmatprep.subr.mxu0 0.0
        %2294 = vmatpush1.msra.mxu0 0.0
        %2295 = vmatprep.subr.mxu0 0.0
        %2296 = vmatpush1.msra.mxu0 0.0
        %2297 = vmatprep.subr.mxu0 0.0
        %2298 = vmatpush1.msra.mxu0 0.0
        %2299 = vmatprep.subr.mxu0 0.0
        %2300 = vmatpush1.msra.mxu0 0.0
        %2301 = vmatprep.subr.mxu0 0.0
        %2302 = vmatpush1.msra.mxu0 0.0
        %2303 = vmatprep.subr.mxu0 0.0
        %2304 = vmatpush1.msra.mxu0 0.0
        %2305 = vmatprep.subr.mxu0 0.0
        %2306 = vmatpush1.msra.mxu0 0.0
        %2307 = vmatprep.subr.mxu0 0.0
        %2308 = vmatpush1.msra.mxu0 0.0
        %2309 = vmatprep.subr.mxu0 0.0
        %2310 = vmatpush1.msra.mxu0 0.0
        %v2311 = vand.u32 %v2119, 4294901760
        %v2312 = vsub.f32 %v2119, %v2311
        %2313 = vmatprep.subr.mxu0 %v2312
        %v2314 = vand.u32 %v2117, 4294901760
        %v2315 = vsub.f32 %v2117, %v2314
        %2316 = vmatpush1.msra.mxu0 %v2315
        %2317 = vmatprep.subr.mxu0 0.0
        %2318 = vmatpush2.msra.mxu0 0.0
        %2319 = vmatprep.subr.mxu0 0.0
        %2320 = vmatpush2.msra.mxu0 0.0
        %2321 = vmatprep.subr.mxu0 0.0
        %2322 = vmatpush2.msra.mxu0 0.0
        %2323 = vmatprep.subr.mxu0 0.0
        %2324 = vmatpush2.msra.mxu0 0.0
        %2325 = vmatprep.subr.mxu0 0.0
        %2326 = vmatpush2.msra.mxu0 0.0
        %2327 = vmatprep.subr.mxu0 0.0
        %2328 = vmatpush2.msra.mxu0 0.0
        %2329 = vmatprep.subr.mxu0 0.0
        %2330 = vmatpush2.msra.mxu0 0.0
        %2331 = vmatprep.subr.mxu0 0.0
        %2332 = vmatpush2.msra.mxu0 0.0
        %2333 = vmatprep.subr.mxu0 0.0
        %2334 = vmatpush2.msra.mxu0 0.0
        %2335 = vmatprep.subr.mxu0 0.0
        %2336 = vmatpush2.msra.mxu0 0.0
        %2337 = vmatprep.subr.mxu0 0.0
        %2338 = vmatpush2.msra.mxu0 0.0
        %2339 = vmatprep.subr.mxu0 0.0
        %2340 = vmatpush2.msra.mxu0 0.0
        %2341 = vmatprep.subr.mxu0 0.0
        %2342 = vmatpush2.msra.mxu0 0.0
        %2343 = vmatprep.subr.mxu0 0.0
        %2344 = vmatpush2.msra.mxu0 0.0
        %2345 = vmatprep.subr.mxu0 0.0
        %2346 = vmatpush2.msra.mxu0 0.0
        %2347 = vmatprep.subr.mxu0 0.0
        %2348 = vmatpush2.msra.mxu0 0.0
        %2349 = vmatprep.mubr.f32.mxu0 0.0
        %v2350 = vand.u32 %v2115, 4294901760
        %v2351 = vsub.f32 %v2115, %v2350
        %2352 = vmatmul.mubr.f32.gmra.mxu0 %v2351
        %v2353 = vpop.f32.mrf.mxu0
        %v2354 = vadd.f32 %v2277, %v2353
        %v2355 = vpop.f32.mrf.mxu0
        %v2356 = vadd.f32 %v2279, %v2355
        %2357 = vdwg.mxu0
        %2358 = vmatprep.subr.mxu0 0.0
        %2359 = vmatpush1.msra.mxu0 0.0
        %2360 = vmatprep.subr.mxu0 0.0
        %2361 = vmatpush1.msra.mxu0 0.0
        %2362 = vmatprep.subr.mxu0 0.0
        %2363 = vmatpush1.msra.mxu0 0.0
        %2364 = vmatprep.subr.mxu0 0.0
        %2365 = vmatpush1.msra.mxu0 0.0
        %2366 = vmatprep.subr.mxu0 0.0
        %2367 = vmatpush1.msra.mxu0 0.0
        %2368 = vmatprep.subr.mxu0 0.0
        %2369 = vmatpush1.msra.mxu0 0.0
        %2370 = vmatprep.subr.mxu0 0.0
        %2371 = vmatpush1.msra.mxu0 0.0
        %2372 = vmatprep.subr.mxu0 0.0
        %2373 = vmatpush1.msra.mxu0 0.0
        %2374 = vmatprep.subr.mxu0 0.0
        %2375 = vmatpush1.msra.mxu0 0.0
        %2376 = vmatprep.subr.mxu0 0.0
        %2377 = vmatpush1.msra.mxu0 0.0
        %2378 = vmatprep.subr.mxu0 0.0
        %2379 = vmatpush1.msra.mxu0 0.0
        %2380 = vmatprep.subr.mxu0 0.0
        %2381 = vmatpush1.msra.mxu0 0.0
        %2382 = vmatprep.subr.mxu0 0.0
        %2383 = vmatpush1.msra.mxu0 0.0
        %2384 = vmatprep.subr.mxu0 0.0
        %2385 = vmatpush1.msra.mxu0 0.0
        %2386 = vmatprep.subr.mxu0 0.0
        %2387 = vmatpush1.msra.mxu0 0.0
        %v2388 = vand.u32 %v2119, 4294901760
        %2389 = vmatprep.subr.mxu0 %v2388
        %v2390 = vand.u32 %v2117, 4294901760
        %2391 = vmatpush1.msra.mxu0 %v2390
        %2392 = vmatprep.subr.mxu0 0.0
        %2393 = vmatpush2.msra.mxu0 0.0
        %2394 = vmatprep.subr.mxu0 0.0
        %2395 = vmatpush2.msra.mxu0 0.0
        %2396 = vmatprep.subr.mxu0 0.0
        %2397 = vmatpush2.msra.mxu0 0.0
        %2398 = vmatprep.subr.mxu0 0.0
        %2399 = vmatpush2.msra.mxu0 0.0
        %2400 = vmatprep.subr.mxu0 0.0
        %2401 = vmatpush2.msra.mxu0 0.0
        %2402 = vmatprep.subr.mxu0 0.0
        %2403 = vmatpush2.msra.mxu0 0.0
        %2404 = vmatprep.subr.mxu0 0.0
        %2405 = vmatpush2.msra.mxu0 0.0
        %2406 = vmatprep.subr.mxu0 0.0
        %2407 = vmatpush2.msra.mxu0 0.0
        %2408 = vmatprep.subr.mxu0 0.0
        %2409 = vmatpush2.msra.mxu0 0.0
        %2410 = vmatprep.subr.mxu0 0.0
        %2411 = vmatpush2.msra.mxu0 0.0
        %2412 = vmatprep.subr.mxu0 0.0
        %2413 = vmatpush2.msra.mxu0 0.0
        %2414 = vmatprep.subr.mxu0 0.0
        %2415 = vmatpush2.msra.mxu0 0.0
        %2416 = vmatprep.subr.mxu0 0.0
        %2417 = vmatpush2.msra.mxu0 0.0
        %2418 = vmatprep.subr.mxu0 0.0
        %2419 = vmatpush2.msra.mxu0 0.0
        %2420 = vmatprep.subr.mxu0 0.0
        %2421 = vmatpush2.msra.mxu0 0.0
        %2422 = vmatprep.subr.mxu0 0.0
        %2423 = vmatpush2.msra.mxu0 0.0
        %2424 = vmatprep.mubr.f32.mxu0 0.0
        %v2425 = vand.u32 %v2115, 4294901760
        %v2426 = vsub.f32 %v2115, %v2425
        %v2427 = vand.u32 %v2426, 4294901760
        %2428 = vmatmul.mubr.f32.gmra.mxu0 %v2427
        %v2429 = vpop.f32.mrf.mxu0
        %v2430 = vadd.f32 %v2354, %v2429
        %v2431 = vpop.f32.mrf.mxu0
        %v2432 = vadd.f32 %v2356, %v2431
        %2433 = vdwg.mxu0
        %2434 = vmatprep.subr.mxu0 0.0
        %2435 = vmatpush1.msra.mxu0 0.0
        %2436 = vmatprep.subr.mxu0 0.0
        %2437 = vmatpush1.msra.mxu0 0.0
        %2438 = vmatprep.subr.mxu0 0.0
        %2439 = vmatpush1.msra.mxu0 0.0
        %2440 = vmatprep.subr.mxu0 0.0
        %2441 = vmatpush1.msra.mxu0 0.0
        %2442 = vmatprep.subr.mxu0 0.0
        %2443 = vmatpush1.msra.mxu0 0.0
        %2444 = vmatprep.subr.mxu0 0.0
        %2445 = vmatpush1.msra.mxu0 0.0
        %2446 = vmatprep.subr.mxu0 0.0
        %2447 = vmatpush1.msra.mxu0 0.0
        %2448 = vmatprep.subr.mxu0 0.0
        %2449 = vmatpush1.msra.mxu0 0.0
        %2450 = vmatprep.subr.mxu0 0.0
        %2451 = vmatpush1.msra.mxu0 0.0
        %2452 = vmatprep.subr.mxu0 0.0
        %2453 = vmatpush1.msra.mxu0 0.0
        %2454 = vmatprep.subr.mxu0 0.0
        %2455 = vmatpush1.msra.mxu0 0.0
        %2456 = vmatprep.subr.mxu0 0.0
        %2457 = vmatpush1.msra.mxu0 0.0
        %2458 = vmatprep.subr.mxu0 0.0
        %2459 = vmatpush1.msra.mxu0 0.0
        %2460 = vmatprep.subr.mxu0 0.0
        %2461 = vmatpush1.msra.mxu0 0.0
        %2462 = vmatprep.subr.mxu0 0.0
        %2463 = vmatpush1.msra.mxu0 0.0
        %v2464 = vand.u32 %v2119, 4294901760
        %v2465 = vsub.f32 %v2119, %v2464
        %v2466 = vand.u32 %v2465, 4294901760
        %2467 = vmatprep.subr.mxu0 %v2466
        %v2468 = vand.u32 %v2117, 4294901760
        %v2469 = vsub.f32 %v2117, %v2468
        %v2470 = vand.u32 %v2469, 4294901760
        %2471 = vmatpush1.msra.mxu0 %v2470
        %2472 = vmatprep.subr.mxu0 0.0
        %2473 = vmatpush2.msra.mxu0 0.0
        %2474 = vmatprep.subr.mxu0 0.0
        %2475 = vmatpush2.msra.mxu0 0.0
        %2476 = vmatprep.subr.mxu0 0.0
        %2477 = vmatpush2.msra.mxu0 0.0
        %2478 = vmatprep.subr.mxu0 0.0
        %2479 = vmatpush2.msra.mxu0 0.0
        %2480 = vmatprep.subr.mxu0 0.0
        %2481 = vmatpush2.msra.mxu0 0.0
        %2482 = vmatprep.subr.mxu0 0.0
        %2483 = vmatpush2.msra.mxu0 0.0
        %2484 = vmatprep.subr.mxu0 0.0
        %2485 = vmatpush2.msra.mxu0 0.0
        %2486 = vmatprep.subr.mxu0 0.0
        %2487 = vmatpush2.msra.mxu0 0.0
        %2488 = vmatprep.subr.mxu0 0.0
        %2489 = vmatpush2.msra.mxu0 0.0
        %2490 = vmatprep.subr.mxu0 0.0
        %2491 = vmatpush2.msra.mxu0 0.0
        %2492 = vmatprep.subr.mxu0 0.0
        %2493 = vmatpush2.msra.mxu0 0.0
        %2494 = vmatprep.subr.mxu0 0.0
        %2495 = vmatpush2.msra.mxu0 0.0
        %2496 = vmatprep.subr.mxu0 0.0
        %2497 = vmatpush2.msra.mxu0 0.0
        %2498 = vmatprep.subr.mxu0 0.0
        %2499 = vmatpush2.msra.mxu0 0.0
        %2500 = vmatprep.subr.mxu0 0.0
        %2501 = vmatpush2.msra.mxu0 0.0
        %2502 = vmatprep.subr.mxu0 0.0
        %2503 = vmatpush2.msra.mxu0 0.0
        %2504 = vmatprep.mubr.f32.mxu0 0.0
        %v2505 = vand.u32 %v2115, 4294901760
        %2506 = vmatmul.mubr.f32.gmra.mxu0 %v2505
        %v2507 = vpop.f32.mrf.mxu0
        %v2508 = vadd.f32 %v2430, %v2507
        %v2509 = vpop.f32.mrf.mxu0
        %v2510 = vadd.f32 %v2432, %v2509
        %2511 = vdwg.mxu0
        %2512 = vmatprep.subr.mxu0 0.0
        %2513 = vmatpush1.msra.mxu0 0.0
        %2514 = vmatprep.subr.mxu0 0.0
        %2515 = vmatpush1.msra.mxu0 0.0
        %2516 = vmatprep.subr.mxu0 0.0
        %2517 = vmatpush1.msra.mxu0 0.0
        %2518 = vmatprep.subr.mxu0 0.0
        %2519 = vmatpush1.msra.mxu0 0.0
        %2520 = vmatprep.subr.mxu0 0.0
        %2521 = vmatpush1.msra.mxu0 0.0
        %2522 = vmatprep.subr.mxu0 0.0
        %2523 = vmatpush1.msra.mxu0 0.0
        %2524 = vmatprep.subr.mxu0 0.0
        %2525 = vmatpush1.msra.mxu0 0.0
        %2526 = vmatprep.subr.mxu0 0.0
        %2527 = vmatpush1.msra.mxu0 0.0
        %2528 = vmatprep.subr.mxu0 0.0
        %2529 = vmatpush1.msra.mxu0 0.0
        %2530 = vmatprep.subr.mxu0 0.0
        %2531 = vmatpush1.msra.mxu0 0.0
        %2532 = vmatprep.subr.mxu0 0.0
        %2533 = vmatpush1.msra.mxu0 0.0
        %2534 = vmatprep.subr.mxu0 0.0
        %2535 = vmatpush1.msra.mxu0 0.0
        %2536 = vmatprep.subr.mxu0 0.0
        %2537 = vmatpush1.msra.mxu0 0.0
        %2538 = vmatprep.subr.mxu0 0.0
        %2539 = vmatpush1.msra.mxu0 0.0
        %2540 = vmatprep.subr.mxu0 0.0
        %2541 = vmatpush1.msra.mxu0 0.0
        %v2542 = vand.u32 %v2119, 4294901760
        %2543 = vmatprep.subr.mxu0 %v2542
        %v2544 = vand.u32 %v2117, 4294901760
        %2545 = vmatpush1.msra.mxu0 %v2544
        %2546 = vmatprep.subr.mxu0 0.0
        %2547 = vmatpush2.msra.mxu0 0.0
        %2548 = vmatprep.subr.mxu0 0.0
        %2549 = vmatpush2.msra.mxu0 0.0
        %2550 = vmatprep.subr.mxu0 0.0
        %2551 = vmatpush2.msra.mxu0 0.0
        %2552 = vmatprep.subr.mxu0 0.0
        %2553 = vmatpush2.msra.mxu0 0.0
        %2554 = vmatprep.subr.mxu0 0.0
        %2555 = vmatpush2.msra.mxu0 0.0
        %2556 = vmatprep.subr.mxu0 0.0
        %2557 = vmatpush2.msra.mxu0 0.0
        %2558 = vmatprep.subr.mxu0 0.0
        %2559 = vmatpush2.msra.mxu0 0.0
        %2560 = vmatprep.subr.mxu0 0.0
        %2561 = vmatpush2.msra.mxu0 0.0
        %2562 = vmatprep.subr.mxu0 0.0
        %2563 = vmatpush2.msra.mxu0 0.0
        %2564 = vmatprep.subr.mxu0 0.0
        %2565 = vmatpush2.msra.mxu0 0.0
        %2566 = vmatprep.subr.mxu0 0.0
        %2567 = vmatpush2.msra.mxu0 0.0
        %2568 = vmatprep.subr.mxu0 0.0
        %2569 = vmatpush2.msra.mxu0 0.0
        %2570 = vmatprep.subr.mxu0 0.0
        %2571 = vmatpush2.msra.mxu0 0.0
        %2572 = vmatprep.subr.mxu0 0.0
        %2573 = vmatpush2.msra.mxu0 0.0
        %2574 = vmatprep.subr.mxu0 0.0
        %2575 = vmatpush2.msra.mxu0 0.0
        %2576 = vmatprep.subr.mxu0 0.0
        %2577 = vmatpush2.msra.mxu0 0.0
        %2578 = vmatprep.mubr.f32.mxu0 0.0
        %v2579 = vand.u32 %v2115, 4294901760
        %2580 = vmatmul.mubr.f32.gmra.mxu0 %v2579
        %v2581 = vpop.f32.mrf.mxu0
        %v2582 = vadd.f32 %v2508, %v2581
        %v2583 = vpop.f32.mrf.mxu0
        %v2584 = vadd.f32 %v2510, %v2583
        %2585 = vdwg.mxu0
        %2589 = vrot.lane.b32.xlu0 %v2096, 17
        %v2590 = vpop.permute.xlu0 %2589
        %2591 = vrot.lane.b32.xlu0 %v2097, 17
        %v2592 = vpop.permute.xlu0 %2591
        %2593 = vrot.lane.b32.xlu0 %v2098, 17
        %v2594 = vpop.permute.xlu0 %2593
        %vm2595 = vcmask 138240
        %v2596 = vsel %vm2595, %v2590, %v2592
        %v2597 = vsel %vm2595, %v2592, %v2594
        %v2599 = vsel %vm607, %v2099, 0
        %v2601 = vsel %vm611, %v2596, 0
        %v2603 = vsel %vm611, %v2597, 0
        %2605 = vmatprep.subr.mxu0 0.0
        %2606 = vmatpush1.msra.mxu0 0.0
        %2607 = vmatprep.subr.mxu0 0.0
        %2608 = vmatpush1.msra.mxu0 0.0
        %2609 = vmatprep.subr.mxu0 0.0
        %2610 = vmatpush1.msra.mxu0 0.0
        %2611 = vmatprep.subr.mxu0 0.0
        %2612 = vmatpush1.msra.mxu0 0.0
        %2613 = vmatprep.subr.mxu0 0.0
        %2614 = vmatpush1.msra.mxu0 0.0
        %2615 = vmatprep.subr.mxu0 0.0
        %2616 = vmatpush1.msra.mxu0 0.0
        %2617 = vmatprep.subr.mxu0 0.0
        %2618 = vmatpush1.msra.mxu0 0.0
        %2619 = vmatprep.subr.mxu0 0.0
        %2620 = vmatpush1.msra.mxu0 0.0
        %2621 = vmatprep.subr.mxu0 0.0
        %2622 = vmatpush1.msra.mxu0 0.0
        %2623 = vmatprep.subr.mxu0 0.0
        %2624 = vmatpush1.msra.mxu0 0.0
        %2625 = vmatprep.subr.mxu0 0.0
        %2626 = vmatpush1.msra.mxu0 0.0
        %2627 = vmatprep.subr.mxu0 0.0
        %2628 = vmatpush1.msra.mxu0 0.0
        %2629 = vmatprep.subr.mxu0 0.0
        %2630 = vmatpush1.msra.mxu0 0.0
        %2631 = vmatprep.subr.mxu0 0.0
        %2632 = vmatpush1.msra.mxu0 0.0
        %2633 = vmatprep.subr.mxu0 0.0
        %2634 = vmatpush1.msra.mxu0 0.0
        %v2635 = vand.u32 %v2603, 4294901760
        %2636 = vmatprep.subr.mxu0 %v2635
        %v2637 = vand.u32 %v2601, 4294901760
        %2638 = vmatpush1.msra.mxu0 %v2637
        %2639 = vmatprep.subr.mxu0 0.0
        %2640 = vmatpush2.msra.mxu0 0.0
        %2641 = vmatprep.subr.mxu0 0.0
        %2642 = vmatpush2.msra.mxu0 0.0
        %2643 = vmatprep.subr.mxu0 0.0
        %2644 = vmatpush2.msra.mxu0 0.0
        %2645 = vmatprep.subr.mxu0 0.0
        %2646 = vmatpush2.msra.mxu0 0.0
        %2647 = vmatprep.subr.mxu0 0.0
        %2648 = vmatpush2.msra.mxu0 0.0
        %2649 = vmatprep.subr.mxu0 0.0
        %2650 = vmatpush2.msra.mxu0 0.0
        %2651 = vmatprep.subr.mxu0 0.0
        %2652 = vmatpush2.msra.mxu0 0.0
        %2653 = vmatprep.subr.mxu0 0.0
        %2654 = vmatpush2.msra.mxu0 0.0
        %2655 = vmatprep.subr.mxu0 0.0
        %2656 = vmatpush2.msra.mxu0 0.0
        %2657 = vmatprep.subr.mxu0 0.0
        %2658 = vmatpush2.msra.mxu0 0.0
        %2659 = vmatprep.subr.mxu0 0.0
        %2660 = vmatpush2.msra.mxu0 0.0
        %2661 = vmatprep.subr.mxu0 0.0
        %2662 = vmatpush2.msra.mxu0 0.0
        %2663 = vmatprep.subr.mxu0 0.0
        %2664 = vmatpush2.msra.mxu0 0.0
        %2665 = vmatprep.subr.mxu0 0.0
        %2666 = vmatpush2.msra.mxu0 0.0
        %2667 = vmatprep.subr.mxu0 0.0
        %2668 = vmatpush2.msra.mxu0 0.0
        %2669 = vmatprep.subr.mxu0 0.0
        %2670 = vmatpush2.msra.mxu0 0.0
        %2671 = vmatprep.mubr.f32.mxu0 0.0
        %v2672 = vand.u32 %v2599, 4294901760
        %v2673 = vsub.f32 %v2599, %v2672
        %v2674 = vand.u32 %v2673, 4294901760
        %v2675 = vsub.f32 %v2673, %v2674
        %v2676 = vand.u32 %v2675, 4294901760
        %2677 = vmatmul.mubr.f32.gmra.mxu0 %v2676
        %v2678 = vpop.f32.mrf.mxu0
        %v2679 = vadd.f32 %v2582, %v2678
        %v2680 = vpop.f32.mrf.mxu0
        %v2681 = vadd.f32 %v2584, %v2680
        %2682 = vdwg.mxu0
        %2683 = vmatprep.subr.mxu0 0.0
        %2684 = vmatpush1.msra.mxu0 0.0
        %2685 = vmatprep.subr.mxu0 0.0
        %2686 = vmatpush1.msra.mxu0 0.0
        %2687 = vmatprep.subr.mxu0 0.0
        %2688 = vmatpush1.msra.mxu0 0.0
        %2689 = vmatprep.subr.mxu0 0.0
        %2690 = vmatpush1.msra.mxu0 0.0
        %2691 = vmatprep.subr.mxu0 0.0
        %2692 = vmatpush1.msra.mxu0 0.0
        %2693 = vmatprep.subr.mxu0 0.0
        %2694 = vmatpush1.msra.mxu0 0.0
        %2695 = vmatprep.subr.mxu0 0.0
        %2696 = vmatpush1.msra.mxu0 0.0
        %2697 = vmatprep.subr.mxu0 0.0
        %2698 = vmatpush1.msra.mxu0 0.0
        %2699 = vmatprep.subr.mxu0 0.0
        %2700 = vmatpush1.msra.mxu0 0.0
        %2701 = vmatprep.subr.mxu0 0.0
        %2702 = vmatpush1.msra.mxu0 0.0
        %2703 = vmatprep.subr.mxu0 0.0
        %2704 = vmatpush1.msra.mxu0 0.0
        %2705 = vmatprep.subr.mxu0 0.0
        %2706 = vmatpush1.msra.mxu0 0.0
        %2707 = vmatprep.subr.mxu0 0.0
        %2708 = vmatpush1.msra.mxu0 0.0
        %2709 = vmatprep.subr.mxu0 0.0
        %2710 = vmatpush1.msra.mxu0 0.0
        %2711 = vmatprep.subr.mxu0 0.0
        %2712 = vmatpush1.msra.mxu0 0.0
        %v2713 = vand.u32 %v2603, 4294901760
        %v2714 = vsub.f32 %v2603, %v2713
        %v2715 = vand.u32 %v2714, 4294901760
        %v2716 = vsub.f32 %v2714, %v2715
        %v2717 = vand.u32 %v2716, 4294901760
        %2718 = vmatprep.subr.mxu0 %v2717
        %v2719 = vand.u32 %v2601, 4294901760
        %v2720 = vsub.f32 %v2601, %v2719
        %v2721 = vand.u32 %v2720, 4294901760
        %v2722 = vsub.f32 %v2720, %v2721
        %v2723 = vand.u32 %v2722, 4294901760
        %2724 = vmatpush1.msra.mxu0 %v2723
        %2725 = vmatprep.subr.mxu0 0.0
        %2726 = vmatpush2.msra.mxu0 0.0
        %2727 = vmatprep.subr.mxu0 0.0
        %2728 = vmatpush2.msra.mxu0 0.0
        %2729 = vmatprep.subr.mxu0 0.0
        %2730 = vmatpush2.msra.mxu0 0.0
        %2731 = vmatprep.subr.mxu0 0.0
        %2732 = vmatpush2.msra.mxu0 0.0
        %2733 = vmatprep.subr.mxu0 0.0
        %2734 = vmatpush2.msra.mxu0 0.0
        %2735 = vmatprep.subr.mxu0 0.0
        %2736 = vmatpush2.msra.mxu0 0.0
        %2737 = vmatprep.subr.mxu0 0.0
        %2738 = vmatpush2.msra.mxu0 0.0
        %2739 = vmatprep.subr.mxu0 0.0
        %2740 = vmatpush2.msra.mxu0 0.0
        %2741 = vmatprep.subr.mxu0 0.0
        %2742 = vmatpush2.msra.mxu0 0.0
        %2743 = vmatprep.subr.mxu0 0.0
        %2744 = vmatpush2.msra.mxu0 0.0
        %2745 = vmatprep.subr.mxu0 0.0
        %2746 = vmatpush2.msra.mxu0 0.0
        %2747 = vmatprep.subr.mxu0 0.0
        %2748 = vmatpush2.msra.mxu0 0.0
        %2749 = vmatprep.subr.mxu0 0.0
        %2750 = vmatpush2.msra.mxu0 0.0
        %2751 = vmatprep.subr.mxu0 0.0
        %2752 = vmatpush2.msra.mxu0 0.0
        %2753 = vmatprep.subr.mxu0 0.0
        %2754 = vmatpush2.msra.mxu0 0.0
        %2755 = vmatprep.subr.mxu0 0.0
        %2756 = vmatpush2.msra.mxu0 0.0
        %2757 = vmatprep.mubr.f32.mxu0 0.0
        %v2758 = vand.u32 %v2599, 4294901760
        %2759 = vmatmul.mubr.f32.gmra.mxu0 %v2758
        %v2760 = vpop.f32.mrf.mxu0
        %v2761 = vadd.f32 %v2679, %v2760
        %v2762 = vpop.f32.mrf.mxu0
        %v2763 = vadd.f32 %v2681, %v2762
        %2764 = vdwg.mxu0
        %2765 = vmatprep.subr.mxu0 0.0
        %2766 = vmatpush1.msra.mxu0 0.0
        %2767 = vmatprep.subr.mxu0 0.0
        %2768 = vmatpush1.msra.mxu0 0.0
        %2769 = vmatprep.subr.mxu0 0.0
        %2770 = vmatpush1.msra.mxu0 0.0
        %2771 = vmatprep.subr.mxu0 0.0
        %2772 = vmatpush1.msra.mxu0 0.0
        %2773 = vmatprep.subr.mxu0 0.0
        %2774 = vmatpush1.msra.mxu0 0.0
        %2775 = vmatprep.subr.mxu0 0.0
        %2776 = vmatpush1.msra.mxu0 0.0
        %2777 = vmatprep.subr.mxu0 0.0
        %2778 = vmatpush1.msra.mxu0 0.0
        %2779 = vmatprep.subr.mxu0 0.0
        %2780 = vmatpush1.msra.mxu0 0.0
        %2781 = vmatprep.subr.mxu0 0.0
        %2782 = vmatpush1.msra.mxu0 0.0
        %2783 = vmatprep.subr.mxu0 0.0
        %2784 = vmatpush1.msra.mxu0 0.0
        %2785 = vmatprep.subr.mxu0 0.0
        %2786 = vmatpush1.msra.mxu0 0.0
        %2787 = vmatprep.subr.mxu0 0.0
        %2788 = vmatpush1.msra.mxu0 0.0
        %2789 = vmatprep.subr.mxu0 0.0
        %2790 = vmatpush1.msra.mxu0 0.0
        %2791 = vmatprep.subr.mxu0 0.0
        %2792 = vmatpush1.msra.mxu0 0.0
        %2793 = vmatprep.subr.mxu0 0.0
        %2794 = vmatpush1.msra.mxu0 0.0
        %v2795 = vand.u32 %v2603, 4294901760
        %v2796 = vsub.f32 %v2603, %v2795
        %2797 = vmatprep.subr.mxu0 %v2796
        %v2798 = vand.u32 %v2601, 4294901760
        %v2799 = vsub.f32 %v2601, %v2798
        %2800 = vmatpush1.msra.mxu0 %v2799
        %2801 = vmatprep.subr.mxu0 0.0
        %2802 = vmatpush2.msra.mxu0 0.0
        %2803 = vmatprep.subr.mxu0 0.0
        %2804 = vmatpush2.msra.mxu0 0.0
        %2805 = vmatprep.subr.mxu0 0.0
        %2806 = vmatpush2.msra.mxu0 0.0
        %2807 = vmatprep.subr.mxu0 0.0
        %2808 = vmatpush2.msra.mxu0 0.0
        %2809 = vmatprep.subr.mxu0 0.0
        %2810 = vmatpush2.msra.mxu0 0.0
        %2811 = vmatprep.subr.mxu0 0.0
        %2812 = vmatpush2.msra.mxu0 0.0
        %2813 = vmatprep.subr.mxu0 0.0
        %2814 = vmatpush2.msra.mxu0 0.0
        %2815 = vmatprep.subr.mxu0 0.0
        %2816 = vmatpush2.msra.mxu0 0.0
        %2817 = vmatprep.subr.mxu0 0.0
        %2818 = vmatpush2.msra.mxu0 0.0
        %2819 = vmatprep.subr.mxu0 0.0
        %2820 = vmatpush2.msra.mxu0 0.0
        %2821 = vmatprep.subr.mxu0 0.0
        %2822 = vmatpush2.msra.mxu0 0.0
        %2823 = vmatprep.subr.mxu0 0.0
        %2824 = vmatpush2.msra.mxu0 0.0
        %2825 = vmatprep.subr.mxu0 0.0
        %2826 = vmatpush2.msra.mxu0 0.0
        %2827 = vmatprep.subr.mxu0 0.0
        %2828 = vmatpush2.msra.mxu0 0.0
        %2829 = vmatprep.subr.mxu0 0.0
        %2830 = vmatpush2.msra.mxu0 0.0
        %2831 = vmatprep.subr.mxu0 0.0
        %2832 = vmatpush2.msra.mxu0 0.0
        %2833 = vmatprep.mubr.f32.mxu0 0.0
        %v2834 = vand.u32 %v2599, 4294901760
        %v2835 = vsub.f32 %v2599, %v2834
        %2836 = vmatmul.mubr.f32.gmra.mxu0 %v2835
        %v2837 = vpop.f32.mrf.mxu0
        %v2838 = vadd.f32 %v2761, %v2837
        %v2839 = vpop.f32.mrf.mxu0
        %v2840 = vadd.f32 %v2763, %v2839
        %2841 = vdwg.mxu0
        %2842 = vmatprep.subr.mxu0 0.0
        %2843 = vmatpush1.msra.mxu0 0.0
        %2844 = vmatprep.subr.mxu0 0.0
        %2845 = vmatpush1.msra.mxu0 0.0
        %2846 = vmatprep.subr.mxu0 0.0
        %2847 = vmatpush1.msra.mxu0 0.0
        %2848 = vmatprep.subr.mxu0 0.0
        %2849 = vmatpush1.msra.mxu0 0.0
        %2850 = vmatprep.subr.mxu0 0.0
        %2851 = vmatpush1.msra.mxu0 0.0
        %2852 = vmatprep.subr.mxu0 0.0
        %2853 = vmatpush1.msra.mxu0 0.0
        %2854 = vmatprep.subr.mxu0 0.0
        %2855 = vmatpush1.msra.mxu0 0.0
        %2856 = vmatprep.subr.mxu0 0.0
        %2857 = vmatpush1.msra.mxu0 0.0
        %2858 = vmatprep.subr.mxu0 0.0
        %2859 = vmatpush1.msra.mxu0 0.0
        %2860 = vmatprep.subr.mxu0 0.0
        %2861 = vmatpush1.msra.mxu0 0.0
        %2862 = vmatprep.subr.mxu0 0.0
        %2863 = vmatpush1.msra.mxu0 0.0
        %2864 = vmatprep.subr.mxu0 0.0
        %2865 = vmatpush1.msra.mxu0 0.0
        %2866 = vmatprep.subr.mxu0 0.0
        %2867 = vmatpush1.msra.mxu0 0.0
        %2868 = vmatprep.subr.mxu0 0.0
        %2869 = vmatpush1.msra.mxu0 0.0
        %2870 = vmatprep.subr.mxu0 0.0
        %2871 = vmatpush1.msra.mxu0 0.0
        %v2872 = vand.u32 %v2603, 4294901760
        %2873 = vmatprep.subr.mxu0 %v2872
        %v2874 = vand.u32 %v2601, 4294901760
        %2875 = vmatpush1.msra.mxu0 %v2874
        %2876 = vmatprep.subr.mxu0 0.0
        %2877 = vmatpush2.msra.mxu0 0.0
        %2878 = vmatprep.subr.mxu0 0.0
        %2879 = vmatpush2.msra.mxu0 0.0
        %2880 = vmatprep.subr.mxu0 0.0
        %2881 = vmatpush2.msra.mxu0 0.0
        %2882 = vmatprep.subr.mxu0 0.0
        %2883 = vmatpush2.msra.mxu0 0.0
        %2884 = vmatprep.subr.mxu0 0.0
        %2885 = vmatpush2.msra.mxu0 0.0
        %2886 = vmatprep.subr.mxu0 0.0
        %2887 = vmatpush2.msra.mxu0 0.0
        %2888 = vmatprep.subr.mxu0 0.0
        %2889 = vmatpush2.msra.mxu0 0.0
        %2890 = vmatprep.subr.mxu0 0.0
        %2891 = vmatpush2.msra.mxu0 0.0
        %2892 = vmatprep.subr.mxu0 0.0
        %2893 = vmatpush2.msra.mxu0 0.0
        %2894 = vmatprep.subr.mxu0 0.0
        %2895 = vmatpush2.msra.mxu0 0.0
        %2896 = vmatprep.subr.mxu0 0.0
        %2897 = vmatpush2.msra.mxu0 0.0
        %2898 = vmatprep.subr.mxu0 0.0
        %2899 = vmatpush2.msra.mxu0 0.0
        %2900 = vmatprep.subr.mxu0 0.0
        %2901 = vmatpush2.msra.mxu0 0.0
        %2902 = vmatprep.subr.mxu0 0.0
        %2903 = vmatpush2.msra.mxu0 0.0
        %2904 = vmatprep.subr.mxu0 0.0
        %2905 = vmatpush2.msra.mxu0 0.0
        %2906 = vmatprep.subr.mxu0 0.0
        %2907 = vmatpush2.msra.mxu0 0.0
        %2908 = vmatprep.mubr.f32.mxu0 0.0
        %v2909 = vand.u32 %v2599, 4294901760
        %v2910 = vsub.f32 %v2599, %v2909
        %v2911 = vand.u32 %v2910, 4294901760
        %2912 = vmatmul.mubr.f32.gmra.mxu0 %v2911
        %v2913 = vpop.f32.mrf.mxu0
        %v2914 = vadd.f32 %v2838, %v2913
        %v2915 = vpop.f32.mrf.mxu0
        %v2916 = vadd.f32 %v2840, %v2915
        %2917 = vdwg.mxu0
        %2918 = vmatprep.subr.mxu0 0.0
        %2919 = vmatpush1.msra.mxu0 0.0
        %2920 = vmatprep.subr.mxu0 0.0
        %2921 = vmatpush1.msra.mxu0 0.0
        %2922 = vmatprep.subr.mxu0 0.0
        %2923 = vmatpush1.msra.mxu0 0.0
        %2924 = vmatprep.subr.mxu0 0.0
        %2925 = vmatpush1.msra.mxu0 0.0
        %2926 = vmatprep.subr.mxu0 0.0
        %2927 = vmatpush1.msra.mxu0 0.0
        %2928 = vmatprep.subr.mxu0 0.0
        %2929 = vmatpush1.msra.mxu0 0.0
        %2930 = vmatprep.subr.mxu0 0.0
        %2931 = vmatpush1.msra.mxu0 0.0
        %2932 = vmatprep.subr.mxu0 0.0
        %2933 = vmatpush1.msra.mxu0 0.0
        %2934 = vmatprep.subr.mxu0 0.0
        %2935 = vmatpush1.msra.mxu0 0.0
        %2936 = vmatprep.subr.mxu0 0.0
        %2937 = vmatpush1.msra.mxu0 0.0
        %2938 = vmatprep.subr.mxu0 0.0
        %2939 = vmatpush1.msra.mxu0 0.0
        %2940 = vmatprep.subr.mxu0 0.0
        %2941 = vmatpush1.msra.mxu0 0.0
        %2942 = vmatprep.subr.mxu0 0.0
        %2943 = vmatpush1.msra.mxu0 0.0
        %2944 = vmatprep.subr.mxu0 0.0
        %2945 = vmatpush1.msra.mxu0 0.0
        %2946 = vmatprep.subr.mxu0 0.0
        %2947 = vmatpush1.msra.mxu0 0.0
        %v2948 = vand.u32 %v2603, 4294901760
        %v2949 = vsub.f32 %v2603, %v2948
        %v2950 = vand.u32 %v2949, 4294901760
        %2951 = vmatprep.subr.mxu0 %v2950
        %v2952 = vand.u32 %v2601, 4294901760
        %v2953 = vsub.f32 %v2601, %v2952
        %v2954 = vand.u32 %v2953, 4294901760
        %2955 = vmatpush1.msra.mxu0 %v2954
        %2956 = vmatprep.subr.mxu0 0.0
        %2957 = vmatpush2.msra.mxu0 0.0
        %2958 = vmatprep.subr.mxu0 0.0
        %2959 = vmatpush2.msra.mxu0 0.0
        %2960 = vmatprep.subr.mxu0 0.0
        %2961 = vmatpush2.msra.mxu0 0.0
        %2962 = vmatprep.subr.mxu0 0.0
        %2963 = vmatpush2.msra.mxu0 0.0
        %2964 = vmatprep.subr.mxu0 0.0
        %2965 = vmatpush2.msra.mxu0 0.0
        %2966 = vmatprep.subr.mxu0 0.0
        %2967 = vmatpush2.msra.mxu0 0.0
        %2968 = vmatprep.subr.mxu0 0.0
        %2969 = vmatpush2.msra.mxu0 0.0
        %2970 = vmatprep.subr.mxu0 0.0
        %2971 = vmatpush2.msra.mxu0 0.0
        %2972 = vmatprep.subr.mxu0 0.0
        %2973 = vmatpush2.msra.mxu0 0.0
        %2974 = vmatprep.subr.mxu0 0.0
        %2975 = vmatpush2.msra.mxu0 0.0
        %2976 = vmatprep.subr.mxu0 0.0
        %2977 = vmatpush2.msra.mxu0 0.0
        %2978 = vmatprep.subr.mxu0 0.0
        %2979 = vmatpush2.msra.mxu0 0.0
        %2980 = vmatprep.subr.mxu0 0.0
        %2981 = vmatpush2.msra.mxu0 0.0
        %2982 = vmatprep.subr.mxu0 0.0
        %2983 = vmatpush2.msra.mxu0 0.0
        %2984 = vmatprep.subr.mxu0 0.0
        %2985 = vmatpush2.msra.mxu0 0.0
        %2986 = vmatprep.subr.mxu0 0.0
        %2987 = vmatpush2.msra.mxu0 0.0
        %2988 = vmatprep.mubr.f32.mxu0 0.0
        %v2989 = vand.u32 %v2599, 4294901760
        %2990 = vmatmul.mubr.f32.gmra.mxu0 %v2989
        %v2991 = vpop.f32.mrf.mxu0
        %v2992 = vadd.f32 %v2914, %v2991
        %v2993 = vpop.f32.mrf.mxu0
        %v2994 = vadd.f32 %v2916, %v2993
        %2995 = vdwg.mxu0
        %2996 = vmatprep.subr.mxu0 0.0
        %2997 = vmatpush1.msra.mxu0 0.0
        %2998 = vmatprep.subr.mxu0 0.0
        %2999 = vmatpush1.msra.mxu0 0.0
        %3000 = vmatprep.subr.mxu0 0.0
        %3001 = vmatpush1.msra.mxu0 0.0
        %3002 = vmatprep.subr.mxu0 0.0
        %3003 = vmatpush1.msra.mxu0 0.0
        %3004 = vmatprep.subr.mxu0 0.0
        %3005 = vmatpush1.msra.mxu0 0.0
        %3006 = vmatprep.subr.mxu0 0.0
        %3007 = vmatpush1.msra.mxu0 0.0
        %3008 = vmatprep.subr.mxu0 0.0
        %3009 = vmatpush1.msra.mxu0 0.0
        %3010 = vmatprep.subr.mxu0 0.0
        %3011 = vmatpush1.msra.mxu0 0.0
        %3012 = vmatprep.subr.mxu0 0.0
        %3013 = vmatpush1.msra.mxu0 0.0
        %3014 = vmatprep.subr.mxu0 0.0
        %3015 = vmatpush1.msra.mxu0 0.0
        %3016 = vmatprep.subr.mxu0 0.0
        %3017 = vmatpush1.msra.mxu0 0.0
        %3018 = vmatprep.subr.mxu0 0.0
        %3019 = vmatpush1.msra.mxu0 0.0
        %3020 = vmatprep.subr.mxu0 0.0
        %3021 = vmatpush1.msra.mxu0 0.0
        %3022 = vmatprep.subr.mxu0 0.0
        %3023 = vmatpush1.msra.mxu0 0.0
        %3024 = vmatprep.subr.mxu0 0.0
        %3025 = vmatpush1.msra.mxu0 0.0
        %v3026 = vand.u32 %v2603, 4294901760
        %3027 = vmatprep.subr.mxu0 %v3026
        %v3028 = vand.u32 %v2601, 4294901760
        %3029 = vmatpush1.msra.mxu0 %v3028
        %3030 = vmatprep.subr.mxu0 0.0
        %3031 = vmatpush2.msra.mxu0 0.0
        %3032 = vmatprep.subr.mxu0 0.0
        %3033 = vmatpush2.msra.mxu0 0.0
        %3034 = vmatprep.subr.mxu0 0.0
        %3035 = vmatpush2.msra.mxu0 0.0
        %3036 = vmatprep.subr.mxu0 0.0
        %3037 = vmatpush2.msra.mxu0 0.0
        %3038 = vmatprep.subr.mxu0 0.0
        %3039 = vmatpush2.msra.mxu0 0.0
        %3040 = vmatprep.subr.mxu0 0.0
        %3041 = vmatpush2.msra.mxu0 0.0
        %3042 = vmatprep.subr.mxu0 0.0
        %3043 = vmatpush2.msra.mxu0 0.0
        %3044 = vmatprep.subr.mxu0 0.0
        %3045 = vmatpush2.msra.mxu0 0.0
        %3046 = vmatprep.subr.mxu0 0.0
        %3047 = vmatpush2.msra.mxu0 0.0
        %3048 = vmatprep.subr.mxu0 0.0
        %3049 = vmatpush2.msra.mxu0 0.0
        %3050 = vmatprep.subr.mxu0 0.0
        %3051 = vmatpush2.msra.mxu0 0.0
        %3052 = vmatprep.subr.mxu0 0.0
        %3053 = vmatpush2.msra.mxu0 0.0
        %3054 = vmatprep.subr.mxu0 0.0
        %3055 = vmatpush2.msra.mxu0 0.0
        %3056 = vmatprep.subr.mxu0 0.0
        %3057 = vmatpush2.msra.mxu0 0.0
        %3058 = vmatprep.subr.mxu0 0.0
        %3059 = vmatpush2.msra.mxu0 0.0
        %3060 = vmatprep.subr.mxu0 0.0
        %3061 = vmatpush2.msra.mxu0 0.0
        %3062 = vmatprep.mubr.f32.mxu0 0.0
        %v3063 = vand.u32 %v2599, 4294901760
        %3064 = vmatmul.mubr.f32.gmra.mxu0 %v3063
        %v3065 = vpop.f32.mrf.mxu0
        %v3066 = vadd.f32 %v2992, %v3065
        %v3067 = vpop.f32.mrf.mxu0
        %v3068 = vadd.f32 %v2994, %v3067
        %3069 = vdwg.mxu0
        %v3070 = vld [vmem:[%s18] sm:$0x3]
        %v3072 = vlaneseq
        %v3073 = vshrl.u32 %v3072, 7
        %v3074 = vsub.s32 0, %v3073
        %v3075 = vrot.slane %v3070, %v3074
        %v3076 = vlaneseq
        %v3077 = vshrl.u32 %v3076, 7
        %v3078 = vsub.s32 1, %v3077
        %v3079 = vrot.slane %v3070, %v3078
        %3080 = vrot.lane.b32.xlu0 %v3075, 113
        %v3081 = vpop.permute.xlu0 %3080
        %3082 = vrot.lane.b32.xlu0 %v3079, 113
        %v3083 = vpop.permute.xlu0 %3082
        %vm3084 = vcmask 924672
        %v3085 = vsel %vm3084, %v3081, %v3083
        %v3089 = vmul.f32 %v3081, 0.0
        %v3090 = vmul.f32 %v2075, %v3085
        %v3091 = vmul.f32 %v2076, %v3083
        %s3092 = scalar_lea.vmem %s4, 8
        %v3093 = vld [vmem:[%s3092] sm:$0xf]
        %3097 = vrot.lane.b32.xlu0 %v3089, 15
        %v3098 = vpop.permute.xlu0 %3097
        %3099 = vrot.lane.b32.xlu0 %v3090, 15
        %v3100 = vpop.permute.xlu0 %3099
        %3101 = vrot.lane.b32.xlu0 %v3091, 15
        %v3102 = vpop.permute.xlu0 %3101
        %vm3103 = vcmask 121856
        %v3104 = vsel %vm3103, %v3098, %v3100
        %v3105 = vsel %vm3103, %v3100, %v3102
        %v3107 = vsel %vm607, %v3093, 0
        %v3109 = vsel %vm611, %v3104, 0
        %v3111 = vsel %vm611, %v3105, 0
        %3113 = vmatprep.subr.mxu0 0.0
        %3114 = vmatpush1.msra.mxu0 0.0
        %3115 = vmatprep.subr.mxu0 0.0
        %3116 = vmatpush1.msra.mxu0 0.0
        %3117 = vmatprep.subr.mxu0 0.0
        %3118 = vmatpush1.msra.mxu0 0.0
        %3119 = vmatprep.subr.mxu0 0.0
        %3120 = vmatpush1.msra.mxu0 0.0
        %3121 = vmatprep.subr.mxu0 0.0
        %3122 = vmatpush1.msra.mxu0 0.0
        %3123 = vmatprep.subr.mxu0 0.0
        %3124 = vmatpush1.msra.mxu0 0.0
        %3125 = vmatprep.subr.mxu0 0.0
        %3126 = vmatpush1.msra.mxu0 0.0
        %3127 = vmatprep.subr.mxu0 0.0
        %3128 = vmatpush1.msra.mxu0 0.0
        %3129 = vmatprep.subr.mxu0 0.0
        %3130 = vmatpush1.msra.mxu0 0.0
        %3131 = vmatprep.subr.mxu0 0.0
        %3132 = vmatpush1.msra.mxu0 0.0
        %3133 = vmatprep.subr.mxu0 0.0
        %3134 = vmatpush1.msra.mxu0 0.0
        %3135 = vmatprep.subr.mxu0 0.0
        %3136 = vmatpush1.msra.mxu0 0.0
        %3137 = vmatprep.subr.mxu0 0.0
        %3138 = vmatpush1.msra.mxu0 0.0
        %3139 = vmatprep.subr.mxu0 0.0
        %3140 = vmatpush1.msra.mxu0 0.0
        %3141 = vmatprep.subr.mxu0 0.0
        %3142 = vmatpush1.msra.mxu0 0.0
        %v3143 = vand.u32 %v3111, 4294901760
        %3144 = vmatprep.subr.mxu0 %v3143
        %v3145 = vand.u32 %v3109, 4294901760
        %3146 = vmatpush1.msra.mxu0 %v3145
        %3147 = vmatprep.subr.mxu0 0.0
        %3148 = vmatpush2.msra.mxu0 0.0
        %3149 = vmatprep.subr.mxu0 0.0
        %3150 = vmatpush2.msra.mxu0 0.0
        %3151 = vmatprep.subr.mxu0 0.0
        %3152 = vmatpush2.msra.mxu0 0.0
        %3153 = vmatprep.subr.mxu0 0.0
        %3154 = vmatpush2.msra.mxu0 0.0
        %3155 = vmatprep.subr.mxu0 0.0
        %3156 = vmatpush2.msra.mxu0 0.0
        %3157 = vmatprep.subr.mxu0 0.0
        %3158 = vmatpush2.msra.mxu0 0.0
        %3159 = vmatprep.subr.mxu0 0.0
        %3160 = vmatpush2.msra.mxu0 0.0
        %3161 = vmatprep.subr.mxu0 0.0
        %3162 = vmatpush2.msra.mxu0 0.0
        %3163 = vmatprep.subr.mxu0 0.0
        %3164 = vmatpush2.msra.mxu0 0.0
        %3165 = vmatprep.subr.mxu0 0.0
        %3166 = vmatpush2.msra.mxu0 0.0
        %3167 = vmatprep.subr.mxu0 0.0
        %3168 = vmatpush2.msra.mxu0 0.0
        %3169 = vmatprep.subr.mxu0 0.0
        %3170 = vmatpush2.msra.mxu0 0.0
        %3171 = vmatprep.subr.mxu0 0.0
        %3172 = vmatpush2.msra.mxu0 0.0
        %3173 = vmatprep.subr.mxu0 0.0
        %3174 = vmatpush2.msra.mxu0 0.0
        %3175 = vmatprep.subr.mxu0 0.0
        %3176 = vmatpush2.msra.mxu0 0.0
        %3177 = vmatprep.subr.mxu0 0.0
        %3178 = vmatpush2.msra.mxu0 0.0
        %3179 = vmatprep.mubr.f32.mxu0 0.0
        %v3180 = vand.u32 %v3107, 4294901760
        %v3181 = vsub.f32 %v3107, %v3180
        %v3182 = vand.u32 %v3181, 4294901760
        %v3183 = vsub.f32 %v3181, %v3182
        %v3184 = vand.u32 %v3183, 4294901760
        %3185 = vmatmul.mubr.f32.gmra.mxu0 %v3184
        %v3186 = vpop.f32.mrf.mxu0
        %v3187 = vadd.f32 0.0, %v3186
        %v3188 = vpop.f32.mrf.mxu0
        %v3189 = vadd.f32 0.0, %v3188
        %3190 = vdwg.mxu0
        %3191 = vmatprep.subr.mxu0 0.0
        %3192 = vmatpush1.msra.mxu0 0.0
        %3193 = vmatprep.subr.mxu0 0.0
        %3194 = vmatpush1.msra.mxu0 0.0
        %3195 = vmatprep.subr.mxu0 0.0
        %3196 = vmatpush1.msra.mxu0 0.0
        %3197 = vmatprep.subr.mxu0 0.0
        %3198 = vmatpush1.msra.mxu0 0.0
        %3199 = vmatprep.subr.mxu0 0.0
        %3200 = vmatpush1.msra.mxu0 0.0
        %3201 = vmatprep.subr.mxu0 0.0
        %3202 = vmatpush1.msra.mxu0 0.0
        %3203 = vmatprep.subr.mxu0 0.0
        %3204 = vmatpush1.msra.mxu0 0.0
        %3205 = vmatprep.subr.mxu0 0.0
        %3206 = vmatpush1.msra.mxu0 0.0
        %3207 = vmatprep.subr.mxu0 0.0
        %3208 = vmatpush1.msra.mxu0 0.0
        %3209 = vmatprep.subr.mxu0 0.0
        %3210 = vmatpush1.msra.mxu0 0.0
        %3211 = vmatprep.subr.mxu0 0.0
        %3212 = vmatpush1.msra.mxu0 0.0
        %3213 = vmatprep.subr.mxu0 0.0
        %3214 = vmatpush1.msra.mxu0 0.0
        %3215 = vmatprep.subr.mxu0 0.0
        %3216 = vmatpush1.msra.mxu0 0.0
        %3217 = vmatprep.subr.mxu0 0.0
        %3218 = vmatpush1.msra.mxu0 0.0
        %3219 = vmatprep.subr.mxu0 0.0
        %3220 = vmatpush1.msra.mxu0 0.0
        %v3221 = vand.u32 %v3111, 4294901760
        %v3222 = vsub.f32 %v3111, %v3221
        %v3223 = vand.u32 %v3222, 4294901760
        %v3224 = vsub.f32 %v3222, %v3223
        %v3225 = vand.u32 %v3224, 4294901760
        %3226 = vmatprep.subr.mxu0 %v3225
        %v3227 = vand.u32 %v3109, 4294901760
        %v3228 = vsub.f32 %v3109, %v3227
        %v3229 = vand.u32 %v3228, 4294901760
        %v3230 = vsub.f32 %v3228, %v3229
        %v3231 = vand.u32 %v3230, 4294901760
        %3232 = vmatpush1.msra.mxu0 %v3231
        %3233 = vmatprep.subr.mxu0 0.0
        %3234 = vmatpush2.msra.mxu0 0.0
        %3235 = vmatprep.subr.mxu0 0.0
        %3236 = vmatpush2.msra.mxu0 0.0
        %3237 = vmatprep.subr.mxu0 0.0
        %3238 = vmatpush2.msra.mxu0 0.0
        %3239 = vmatprep.subr.mxu0 0.0
        %3240 = vmatpush2.msra.mxu0 0.0
        %3241 = vmatprep.subr.mxu0 0.0
        %3242 = vmatpush2.msra.mxu0 0.0
        %3243 = vmatprep.subr.mxu0 0.0
        %3244 = vmatpush2.msra.mxu0 0.0
        %3245 = vmatprep.subr.mxu0 0.0
        %3246 = vmatpush2.msra.mxu0 0.0
        %3247 = vmatprep.subr.mxu0 0.0
        %3248 = vmatpush2.msra.mxu0 0.0
        %3249 = vmatprep.subr.mxu0 0.0
        %3250 = vmatpush2.msra.mxu0 0.0
        %3251 = vmatprep.subr.mxu0 0.0
        %3252 = vmatpush2.msra.mxu0 0.0
        %3253 = vmatprep.subr.mxu0 0.0
        %3254 = vmatpush2.msra.mxu0 0.0
        %3255 = vmatprep.subr.mxu0 0.0
        %3256 = vmatpush2.msra.mxu0 0.0
        %3257 = vmatprep.subr.mxu0 0.0
        %3258 = vmatpush2.msra.mxu0 0.0
        %3259 = vmatprep.subr.mxu0 0.0
        %3260 = vmatpush2.msra.mxu0 0.0
        %3261 = vmatprep.subr.mxu0 0.0
        %3262 = vmatpush2.msra.mxu0 0.0
        %3263 = vmatprep.subr.mxu0 0.0
        %3264 = vmatpush2.msra.mxu0 0.0
        %3265 = vmatprep.mubr.f32.mxu0 0.0
        %v3266 = vand.u32 %v3107, 4294901760
        %3267 = vmatmul.mubr.f32.gmra.mxu0 %v3266
        %v3268 = vpop.f32.mrf.mxu0
        %v3269 = vadd.f32 %v3187, %v3268
        %v3270 = vpop.f32.mrf.mxu0
        %v3271 = vadd.f32 %v3189, %v3270
        %3272 = vdwg.mxu0
        %3273 = vmatprep.subr.mxu0 0.0
        %3274 = vmatpush1.msra.mxu0 0.0
        %3275 = vmatprep.subr.mxu0 0.0
        %3276 = vmatpush1.msra.mxu0 0.0
        %3277 = vmatprep.subr.mxu0 0.0
        %3278 = vmatpush1.msra.mxu0 0.0
        %3279 = vmatprep.subr.mxu0 0.0
        %3280 = vmatpush1.msra.mxu0 0.0
        %3281 = vmatprep.subr.mxu0 0.0
        %3282 = vmatpush1.msra.mxu0 0.0
        %3283 = vmatprep.subr.mxu0 0.0
        %3284 = vmatpush1.msra.mxu0 0.0
        %3285 = vmatprep.subr.mxu0 0.0
        %3286 = vmatpush1.msra.mxu0 0.0
        %3287 = vmatprep.subr.mxu0 0.0
        %3288 = vmatpush1.msra.mxu0 0.0
        %3289 = vmatprep.subr.mxu0 0.0
        %3290 = vmatpush1.msra.mxu0 0.0
        %3291 = vmatprep.subr.mxu0 0.0
        %3292 = vmatpush1.msra.mxu0 0.0
        %3293 = vmatprep.subr.mxu0 0.0
        %3294 = vmatpush1.msra.mxu0 0.0
        %3295 = vmatprep.subr.mxu0 0.0
        %3296 = vmatpush1.msra.mxu0 0.0
        %3297 = vmatprep.subr.mxu0 0.0
        %3298 = vmatpush1.msra.mxu0 0.0
        %3299 = vmatprep.subr.mxu0 0.0
        %3300 = vmatpush1.msra.mxu0 0.0
        %3301 = vmatprep.subr.mxu0 0.0
        %3302 = vmatpush1.msra.mxu0 0.0
        %v3303 = vand.u32 %v3111, 4294901760
        %v3304 = vsub.f32 %v3111, %v3303
        %3305 = vmatprep.subr.mxu0 %v3304
        %v3306 = vand.u32 %v3109, 4294901760
        %v3307 = vsub.f32 %v3109, %v3306
        %3308 = vmatpush1.msra.mxu0 %v3307
        %3309 = vmatprep.subr.mxu0 0.0
        %3310 = vmatpush2.msra.mxu0 0.0
        %3311 = vmatprep.subr.mxu0 0.0
        %3312 = vmatpush2.msra.mxu0 0.0
        %3313 = vmatprep.subr.mxu0 0.0
        %3314 = vmatpush2.msra.mxu0 0.0
        %3315 = vmatprep.subr.mxu0 0.0
        %3316 = vmatpush2.msra.mxu0 0.0
        %3317 = vmatprep.subr.mxu0 0.0
        %3318 = vmatpush2.msra.mxu0 0.0
        %3319 = vmatprep.subr.mxu0 0.0
        %3320 = vmatpush2.msra.mxu0 0.0
        %3321 = vmatprep.subr.mxu0 0.0
        %3322 = vmatpush2.msra.mxu0 0.0
        %3323 = vmatprep.subr.mxu0 0.0
        %3324 = vmatpush2.msra.mxu0 0.0
        %3325 = vmatprep.subr.mxu0 0.0
        %3326 = vmatpush2.msra.mxu0 0.0
        %3327 = vmatprep.subr.mxu0 0.0
        %3328 = vmatpush2.msra.mxu0 0.0
        %3329 = vmatprep.subr.mxu0 0.0
        %3330 = vmatpush2.msra.mxu0 0.0
        %3331 = vmatprep.subr.mxu0 0.0
        %3332 = vmatpush2.msra.mxu0 0.0
        %3333 = vmatprep.subr.mxu0 0.0
        %3334 = vmatpush2.msra.mxu0 0.0
        %3335 = vmatprep.subr.mxu0 0.0
        %3336 = vmatpush2.msra.mxu0 0.0
        %3337 = vmatprep.subr.mxu0 0.0
        %3338 = vmatpush2.msra.mxu0 0.0
        %3339 = vmatprep.subr.mxu0 0.0
        %3340 = vmatpush2.msra.mxu0 0.0
        %3341 = vmatprep.mubr.f32.mxu0 0.0
        %v3342 = vand.u32 %v3107, 4294901760
        %v3343 = vsub.f32 %v3107, %v3342
        %3344 = vmatmul.mubr.f32.gmra.mxu0 %v3343
        %v3345 = vpop.f32.mrf.mxu0
        %v3346 = vadd.f32 %v3269, %v3345
        %v3347 = vpop.f32.mrf.mxu0
        %v3348 = vadd.f32 %v3271, %v3347
        %3349 = vdwg.mxu0
        %3350 = vmatprep.subr.mxu0 0.0
        %3351 = vmatpush1.msra.mxu0 0.0
        %3352 = vmatprep.subr.mxu0 0.0
        %3353 = vmatpush1.msra.mxu0 0.0
        %3354 = vmatprep.subr.mxu0 0.0
        %3355 = vmatpush1.msra.mxu0 0.0
        %3356 = vmatprep.subr.mxu0 0.0
        %3357 = vmatpush1.msra.mxu0 0.0
        %3358 = vmatprep.subr.mxu0 0.0
        %3359 = vmatpush1.msra.mxu0 0.0
        %3360 = vmatprep.subr.mxu0 0.0
        %3361 = vmatpush1.msra.mxu0 0.0
        %3362 = vmatprep.subr.mxu0 0.0
        %3363 = vmatpush1.msra.mxu0 0.0
        %3364 = vmatprep.subr.mxu0 0.0
        %3365 = vmatpush1.msra.mxu0 0.0
        %3366 = vmatprep.subr.mxu0 0.0
        %3367 = vmatpush1.msra.mxu0 0.0
        %3368 = vmatprep.subr.mxu0 0.0
        %3369 = vmatpush1.msra.mxu0 0.0
        %3370 = vmatprep.subr.mxu0 0.0
        %3371 = vmatpush1.msra.mxu0 0.0
        %3372 = vmatprep.subr.mxu0 0.0
        %3373 = vmatpush1.msra.mxu0 0.0
        %3374 = vmatprep.subr.mxu0 0.0
        %3375 = vmatpush1.msra.mxu0 0.0
        %3376 = vmatprep.subr.mxu0 0.0
        %3377 = vmatpush1.msra.mxu0 0.0
        %3378 = vmatprep.subr.mxu0 0.0
        %3379 = vmatpush1.msra.mxu0 0.0
        %v3380 = vand.u32 %v3111, 4294901760
        %3381 = vmatprep.subr.mxu0 %v3380
        %v3382 = vand.u32 %v3109, 4294901760
        %3383 = vmatpush1.msra.mxu0 %v3382
        %3384 = vmatprep.subr.mxu0 0.0
        %3385 = vmatpush2.msra.mxu0 0.0
        %3386 = vmatprep.subr.mxu0 0.0
        %3387 = vmatpush2.msra.mxu0 0.0
        %3388 = vmatprep.subr.mxu0 0.0
        %3389 = vmatpush2.msra.mxu0 0.0
        %3390 = vmatprep.subr.mxu0 0.0
        %3391 = vmatpush2.msra.mxu0 0.0
        %3392 = vmatprep.subr.mxu0 0.0
        %3393 = vmatpush2.msra.mxu0 0.0
        %3394 = vmatprep.subr.mxu0 0.0
        %3395 = vmatpush2.msra.mxu0 0.0
        %3396 = vmatprep.subr.mxu0 0.0
        %3397 = vmatpush2.msra.mxu0 0.0
        %3398 = vmatprep.subr.mxu0 0.0
        %3399 = vmatpush2.msra.mxu0 0.0
        %3400 = vmatprep.subr.mxu0 0.0
        %3401 = vmatpush2.msra.mxu0 0.0
        %3402 = vmatprep.subr.mxu0 0.0
        %3403 = vmatpush2.msra.mxu0 0.0
        %3404 = vmatprep.subr.mxu0 0.0
        %3405 = vmatpush2.msra.mxu0 0.0
        %3406 = vmatprep.subr.mxu0 0.0
        %3407 = vmatpush2.msra.mxu0 0.0
        %3408 = vmatprep.subr.mxu0 0.0
        %3409 = vmatpush2.msra.mxu0 0.0
        %3410 = vmatprep.subr.mxu0 0.0
        %3411 = vmatpush2.msra.mxu0 0.0
        %3412 = vmatprep.subr.mxu0 0.0
        %3413 = vmatpush2.msra.mxu0 0.0
        %3414 = vmatprep.subr.mxu0 0.0
        %3415 = vmatpush2.msra.mxu0 0.0
        %3416 = vmatprep.mubr.f32.mxu0 0.0
        %v3417 = vand.u32 %v3107, 4294901760
        %v3418 = vsub.f32 %v3107, %v3417
        %v3419 = vand.u32 %v3418, 4294901760
        %3420 = vmatmul.mubr.f32.gmra.mxu0 %v3419
        %v3421 = vpop.f32.mrf.mxu0
        %v3422 = vadd.f32 %v3346, %v3421
        %v3423 = vpop.f32.mrf.mxu0
        %v3424 = vadd.f32 %v3348, %v3423
        %3425 = vdwg.mxu0
        %3426 = vmatprep.subr.mxu0 0.0
        %3427 = vmatpush1.msra.mxu0 0.0
        %3428 = vmatprep.subr.mxu0 0.0
        %3429 = vmatpush1.msra.mxu0 0.0
        %3430 = vmatprep.subr.mxu0 0.0
        %3431 = vmatpush1.msra.mxu0 0.0
        %3432 = vmatprep.subr.mxu0 0.0
        %3433 = vmatpush1.msra.mxu0 0.0
        %3434 = vmatprep.subr.mxu0 0.0
        %3435 = vmatpush1.msra.mxu0 0.0
        %3436 = vmatprep.subr.mxu0 0.0
        %3437 = vmatpush1.msra.mxu0 0.0
        %3438 = vmatprep.subr.mxu0 0.0
        %3439 = vmatpush1.msra.mxu0 0.0
        %3440 = vmatprep.subr.mxu0 0.0
        %3441 = vmatpush1.msra.mxu0 0.0
        %3442 = vmatprep.subr.mxu0 0.0
        %3443 = vmatpush1.msra.mxu0 0.0
        %3444 = vmatprep.subr.mxu0 0.0
        %3445 = vmatpush1.msra.mxu0 0.0
        %3446 = vmatprep.subr.mxu0 0.0
        %3447 = vmatpush1.msra.mxu0 0.0
        %3448 = vmatprep.subr.mxu0 0.0
        %3449 = vmatpush1.msra.mxu0 0.0
        %3450 = vmatprep.subr.mxu0 0.0
        %3451 = vmatpush1.msra.mxu0 0.0
        %3452 = vmatprep.subr.mxu0 0.0
        %3453 = vmatpush1.msra.mxu0 0.0
        %3454 = vmatprep.subr.mxu0 0.0
        %3455 = vmatpush1.msra.mxu0 0.0
        %v3456 = vand.u32 %v3111, 4294901760
        %v3457 = vsub.f32 %v3111, %v3456
        %v3458 = vand.u32 %v3457, 4294901760
        %3459 = vmatprep.subr.mxu0 %v3458
        %v3460 = vand.u32 %v3109, 4294901760
        %v3461 = vsub.f32 %v3109, %v3460
        %v3462 = vand.u32 %v3461, 4294901760
        %3463 = vmatpush1.msra.mxu0 %v3462
        %3464 = vmatprep.subr.mxu0 0.0
        %3465 = vmatpush2.msra.mxu0 0.0
        %3466 = vmatprep.subr.mxu0 0.0
        %3467 = vmatpush2.msra.mxu0 0.0
        %3468 = vmatprep.subr.mxu0 0.0
        %3469 = vmatpush2.msra.mxu0 0.0
        %3470 = vmatprep.subr.mxu0 0.0
        %3471 = vmatpush2.msra.mxu0 0.0
        %3472 = vmatprep.subr.mxu0 0.0
        %3473 = vmatpush2.msra.mxu0 0.0
        %3474 = vmatprep.subr.mxu0 0.0
        %3475 = vmatpush2.msra.mxu0 0.0
        %3476 = vmatprep.subr.mxu0 0.0
        %3477 = vmatpush2.msra.mxu0 0.0
        %3478 = vmatprep.subr.mxu0 0.0
        %3479 = vmatpush2.msra.mxu0 0.0
        %3480 = vmatprep.subr.mxu0 0.0
        %3481 = vmatpush2.msra.mxu0 0.0
        %3482 = vmatprep.subr.mxu0 0.0
        %3483 = vmatpush2.msra.mxu0 0.0
        %3484 = vmatprep.subr.mxu0 0.0
        %3485 = vmatpush2.msra.mxu0 0.0
        %3486 = vmatprep.subr.mxu0 0.0
        %3487 = vmatpush2.msra.mxu0 0.0
        %3488 = vmatprep.subr.mxu0 0.0
        %3489 = vmatpush2.msra.mxu0 0.0
        %3490 = vmatprep.subr.mxu0 0.0
        %3491 = vmatpush2.msra.mxu0 0.0
        %3492 = vmatprep.subr.mxu0 0.0
        %3493 = vmatpush2.msra.mxu0 0.0
        %3494 = vmatprep.subr.mxu0 0.0
        %3495 = vmatpush2.msra.mxu0 0.0
        %3496 = vmatprep.mubr.f32.mxu0 0.0
        %v3497 = vand.u32 %v3107, 4294901760
        %3498 = vmatmul.mubr.f32.gmra.mxu0 %v3497
        %v3499 = vpop.f32.mrf.mxu0
        %v3500 = vadd.f32 %v3422, %v3499
        %v3501 = vpop.f32.mrf.mxu0
        %v3502 = vadd.f32 %v3424, %v3501
        %3503 = vdwg.mxu0
        %3504 = vmatprep.subr.mxu0 0.0
        %3505 = vmatpush1.msra.mxu0 0.0
        %3506 = vmatprep.subr.mxu0 0.0
        %3507 = vmatpush1.msra.mxu0 0.0
        %3508 = vmatprep.subr.mxu0 0.0
        %3509 = vmatpush1.msra.mxu0 0.0
        %3510 = vmatprep.subr.mxu0 0.0
        %3511 = vmatpush1.msra.mxu0 0.0
        %3512 = vmatprep.subr.mxu0 0.0
        %3513 = vmatpush1.msra.mxu0 0.0
        %3514 = vmatprep.subr.mxu0 0.0
        %3515 = vmatpush1.msra.mxu0 0.0
        %3516 = vmatprep.subr.mxu0 0.0
        %3517 = vmatpush1.msra.mxu0 0.0
        %3518 = vmatprep.subr.mxu0 0.0
        %3519 = vmatpush1.msra.mxu0 0.0
        %3520 = vmatprep.subr.mxu0 0.0
        %3521 = vmatpush1.msra.mxu0 0.0
        %3522 = vmatprep.subr.mxu0 0.0
        %3523 = vmatpush1.msra.mxu0 0.0
        %3524 = vmatprep.subr.mxu0 0.0
        %3525 = vmatpush1.msra.mxu0 0.0
        %3526 = vmatprep.subr.mxu0 0.0
        %3527 = vmatpush1.msra.mxu0 0.0
        %3528 = vmatprep.subr.mxu0 0.0
        %3529 = vmatpush1.msra.mxu0 0.0
        %3530 = vmatprep.subr.mxu0 0.0
        %3531 = vmatpush1.msra.mxu0 0.0
        %3532 = vmatprep.subr.mxu0 0.0
        %3533 = vmatpush1.msra.mxu0 0.0
        %v3534 = vand.u32 %v3111, 4294901760
        %3535 = vmatprep.subr.mxu0 %v3534
        %v3536 = vand.u32 %v3109, 4294901760
        %3537 = vmatpush1.msra.mxu0 %v3536
        %3538 = vmatprep.subr.mxu0 0.0
        %3539 = vmatpush2.msra.mxu0 0.0
        %3540 = vmatprep.subr.mxu0 0.0
        %3541 = vmatpush2.msra.mxu0 0.0
        %3542 = vmatprep.subr.mxu0 0.0
        %3543 = vmatpush2.msra.mxu0 0.0
        %3544 = vmatprep.subr.mxu0 0.0
        %3545 = vmatpush2.msra.mxu0 0.0
        %3546 = vmatprep.subr.mxu0 0.0
        %3547 = vmatpush2.msra.mxu0 0.0
        %3548 = vmatprep.subr.mxu0 0.0
        %3549 = vmatpush2.msra.mxu0 0.0
        %3550 = vmatprep.subr.mxu0 0.0
        %3551 = vmatpush2.msra.mxu0 0.0
        %3552 = vmatprep.subr.mxu0 0.0
        %3553 = vmatpush2.msra.mxu0 0.0
        %3554 = vmatprep.subr.mxu0 0.0
        %3555 = vmatpush2.msra.mxu0 0.0
        %3556 = vmatprep.subr.mxu0 0.0
        %3557 = vmatpush2.msra.mxu0 0.0
        %3558 = vmatprep.subr.mxu0 0.0
        %3559 = vmatpush2.msra.mxu0 0.0
        %3560 = vmatprep.subr.mxu0 0.0
        %3561 = vmatpush2.msra.mxu0 0.0
        %3562 = vmatprep.subr.mxu0 0.0
        %3563 = vmatpush2.msra.mxu0 0.0
        %3564 = vmatprep.subr.mxu0 0.0
        %3565 = vmatpush2.msra.mxu0 0.0
        %3566 = vmatprep.subr.mxu0 0.0
        %3567 = vmatpush2.msra.mxu0 0.0
        %3568 = vmatprep.subr.mxu0 0.0
        %3569 = vmatpush2.msra.mxu0 0.0
        %3570 = vmatprep.mubr.f32.mxu0 0.0
        %v3571 = vand.u32 %v3107, 4294901760
        %3572 = vmatmul.mubr.f32.gmra.mxu0 %v3571
        %v3573 = vpop.f32.mrf.mxu0
        %v3574 = vadd.f32 %v3500, %v3573
        %v3575 = vpop.f32.mrf.mxu0
        %v3576 = vadd.f32 %v3502, %v3575
        %3577 = vdwg.mxu0
        %v3578 = vadd.f32 %v3066, %v3574
        %v3579 = vadd.f32 %v3068, %v3576
        %3580 = vrot.lane.b32.xlu0 %v2082, 127
        %v3581 = vpop.permute.xlu0 %3580
        %3582 = vrot.lane.b32.xlu0 %v2086, 127
        %v3583 = vpop.permute.xlu0 %3582
        %vm3584 = vcmask 1039360
        %v3585 = vsel %vm3584, %v3581, %v3583
        %v3589 = vmul.f32 %v3581, 0.0
        %v3590 = vmul.f32 %v2075, %v3585
        %v3591 = vmul.f32 %v2076, %v3583
        %s3592 = scalar_lea.vmem %s4, 12
        %v3593 = vld [vmem:[%s3592] sm:$0xf]
        %3597 = vrot.lane.b32.xlu0 %v3589, 1
        %v3598 = vpop.permute.xlu0 %3597
        %3599 = vrot.lane.b32.xlu0 %v3590, 1
        %v3600 = vpop.permute.xlu0 %3599
        %3601 = vrot.lane.b32.xlu0 %v3591, 1
        %v3602 = vpop.permute.xlu0 %3601
        %vm3603 = vcmask 7168
        %v3604 = vsel %vm3603, %v3598, %v3600
        %v3605 = vsel %vm3603, %v3600, %v3602
        %v3607 = vsel %vm607, %v3593, 0
        %v3609 = vsel %vm611, %v3604, 0
        %v3611 = vsel %vm611, %v3605, 0
        %3613 = vmatprep.subr.mxu0 0.0
        %3614 = vmatpush1.msra.mxu0 0.0
        %3615 = vmatprep.subr.mxu0 0.0
        %3616 = vmatpush1.msra.mxu0 0.0
        %3617 = vmatprep.subr.mxu0 0.0
        %3618 = vmatpush1.msra.mxu0 0.0
        %3619 = vmatprep.subr.mxu0 0.0
        %3620 = vmatpush1.msra.mxu0 0.0
        %3621 = vmatprep.subr.mxu0 0.0
        %3622 = vmatpush1.msra.mxu0 0.0
        %3623 = vmatprep.subr.mxu0 0.0
        %3624 = vmatpush1.msra.mxu0 0.0
        %3625 = vmatprep.subr.mxu0 0.0
        %3626 = vmatpush1.msra.mxu0 0.0
        %3627 = vmatprep.subr.mxu0 0.0
        %3628 = vmatpush1.msra.mxu0 0.0
        %3629 = vmatprep.subr.mxu0 0.0
        %3630 = vmatpush1.msra.mxu0 0.0
        %3631 = vmatprep.subr.mxu0 0.0
        %3632 = vmatpush1.msra.mxu0 0.0
        %3633 = vmatprep.subr.mxu0 0.0
        %3634 = vmatpush1.msra.mxu0 0.0
        %3635 = vmatprep.subr.mxu0 0.0
        %3636 = vmatpush1.msra.mxu0 0.0
        %3637 = vmatprep.subr.mxu0 0.0
        %3638 = vmatpush1.msra.mxu0 0.0
        %3639 = vmatprep.subr.mxu0 0.0
        %3640 = vmatpush1.msra.mxu0 0.0
        %3641 = vmatprep.subr.mxu0 0.0
        %3642 = vmatpush1.msra.mxu0 0.0
        %v3643 = vand.u32 %v3611, 4294901760
        %3644 = vmatprep.subr.mxu0 %v3643
        %v3645 = vand.u32 %v3609, 4294901760
        %3646 = vmatpush1.msra.mxu0 %v3645
        %3647 = vmatprep.subr.mxu0 0.0
        %3648 = vmatpush2.msra.mxu0 0.0
        %3649 = vmatprep.subr.mxu0 0.0
        %3650 = vmatpush2.msra.mxu0 0.0
        %3651 = vmatprep.subr.mxu0 0.0
        %3652 = vmatpush2.msra.mxu0 0.0
        %3653 = vmatprep.subr.mxu0 0.0
        %3654 = vmatpush2.msra.mxu0 0.0
        %3655 = vmatprep.subr.mxu0 0.0
        %3656 = vmatpush2.msra.mxu0 0.0
        %3657 = vmatprep.subr.mxu0 0.0
        %3658 = vmatpush2.msra.mxu0 0.0
        %3659 = vmatprep.subr.mxu0 0.0
        %3660 = vmatpush2.msra.mxu0 0.0
        %3661 = vmatprep.subr.mxu0 0.0
        %3662 = vmatpush2.msra.mxu0 0.0
        %3663 = vmatprep.subr.mxu0 0.0
        %3664 = vmatpush2.msra.mxu0 0.0
        %3665 = vmatprep.subr.mxu0 0.0
        %3666 = vmatpush2.msra.mxu0 0.0
        %3667 = vmatprep.subr.mxu0 0.0
        %3668 = vmatpush2.msra.mxu0 0.0
        %3669 = vmatprep.subr.mxu0 0.0
        %3670 = vmatpush2.msra.mxu0 0.0
        %3671 = vmatprep.subr.mxu0 0.0
        %3672 = vmatpush2.msra.mxu0 0.0
        %3673 = vmatprep.subr.mxu0 0.0
        %3674 = vmatpush2.msra.mxu0 0.0
        %3675 = vmatprep.subr.mxu0 0.0
        %3676 = vmatpush2.msra.mxu0 0.0
        %3677 = vmatprep.subr.mxu0 0.0
        %3678 = vmatpush2.msra.mxu0 0.0
        %3679 = vmatprep.mubr.f32.mxu0 0.0
        %v3680 = vand.u32 %v3607, 4294901760
        %v3681 = vsub.f32 %v3607, %v3680
        %v3682 = vand.u32 %v3681, 4294901760
        %v3683 = vsub.f32 %v3681, %v3682
        %v3684 = vand.u32 %v3683, 4294901760
        %3685 = vmatmul.mubr.f32.gmra.mxu0 %v3684
        %v3686 = vpop.f32.mrf.mxu0
        %v3687 = vadd.f32 0.0, %v3686
        %v3688 = vpop.f32.mrf.mxu0
        %v3689 = vadd.f32 0.0, %v3688
        %3690 = vdwg.mxu0
        %3691 = vmatprep.subr.mxu0 0.0
        %3692 = vmatpush1.msra.mxu0 0.0
        %3693 = vmatprep.subr.mxu0 0.0
        %3694 = vmatpush1.msra.mxu0 0.0
        %3695 = vmatprep.subr.mxu0 0.0
        %3696 = vmatpush1.msra.mxu0 0.0
        %3697 = vmatprep.subr.mxu0 0.0
        %3698 = vmatpush1.msra.mxu0 0.0
        %3699 = vmatprep.subr.mxu0 0.0
        %3700 = vmatpush1.msra.mxu0 0.0
        %3701 = vmatprep.subr.mxu0 0.0
        %3702 = vmatpush1.msra.mxu0 0.0
        %3703 = vmatprep.subr.mxu0 0.0
        %3704 = vmatpush1.msra.mxu0 0.0
        %3705 = vmatprep.subr.mxu0 0.0
        %3706 = vmatpush1.msra.mxu0 0.0
        %3707 = vmatprep.subr.mxu0 0.0
        %3708 = vmatpush1.msra.mxu0 0.0
        %3709 = vmatprep.subr.mxu0 0.0
        %3710 = vmatpush1.msra.mxu0 0.0
        %3711 = vmatprep.subr.mxu0 0.0
        %3712 = vmatpush1.msra.mxu0 0.0
        %3713 = vmatprep.subr.mxu0 0.0
        %3714 = vmatpush1.msra.mxu0 0.0
        %3715 = vmatprep.subr.mxu0 0.0
        %3716 = vmatpush1.msra.mxu0 0.0
        %3717 = vmatprep.subr.mxu0 0.0
        %3718 = vmatpush1.msra.mxu0 0.0
        %3719 = vmatprep.subr.mxu0 0.0
        %3720 = vmatpush1.msra.mxu0 0.0
        %v3721 = vand.u32 %v3611, 4294901760
        %v3722 = vsub.f32 %v3611, %v3721
        %v3723 = vand.u32 %v3722, 4294901760
        %v3724 = vsub.f32 %v3722, %v3723
        %v3725 = vand.u32 %v3724, 4294901760
        %3726 = vmatprep.subr.mxu0 %v3725
        %v3727 = vand.u32 %v3609, 4294901760
        %v3728 = vsub.f32 %v3609, %v3727
        %v3729 = vand.u32 %v3728, 4294901760
        %v3730 = vsub.f32 %v3728, %v3729
        %v3731 = vand.u32 %v3730, 4294901760
        %3732 = vmatpush1.msra.mxu0 %v3731
        %3733 = vmatprep.subr.mxu0 0.0
        %3734 = vmatpush2.msra.mxu0 0.0
        %3735 = vmatprep.subr.mxu0 0.0
        %3736 = vmatpush2.msra.mxu0 0.0
        %3737 = vmatprep.subr.mxu0 0.0
        %3738 = vmatpush2.msra.mxu0 0.0
        %3739 = vmatprep.subr.mxu0 0.0
        %3740 = vmatpush2.msra.mxu0 0.0
        %3741 = vmatprep.subr.mxu0 0.0
        %3742 = vmatpush2.msra.mxu0 0.0
        %3743 = vmatprep.subr.mxu0 0.0
        %3744 = vmatpush2.msra.mxu0 0.0
        %3745 = vmatprep.subr.mxu0 0.0
        %3746 = vmatpush2.msra.mxu0 0.0
        %3747 = vmatprep.subr.mxu0 0.0
        %3748 = vmatpush2.msra.mxu0 0.0
        %3749 = vmatprep.subr.mxu0 0.0
        %3750 = vmatpush2.msra.mxu0 0.0
        %3751 = vmatprep.subr.mxu0 0.0
        %3752 = vmatpush2.msra.mxu0 0.0
        %3753 = vmatprep.subr.mxu0 0.0
        %3754 = vmatpush2.msra.mxu0 0.0
        %3755 = vmatprep.subr.mxu0 0.0
        %3756 = vmatpush2.msra.mxu0 0.0
        %3757 = vmatprep.subr.mxu0 0.0
        %3758 = vmatpush2.msra.mxu0 0.0
        %3759 = vmatprep.subr.mxu0 0.0
        %3760 = vmatpush2.msra.mxu0 0.0
        %3761 = vmatprep.subr.mxu0 0.0
        %3762 = vmatpush2.msra.mxu0 0.0
        %3763 = vmatprep.subr.mxu0 0.0
        %3764 = vmatpush2.msra.mxu0 0.0
        %3765 = vmatprep.mubr.f32.mxu0 0.0
        %v3766 = vand.u32 %v3607, 4294901760
        %3767 = vmatmul.mubr.f32.gmra.mxu0 %v3766
        %v3768 = vpop.f32.mrf.mxu0
        %v3769 = vadd.f32 %v3687, %v3768
        %v3770 = vpop.f32.mrf.mxu0
        %v3771 = vadd.f32 %v3689, %v3770
        %3772 = vdwg.mxu0
        %3773 = vmatprep.subr.mxu0 0.0
        %3774 = vmatpush1.msra.mxu0 0.0
        %3775 = vmatprep.subr.mxu0 0.0
        %3776 = vmatpush1.msra.mxu0 0.0
        %3777 = vmatprep.subr.mxu0 0.0
        %3778 = vmatpush1.msra.mxu0 0.0
        %3779 = vmatprep.subr.mxu0 0.0
        %3780 = vmatpush1.msra.mxu0 0.0
        %3781 = vmatprep.subr.mxu0 0.0
        %3782 = vmatpush1.msra.mxu0 0.0
        %3783 = vmatprep.subr.mxu0 0.0
        %3784 = vmatpush1.msra.mxu0 0.0
        %3785 = vmatprep.subr.mxu0 0.0
        %3786 = vmatpush1.msra.mxu0 0.0
        %3787 = vmatprep.subr.mxu0 0.0
        %3788 = vmatpush1.msra.mxu0 0.0
        %3789 = vmatprep.subr.mxu0 0.0
        %3790 = vmatpush1.msra.mxu0 0.0
        %3791 = vmatprep.subr.mxu0 0.0
        %3792 = vmatpush1.msra.mxu0 0.0
        %3793 = vmatprep.subr.mxu0 0.0
        %3794 = vmatpush1.msra.mxu0 0.0
        %3795 = vmatprep.subr.mxu0 0.0
        %3796 = vmatpush1.msra.mxu0 0.0
        %3797 = vmatprep.subr.mxu0 0.0
        %3798 = vmatpush1.msra.mxu0 0.0
        %3799 = vmatprep.subr.mxu0 0.0
        %3800 = vmatpush1.msra.mxu0 0.0
        %3801 = vmatprep.subr.mxu0 0.0
        %3802 = vmatpush1.msra.mxu0 0.0
        %v3803 = vand.u32 %v3611, 4294901760
        %v3804 = vsub.f32 %v3611, %v3803
        %3805 = vmatprep.subr.mxu0 %v3804
        %v3806 = vand.u32 %v3609, 4294901760
        %v3807 = vsub.f32 %v3609, %v3806
        %3808 = vmatpush1.msra.mxu0 %v3807
        %3809 = vmatprep.subr.mxu0 0.0
        %3810 = vmatpush2.msra.mxu0 0.0
        %3811 = vmatprep.subr.mxu0 0.0
        %3812 = vmatpush2.msra.mxu0 0.0
        %3813 = vmatprep.subr.mxu0 0.0
        %3814 = vmatpush2.msra.mxu0 0.0
        %3815 = vmatprep.subr.mxu0 0.0
        %3816 = vmatpush2.msra.mxu0 0.0
        %3817 = vmatprep.subr.mxu0 0.0
        %3818 = vmatpush2.msra.mxu0 0.0
        %3819 = vmatprep.subr.mxu0 0.0
        %3820 = vmatpush2.msra.mxu0 0.0
        %3821 = vmatprep.subr.mxu0 0.0
        %3822 = vmatpush2.msra.mxu0 0.0
        %3823 = vmatprep.subr.mxu0 0.0
        %3824 = vmatpush2.msra.mxu0 0.0
        %3825 = vmatprep.subr.mxu0 0.0
        %3826 = vmatpush2.msra.mxu0 0.0
        %3827 = vmatprep.subr.mxu0 0.0
        %3828 = vmatpush2.msra.mxu0 0.0
        %3829 = vmatprep.subr.mxu0 0.0
        %3830 = vmatpush2.msra.mxu0 0.0
        %3831 = vmatprep.subr.mxu0 0.0
        %3832 = vmatpush2.msra.mxu0 0.0
        %3833 = vmatprep.subr.mxu0 0.0
        %3834 = vmatpush2.msra.mxu0 0.0
        %3835 = vmatprep.subr.mxu0 0.0
        %3836 = vmatpush2.msra.mxu0 0.0
        %3837 = vmatprep.subr.mxu0 0.0
        %3838 = vmatpush2.msra.mxu0 0.0
        %3839 = vmatprep.subr.mxu0 0.0
        %3840 = vmatpush2.msra.mxu0 0.0
        %3841 = vmatprep.mubr.f32.mxu0 0.0
        %v3842 = vand.u32 %v3607, 4294901760
        %v3843 = vsub.f32 %v3607, %v3842
        %3844 = vmatmul.mubr.f32.gmra.mxu0 %v3843
        %v3845 = vpop.f32.mrf.mxu0
        %v3846 = vadd.f32 %v3769, %v3845
        %v3847 = vpop.f32.mrf.mxu0
        %v3848 = vadd.f32 %v3771, %v3847
        %3849 = vdwg.mxu0
        %3850 = vmatprep.subr.mxu0 0.0
        %3851 = vmatpush1.msra.mxu0 0.0
        %3852 = vmatprep.subr.mxu0 0.0
        %3853 = vmatpush1.msra.mxu0 0.0
        %3854 = vmatprep.subr.mxu0 0.0
        %3855 = vmatpush1.msra.mxu0 0.0
        %3856 = vmatprep.subr.mxu0 0.0
        %3857 = vmatpush1.msra.mxu0 0.0
        %3858 = vmatprep.subr.mxu0 0.0
        %3859 = vmatpush1.msra.mxu0 0.0
        %3860 = vmatprep.subr.mxu0 0.0
        %3861 = vmatpush1.msra.mxu0 0.0
        %3862 = vmatprep.subr.mxu0 0.0
        %3863 = vmatpush1.msra.mxu0 0.0
        %3864 = vmatprep.subr.mxu0 0.0
        %3865 = vmatpush1.msra.mxu0 0.0
        %3866 = vmatprep.subr.mxu0 0.0
        %3867 = vmatpush1.msra.mxu0 0.0
        %3868 = vmatprep.subr.mxu0 0.0
        %3869 = vmatpush1.msra.mxu0 0.0
        %3870 = vmatprep.subr.mxu0 0.0
        %3871 = vmatpush1.msra.mxu0 0.0
        %3872 = vmatprep.subr.mxu0 0.0
        %3873 = vmatpush1.msra.mxu0 0.0
        %3874 = vmatprep.subr.mxu0 0.0
        %3875 = vmatpush1.msra.mxu0 0.0
        %3876 = vmatprep.subr.mxu0 0.0
        %3877 = vmatpush1.msra.mxu0 0.0
        %3878 = vmatprep.subr.mxu0 0.0
        %3879 = vmatpush1.msra.mxu0 0.0
        %v3880 = vand.u32 %v3611, 4294901760
        %3881 = vmatprep.subr.mxu0 %v3880
        %v3882 = vand.u32 %v3609, 4294901760
        %3883 = vmatpush1.msra.mxu0 %v3882
        %3884 = vmatprep.subr.mxu0 0.0
        %3885 = vmatpush2.msra.mxu0 0.0
        %3886 = vmatprep.subr.mxu0 0.0
        %3887 = vmatpush2.msra.mxu0 0.0
        %3888 = vmatprep.subr.mxu0 0.0
        %3889 = vmatpush2.msra.mxu0 0.0
        %3890 = vmatprep.subr.mxu0 0.0
        %3891 = vmatpush2.msra.mxu0 0.0
        %3892 = vmatprep.subr.mxu0 0.0
        %3893 = vmatpush2.msra.mxu0 0.0
        %3894 = vmatprep.subr.mxu0 0.0
        %3895 = vmatpush2.msra.mxu0 0.0
        %3896 = vmatprep.subr.mxu0 0.0
        %3897 = vmatpush2.msra.mxu0 0.0
        %3898 = vmatprep.subr.mxu0 0.0
        %3899 = vmatpush2.msra.mxu0 0.0
        %3900 = vmatprep.subr.mxu0 0.0
        %3901 = vmatpush2.msra.mxu0 0.0
        %3902 = vmatprep.subr.mxu0 0.0
        %3903 = vmatpush2.msra.mxu0 0.0
        %3904 = vmatprep.subr.mxu0 0.0
        %3905 = vmatpush2.msra.mxu0 0.0
        %3906 = vmatprep.subr.mxu0 0.0
        %3907 = vmatpush2.msra.mxu0 0.0
        %3908 = vmatprep.subr.mxu0 0.0
        %3909 = vmatpush2.msra.mxu0 0.0
        %3910 = vmatprep.subr.mxu0 0.0
        %3911 = vmatpush2.msra.mxu0 0.0
        %3912 = vmatprep.subr.mxu0 0.0
        %3913 = vmatpush2.msra.mxu0 0.0
        %3914 = vmatprep.subr.mxu0 0.0
        %3915 = vmatpush2.msra.mxu0 0.0
        %3916 = vmatprep.mubr.f32.mxu0 0.0
        %v3917 = vand.u32 %v3607, 4294901760
        %v3918 = vsub.f32 %v3607, %v3917
        %v3919 = vand.u32 %v3918, 4294901760
        %3920 = vmatmul.mubr.f32.gmra.mxu0 %v3919
        %v3921 = vpop.f32.mrf.mxu0
        %v3922 = vadd.f32 %v3846, %v3921
        %v3923 = vpop.f32.mrf.mxu0
        %v3924 = vadd.f32 %v3848, %v3923
        %3925 = vdwg.mxu0
        %3926 = vmatprep.subr.mxu0 0.0
        %3927 = vmatpush1.msra.mxu0 0.0
        %3928 = vmatprep.subr.mxu0 0.0
        %3929 = vmatpush1.msra.mxu0 0.0
        %3930 = vmatprep.subr.mxu0 0.0
        %3931 = vmatpush1.msra.mxu0 0.0
        %3932 = vmatprep.subr.mxu0 0.0
        %3933 = vmatpush1.msra.mxu0 0.0
        %3934 = vmatprep.subr.mxu0 0.0
        %3935 = vmatpush1.msra.mxu0 0.0
        %3936 = vmatprep.subr.mxu0 0.0
        %3937 = vmatpush1.msra.mxu0 0.0
        %3938 = vmatprep.subr.mxu0 0.0
        %3939 = vmatpush1.msra.mxu0 0.0
        %3940 = vmatprep.subr.mxu0 0.0
        %3941 = vmatpush1.msra.mxu0 0.0
        %3942 = vmatprep.subr.mxu0 0.0
        %3943 = vmatpush1.msra.mxu0 0.0
        %3944 = vmatprep.subr.mxu0 0.0
        %3945 = vmatpush1.msra.mxu0 0.0
        %3946 = vmatprep.subr.mxu0 0.0
        %3947 = vmatpush1.msra.mxu0 0.0
        %3948 = vmatprep.subr.mxu0 0.0
        %3949 = vmatpush1.msra.mxu0 0.0
        %3950 = vmatprep.subr.mxu0 0.0
        %3951 = vmatpush1.msra.mxu0 0.0
        %3952 = vmatprep.subr.mxu0 0.0
        %3953 = vmatpush1.msra.mxu0 0.0
        %3954 = vmatprep.subr.mxu0 0.0
        %3955 = vmatpush1.msra.mxu0 0.0
        %v3956 = vand.u32 %v3611, 4294901760
        %v3957 = vsub.f32 %v3611, %v3956
        %v3958 = vand.u32 %v3957, 4294901760
        %3959 = vmatprep.subr.mxu0 %v3958
        %v3960 = vand.u32 %v3609, 4294901760
        %v3961 = vsub.f32 %v3609, %v3960
        %v3962 = vand.u32 %v3961, 4294901760
        %3963 = vmatpush1.msra.mxu0 %v3962
        %3964 = vmatprep.subr.mxu0 0.0
        %3965 = vmatpush2.msra.mxu0 0.0
        %3966 = vmatprep.subr.mxu0 0.0
        %3967 = vmatpush2.msra.mxu0 0.0
        %3968 = vmatprep.subr.mxu0 0.0
        %3969 = vmatpush2.msra.mxu0 0.0
        %3970 = vmatprep.subr.mxu0 0.0
        %3971 = vmatpush2.msra.mxu0 0.0
        %3972 = vmatprep.subr.mxu0 0.0
        %3973 = vmatpush2.msra.mxu0 0.0
        %3974 = vmatprep.subr.mxu0 0.0
        %3975 = vmatpush2.msra.mxu0 0.0
        %3976 = vmatprep.subr.mxu0 0.0
        %3977 = vmatpush2.msra.mxu0 0.0
        %3978 = vmatprep.subr.mxu0 0.0
        %3979 = vmatpush2.msra.mxu0 0.0
        %3980 = vmatprep.subr.mxu0 0.0
        %3981 = vmatpush2.msra.mxu0 0.0
        %3982 = vmatprep.subr.mxu0 0.0
        %3983 = vmatpush2.msra.mxu0 0.0
        %3984 = vmatprep.subr.mxu0 0.0
        %3985 = vmatpush2.msra.mxu0 0.0
        %3986 = vmatprep.subr.mxu0 0.0
        %3987 = vmatpush2.msra.mxu0 0.0
        %3988 = vmatprep.subr.mxu0 0.0
        %3989 = vmatpush2.msra.mxu0 0.0
        %3990 = vmatprep.subr.mxu0 0.0
        %3991 = vmatpush2.msra.mxu0 0.0
        %3992 = vmatprep.subr.mxu0 0.0
        %3993 = vmatpush2.msra.mxu0 0.0
        %3994 = vmatprep.subr.mxu0 0.0
        %3995 = vmatpush2.msra.mxu0 0.0
        %3996 = vmatprep.mubr.f32.mxu0 0.0
        %v3997 = vand.u32 %v3607, 4294901760
        %3998 = vmatmul.mubr.f32.gmra.mxu0 %v3997
        %v3999 = vpop.f32.mrf.mxu0
        %v4000 = vadd.f32 %v3922, %v3999
        %v4001 = vpop.f32.mrf.mxu0
        %v4002 = vadd.f32 %v3924, %v4001
        %4003 = vdwg.mxu0
        %4004 = vmatprep.subr.mxu0 0.0
        %4005 = vmatpush1.msra.mxu0 0.0
        %4006 = vmatprep.subr.mxu0 0.0
        %4007 = vmatpush1.msra.mxu0 0.0
        %4008 = vmatprep.subr.mxu0 0.0
        %4009 = vmatpush1.msra.mxu0 0.0
        %4010 = vmatprep.subr.mxu0 0.0
        %4011 = vmatpush1.msra.mxu0 0.0
        %4012 = vmatprep.subr.mxu0 0.0
        %4013 = vmatpush1.msra.mxu0 0.0
        %4014 = vmatprep.subr.mxu0 0.0
        %4015 = vmatpush1.msra.mxu0 0.0
        %4016 = vmatprep.subr.mxu0 0.0
        %4017 = vmatpush1.msra.mxu0 0.0
        %4018 = vmatprep.subr.mxu0 0.0
        %4019 = vmatpush1.msra.mxu0 0.0
        %4020 = vmatprep.subr.mxu0 0.0
        %4021 = vmatpush1.msra.mxu0 0.0
        %4022 = vmatprep.subr.mxu0 0.0
        %4023 = vmatpush1.msra.mxu0 0.0
        %4024 = vmatprep.subr.mxu0 0.0
        %4025 = vmatpush1.msra.mxu0 0.0
        %4026 = vmatprep.subr.mxu0 0.0
        %4027 = vmatpush1.msra.mxu0 0.0
        %4028 = vmatprep.subr.mxu0 0.0
        %4029 = vmatpush1.msra.mxu0 0.0
        %4030 = vmatprep.subr.mxu0 0.0
        %4031 = vmatpush1.msra.mxu0 0.0
        %4032 = vmatprep.subr.mxu0 0.0
        %4033 = vmatpush1.msra.mxu0 0.0
        %v4034 = vand.u32 %v3611, 4294901760
        %4035 = vmatprep.subr.mxu0 %v4034
        %v4036 = vand.u32 %v3609, 4294901760
        %4037 = vmatpush1.msra.mxu0 %v4036
        %4038 = vmatprep.subr.mxu0 0.0
        %4039 = vmatpush2.msra.mxu0 0.0
        %4040 = vmatprep.subr.mxu0 0.0
        %4041 = vmatpush2.msra.mxu0 0.0
        %4042 = vmatprep.subr.mxu0 0.0
        %4043 = vmatpush2.msra.mxu0 0.0
        %4044 = vmatprep.subr.mxu0 0.0
        %4045 = vmatpush2.msra.mxu0 0.0
        %4046 = vmatprep.subr.mxu0 0.0
        %4047 = vmatpush2.msra.mxu0 0.0
        %4048 = vmatprep.subr.mxu0 0.0
        %4049 = vmatpush2.msra.mxu0 0.0
        %4050 = vmatprep.subr.mxu0 0.0
        %4051 = vmatpush2.msra.mxu0 0.0
        %4052 = vmatprep.subr.mxu0 0.0
        %4053 = vmatpush2.msra.mxu0 0.0
        %4054 = vmatprep.subr.mxu0 0.0
        %4055 = vmatpush2.msra.mxu0 0.0
        %4056 = vmatprep.subr.mxu0 0.0
        %4057 = vmatpush2.msra.mxu0 0.0
        %4058 = vmatprep.subr.mxu0 0.0
        %4059 = vmatpush2.msra.mxu0 0.0
        %4060 = vmatprep.subr.mxu0 0.0
        %4061 = vmatpush2.msra.mxu0 0.0
        %4062 = vmatprep.subr.mxu0 0.0
        %4063 = vmatpush2.msra.mxu0 0.0
        %4064 = vmatprep.subr.mxu0 0.0
        %4065 = vmatpush2.msra.mxu0 0.0
        %4066 = vmatprep.subr.mxu0 0.0
        %4067 = vmatpush2.msra.mxu0 0.0
        %4068 = vmatprep.subr.mxu0 0.0
        %4069 = vmatpush2.msra.mxu0 0.0
        %4070 = vmatprep.mubr.f32.mxu0 0.0
        %v4071 = vand.u32 %v3607, 4294901760
        %4072 = vmatmul.mubr.f32.gmra.mxu0 %v4071
        %v4073 = vpop.f32.mrf.mxu0
        %v4074 = vadd.f32 %v4000, %v4073
        %v4075 = vpop.f32.mrf.mxu0
        %v4076 = vadd.f32 %v4002, %v4075
        %4077 = vdwg.mxu0
        %v4078 = vadd.f32 %v3578, %v4074
        %v4079 = vadd.f32 %v3579, %v4076
        %s4080 = scalar_lea.vmem %s4, 16
        %v4081 = vld [vmem:[%s4080] sm:$0xf]
        %v4083 = vsel %vm607, %v4081, 0
        %v4085 = vsel %vm611, %v2075, 0
        %v4087 = vsel %vm611, %v2076, 0
        %4089 = vmatprep.subr.mxu0 0.0
        %4090 = vmatpush1.msra.mxu0 0.0
        %4091 = vmatprep.subr.mxu0 0.0
        %4092 = vmatpush1.msra.mxu0 0.0
        %4093 = vmatprep.subr.mxu0 0.0
        %4094 = vmatpush1.msra.mxu0 0.0
        %4095 = vmatprep.subr.mxu0 0.0
        %4096 = vmatpush1.msra.mxu0 0.0
        %4097 = vmatprep.subr.mxu0 0.0
        %4098 = vmatpush1.msra.mxu0 0.0
        %4099 = vmatprep.subr.mxu0 0.0
        %4100 = vmatpush1.msra.mxu0 0.0
        %4101 = vmatprep.subr.mxu0 0.0
        %4102 = vmatpush1.msra.mxu0 0.0
        %4103 = vmatprep.subr.mxu0 0.0
        %4104 = vmatpush1.msra.mxu0 0.0
        %4105 = vmatprep.subr.mxu0 0.0
        %4106 = vmatpush1.msra.mxu0 0.0
        %4107 = vmatprep.subr.mxu0 0.0
        %4108 = vmatpush1.msra.mxu0 0.0
        %4109 = vmatprep.subr.mxu0 0.0
        %4110 = vmatpush1.msra.mxu0 0.0
        %4111 = vmatprep.subr.mxu0 0.0
        %4112 = vmatpush1.msra.mxu0 0.0
        %4113 = vmatprep.subr.mxu0 0.0
        %4114 = vmatpush1.msra.mxu0 0.0
        %4115 = vmatprep.subr.mxu0 0.0
        %4116 = vmatpush1.msra.mxu0 0.0
        %4117 = vmatprep.subr.mxu0 0.0
        %4118 = vmatpush1.msra.mxu0 0.0
        %v4119 = vand.u32 %v4087, 4294901760
        %4120 = vmatprep.subr.mxu0 %v4119
        %v4121 = vand.u32 %v4085, 4294901760
        %4122 = vmatpush1.msra.mxu0 %v4121
        %4123 = vmatprep.subr.mxu0 0.0
        %4124 = vmatpush2.msra.mxu0 0.0
        %4125 = vmatprep.subr.mxu0 0.0
        %4126 = vmatpush2.msra.mxu0 0.0
        %4127 = vmatprep.subr.mxu0 0.0
        %4128 = vmatpush2.msra.mxu0 0.0
        %4129 = vmatprep.subr.mxu0 0.0
        %4130 = vmatpush2.msra.mxu0 0.0
        %4131 = vmatprep.subr.mxu0 0.0
        %4132 = vmatpush2.msra.mxu0 0.0
        %4133 = vmatprep.subr.mxu0 0.0
        %4134 = vmatpush2.msra.mxu0 0.0
        %4135 = vmatprep.subr.mxu0 0.0
        %4136 = vmatpush2.msra.mxu0 0.0
        %4137 = vmatprep.subr.mxu0 0.0
        %4138 = vmatpush2.msra.mxu0 0.0
        %4139 = vmatprep.subr.mxu0 0.0
        %4140 = vmatpush2.msra.mxu0 0.0
        %4141 = vmatprep.subr.mxu0 0.0
        %4142 = vmatpush2.msra.mxu0 0.0
        %4143 = vmatprep.subr.mxu0 0.0
        %4144 = vmatpush2.msra.mxu0 0.0
        %4145 = vmatprep.subr.mxu0 0.0
        %4146 = vmatpush2.msra.mxu0 0.0
        %4147 = vmatprep.subr.mxu0 0.0
        %4148 = vmatpush2.msra.mxu0 0.0
        %4149 = vmatprep.subr.mxu0 0.0
        %4150 = vmatpush2.msra.mxu0 0.0
        %4151 = vmatprep.subr.mxu0 0.0
        %4152 = vmatpush2.msra.mxu0 0.0
        %4153 = vmatprep.subr.mxu0 0.0
        %4154 = vmatpush2.msra.mxu0 0.0
        %4155 = vmatprep.mubr.f32.mxu0 0.0
        %v4156 = vand.u32 %v4083, 4294901760
        %v4157 = vsub.f32 %v4083, %v4156
        %v4158 = vand.u32 %v4157, 4294901760
        %v4159 = vsub.f32 %v4157, %v4158
        %v4160 = vand.u32 %v4159, 4294901760
        %4161 = vmatmul.mubr.f32.gmra.mxu0 %v4160
        %v4162 = vpop.f32.mrf.mxu0
        %v4163 = vadd.f32 0.0, %v4162
        %v4164 = vpop.f32.mrf.mxu0
        %v4165 = vadd.f32 0.0, %v4164
        %4166 = vdwg.mxu0
        %4167 = vmatprep.subr.mxu0 0.0
        %4168 = vmatpush1.msra.mxu0 0.0
        %4169 = vmatprep.subr.mxu0 0.0
        %4170 = vmatpush1.msra.mxu0 0.0
        %4171 = vmatprep.subr.mxu0 0.0
        %4172 = vmatpush1.msra.mxu0 0.0
        %4173 = vmatprep.subr.mxu0 0.0
        %4174 = vmatpush1.msra.mxu0 0.0
        %4175 = vmatprep.subr.mxu0 0.0
        %4176 = vmatpush1.msra.mxu0 0.0
        %4177 = vmatprep.subr.mxu0 0.0
        %4178 = vmatpush1.msra.mxu0 0.0
        %4179 = vmatprep.subr.mxu0 0.0
        %4180 = vmatpush1.msra.mxu0 0.0
        %4181 = vmatprep.subr.mxu0 0.0
        %4182 = vmatpush1.msra.mxu0 0.0
        %4183 = vmatprep.subr.mxu0 0.0
        %4184 = vmatpush1.msra.mxu0 0.0
        %4185 = vmatprep.subr.mxu0 0.0
        %4186 = vmatpush1.msra.mxu0 0.0
        %4187 = vmatprep.subr.mxu0 0.0
        %4188 = vmatpush1.msra.mxu0 0.0
        %4189 = vmatprep.subr.mxu0 0.0
        %4190 = vmatpush1.msra.mxu0 0.0
        %4191 = vmatprep.subr.mxu0 0.0
        %4192 = vmatpush1.msra.mxu0 0.0
        %4193 = vmatprep.subr.mxu0 0.0
        %4194 = vmatpush1.msra.mxu0 0.0
        %4195 = vmatprep.subr.mxu0 0.0
        %4196 = vmatpush1.msra.mxu0 0.0
        %v4197 = vand.u32 %v4087, 4294901760
        %v4198 = vsub.f32 %v4087, %v4197
        %v4199 = vand.u32 %v4198, 4294901760
        %v4200 = vsub.f32 %v4198, %v4199
        %v4201 = vand.u32 %v4200, 4294901760
        %4202 = vmatprep.subr.mxu0 %v4201
        %v4203 = vand.u32 %v4085, 4294901760
        %v4204 = vsub.f32 %v4085, %v4203
        %v4205 = vand.u32 %v4204, 4294901760
        %v4206 = vsub.f32 %v4204, %v4205
        %v4207 = vand.u32 %v4206, 4294901760
        %4208 = vmatpush1.msra.mxu0 %v4207
        %4209 = vmatprep.subr.mxu0 0.0
        %4210 = vmatpush2.msra.mxu0 0.0
        %4211 = vmatprep.subr.mxu0 0.0
        %4212 = vmatpush2.msra.mxu0 0.0
        %4213 = vmatprep.subr.mxu0 0.0
        %4214 = vmatpush2.msra.mxu0 0.0
        %4215 = vmatprep.subr.mxu0 0.0
        %4216 = vmatpush2.msra.mxu0 0.0
        %4217 = vmatprep.subr.mxu0 0.0
        %4218 = vmatpush2.msra.mxu0 0.0
        %4219 = vmatprep.subr.mxu0 0.0
        %4220 = vmatpush2.msra.mxu0 0.0
        %4221 = vmatprep.subr.mxu0 0.0
        %4222 = vmatpush2.msra.mxu0 0.0
        %4223 = vmatprep.subr.mxu0 0.0
        %4224 = vmatpush2.msra.mxu0 0.0
        %4225 = vmatprep.subr.mxu0 0.0
        %4226 = vmatpush2.msra.mxu0 0.0
        %4227 = vmatprep.subr.mxu0 0.0
        %4228 = vmatpush2.msra.mxu0 0.0
        %4229 = vmatprep.subr.mxu0 0.0
        %4230 = vmatpush2.msra.mxu0 0.0
        %4231 = vmatprep.subr.mxu0 0.0
        %4232 = vmatpush2.msra.mxu0 0.0
        %4233 = vmatprep.subr.mxu0 0.0
        %4234 = vmatpush2.msra.mxu0 0.0
        %4235 = vmatprep.subr.mxu0 0.0
        %4236 = vmatpush2.msra.mxu0 0.0
        %4237 = vmatprep.subr.mxu0 0.0
        %4238 = vmatpush2.msra.mxu0 0.0
        %4239 = vmatprep.subr.mxu0 0.0
        %4240 = vmatpush2.msra.mxu0 0.0
        %4241 = vmatprep.mubr.f32.mxu0 0.0
        %v4242 = vand.u32 %v4083, 4294901760
        %4243 = vmatmul.mubr.f32.gmra.mxu0 %v4242
        %v4244 = vpop.f32.mrf.mxu0
        %v4245 = vadd.f32 %v4163, %v4244
        %v4246 = vpop.f32.mrf.mxu0
        %v4247 = vadd.f32 %v4165, %v4246
        %4248 = vdwg.mxu0
        %4249 = vmatprep.subr.mxu0 0.0
        %4250 = vmatpush1.msra.mxu0 0.0
        %4251 = vmatprep.subr.mxu0 0.0
        %4252 = vmatpush1.msra.mxu0 0.0
        %4253 = vmatprep.subr.mxu0 0.0
        %4254 = vmatpush1.msra.mxu0 0.0
        %4255 = vmatprep.subr.mxu0 0.0
        %4256 = vmatpush1.msra.mxu0 0.0
        %4257 = vmatprep.subr.mxu0 0.0
        %4258 = vmatpush1.msra.mxu0 0.0
        %4259 = vmatprep.subr.mxu0 0.0
        %4260 = vmatpush1.msra.mxu0 0.0
        %4261 = vmatprep.subr.mxu0 0.0
        %4262 = vmatpush1.msra.mxu0 0.0
        %4263 = vmatprep.subr.mxu0 0.0
        %4264 = vmatpush1.msra.mxu0 0.0
        %4265 = vmatprep.subr.mxu0 0.0
        %4266 = vmatpush1.msra.mxu0 0.0
        %4267 = vmatprep.subr.mxu0 0.0
        %4268 = vmatpush1.msra.mxu0 0.0
        %4269 = vmatprep.subr.mxu0 0.0
        %4270 = vmatpush1.msra.mxu0 0.0
        %4271 = vmatprep.subr.mxu0 0.0
        %4272 = vmatpush1.msra.mxu0 0.0
        %4273 = vmatprep.subr.mxu0 0.0
        %4274 = vmatpush1.msra.mxu0 0.0
        %4275 = vmatprep.subr.mxu0 0.0
        %4276 = vmatpush1.msra.mxu0 0.0
        %4277 = vmatprep.subr.mxu0 0.0
        %4278 = vmatpush1.msra.mxu0 0.0
        %v4279 = vand.u32 %v4087, 4294901760
        %v4280 = vsub.f32 %v4087, %v4279
        %4281 = vmatprep.subr.mxu0 %v4280
        %v4282 = vand.u32 %v4085, 4294901760
        %v4283 = vsub.f32 %v4085, %v4282
        %4284 = vmatpush1.msra.mxu0 %v4283
        %4285 = vmatprep.subr.mxu0 0.0
        %4286 = vmatpush2.msra.mxu0 0.0
        %4287 = vmatprep.subr.mxu0 0.0
        %4288 = vmatpush2.msra.mxu0 0.0
        %4289 = vmatprep.subr.mxu0 0.0
        %4290 = vmatpush2.msra.mxu0 0.0
        %4291 = vmatprep.subr.mxu0 0.0
        %4292 = vmatpush2.msra.mxu0 0.0
        %4293 = vmatprep.subr.mxu0 0.0
        %4294 = vmatpush2.msra.mxu0 0.0
        %4295 = vmatprep.subr.mxu0 0.0
        %4296 = vmatpush2.msra.mxu0 0.0
        %4297 = vmatprep.subr.mxu0 0.0
        %4298 = vmatpush2.msra.mxu0 0.0
        %4299 = vmatprep.subr.mxu0 0.0
        %4300 = vmatpush2.msra.mxu0 0.0
        %4301 = vmatprep.subr.mxu0 0.0
        %4302 = vmatpush2.msra.mxu0 0.0
        %4303 = vmatprep.subr.mxu0 0.0
        %4304 = vmatpush2.msra.mxu0 0.0
        %4305 = vmatprep.subr.mxu0 0.0
        %4306 = vmatpush2.msra.mxu0 0.0
        %4307 = vmatprep.subr.mxu0 0.0
        %4308 = vmatpush2.msra.mxu0 0.0
        %4309 = vmatprep.subr.mxu0 0.0
        %4310 = vmatpush2.msra.mxu0 0.0
        %4311 = vmatprep.subr.mxu0 0.0
        %4312 = vmatpush2.msra.mxu0 0.0
        %4313 = vmatprep.subr.mxu0 0.0
        %4314 = vmatpush2.msra.mxu0 0.0
        %4315 = vmatprep.subr.mxu0 0.0
        %4316 = vmatpush2.msra.mxu0 0.0
        %4317 = vmatprep.mubr.f32.mxu0 0.0
        %v4318 = vand.u32 %v4083, 4294901760
        %v4319 = vsub.f32 %v4083, %v4318
        %4320 = vmatmul.mubr.f32.gmra.mxu0 %v4319
        %v4321 = vpop.f32.mrf.mxu0
        %v4322 = vadd.f32 %v4245, %v4321
        %v4323 = vpop.f32.mrf.mxu0
        %v4324 = vadd.f32 %v4247, %v4323
        %4325 = vdwg.mxu0
        %4326 = vmatprep.subr.mxu0 0.0
        %4327 = vmatpush1.msra.mxu0 0.0
        %4328 = vmatprep.subr.mxu0 0.0
        %4329 = vmatpush1.msra.mxu0 0.0
        %4330 = vmatprep.subr.mxu0 0.0
        %4331 = vmatpush1.msra.mxu0 0.0
        %4332 = vmatprep.subr.mxu0 0.0
        %4333 = vmatpush1.msra.mxu0 0.0
        %4334 = vmatprep.subr.mxu0 0.0
        %4335 = vmatpush1.msra.mxu0 0.0
        %4336 = vmatprep.subr.mxu0 0.0
        %4337 = vmatpush1.msra.mxu0 0.0
        %4338 = vmatprep.subr.mxu0 0.0
        %4339 = vmatpush1.msra.mxu0 0.0
        %4340 = vmatprep.subr.mxu0 0.0
        %4341 = vmatpush1.msra.mxu0 0.0
        %4342 = vmatprep.subr.mxu0 0.0
        %4343 = vmatpush1.msra.mxu0 0.0
        %4344 = vmatprep.subr.mxu0 0.0
        %4345 = vmatpush1.msra.mxu0 0.0
        %4346 = vmatprep.subr.mxu0 0.0
        %4347 = vmatpush1.msra.mxu0 0.0
        %4348 = vmatprep.subr.mxu0 0.0
        %4349 = vmatpush1.msra.mxu0 0.0
        %4350 = vmatprep.subr.mxu0 0.0
        %4351 = vmatpush1.msra.mxu0 0.0
        %4352 = vmatprep.subr.mxu0 0.0
        %4353 = vmatpush1.msra.mxu0 0.0
        %4354 = vmatprep.subr.mxu0 0.0
        %4355 = vmatpush1.msra.mxu0 0.0
        %v4356 = vand.u32 %v4087, 4294901760
        %4357 = vmatprep.subr.mxu0 %v4356
        %v4358 = vand.u32 %v4085, 4294901760
        %4359 = vmatpush1.msra.mxu0 %v4358
        %4360 = vmatprep.subr.mxu0 0.0
        %4361 = vmatpush2.msra.mxu0 0.0
        %4362 = vmatprep.subr.mxu0 0.0
        %4363 = vmatpush2.msra.mxu0 0.0
        %4364 = vmatprep.subr.mxu0 0.0
        %4365 = vmatpush2.msra.mxu0 0.0
        %4366 = vmatprep.subr.mxu0 0.0
        %4367 = vmatpush2.msra.mxu0 0.0
        %4368 = vmatprep.subr.mxu0 0.0
        %4369 = vmatpush2.msra.mxu0 0.0
        %4370 = vmatprep.subr.mxu0 0.0
        %4371 = vmatpush2.msra.mxu0 0.0
        %4372 = vmatprep.subr.mxu0 0.0
        %4373 = vmatpush2.msra.mxu0 0.0
        %4374 = vmatprep.subr.mxu0 0.0
        %4375 = vmatpush2.msra.mxu0 0.0
        %4376 = vmatprep.subr.mxu0 0.0
        %4377 = vmatpush2.msra.mxu0 0.0
        %4378 = vmatprep.subr.mxu0 0.0
        %4379 = vmatpush2.msra.mxu0 0.0
        %4380 = vmatprep.subr.mxu0 0.0
        %4381 = vmatpush2.msra.mxu0 0.0
        %4382 = vmatprep.subr.mxu0 0.0
        %4383 = vmatpush2.msra.mxu0 0.0
        %4384 = vmatprep.subr.mxu0 0.0
        %4385 = vmatpush2.msra.mxu0 0.0
        %4386 = vmatprep.subr.mxu0 0.0
        %4387 = vmatpush2.msra.mxu0 0.0
        %4388 = vmatprep.subr.mxu0 0.0
        %4389 = vmatpush2.msra.mxu0 0.0
        %4390 = vmatprep.subr.mxu0 0.0
        %4391 = vmatpush2.msra.mxu0 0.0
        %4392 = vmatprep.mubr.f32.mxu0 0.0
        %v4393 = vand.u32 %v4083, 4294901760
        %v4394 = vsub.f32 %v4083, %v4393
        %v4395 = vand.u32 %v4394, 4294901760
        %4396 = vmatmul.mubr.f32.gmra.mxu0 %v4395
        %v4397 = vpop.f32.mrf.mxu0
        %v4398 = vadd.f32 %v4322, %v4397
        %v4399 = vpop.f32.mrf.mxu0
        %v4400 = vadd.f32 %v4324, %v4399
        %4401 = vdwg.mxu0
        %4402 = vmatprep.subr.mxu0 0.0
        %4403 = vmatpush1.msra.mxu0 0.0
        %4404 = vmatprep.subr.mxu0 0.0
        %4405 = vmatpush1.msra.mxu0 0.0
        %4406 = vmatprep.subr.mxu0 0.0
        %4407 = vmatpush1.msra.mxu0 0.0
        %4408 = vmatprep.subr.mxu0 0.0
        %4409 = vmatpush1.msra.mxu0 0.0
        %4410 = vmatprep.subr.mxu0 0.0
        %4411 = vmatpush1.msra.mxu0 0.0
        %4412 = vmatprep.subr.mxu0 0.0
        %4413 = vmatpush1.msra.mxu0 0.0
        %4414 = vmatprep.subr.mxu0 0.0
        %4415 = vmatpush1.msra.mxu0 0.0
        %4416 = vmatprep.subr.mxu0 0.0
        %4417 = vmatpush1.msra.mxu0 0.0
        %4418 = vmatprep.subr.mxu0 0.0
        %4419 = vmatpush1.msra.mxu0 0.0
        %4420 = vmatprep.subr.mxu0 0.0
        %4421 = vmatpush1.msra.mxu0 0.0
        %4422 = vmatprep.subr.mxu0 0.0
        %4423 = vmatpush1.msra.mxu0 0.0
        %4424 = vmatprep.subr.mxu0 0.0
        %4425 = vmatpush1.msra.mxu0 0.0
        %4426 = vmatprep.subr.mxu0 0.0
        %4427 = vmatpush1.msra.mxu0 0.0
        %4428 = vmatprep.subr.mxu0 0.0
        %4429 = vmatpush1.msra.mxu0 0.0
        %4430 = vmatprep.subr.mxu0 0.0
        %4431 = vmatpush1.msra.mxu0 0.0
        %v4432 = vand.u32 %v4087, 4294901760
        %v4433 = vsub.f32 %v4087, %v4432
        %v4434 = vand.u32 %v4433, 4294901760
        %4435 = vmatprep.subr.mxu0 %v4434
        %v4436 = vand.u32 %v4085, 4294901760
        %v4437 = vsub.f32 %v4085, %v4436
        %v4438 = vand.u32 %v4437, 4294901760
        %4439 = vmatpush1.msra.mxu0 %v4438
        %4440 = vmatprep.subr.mxu0 0.0
        %4441 = vmatpush2.msra.mxu0 0.0
        %4442 = vmatprep.subr.mxu0 0.0
        %4443 = vmatpush2.msra.mxu0 0.0
        %4444 = vmatprep.subr.mxu0 0.0
        %4445 = vmatpush2.msra.mxu0 0.0
        %4446 = vmatprep.subr.mxu0 0.0
        %4447 = vmatpush2.msra.mxu0 0.0
        %4448 = vmatprep.subr.mxu0 0.0
        %4449 = vmatpush2.msra.mxu0 0.0
        %4450 = vmatprep.subr.mxu0 0.0
        %4451 = vmatpush2.msra.mxu0 0.0
        %4452 = vmatprep.subr.mxu0 0.0
        %4453 = vmatpush2.msra.mxu0 0.0
        %4454 = vmatprep.subr.mxu0 0.0
        %4455 = vmatpush2.msra.mxu0 0.0
        %4456 = vmatprep.subr.mxu0 0.0
        %4457 = vmatpush2.msra.mxu0 0.0
        %4458 = vmatprep.subr.mxu0 0.0
        %4459 = vmatpush2.msra.mxu0 0.0
        %4460 = vmatprep.subr.mxu0 0.0
        %4461 = vmatpush2.msra.mxu0 0.0
        %4462 = vmatprep.subr.mxu0 0.0
        %4463 = vmatpush2.msra.mxu0 0.0
        %4464 = vmatprep.subr.mxu0 0.0
        %4465 = vmatpush2.msra.mxu0 0.0
        %4466 = vmatprep.subr.mxu0 0.0
        %4467 = vmatpush2.msra.mxu0 0.0
        %4468 = vmatprep.subr.mxu0 0.0
        %4469 = vmatpush2.msra.mxu0 0.0
        %4470 = vmatprep.subr.mxu0 0.0
        %4471 = vmatpush2.msra.mxu0 0.0
        %4472 = vmatprep.mubr.f32.mxu0 0.0
        %v4473 = vand.u32 %v4083, 4294901760
        %4474 = vmatmul.mubr.f32.gmra.mxu0 %v4473
        %v4475 = vpop.f32.mrf.mxu0
        %v4476 = vadd.f32 %v4398, %v4475
        %v4477 = vpop.f32.mrf.mxu0
        %v4478 = vadd.f32 %v4400, %v4477
        %4479 = vdwg.mxu0
        %4480 = vmatprep.subr.mxu0 0.0
        %4481 = vmatpush1.msra.mxu0 0.0
        %4482 = vmatprep.subr.mxu0 0.0
        %4483 = vmatpush1.msra.mxu0 0.0
        %4484 = vmatprep.subr.mxu0 0.0
        %4485 = vmatpush1.msra.mxu0 0.0
        %4486 = vmatprep.subr.mxu0 0.0
        %4487 = vmatpush1.msra.mxu0 0.0
        %4488 = vmatprep.subr.mxu0 0.0
        %4489 = vmatpush1.msra.mxu0 0.0
        %4490 = vmatprep.subr.mxu0 0.0
        %4491 = vmatpush1.msra.mxu0 0.0
        %4492 = vmatprep.subr.mxu0 0.0
        %4493 = vmatpush1.msra.mxu0 0.0
        %4494 = vmatprep.subr.mxu0 0.0
        %4495 = vmatpush1.msra.mxu0 0.0
        %4496 = vmatprep.subr.mxu0 0.0
        %4497 = vmatpush1.msra.mxu0 0.0
        %4498 = vmatprep.subr.mxu0 0.0
        %4499 = vmatpush1.msra.mxu0 0.0
        %4500 = vmatprep.subr.mxu0 0.0
        %4501 = vmatpush1.msra.mxu0 0.0
        %4502 = vmatprep.subr.mxu0 0.0
        %4503 = vmatpush1.msra.mxu0 0.0
        %4504 = vmatprep.subr.mxu0 0.0
        %4505 = vmatpush1.msra.mxu0 0.0
        %4506 = vmatprep.subr.mxu0 0.0
        %4507 = vmatpush1.msra.mxu0 0.0
        %4508 = vmatprep.subr.mxu0 0.0
        %4509 = vmatpush1.msra.mxu0 0.0
        %v4510 = vand.u32 %v4087, 4294901760
        %4511 = vmatprep.subr.mxu0 %v4510
        %v4512 = vand.u32 %v4085, 4294901760
        %4513 = vmatpush1.msra.mxu0 %v4512
        %4514 = vmatprep.subr.mxu0 0.0
        %4515 = vmatpush2.msra.mxu0 0.0
        %4516 = vmatprep.subr.mxu0 0.0
        %4517 = vmatpush2.msra.mxu0 0.0
        %4518 = vmatprep.subr.mxu0 0.0
        %4519 = vmatpush2.msra.mxu0 0.0
        %4520 = vmatprep.subr.mxu0 0.0
        %4521 = vmatpush2.msra.mxu0 0.0
        %4522 = vmatprep.subr.mxu0 0.0
        %4523 = vmatpush2.msra.mxu0 0.0
        %4524 = vmatprep.subr.mxu0 0.0
        %4525 = vmatpush2.msra.mxu0 0.0
        %4526 = vmatprep.subr.mxu0 0.0
        %4527 = vmatpush2.msra.mxu0 0.0
        %4528 = vmatprep.subr.mxu0 0.0
        %4529 = vmatpush2.msra.mxu0 0.0
        %4530 = vmatprep.subr.mxu0 0.0
        %4531 = vmatpush2.msra.mxu0 0.0
        %4532 = vmatprep.subr.mxu0 0.0
        %4533 = vmatpush2.msra.mxu0 0.0
        %4534 = vmatprep.subr.mxu0 0.0
        %4535 = vmatpush2.msra.mxu0 0.0
        %4536 = vmatprep.subr.mxu0 0.0
        %4537 = vmatpush2.msra.mxu0 0.0
        %4538 = vmatprep.subr.mxu0 0.0
        %4539 = vmatpush2.msra.mxu0 0.0
        %4540 = vmatprep.subr.mxu0 0.0
        %4541 = vmatpush2.msra.mxu0 0.0
        %4542 = vmatprep.subr.mxu0 0.0
        %4543 = vmatpush2.msra.mxu0 0.0
        %4544 = vmatprep.subr.mxu0 0.0
        %4545 = vmatpush2.msra.mxu0 0.0
        %4546 = vmatprep.mubr.f32.mxu0 0.0
        %v4547 = vand.u32 %v4083, 4294901760
        %4548 = vmatmul.mubr.f32.gmra.mxu0 %v4547
        %v4549 = vpop.f32.mrf.mxu0
        %v4550 = vadd.f32 %v4476, %v4549
        %v4551 = vpop.f32.mrf.mxu0
        %v4552 = vadd.f32 %v4478, %v4551
        %4553 = vdwg.mxu0
        %v4554 = vadd.f32 %v4078, %v4550
        %v4555 = vadd.f32 %v4079, %v4552
        %4556 = vrot.lane.b32.xlu0 %v3075, 1
        %v4557 = vpop.permute.xlu0 %4556
        %4558 = vrot.lane.b32.xlu0 %v3079, 1
        %v4559 = vpop.permute.xlu0 %4558
        %v4560 = vsel %vm3603, %v4557, %v4559
        %v4564 = vmul.f32 %v2075, %v4557
        %v4565 = vmul.f32 %v2076, %v4560
        %v4566 = vmul.f32 %v4559, 0.0
        %s4567 = scalar_lea.vmem %s4, 20
        %v4568 = vld [vmem:[%s4567] sm:$0xf]
        %4572 = vrot.lane.b32.xlu0 %v4564, 127
        %v4573 = vpop.permute.xlu0 %4572
        %4574 = vrot.lane.b32.xlu0 %v4565, 127
        %v4575 = vpop.permute.xlu0 %4574
        %4576 = vrot.lane.b32.xlu0 %v4566, 127
        %v4577 = vpop.permute.xlu0 %4576
        %v4578 = vsel %vm3584, %v4573, %v4575
        %v4579 = vsel %vm3584, %v4575, %v4577
        %v4581 = vsel %vm607, %v4568, 0
        %v4583 = vsel %vm611, %v4578, 0
        %v4585 = vsel %vm611, %v4579, 0
        %4587 = vmatprep.subr.mxu0 0.0
        %4588 = vmatpush1.msra.mxu0 0.0
        %4589 = vmatprep.subr.mxu0 0.0
        %4590 = vmatpush1.msra.mxu0 0.0
        %4591 = vmatprep.subr.mxu0 0.0
        %4592 = vmatpush1.msra.mxu0 0.0
        %4593 = vmatprep.subr.mxu0 0.0
        %4594 = vmatpush1.msra.mxu0 0.0
        %4595 = vmatprep.subr.mxu0 0.0
        %4596 = vmatpush1.msra.mxu0 0.0
        %4597 = vmatprep.subr.mxu0 0.0
        %4598 = vmatpush1.msra.mxu0 0.0
        %4599 = vmatprep.subr.mxu0 0.0
        %4600 = vmatpush1.msra.mxu0 0.0
        %4601 = vmatprep.subr.mxu0 0.0
        %4602 = vmatpush1.msra.mxu0 0.0
        %4603 = vmatprep.subr.mxu0 0.0
        %4604 = vmatpush1.msra.mxu0 0.0
        %4605 = vmatprep.subr.mxu0 0.0
        %4606 = vmatpush1.msra.mxu0 0.0
        %4607 = vmatprep.subr.mxu0 0.0
        %4608 = vmatpush1.msra.mxu0 0.0
        %4609 = vmatprep.subr.mxu0 0.0
        %4610 = vmatpush1.msra.mxu0 0.0
        %4611 = vmatprep.subr.mxu0 0.0
        %4612 = vmatpush1.msra.mxu0 0.0
        %4613 = vmatprep.subr.mxu0 0.0
        %4614 = vmatpush1.msra.mxu0 0.0
        %4615 = vmatprep.subr.mxu0 0.0
        %4616 = vmatpush1.msra.mxu0 0.0
        %v4617 = vand.u32 %v4585, 4294901760
        %4618 = vmatprep.subr.mxu0 %v4617
        %v4619 = vand.u32 %v4583, 4294901760
        %4620 = vmatpush1.msra.mxu0 %v4619
        %4621 = vmatprep.subr.mxu0 0.0
        %4622 = vmatpush2.msra.mxu0 0.0
        %4623 = vmatprep.subr.mxu0 0.0
        %4624 = vmatpush2.msra.mxu0 0.0
        %4625 = vmatprep.subr.mxu0 0.0
        %4626 = vmatpush2.msra.mxu0 0.0
        %4627 = vmatprep.subr.mxu0 0.0
        %4628 = vmatpush2.msra.mxu0 0.0
        %4629 = vmatprep.subr.mxu0 0.0
        %4630 = vmatpush2.msra.mxu0 0.0
        %4631 = vmatprep.subr.mxu0 0.0
        %4632 = vmatpush2.msra.mxu0 0.0
        %4633 = vmatprep.subr.mxu0 0.0
        %4634 = vmatpush2.msra.mxu0 0.0
        %4635 = vmatprep.subr.mxu0 0.0
        %4636 = vmatpush2.msra.mxu0 0.0
        %4637 = vmatprep.subr.mxu0 0.0
        %4638 = vmatpush2.msra.mxu0 0.0
        %4639 = vmatprep.subr.mxu0 0.0
        %4640 = vmatpush2.msra.mxu0 0.0
        %4641 = vmatprep.subr.mxu0 0.0
        %4642 = vmatpush2.msra.mxu0 0.0
        %4643 = vmatprep.subr.mxu0 0.0
        %4644 = vmatpush2.msra.mxu0 0.0
        %4645 = vmatprep.subr.mxu0 0.0
        %4646 = vmatpush2.msra.mxu0 0.0
        %4647 = vmatprep.subr.mxu0 0.0
        %4648 = vmatpush2.msra.mxu0 0.0
        %4649 = vmatprep.subr.mxu0 0.0
        %4650 = vmatpush2.msra.mxu0 0.0
        %4651 = vmatprep.subr.mxu0 0.0
        %4652 = vmatpush2.msra.mxu0 0.0
        %4653 = vmatprep.mubr.f32.mxu0 0.0
        %v4654 = vand.u32 %v4581, 4294901760
        %v4655 = vsub.f32 %v4581, %v4654
        %v4656 = vand.u32 %v4655, 4294901760
        %v4657 = vsub.f32 %v4655, %v4656
        %v4658 = vand.u32 %v4657, 4294901760
        %4659 = vmatmul.mubr.f32.gmra.mxu0 %v4658
        %v4660 = vpop.f32.mrf.mxu0
        %v4661 = vadd.f32 0.0, %v4660
        %v4662 = vpop.f32.mrf.mxu0
        %v4663 = vadd.f32 0.0, %v4662
        %4664 = vdwg.mxu0
        %4665 = vmatprep.subr.mxu0 0.0
        %4666 = vmatpush1.msra.mxu0 0.0
        %4667 = vmatprep.subr.mxu0 0.0
        %4668 = vmatpush1.msra.mxu0 0.0
        %4669 = vmatprep.subr.mxu0 0.0
        %4670 = vmatpush1.msra.mxu0 0.0
        %4671 = vmatprep.subr.mxu0 0.0
        %4672 = vmatpush1.msra.mxu0 0.0
        %4673 = vmatprep.subr.mxu0 0.0
        %4674 = vmatpush1.msra.mxu0 0.0
        %4675 = vmatprep.subr.mxu0 0.0
        %4676 = vmatpush1.msra.mxu0 0.0
        %4677 = vmatprep.subr.mxu0 0.0
        %4678 = vmatpush1.msra.mxu0 0.0
        %4679 = vmatprep.subr.mxu0 0.0
        %4680 = vmatpush1.msra.mxu0 0.0
        %4681 = vmatprep.subr.mxu0 0.0
        %4682 = vmatpush1.msra.mxu0 0.0
        %4683 = vmatprep.subr.mxu0 0.0
        %4684 = vmatpush1.msra.mxu0 0.0
        %4685 = vmatprep.subr.mxu0 0.0
        %4686 = vmatpush1.msra.mxu0 0.0
        %4687 = vmatprep.subr.mxu0 0.0
        %4688 = vmatpush1.msra.mxu0 0.0
        %4689 = vmatprep.subr.mxu0 0.0
        %4690 = vmatpush1.msra.mxu0 0.0
        %4691 = vmatprep.subr.mxu0 0.0
        %4692 = vmatpush1.msra.mxu0 0.0
        %4693 = vmatprep.subr.mxu0 0.0
        %4694 = vmatpush1.msra.mxu0 0.0
        %v4695 = vand.u32 %v4585, 4294901760
        %v4696 = vsub.f32 %v4585, %v4695
        %v4697 = vand.u32 %v4696, 4294901760
        %v4698 = vsub.f32 %v4696, %v4697
        %v4699 = vand.u32 %v4698, 4294901760
        %4700 = vmatprep.subr.mxu0 %v4699
        %v4701 = vand.u32 %v4583, 4294901760
        %v4702 = vsub.f32 %v4583, %v4701
        %v4703 = vand.u32 %v4702, 4294901760
        %v4704 = vsub.f32 %v4702, %v4703
        %v4705 = vand.u32 %v4704, 4294901760
        %4706 = vmatpush1.msra.mxu0 %v4705
        %4707 = vmatprep.subr.mxu0 0.0
        %4708 = vmatpush2.msra.mxu0 0.0
        %4709 = vmatprep.subr.mxu0 0.0
        %4710 = vmatpush2.msra.mxu0 0.0
        %4711 = vmatprep.subr.mxu0 0.0
        %4712 = vmatpush2.msra.mxu0 0.0
        %4713 = vmatprep.subr.mxu0 0.0
        %4714 = vmatpush2.msra.mxu0 0.0
        %4715 = vmatprep.subr.mxu0 0.0
        %4716 = vmatpush2.msra.mxu0 0.0
        %4717 = vmatprep.subr.mxu0 0.0
        %4718 = vmatpush2.msra.mxu0 0.0
        %4719 = vmatprep.subr.mxu0 0.0
        %4720 = vmatpush2.msra.mxu0 0.0
        %4721 = vmatprep.subr.mxu0 0.0
        %4722 = vmatpush2.msra.mxu0 0.0
        %4723 = vmatprep.subr.mxu0 0.0
        %4724 = vmatpush2.msra.mxu0 0.0
        %4725 = vmatprep.subr.mxu0 0.0
        %4726 = vmatpush2.msra.mxu0 0.0
        %4727 = vmatprep.subr.mxu0 0.0
        %4728 = vmatpush2.msra.mxu0 0.0
        %4729 = vmatprep.subr.mxu0 0.0
        %4730 = vmatpush2.msra.mxu0 0.0
        %4731 = vmatprep.subr.mxu0 0.0
        %4732 = vmatpush2.msra.mxu0 0.0
        %4733 = vmatprep.subr.mxu0 0.0
        %4734 = vmatpush2.msra.mxu0 0.0
        %4735 = vmatprep.subr.mxu0 0.0
        %4736 = vmatpush2.msra.mxu0 0.0
        %4737 = vmatprep.subr.mxu0 0.0
        %4738 = vmatpush2.msra.mxu0 0.0
        %4739 = vmatprep.mubr.f32.mxu0 0.0
        %v4740 = vand.u32 %v4581, 4294901760
        %4741 = vmatmul.mubr.f32.gmra.mxu0 %v4740
        %v4742 = vpop.f32.mrf.mxu0
        %v4743 = vadd.f32 %v4661, %v4742
        %v4744 = vpop.f32.mrf.mxu0
        %v4745 = vadd.f32 %v4663, %v4744
        %4746 = vdwg.mxu0
        %4747 = vmatprep.subr.mxu0 0.0
        %4748 = vmatpush1.msra.mxu0 0.0
        %4749 = vmatprep.subr.mxu0 0.0
        %4750 = vmatpush1.msra.mxu0 0.0
        %4751 = vmatprep.subr.mxu0 0.0
        %4752 = vmatpush1.msra.mxu0 0.0
        %4753 = vmatprep.subr.mxu0 0.0
        %4754 = vmatpush1.msra.mxu0 0.0
        %4755 = vmatprep.subr.mxu0 0.0
        %4756 = vmatpush1.msra.mxu0 0.0
        %4757 = vmatprep.subr.mxu0 0.0
        %4758 = vmatpush1.msra.mxu0 0.0
        %4759 = vmatprep.subr.mxu0 0.0
        %4760 = vmatpush1.msra.mxu0 0.0
        %4761 = vmatprep.subr.mxu0 0.0
        %4762 = vmatpush1.msra.mxu0 0.0
        %4763 = vmatprep.subr.mxu0 0.0
        %4764 = vmatpush1.msra.mxu0 0.0
        %4765 = vmatprep.subr.mxu0 0.0
        %4766 = vmatpush1.msra.mxu0 0.0
        %4767 = vmatprep.subr.mxu0 0.0
        %4768 = vmatpush1.msra.mxu0 0.0
        %4769 = vmatprep.subr.mxu0 0.0
        %4770 = vmatpush1.msra.mxu0 0.0
        %4771 = vmatprep.subr.mxu0 0.0
        %4772 = vmatpush1.msra.mxu0 0.0
        %4773 = vmatprep.subr.mxu0 0.0
        %4774 = vmatpush1.msra.mxu0 0.0
        %4775 = vmatprep.subr.mxu0 0.0
        %4776 = vmatpush1.msra.mxu0 0.0
        %v4777 = vand.u32 %v4585, 4294901760
        %v4778 = vsub.f32 %v4585, %v4777
        %4779 = vmatprep.subr.mxu0 %v4778
        %v4780 = vand.u32 %v4583, 4294901760
        %v4781 = vsub.f32 %v4583, %v4780
        %4782 = vmatpush1.msra.mxu0 %v4781
        %4783 = vmatprep.subr.mxu0 0.0
        %4784 = vmatpush2.msra.mxu0 0.0
        %4785 = vmatprep.subr.mxu0 0.0
        %4786 = vmatpush2.msra.mxu0 0.0
        %4787 = vmatprep.subr.mxu0 0.0
        %4788 = vmatpush2.msra.mxu0 0.0
        %4789 = vmatprep.subr.mxu0 0.0
        %4790 = vmatpush2.msra.mxu0 0.0
        %4791 = vmatprep.subr.mxu0 0.0
        %4792 = vmatpush2.msra.mxu0 0.0
        %4793 = vmatprep.subr.mxu0 0.0
        %4794 = vmatpush2.msra.mxu0 0.0
        %4795 = vmatprep.subr.mxu0 0.0
        %4796 = vmatpush2.msra.mxu0 0.0
        %4797 = vmatprep.subr.mxu0 0.0
        %4798 = vmatpush2.msra.mxu0 0.0
        %4799 = vmatprep.subr.mxu0 0.0
        %4800 = vmatpush2.msra.mxu0 0.0
        %4801 = vmatprep.subr.mxu0 0.0
        %4802 = vmatpush2.msra.mxu0 0.0
        %4803 = vmatprep.subr.mxu0 0.0
        %4804 = vmatpush2.msra.mxu0 0.0
        %4805 = vmatprep.subr.mxu0 0.0
        %4806 = vmatpush2.msra.mxu0 0.0
        %4807 = vmatprep.subr.mxu0 0.0
        %4808 = vmatpush2.msra.mxu0 0.0
        %4809 = vmatprep.subr.mxu0 0.0
        %4810 = vmatpush2.msra.mxu0 0.0
        %4811 = vmatprep.subr.mxu0 0.0
        %4812 = vmatpush2.msra.mxu0 0.0
        %4813 = vmatprep.subr.mxu0 0.0
        %4814 = vmatpush2.msra.mxu0 0.0
        %4815 = vmatprep.mubr.f32.mxu0 0.0
        %v4816 = vand.u32 %v4581, 4294901760
        %v4817 = vsub.f32 %v4581, %v4816
        %4818 = vmatmul.mubr.f32.gmra.mxu0 %v4817
        %v4819 = vpop.f32.mrf.mxu0
        %v4820 = vadd.f32 %v4743, %v4819
        %v4821 = vpop.f32.mrf.mxu0
        %v4822 = vadd.f32 %v4745, %v4821
        %4823 = vdwg.mxu0
        %4824 = vmatprep.subr.mxu0 0.0
        %4825 = vmatpush1.msra.mxu0 0.0
        %4826 = vmatprep.subr.mxu0 0.0
        %4827 = vmatpush1.msra.mxu0 0.0
        %4828 = vmatprep.subr.mxu0 0.0
        %4829 = vmatpush1.msra.mxu0 0.0
        %4830 = vmatprep.subr.mxu0 0.0
        %4831 = vmatpush1.msra.mxu0 0.0
        %4832 = vmatprep.subr.mxu0 0.0
        %4833 = vmatpush1.msra.mxu0 0.0
        %4834 = vmatprep.subr.mxu0 0.0
        %4835 = vmatpush1.msra.mxu0 0.0
        %4836 = vmatprep.subr.mxu0 0.0
        %4837 = vmatpush1.msra.mxu0 0.0
        %4838 = vmatprep.subr.mxu0 0.0
        %4839 = vmatpush1.msra.mxu0 0.0
        %4840 = vmatprep.subr.mxu0 0.0
        %4841 = vmatpush1.msra.mxu0 0.0
        %4842 = vmatprep.subr.mxu0 0.0
        %4843 = vmatpush1.msra.mxu0 0.0
        %4844 = vmatprep.subr.mxu0 0.0
        %4845 = vmatpush1.msra.mxu0 0.0
        %4846 = vmatprep.subr.mxu0 0.0
        %4847 = vmatpush1.msra.mxu0 0.0
        %4848 = vmatprep.subr.mxu0 0.0
        %4849 = vmatpush1.msra.mxu0 0.0
        %4850 = vmatprep.subr.mxu0 0.0
        %4851 = vmatpush1.msra.mxu0 0.0
        %4852 = vmatprep.subr.mxu0 0.0
        %4853 = vmatpush1.msra.mxu0 0.0
        %v4854 = vand.u32 %v4585, 4294901760
        %4855 = vmatprep.subr.mxu0 %v4854
        %v4856 = vand.u32 %v4583, 4294901760
        %4857 = vmatpush1.msra.mxu0 %v4856
        %4858 = vmatprep.subr.mxu0 0.0
        %4859 = vmatpush2.msra.mxu0 0.0
        %4860 = vmatprep.subr.mxu0 0.0
        %4861 = vmatpush2.msra.mxu0 0.0
        %4862 = vmatprep.subr.mxu0 0.0
        %4863 = vmatpush2.msra.mxu0 0.0
        %4864 = vmatprep.subr.mxu0 0.0
        %4865 = vmatpush2.msra.mxu0 0.0
        %4866 = vmatprep.subr.mxu0 0.0
        %4867 = vmatpush2.msra.mxu0 0.0
        %4868 = vmatprep.subr.mxu0 0.0
        %4869 = vmatpush2.msra.mxu0 0.0
        %4870 = vmatprep.subr.mxu0 0.0
        %4871 = vmatpush2.msra.mxu0 0.0
        %4872 = vmatprep.subr.mxu0 0.0
        %4873 = vmatpush2.msra.mxu0 0.0
        %4874 = vmatprep.subr.mxu0 0.0
        %4875 = vmatpush2.msra.mxu0 0.0
        %4876 = vmatprep.subr.mxu0 0.0
        %4877 = vmatpush2.msra.mxu0 0.0
        %4878 = vmatprep.subr.mxu0 0.0
        %4879 = vmatpush2.msra.mxu0 0.0
        %4880 = vmatprep.subr.mxu0 0.0
        %4881 = vmatpush2.msra.mxu0 0.0
        %4882 = vmatprep.subr.mxu0 0.0
        %4883 = vmatpush2.msra.mxu0 0.0
        %4884 = vmatprep.subr.mxu0 0.0
        %4885 = vmatpush2.msra.mxu0 0.0
        %4886 = vmatprep.subr.mxu0 0.0
        %4887 = vmatpush2.msra.mxu0 0.0
        %4888 = vmatprep.subr.mxu0 0.0
        %4889 = vmatpush2.msra.mxu0 0.0
        %4890 = vmatprep.mubr.f32.mxu0 0.0
        %v4891 = vand.u32 %v4581, 4294901760
        %v4892 = vsub.f32 %v4581, %v4891
        %v4893 = vand.u32 %v4892, 4294901760
        %4894 = vmatmul.mubr.f32.gmra.mxu0 %v4893
        %v4895 = vpop.f32.mrf.mxu0
        %v4896 = vadd.f32 %v4820, %v4895
        %v4897 = vpop.f32.mrf.mxu0
        %v4898 = vadd.f32 %v4822, %v4897
        %4899 = vdwg.mxu0
        %4900 = vmatprep.subr.mxu0 0.0
        %4901 = vmatpush1.msra.mxu0 0.0
        %4902 = vmatprep.subr.mxu0 0.0
        %4903 = vmatpush1.msra.mxu0 0.0
        %4904 = vmatprep.subr.mxu0 0.0
        %4905 = vmatpush1.msra.mxu0 0.0
        %4906 = vmatprep.subr.mxu0 0.0
        %4907 = vmatpush1.msra.mxu0 0.0
        %4908 = vmatprep.subr.mxu0 0.0
        %4909 = vmatpush1.msra.mxu0 0.0
        %4910 = vmatprep.subr.mxu0 0.0
        %4911 = vmatpush1.msra.mxu0 0.0
        %4912 = vmatprep.subr.mxu0 0.0
        %4913 = vmatpush1.msra.mxu0 0.0
        %4914 = vmatprep.subr.mxu0 0.0
        %4915 = vmatpush1.msra.mxu0 0.0
        %4916 = vmatprep.subr.mxu0 0.0
        %4917 = vmatpush1.msra.mxu0 0.0
        %4918 = vmatprep.subr.mxu0 0.0
        %4919 = vmatpush1.msra.mxu0 0.0
        %4920 = vmatprep.subr.mxu0 0.0
        %4921 = vmatpush1.msra.mxu0 0.0
        %4922 = vmatprep.subr.mxu0 0.0
        %4923 = vmatpush1.msra.mxu0 0.0
        %4924 = vmatprep.subr.mxu0 0.0
        %4925 = vmatpush1.msra.mxu0 0.0
        %4926 = vmatprep.subr.mxu0 0.0
        %4927 = vmatpush1.msra.mxu0 0.0
        %4928 = vmatprep.subr.mxu0 0.0
        %4929 = vmatpush1.msra.mxu0 0.0
        %v4930 = vand.u32 %v4585, 4294901760
        %v4931 = vsub.f32 %v4585, %v4930
        %v4932 = vand.u32 %v4931, 4294901760
        %4933 = vmatprep.subr.mxu0 %v4932
        %v4934 = vand.u32 %v4583, 4294901760
        %v4935 = vsub.f32 %v4583, %v4934
        %v4936 = vand.u32 %v4935, 4294901760
        %4937 = vmatpush1.msra.mxu0 %v4936
        %4938 = vmatprep.subr.mxu0 0.0
        %4939 = vmatpush2.msra.mxu0 0.0
        %4940 = vmatprep.subr.mxu0 0.0
        %4941 = vmatpush2.msra.mxu0 0.0
        %4942 = vmatprep.subr.mxu0 0.0
        %4943 = vmatpush2.msra.mxu0 0.0
        %4944 = vmatprep.subr.mxu0 0.0
        %4945 = vmatpush2.msra.mxu0 0.0
        %4946 = vmatprep.subr.mxu0 0.0
        %4947 = vmatpush2.msra.mxu0 0.0
        %4948 = vmatprep.subr.mxu0 0.0
        %4949 = vmatpush2.msra.mxu0 0.0
        %4950 = vmatprep.subr.mxu0 0.0
        %4951 = vmatpush2.msra.mxu0 0.0
        %4952 = vmatprep.subr.mxu0 0.0
        %4953 = vmatpush2.msra.mxu0 0.0
        %4954 = vmatprep.subr.mxu0 0.0
        %4955 = vmatpush2.msra.mxu0 0.0
        %4956 = vmatprep.subr.mxu0 0.0
        %4957 = vmatpush2.msra.mxu0 0.0
        %4958 = vmatprep.subr.mxu0 0.0
        %4959 = vmatpush2.msra.mxu0 0.0
        %4960 = vmatprep.subr.mxu0 0.0
        %4961 = vmatpush2.msra.mxu0 0.0
        %4962 = vmatprep.subr.mxu0 0.0
        %4963 = vmatpush2.msra.mxu0 0.0
        %4964 = vmatprep.subr.mxu0 0.0
        %4965 = vmatpush2.msra.mxu0 0.0
        %4966 = vmatprep.subr.mxu0 0.0
        %4967 = vmatpush2.msra.mxu0 0.0
        %4968 = vmatprep.subr.mxu0 0.0
        %4969 = vmatpush2.msra.mxu0 0.0
        %4970 = vmatprep.mubr.f32.mxu0 0.0
        %v4971 = vand.u32 %v4581, 4294901760
        %4972 = vmatmul.mubr.f32.gmra.mxu0 %v4971
        %v4973 = vpop.f32.mrf.mxu0
        %v4974 = vadd.f32 %v4896, %v4973
        %v4975 = vpop.f32.mrf.mxu0
        %v4976 = vadd.f32 %v4898, %v4975
        %4977 = vdwg.mxu0
        %4978 = vmatprep.subr.mxu0 0.0
        %4979 = vmatpush1.msra.mxu0 0.0
        %4980 = vmatprep.subr.mxu0 0.0
        %4981 = vmatpush1.msra.mxu0 0.0
        %4982 = vmatprep.subr.mxu0 0.0
        %4983 = vmatpush1.msra.mxu0 0.0
        %4984 = vmatprep.subr.mxu0 0.0
        %4985 = vmatpush1.msra.mxu0 0.0
        %4986 = vmatprep.subr.mxu0 0.0
        %4987 = vmatpush1.msra.mxu0 0.0
        %4988 = vmatprep.subr.mxu0 0.0
        %4989 = vmatpush1.msra.mxu0 0.0
        %4990 = vmatprep.subr.mxu0 0.0
        %4991 = vmatpush1.msra.mxu0 0.0
        %4992 = vmatprep.subr.mxu0 0.0
        %4993 = vmatpush1.msra.mxu0 0.0
        %4994 = vmatprep.subr.mxu0 0.0
        %4995 = vmatpush1.msra.mxu0 0.0
        %4996 = vmatprep.subr.mxu0 0.0
        %4997 = vmatpush1.msra.mxu0 0.0
        %4998 = vmatprep.subr.mxu0 0.0
        %4999 = vmatpush1.msra.mxu0 0.0
        %5000 = vmatprep.subr.mxu0 0.0
        %5001 = vmatpush1.msra.mxu0 0.0
        %5002 = vmatprep.subr.mxu0 0.0
        %5003 = vmatpush1.msra.mxu0 0.0
        %5004 = vmatprep.subr.mxu0 0.0
        %5005 = vmatpush1.msra.mxu0 0.0
        %5006 = vmatprep.subr.mxu0 0.0
        %5007 = vmatpush1.msra.mxu0 0.0
        %v5008 = vand.u32 %v4585, 4294901760
        %5009 = vmatprep.subr.mxu0 %v5008
        %v5010 = vand.u32 %v4583, 4294901760
        %5011 = vmatpush1.msra.mxu0 %v5010
        %5012 = vmatprep.subr.mxu0 0.0
        %5013 = vmatpush2.msra.mxu0 0.0
        %5014 = vmatprep.subr.mxu0 0.0
        %5015 = vmatpush2.msra.mxu0 0.0
        %5016 = vmatprep.subr.mxu0 0.0
        %5017 = vmatpush2.msra.mxu0 0.0
        %5018 = vmatprep.subr.mxu0 0.0
        %5019 = vmatpush2.msra.mxu0 0.0
        %5020 = vmatprep.subr.mxu0 0.0
        %5021 = vmatpush2.msra.mxu0 0.0
        %5022 = vmatprep.subr.mxu0 0.0
        %5023 = vmatpush2.msra.mxu0 0.0
        %5024 = vmatprep.subr.mxu0 0.0
        %5025 = vmatpush2.msra.mxu0 0.0
        %5026 = vmatprep.subr.mxu0 0.0
        %5027 = vmatpush2.msra.mxu0 0.0
        %5028 = vmatprep.subr.mxu0 0.0
        %5029 = vmatpush2.msra.mxu0 0.0
        %5030 = vmatprep.subr.mxu0 0.0
        %5031 = vmatpush2.msra.mxu0 0.0
        %5032 = vmatprep.subr.mxu0 0.0
        %5033 = vmatpush2.msra.mxu0 0.0
        %5034 = vmatprep.subr.mxu0 0.0
        %5035 = vmatpush2.msra.mxu0 0.0
        %5036 = vmatprep.subr.mxu0 0.0
        %5037 = vmatpush2.msra.mxu0 0.0
        %5038 = vmatprep.subr.mxu0 0.0
        %5039 = vmatpush2.msra.mxu0 0.0
        %5040 = vmatprep.subr.mxu0 0.0
        %5041 = vmatpush2.msra.mxu0 0.0
        %5042 = vmatprep.subr.mxu0 0.0
        %5043 = vmatpush2.msra.mxu0 0.0
        %5044 = vmatprep.mubr.f32.mxu0 0.0
        %v5045 = vand.u32 %v4581, 4294901760
        %5046 = vmatmul.mubr.f32.gmra.mxu0 %v5045
        %v5047 = vpop.f32.mrf.mxu0
        %v5048 = vadd.f32 %v4974, %v5047
        %v5049 = vpop.f32.mrf.mxu0
        %v5050 = vadd.f32 %v4976, %v5049
        %5051 = vdwg.mxu0
        %v5052 = vadd.f32 %v4554, %v5048
        %v5053 = vadd.f32 %v4555, %v5050
        %5054 = vrot.lane.b32.xlu0 %v2082, 15
        %v5055 = vpop.permute.xlu0 %5054
        %5056 = vrot.lane.b32.xlu0 %v2086, 15
        %v5057 = vpop.permute.xlu0 %5056
        %v5058 = vsel %vm3103, %v5055, %v5057
        %v5062 = vmul.f32 %v2075, %v5055
        %v5063 = vmul.f32 %v2076, %v5058
        %v5064 = vmul.f32 %v5057, 0.0
        %s5065 = scalar_lea.vmem %s4, 24
        %v5066 = vld [vmem:[%s5065] sm:$0xf]
        %5070 = vrot.lane.b32.xlu0 %v5062, 113
        %v5071 = vpop.permute.xlu0 %5070
        %5072 = vrot.lane.b32.xlu0 %v5063, 113
        %v5073 = vpop.permute.xlu0 %5072
        %5074 = vrot.lane.b32.xlu0 %v5064, 113
        %v5075 = vpop.permute.xlu0 %5074
        %v5076 = vsel %vm3084, %v5071, %v5073
        %v5077 = vsel %vm3084, %v5073, %v5075
        %v5079 = vsel %vm607, %v5066, 0
        %v5081 = vsel %vm611, %v5076, 0
        %v5083 = vsel %vm611, %v5077, 0
        %5085 = vmatprep.subr.mxu0 0.0
        %5086 = vmatpush1.msra.mxu0 0.0
        %5087 = vmatprep.subr.mxu0 0.0
        %5088 = vmatpush1.msra.mxu0 0.0
        %5089 = vmatprep.subr.mxu0 0.0
        %5090 = vmatpush1.msra.mxu0 0.0
        %5091 = vmatprep.subr.mxu0 0.0
        %5092 = vmatpush1.msra.mxu0 0.0
        %5093 = vmatprep.subr.mxu0 0.0
        %5094 = vmatpush1.msra.mxu0 0.0
        %5095 = vmatprep.subr.mxu0 0.0
        %5096 = vmatpush1.msra.mxu0 0.0
        %5097 = vmatprep.subr.mxu0 0.0
        %5098 = vmatpush1.msra.mxu0 0.0
        %5099 = vmatprep.subr.mxu0 0.0
        %5100 = vmatpush1.msra.mxu0 0.0
        %5101 = vmatprep.subr.mxu0 0.0
        %5102 = vmatpush1.msra.mxu0 0.0
        %5103 = vmatprep.subr.mxu0 0.0
        %5104 = vmatpush1.msra.mxu0 0.0
        %5105 = vmatprep.subr.mxu0 0.0
        %5106 = vmatpush1.msra.mxu0 0.0
        %5107 = vmatprep.subr.mxu0 0.0
        %5108 = vmatpush1.msra.mxu0 0.0
        %5109 = vmatprep.subr.mxu0 0.0
        %5110 = vmatpush1.msra.mxu0 0.0
        %5111 = vmatprep.subr.mxu0 0.0
        %5112 = vmatpush1.msra.mxu0 0.0
        %5113 = vmatprep.subr.mxu0 0.0
        %5114 = vmatpush1.msra.mxu0 0.0
        %v5115 = vand.u32 %v5083, 4294901760
        %5116 = vmatprep.subr.mxu0 %v5115
        %v5117 = vand.u32 %v5081, 4294901760
        %5118 = vmatpush1.msra.mxu0 %v5117
        %5119 = vmatprep.subr.mxu0 0.0
        %5120 = vmatpush2.msra.mxu0 0.0
        %5121 = vmatprep.subr.mxu0 0.0
        %5122 = vmatpush2.msra.mxu0 0.0
        %5123 = vmatprep.subr.mxu0 0.0
        %5124 = vmatpush2.msra.mxu0 0.0
        %5125 = vmatprep.subr.mxu0 0.0
        %5126 = vmatpush2.msra.mxu0 0.0
        %5127 = vmatprep.subr.mxu0 0.0
        %5128 = vmatpush2.msra.mxu0 0.0
        %5129 = vmatprep.subr.mxu0 0.0
        %5130 = vmatpush2.msra.mxu0 0.0
        %5131 = vmatprep.subr.mxu0 0.0
        %5132 = vmatpush2.msra.mxu0 0.0
        %5133 = vmatprep.subr.mxu0 0.0
        %5134 = vmatpush2.msra.mxu0 0.0
        %5135 = vmatprep.subr.mxu0 0.0
        %5136 = vmatpush2.msra.mxu0 0.0
        %5137 = vmatprep.subr.mxu0 0.0
        %5138 = vmatpush2.msra.mxu0 0.0
        %5139 = vmatprep.subr.mxu0 0.0
        %5140 = vmatpush2.msra.mxu0 0.0
        %5141 = vmatprep.subr.mxu0 0.0
        %5142 = vmatpush2.msra.mxu0 0.0
        %5143 = vmatprep.subr.mxu0 0.0
        %5144 = vmatpush2.msra.mxu0 0.0
        %5145 = vmatprep.subr.mxu0 0.0
        %5146 = vmatpush2.msra.mxu0 0.0
        %5147 = vmatprep.subr.mxu0 0.0
        %5148 = vmatpush2.msra.mxu0 0.0
        %5149 = vmatprep.subr.mxu0 0.0
        %5150 = vmatpush2.msra.mxu0 0.0
        %5151 = vmatprep.mubr.f32.mxu0 0.0
        %v5152 = vand.u32 %v5079, 4294901760
        %v5153 = vsub.f32 %v5079, %v5152
        %v5154 = vand.u32 %v5153, 4294901760
        %v5155 = vsub.f32 %v5153, %v5154
        %v5156 = vand.u32 %v5155, 4294901760
        %5157 = vmatmul.mubr.f32.gmra.mxu0 %v5156
        %v5158 = vpop.f32.mrf.mxu0
        %v5159 = vadd.f32 0.0, %v5158
        %v5160 = vpop.f32.mrf.mxu0
        %v5161 = vadd.f32 0.0, %v5160
        %5162 = vdwg.mxu0
        %5163 = vmatprep.subr.mxu0 0.0
        %5164 = vmatpush1.msra.mxu0 0.0
        %5165 = vmatprep.subr.mxu0 0.0
        %5166 = vmatpush1.msra.mxu0 0.0
        %5167 = vmatprep.subr.mxu0 0.0
        %5168 = vmatpush1.msra.mxu0 0.0
        %5169 = vmatprep.subr.mxu0 0.0
        %5170 = vmatpush1.msra.mxu0 0.0
        %5171 = vmatprep.subr.mxu0 0.0
        %5172 = vmatpush1.msra.mxu0 0.0
        %5173 = vmatprep.subr.mxu0 0.0
        %5174 = vmatpush1.msra.mxu0 0.0
        %5175 = vmatprep.subr.mxu0 0.0
        %5176 = vmatpush1.msra.mxu0 0.0
        %5177 = vmatprep.subr.mxu0 0.0
        %5178 = vmatpush1.msra.mxu0 0.0
        %5179 = vmatprep.subr.mxu0 0.0
        %5180 = vmatpush1.msra.mxu0 0.0
        %5181 = vmatprep.subr.mxu0 0.0
        %5182 = vmatpush1.msra.mxu0 0.0
        %5183 = vmatprep.subr.mxu0 0.0
        %5184 = vmatpush1.msra.mxu0 0.0
        %5185 = vmatprep.subr.mxu0 0.0
        %5186 = vmatpush1.msra.mxu0 0.0
        %5187 = vmatprep.subr.mxu0 0.0
        %5188 = vmatpush1.msra.mxu0 0.0
        %5189 = vmatprep.subr.mxu0 0.0
        %5190 = vmatpush1.msra.mxu0 0.0
        %5191 = vmatprep.subr.mxu0 0.0
        %5192 = vmatpush1.msra.mxu0 0.0
        %v5193 = vand.u32 %v5083, 4294901760
        %v5194 = vsub.f32 %v5083, %v5193
        %v5195 = vand.u32 %v5194, 4294901760
        %v5196 = vsub.f32 %v5194, %v5195
        %v5197 = vand.u32 %v5196, 4294901760
        %5198 = vmatprep.subr.mxu0 %v5197
        %v5199 = vand.u32 %v5081, 4294901760
        %v5200 = vsub.f32 %v5081, %v5199
        %v5201 = vand.u32 %v5200, 4294901760
        %v5202 = vsub.f32 %v5200, %v5201
        %v5203 = vand.u32 %v5202, 4294901760
        %5204 = vmatpush1.msra.mxu0 %v5203
        %5205 = vmatprep.subr.mxu0 0.0
        %5206 = vmatpush2.msra.mxu0 0.0
        %5207 = vmatprep.subr.mxu0 0.0
        %5208 = vmatpush2.msra.mxu0 0.0
        %5209 = vmatprep.subr.mxu0 0.0
        %5210 = vmatpush2.msra.mxu0 0.0
        %5211 = vmatprep.subr.mxu0 0.0
        %5212 = vmatpush2.msra.mxu0 0.0
        %5213 = vmatprep.subr.mxu0 0.0
        %5214 = vmatpush2.msra.mxu0 0.0
        %5215 = vmatprep.subr.mxu0 0.0
        %5216 = vmatpush2.msra.mxu0 0.0
        %5217 = vmatprep.subr.mxu0 0.0
        %5218 = vmatpush2.msra.mxu0 0.0
        %5219 = vmatprep.subr.mxu0 0.0
        %5220 = vmatpush2.msra.mxu0 0.0
        %5221 = vmatprep.subr.mxu0 0.0
        %5222 = vmatpush2.msra.mxu0 0.0
        %5223 = vmatprep.subr.mxu0 0.0
        %5224 = vmatpush2.msra.mxu0 0.0
        %5225 = vmatprep.subr.mxu0 0.0
        %5226 = vmatpush2.msra.mxu0 0.0
        %5227 = vmatprep.subr.mxu0 0.0
        %5228 = vmatpush2.msra.mxu0 0.0
        %5229 = vmatprep.subr.mxu0 0.0
        %5230 = vmatpush2.msra.mxu0 0.0
        %5231 = vmatprep.subr.mxu0 0.0
        %5232 = vmatpush2.msra.mxu0 0.0
        %5233 = vmatprep.subr.mxu0 0.0
        %5234 = vmatpush2.msra.mxu0 0.0
        %5235 = vmatprep.subr.mxu0 0.0
        %5236 = vmatpush2.msra.mxu0 0.0
        %5237 = vmatprep.mubr.f32.mxu0 0.0
        %v5238 = vand.u32 %v5079, 4294901760
        %5239 = vmatmul.mubr.f32.gmra.mxu0 %v5238
        %v5240 = vpop.f32.mrf.mxu0
        %v5241 = vadd.f32 %v5159, %v5240
        %v5242 = vpop.f32.mrf.mxu0
        %v5243 = vadd.f32 %v5161, %v5242
        %5244 = vdwg.mxu0
        %5245 = vmatprep.subr.mxu0 0.0
        %5246 = vmatpush1.msra.mxu0 0.0
        %5247 = vmatprep.subr.mxu0 0.0
        %5248 = vmatpush1.msra.mxu0 0.0
        %5249 = vmatprep.subr.mxu0 0.0
        %5250 = vmatpush1.msra.mxu0 0.0
        %5251 = vmatprep.subr.mxu0 0.0
        %5252 = vmatpush1.msra.mxu0 0.0
        %5253 = vmatprep.subr.mxu0 0.0
        %5254 = vmatpush1.msra.mxu0 0.0
        %5255 = vmatprep.subr.mxu0 0.0
        %5256 = vmatpush1.msra.mxu0 0.0
        %5257 = vmatprep.subr.mxu0 0.0
        %5258 = vmatpush1.msra.mxu0 0.0
        %5259 = vmatprep.subr.mxu0 0.0
        %5260 = vmatpush1.msra.mxu0 0.0
        %5261 = vmatprep.subr.mxu0 0.0
        %5262 = vmatpush1.msra.mxu0 0.0
        %5263 = vmatprep.subr.mxu0 0.0
        %5264 = vmatpush1.msra.mxu0 0.0
        %5265 = vmatprep.subr.mxu0 0.0
        %5266 = vmatpush1.msra.mxu0 0.0
        %5267 = vmatprep.subr.mxu0 0.0
        %5268 = vmatpush1.msra.mxu0 0.0
        %5269 = vmatprep.subr.mxu0 0.0
        %5270 = vmatpush1.msra.mxu0 0.0
        %5271 = vmatprep.subr.mxu0 0.0
        %5272 = vmatpush1.msra.mxu0 0.0
        %5273 = vmatprep.subr.mxu0 0.0
        %5274 = vmatpush1.msra.mxu0 0.0
        %v5275 = vand.u32 %v5083, 4294901760
        %v5276 = vsub.f32 %v5083, %v5275
        %5277 = vmatprep.subr.mxu0 %v5276
        %v5278 = vand.u32 %v5081, 4294901760
        %v5279 = vsub.f32 %v5081, %v5278
        %5280 = vmatpush1.msra.mxu0 %v5279
        %5281 = vmatprep.subr.mxu0 0.0
        %5282 = vmatpush2.msra.mxu0 0.0
        %5283 = vmatprep.subr.mxu0 0.0
        %5284 = vmatpush2.msra.mxu0 0.0
        %5285 = vmatprep.subr.mxu0 0.0
        %5286 = vmatpush2.msra.mxu0 0.0
        %5287 = vmatprep.subr.mxu0 0.0
        %5288 = vmatpush2.msra.mxu0 0.0
        %5289 = vmatprep.subr.mxu0 0.0
        %5290 = vmatpush2.msra.mxu0 0.0
        %5291 = vmatprep.subr.mxu0 0.0
        %5292 = vmatpush2.msra.mxu0 0.0
        %5293 = vmatprep.subr.mxu0 0.0
        %5294 = vmatpush2.msra.mxu0 0.0
        %5295 = vmatprep.subr.mxu0 0.0
        %5296 = vmatpush2.msra.mxu0 0.0
        %5297 = vmatprep.subr.mxu0 0.0
        %5298 = vmatpush2.msra.mxu0 0.0
        %5299 = vmatprep.subr.mxu0 0.0
        %5300 = vmatpush2.msra.mxu0 0.0
        %5301 = vmatprep.subr.mxu0 0.0
        %5302 = vmatpush2.msra.mxu0 0.0
        %5303 = vmatprep.subr.mxu0 0.0
        %5304 = vmatpush2.msra.mxu0 0.0
        %5305 = vmatprep.subr.mxu0 0.0
        %5306 = vmatpush2.msra.mxu0 0.0
        %5307 = vmatprep.subr.mxu0 0.0
        %5308 = vmatpush2.msra.mxu0 0.0
        %5309 = vmatprep.subr.mxu0 0.0
        %5310 = vmatpush2.msra.mxu0 0.0
        %5311 = vmatprep.subr.mxu0 0.0
        %5312 = vmatpush2.msra.mxu0 0.0
        %5313 = vmatprep.mubr.f32.mxu0 0.0
        %v5314 = vand.u32 %v5079, 4294901760
        %v5315 = vsub.f32 %v5079, %v5314
        %5316 = vmatmul.mubr.f32.gmra.mxu0 %v5315
        %v5317 = vpop.f32.mrf.mxu0
        %v5318 = vadd.f32 %v5241, %v5317
        %v5319 = vpop.f32.mrf.mxu0
        %v5320 = vadd.f32 %v5243, %v5319
        %5321 = vdwg.mxu0
        %5322 = vmatprep.subr.mxu0 0.0
        %5323 = vmatpush1.msra.mxu0 0.0
        %5324 = vmatprep.subr.mxu0 0.0
        %5325 = vmatpush1.msra.mxu0 0.0
        %5326 = vmatprep.subr.mxu0 0.0
        %5327 = vmatpush1.msra.mxu0 0.0
        %5328 = vmatprep.subr.mxu0 0.0
        %5329 = vmatpush1.msra.mxu0 0.0
        %5330 = vmatprep.subr.mxu0 0.0
        %5331 = vmatpush1.msra.mxu0 0.0
        %5332 = vmatprep.subr.mxu0 0.0
        %5333 = vmatpush1.msra.mxu0 0.0
        %5334 = vmatprep.subr.mxu0 0.0
        %5335 = vmatpush1.msra.mxu0 0.0
        %5336 = vmatprep.subr.mxu0 0.0
        %5337 = vmatpush1.msra.mxu0 0.0
        %5338 = vmatprep.subr.mxu0 0.0
        %5339 = vmatpush1.msra.mxu0 0.0
        %5340 = vmatprep.subr.mxu0 0.0
        %5341 = vmatpush1.msra.mxu0 0.0
        %5342 = vmatprep.subr.mxu0 0.0
        %5343 = vmatpush1.msra.mxu0 0.0
        %5344 = vmatprep.subr.mxu0 0.0
        %5345 = vmatpush1.msra.mxu0 0.0
        %5346 = vmatprep.subr.mxu0 0.0
        %5347 = vmatpush1.msra.mxu0 0.0
        %5348 = vmatprep.subr.mxu0 0.0
        %5349 = vmatpush1.msra.mxu0 0.0
        %5350 = vmatprep.subr.mxu0 0.0
        %5351 = vmatpush1.msra.mxu0 0.0
        %v5352 = vand.u32 %v5083, 4294901760
        %5353 = vmatprep.subr.mxu0 %v5352
        %v5354 = vand.u32 %v5081, 4294901760
        %5355 = vmatpush1.msra.mxu0 %v5354
        %5356 = vmatprep.subr.mxu0 0.0
        %5357 = vmatpush2.msra.mxu0 0.0
        %5358 = vmatprep.subr.mxu0 0.0
        %5359 = vmatpush2.msra.mxu0 0.0
        %5360 = vmatprep.subr.mxu0 0.0
        %5361 = vmatpush2.msra.mxu0 0.0
        %5362 = vmatprep.subr.mxu0 0.0
        %5363 = vmatpush2.msra.mxu0 0.0
        %5364 = vmatprep.subr.mxu0 0.0
        %5365 = vmatpush2.msra.mxu0 0.0
        %5366 = vmatprep.subr.mxu0 0.0
        %5367 = vmatpush2.msra.mxu0 0.0
        %5368 = vmatprep.subr.mxu0 0.0
        %5369 = vmatpush2.msra.mxu0 0.0
        %5370 = vmatprep.subr.mxu0 0.0
        %5371 = vmatpush2.msra.mxu0 0.0
        %5372 = vmatprep.subr.mxu0 0.0
        %5373 = vmatpush2.msra.mxu0 0.0
        %5374 = vmatprep.subr.mxu0 0.0
        %5375 = vmatpush2.msra.mxu0 0.0
        %5376 = vmatprep.subr.mxu0 0.0
        %5377 = vmatpush2.msra.mxu0 0.0
        %5378 = vmatprep.subr.mxu0 0.0
        %5379 = vmatpush2.msra.mxu0 0.0
        %5380 = vmatprep.subr.mxu0 0.0
        %5381 = vmatpush2.msra.mxu0 0.0
        %5382 = vmatprep.subr.mxu0 0.0
        %5383 = vmatpush2.msra.mxu0 0.0
        %5384 = vmatprep.subr.mxu0 0.0
        %5385 = vmatpush2.msra.mxu0 0.0
        %5386 = vmatprep.subr.mxu0 0.0
        %5387 = vmatpush2.msra.mxu0 0.0
        %5388 = vmatprep.mubr.f32.mxu0 0.0
        %v5389 = vand.u32 %v5079, 4294901760
        %v5390 = vsub.f32 %v5079, %v5389
        %v5391 = vand.u32 %v5390, 4294901760
        %5392 = vmatmul.mubr.f32.gmra.mxu0 %v5391
        %v5393 = vpop.f32.mrf.mxu0
        %v5394 = vadd.f32 %v5318, %v5393
        %v5395 = vpop.f32.mrf.mxu0
        %v5396 = vadd.f32 %v5320, %v5395
        %5397 = vdwg.mxu0
        %5398 = vmatprep.subr.mxu0 0.0
        %5399 = vmatpush1.msra.mxu0 0.0
        %5400 = vmatprep.subr.mxu0 0.0
        %5401 = vmatpush1.msra.mxu0 0.0
        %5402 = vmatprep.subr.mxu0 0.0
        %5403 = vmatpush1.msra.mxu0 0.0
        %5404 = vmatprep.subr.mxu0 0.0
        %5405 = vmatpush1.msra.mxu0 0.0
        %5406 = vmatprep.subr.mxu0 0.0
        %5407 = vmatpush1.msra.mxu0 0.0
        %5408 = vmatprep.subr.mxu0 0.0
        %5409 = vmatpush1.msra.mxu0 0.0
        %5410 = vmatprep.subr.mxu0 0.0
        %5411 = vmatpush1.msra.mxu0 0.0
        %5412 = vmatprep.subr.mxu0 0.0
        %5413 = vmatpush1.msra.mxu0 0.0
        %5414 = vmatprep.subr.mxu0 0.0
        %5415 = vmatpush1.msra.mxu0 0.0
        %5416 = vmatprep.subr.mxu0 0.0
        %5417 = vmatpush1.msra.mxu0 0.0
        %5418 = vmatprep.subr.mxu0 0.0
        %5419 = vmatpush1.msra.mxu0 0.0
        %5420 = vmatprep.subr.mxu0 0.0
        %5421 = vmatpush1.msra.mxu0 0.0
        %5422 = vmatprep.subr.mxu0 0.0
        %5423 = vmatpush1.msra.mxu0 0.0
        %5424 = vmatprep.subr.mxu0 0.0
        %5425 = vmatpush1.msra.mxu0 0.0
        %5426 = vmatprep.subr.mxu0 0.0
        %5427 = vmatpush1.msra.mxu0 0.0
        %v5428 = vand.u32 %v5083, 4294901760
        %v5429 = vsub.f32 %v5083, %v5428
        %v5430 = vand.u32 %v5429, 4294901760
        %5431 = vmatprep.subr.mxu0 %v5430
        %v5432 = vand.u32 %v5081, 4294901760
        %v5433 = vsub.f32 %v5081, %v5432
        %v5434 = vand.u32 %v5433, 4294901760
        %5435 = vmatpush1.msra.mxu0 %v5434
        %5436 = vmatprep.subr.mxu0 0.0
        %5437 = vmatpush2.msra.mxu0 0.0
        %5438 = vmatprep.subr.mxu0 0.0
        %5439 = vmatpush2.msra.mxu0 0.0
        %5440 = vmatprep.subr.mxu0 0.0
        %5441 = vmatpush2.msra.mxu0 0.0
        %5442 = vmatprep.subr.mxu0 0.0
        %5443 = vmatpush2.msra.mxu0 0.0
        %5444 = vmatprep.subr.mxu0 0.0
        %5445 = vmatpush2.msra.mxu0 0.0
        %5446 = vmatprep.subr.mxu0 0.0
        %5447 = vmatpush2.msra.mxu0 0.0
        %5448 = vmatprep.subr.mxu0 0.0
        %5449 = vmatpush2.msra.mxu0 0.0
        %5450 = vmatprep.subr.mxu0 0.0
        %5451 = vmatpush2.msra.mxu0 0.0
        %5452 = vmatprep.subr.mxu0 0.0
        %5453 = vmatpush2.msra.mxu0 0.0
        %5454 = vmatprep.subr.mxu0 0.0
        %5455 = vmatpush2.msra.mxu0 0.0
        %5456 = vmatprep.subr.mxu0 0.0
        %5457 = vmatpush2.msra.mxu0 0.0
        %5458 = vmatprep.subr.mxu0 0.0
        %5459 = vmatpush2.msra.mxu0 0.0
        %5460 = vmatprep.subr.mxu0 0.0
        %5461 = vmatpush2.msra.mxu0 0.0
        %5462 = vmatprep.subr.mxu0 0.0
        %5463 = vmatpush2.msra.mxu0 0.0
        %5464 = vmatprep.subr.mxu0 0.0
        %5465 = vmatpush2.msra.mxu0 0.0
        %5466 = vmatprep.subr.mxu0 0.0
        %5467 = vmatpush2.msra.mxu0 0.0
        %5468 = vmatprep.mubr.f32.mxu0 0.0
        %v5469 = vand.u32 %v5079, 4294901760
        %5470 = vmatmul.mubr.f32.gmra.mxu0 %v5469
        %v5471 = vpop.f32.mrf.mxu0
        %v5472 = vadd.f32 %v5394, %v5471
        %v5473 = vpop.f32.mrf.mxu0
        %v5474 = vadd.f32 %v5396, %v5473
        %5475 = vdwg.mxu0
        %5476 = vmatprep.subr.mxu0 0.0
        %5477 = vmatpush1.msra.mxu0 0.0
        %5478 = vmatprep.subr.mxu0 0.0
        %5479 = vmatpush1.msra.mxu0 0.0
        %5480 = vmatprep.subr.mxu0 0.0
        %5481 = vmatpush1.msra.mxu0 0.0
        %5482 = vmatprep.subr.mxu0 0.0
        %5483 = vmatpush1.msra.mxu0 0.0
        %5484 = vmatprep.subr.mxu0 0.0
        %5485 = vmatpush1.msra.mxu0 0.0
        %5486 = vmatprep.subr.mxu0 0.0
        %5487 = vmatpush1.msra.mxu0 0.0
        %5488 = vmatprep.subr.mxu0 0.0
        %5489 = vmatpush1.msra.mxu0 0.0
        %5490 = vmatprep.subr.mxu0 0.0
        %5491 = vmatpush1.msra.mxu0 0.0
        %5492 = vmatprep.subr.mxu0 0.0
        %5493 = vmatpush1.msra.mxu0 0.0
        %5494 = vmatprep.subr.mxu0 0.0
        %5495 = vmatpush1.msra.mxu0 0.0
        %5496 = vmatprep.subr.mxu0 0.0
        %5497 = vmatpush1.msra.mxu0 0.0
        %5498 = vmatprep.subr.mxu0 0.0
        %5499 = vmatpush1.msra.mxu0 0.0
        %5500 = vmatprep.subr.mxu0 0.0
        %5501 = vmatpush1.msra.mxu0 0.0
        %5502 = vmatprep.subr.mxu0 0.0
        %5503 = vmatpush1.msra.mxu0 0.0
        %5504 = vmatprep.subr.mxu0 0.0
        %5505 = vmatpush1.msra.mxu0 0.0
        %v5506 = vand.u32 %v5083, 4294901760
        %5507 = vmatprep.subr.mxu0 %v5506
        %v5508 = vand.u32 %v5081, 4294901760
        %5509 = vmatpush1.msra.mxu0 %v5508
        %5510 = vmatprep.subr.mxu0 0.0
        %5511 = vmatpush2.msra.mxu0 0.0
        %5512 = vmatprep.subr.mxu0 0.0
        %5513 = vmatpush2.msra.mxu0 0.0
        %5514 = vmatprep.subr.mxu0 0.0
        %5515 = vmatpush2.msra.mxu0 0.0
        %5516 = vmatprep.subr.mxu0 0.0
        %5517 = vmatpush2.msra.mxu0 0.0
        %5518 = vmatprep.subr.mxu0 0.0
        %5519 = vmatpush2.msra.mxu0 0.0
        %5520 = vmatprep.subr.mxu0 0.0
        %5521 = vmatpush2.msra.mxu0 0.0
        %5522 = vmatprep.subr.mxu0 0.0
        %5523 = vmatpush2.msra.mxu0 0.0
        %5524 = vmatprep.subr.mxu0 0.0
        %5525 = vmatpush2.msra.mxu0 0.0
        %5526 = vmatprep.subr.mxu0 0.0
        %5527 = vmatpush2.msra.mxu0 0.0
        %5528 = vmatprep.subr.mxu0 0.0
        %5529 = vmatpush2.msra.mxu0 0.0
        %5530 = vmatprep.subr.mxu0 0.0
        %5531 = vmatpush2.msra.mxu0 0.0
        %5532 = vmatprep.subr.mxu0 0.0
        %5533 = vmatpush2.msra.mxu0 0.0
        %5534 = vmatprep.subr.mxu0 0.0
        %5535 = vmatpush2.msra.mxu0 0.0
        %5536 = vmatprep.subr.mxu0 0.0
        %5537 = vmatpush2.msra.mxu0 0.0
        %5538 = vmatprep.subr.mxu0 0.0
        %5539 = vmatpush2.msra.mxu0 0.0
        %5540 = vmatprep.subr.mxu0 0.0
        %5541 = vmatpush2.msra.mxu0 0.0
        %5542 = vmatprep.mubr.f32.mxu0 0.0
        %v5543 = vand.u32 %v5079, 4294901760
        %5544 = vmatmul.mubr.f32.gmra.mxu0 %v5543
        %v5545 = vpop.f32.mrf.mxu0
        %v5546 = vadd.f32 %v5472, %v5545
        %v5547 = vpop.f32.mrf.mxu0
        %v5548 = vadd.f32 %v5474, %v5547
        %5549 = vdwg.mxu0
        %v5550 = vadd.f32 %v5052, %v5546
        %v5551 = vadd.f32 %v5053, %v5548
        %s5552 = scalar_lea.vmem %s4, 28
        %v5553 = vld [vmem:[%s5552] sm:$0xf]
        %5554 = vrot.lane.b32.xlu0 %v2075, 112
        %v5555 = vpop.permute.xlu0 %5554
        %5556 = vrot.lane.b32.xlu0 %v2076, 112
        %v5557 = vpop.permute.xlu0 %5556
        %5558 = vrot.lane.b32.xlu0 0.0, 112
        %v5559 = vpop.permute.xlu0 %5558
        %vm5560 = vcmask 916480
        %v5561 = vsel %vm5560, %v5555, %v5557
        %v5562 = vsel %vm5560, %v5557, %v5559
        %v5564 = vsel %vm607, %v5553, 0
        %v5566 = vsel %vm611, %v5561, 0
        %v5568 = vsel %vm611, %v5562, 0
        %5570 = vmatprep.subr.mxu0 0.0
        %5571 = vmatpush1.msra.mxu0 0.0
        %5572 = vmatprep.subr.mxu0 0.0
        %5573 = vmatpush1.msra.mxu0 0.0
        %5574 = vmatprep.subr.mxu0 0.0
        %5575 = vmatpush1.msra.mxu0 0.0
        %5576 = vmatprep.subr.mxu0 0.0
        %5577 = vmatpush1.msra.mxu0 0.0
        %5578 = vmatprep.subr.mxu0 0.0
        %5579 = vmatpush1.msra.mxu0 0.0
        %5580 = vmatprep.subr.mxu0 0.0
        %5581 = vmatpush1.msra.mxu0 0.0
        %5582 = vmatprep.subr.mxu0 0.0
        %5583 = vmatpush1.msra.mxu0 0.0
        %5584 = vmatprep.subr.mxu0 0.0
        %5585 = vmatpush1.msra.mxu0 0.0
        %5586 = vmatprep.subr.mxu0 0.0
        %5587 = vmatpush1.msra.mxu0 0.0
        %5588 = vmatprep.subr.mxu0 0.0
        %5589 = vmatpush1.msra.mxu0 0.0
        %5590 = vmatprep.subr.mxu0 0.0
        %5591 = vmatpush1.msra.mxu0 0.0
        %5592 = vmatprep.subr.mxu0 0.0
        %5593 = vmatpush1.msra.mxu0 0.0
        %5594 = vmatprep.subr.mxu0 0.0
        %5595 = vmatpush1.msra.mxu0 0.0
        %5596 = vmatprep.subr.mxu0 0.0
        %5597 = vmatpush1.msra.mxu0 0.0
        %5598 = vmatprep.subr.mxu0 0.0
        %5599 = vmatpush1.msra.mxu0 0.0
        %v5600 = vand.u32 %v5568, 4294901760
        %5601 = vmatprep.subr.mxu0 %v5600
        %v5602 = vand.u32 %v5566, 4294901760
        %5603 = vmatpush1.msra.mxu0 %v5602
        %5604 = vmatprep.subr.mxu0 0.0
        %5605 = vmatpush2.msra.mxu0 0.0
        %5606 = vmatprep.subr.mxu0 0.0
        %5607 = vmatpush2.msra.mxu0 0.0
        %5608 = vmatprep.subr.mxu0 0.0
        %5609 = vmatpush2.msra.mxu0 0.0
        %5610 = vmatprep.subr.mxu0 0.0
        %5611 = vmatpush2.msra.mxu0 0.0
        %5612 = vmatprep.subr.mxu0 0.0
        %5613 = vmatpush2.msra.mxu0 0.0
        %5614 = vmatprep.subr.mxu0 0.0
        %5615 = vmatpush2.msra.mxu0 0.0
        %5616 = vmatprep.subr.mxu0 0.0
        %5617 = vmatpush2.msra.mxu0 0.0
        %5618 = vmatprep.subr.mxu0 0.0
        %5619 = vmatpush2.msra.mxu0 0.0
        %5620 = vmatprep.subr.mxu0 0.0
        %5621 = vmatpush2.msra.mxu0 0.0
        %5622 = vmatprep.subr.mxu0 0.0
        %5623 = vmatpush2.msra.mxu0 0.0
        %5624 = vmatprep.subr.mxu0 0.0
        %5625 = vmatpush2.msra.mxu0 0.0
        %5626 = vmatprep.subr.mxu0 0.0
        %5627 = vmatpush2.msra.mxu0 0.0
        %5628 = vmatprep.subr.mxu0 0.0
        %5629 = vmatpush2.msra.mxu0 0.0
        %5630 = vmatprep.subr.mxu0 0.0
        %5631 = vmatpush2.msra.mxu0 0.0
        %5632 = vmatprep.subr.mxu0 0.0
        %5633 = vmatpush2.msra.mxu0 0.0
        %5634 = vmatprep.subr.mxu0 0.0
        %5635 = vmatpush2.msra.mxu0 0.0
        %5636 = vmatprep.mubr.f32.mxu0 0.0
        %v5637 = vand.u32 %v5564, 4294901760
        %v5638 = vsub.f32 %v5564, %v5637
        %v5639 = vand.u32 %v5638, 4294901760
        %v5640 = vsub.f32 %v5638, %v5639
        %v5641 = vand.u32 %v5640, 4294901760
        %5642 = vmatmul.mubr.f32.gmra.mxu0 %v5641
        %v5643 = vpop.f32.mrf.mxu0
        %v5644 = vadd.f32 0.0, %v5643
        %v5645 = vpop.f32.mrf.mxu0
        %v5646 = vadd.f32 0.0, %v5645
        %5647 = vdwg.mxu0
        %5648 = vmatprep.subr.mxu0 0.0
        %5649 = vmatpush1.msra.mxu0 0.0
        %5650 = vmatprep.subr.mxu0 0.0
        %5651 = vmatpush1.msra.mxu0 0.0
        %5652 = vmatprep.subr.mxu0 0.0
        %5653 = vmatpush1.msra.mxu0 0.0
        %5654 = vmatprep.subr.mxu0 0.0
        %5655 = vmatpush1.msra.mxu0 0.0
        %5656 = vmatprep.subr.mxu0 0.0
        %5657 = vmatpush1.msra.mxu0 0.0
        %5658 = vmatprep.subr.mxu0 0.0
        %5659 = vmatpush1.msra.mxu0 0.0
        %5660 = vmatprep.subr.mxu0 0.0
        %5661 = vmatpush1.msra.mxu0 0.0
        %5662 = vmatprep.subr.mxu0 0.0
        %5663 = vmatpush1.msra.mxu0 0.0
        %5664 = vmatprep.subr.mxu0 0.0
        %5665 = vmatpush1.msra.mxu0 0.0
        %5666 = vmatprep.subr.mxu0 0.0
        %5667 = vmatpush1.msra.mxu0 0.0
        %5668 = vmatprep.subr.mxu0 0.0
        %5669 = vmatpush1.msra.mxu0 0.0
        %5670 = vmatprep.subr.mxu0 0.0
        %5671 = vmatpush1.msra.mxu0 0.0
        %5672 = vmatprep.subr.mxu0 0.0
        %5673 = vmatpush1.msra.mxu0 0.0
        %5674 = vmatprep.subr.mxu0 0.0
        %5675 = vmatpush1.msra.mxu0 0.0
        %5676 = vmatprep.subr.mxu0 0.0
        %5677 = vmatpush1.msra.mxu0 0.0
        %v5678 = vand.u32 %v5568, 4294901760
        %v5679 = vsub.f32 %v5568, %v5678
        %v5680 = vand.u32 %v5679, 4294901760
        %v5681 = vsub.f32 %v5679, %v5680
        %v5682 = vand.u32 %v5681, 4294901760
        %5683 = vmatprep.subr.mxu0 %v5682
        %v5684 = vand.u32 %v5566, 4294901760
        %v5685 = vsub.f32 %v5566, %v5684
        %v5686 = vand.u32 %v5685, 4294901760
        %v5687 = vsub.f32 %v5685, %v5686
        %v5688 = vand.u32 %v5687, 4294901760
        %5689 = vmatpush1.msra.mxu0 %v5688
        %5690 = vmatprep.subr.mxu0 0.0
        %5691 = vmatpush2.msra.mxu0 0.0
        %5692 = vmatprep.subr.mxu0 0.0
        %5693 = vmatpush2.msra.mxu0 0.0
        %5694 = vmatprep.subr.mxu0 0.0
        %5695 = vmatpush2.msra.mxu0 0.0
        %5696 = vmatprep.subr.mxu0 0.0
        %5697 = vmatpush2.msra.mxu0 0.0
        %5698 = vmatprep.subr.mxu0 0.0
        %5699 = vmatpush2.msra.mxu0 0.0
        %5700 = vmatprep.subr.mxu0 0.0
        %5701 = vmatpush2.msra.mxu0 0.0
        %5702 = vmatprep.subr.mxu0 0.0
        %5703 = vmatpush2.msra.mxu0 0.0
        %5704 = vmatprep.subr.mxu0 0.0
        %5705 = vmatpush2.msra.mxu0 0.0
        %5706 = vmatprep.subr.mxu0 0.0
        %5707 = vmatpush2.msra.mxu0 0.0
        %5708 = vmatprep.subr.mxu0 0.0
        %5709 = vmatpush2.msra.mxu0 0.0
        %5710 = vmatprep.subr.mxu0 0.0
        %5711 = vmatpush2.msra.mxu0 0.0
        %5712 = vmatprep.subr.mxu0 0.0
        %5713 = vmatpush2.msra.mxu0 0.0
        %5714 = vmatprep.subr.mxu0 0.0
        %5715 = vmatpush2.msra.mxu0 0.0
        %5716 = vmatprep.subr.mxu0 0.0
        %5717 = vmatpush2.msra.mxu0 0.0
        %5718 = vmatprep.subr.mxu0 0.0
        %5719 = vmatpush2.msra.mxu0 0.0
        %5720 = vmatprep.subr.mxu0 0.0
        %5721 = vmatpush2.msra.mxu0 0.0
        %5722 = vmatprep.mubr.f32.mxu0 0.0
        %v5723 = vand.u32 %v5564, 4294901760
        %5724 = vmatmul.mubr.f32.gmra.mxu0 %v5723
        %v5725 = vpop.f32.mrf.mxu0
        %v5726 = vadd.f32 %v5644, %v5725
        %v5727 = vpop.f32.mrf.mxu0
        %v5728 = vadd.f32 %v5646, %v5727
        %5729 = vdwg.mxu0
        %5730 = vmatprep.subr.mxu0 0.0
        %5731 = vmatpush1.msra.mxu0 0.0
        %5732 = vmatprep.subr.mxu0 0.0
        %5733 = vmatpush1.msra.mxu0 0.0
        %5734 = vmatprep.subr.mxu0 0.0
        %5735 = vmatpush1.msra.mxu0 0.0
        %5736 = vmatprep.subr.mxu0 0.0
        %5737 = vmatpush1.msra.mxu0 0.0
        %5738 = vmatprep.subr.mxu0 0.0
        %5739 = vmatpush1.msra.mxu0 0.0
        %5740 = vmatprep.subr.mxu0 0.0
        %5741 = vmatpush1.msra.mxu0 0.0
        %5742 = vmatprep.subr.mxu0 0.0
        %5743 = vmatpush1.msra.mxu0 0.0
        %5744 = vmatprep.subr.mxu0 0.0
        %5745 = vmatpush1.msra.mxu0 0.0
        %5746 = vmatprep.subr.mxu0 0.0
        %5747 = vmatpush1.msra.mxu0 0.0
        %5748 = vmatprep.subr.mxu0 0.0
        %5749 = vmatpush1.msra.mxu0 0.0
        %5750 = vmatprep.subr.mxu0 0.0
        %5751 = vmatpush1.msra.mxu0 0.0
        %5752 = vmatprep.subr.mxu0 0.0
        %5753 = vmatpush1.msra.mxu0 0.0
        %5754 = vmatprep.subr.mxu0 0.0
        %5755 = vmatpush1.msra.mxu0 0.0
        %5756 = vmatprep.subr.mxu0 0.0
        %5757 = vmatpush1.msra.mxu0 0.0
        %5758 = vmatprep.subr.mxu0 0.0
        %5759 = vmatpush1.msra.mxu0 0.0
        %v5760 = vand.u32 %v5568, 4294901760
        %v5761 = vsub.f32 %v5568, %v5760
        %5762 = vmatprep.subr.mxu0 %v5761
        %v5763 = vand.u32 %v5566, 4294901760
        %v5764 = vsub.f32 %v5566, %v5763
        %5765 = vmatpush1.msra.mxu0 %v5764
        %5766 = vmatprep.subr.mxu0 0.0
        %5767 = vmatpush2.msra.mxu0 0.0
        %5768 = vmatprep.subr.mxu0 0.0
        %5769 = vmatpush2.msra.mxu0 0.0
        %5770 = vmatprep.subr.mxu0 0.0
        %5771 = vmatpush2.msra.mxu0 0.0
        %5772 = vmatprep.subr.mxu0 0.0
        %5773 = vmatpush2.msra.mxu0 0.0
        %5774 = vmatprep.subr.mxu0 0.0
        %5775 = vmatpush2.msra.mxu0 0.0
        %5776 = vmatprep.subr.mxu0 0.0
        %5777 = vmatpush2.msra.mxu0 0.0
        %5778 = vmatprep.subr.mxu0 0.0
        %5779 = vmatpush2.msra.mxu0 0.0
        %5780 = vmatprep.subr.mxu0 0.0
        %5781 = vmatpush2.msra.mxu0 0.0
        %5782 = vmatprep.subr.mxu0 0.0
        %5783 = vmatpush2.msra.mxu0 0.0
        %5784 = vmatprep.subr.mxu0 0.0
        %5785 = vmatpush2.msra.mxu0 0.0
        %5786 = vmatprep.subr.mxu0 0.0
        %5787 = vmatpush2.msra.mxu0 0.0
        %5788 = vmatprep.subr.mxu0 0.0
        %5789 = vmatpush2.msra.mxu0 0.0
        %5790 = vmatprep.subr.mxu0 0.0
        %5791 = vmatpush2.msra.mxu0 0.0
        %5792 = vmatprep.subr.mxu0 0.0
        %5793 = vmatpush2.msra.mxu0 0.0
        %5794 = vmatprep.subr.mxu0 0.0
        %5795 = vmatpush2.msra.mxu0 0.0
        %5796 = vmatprep.subr.mxu0 0.0
        %5797 = vmatpush2.msra.mxu0 0.0
        %5798 = vmatprep.mubr.f32.mxu0 0.0
        %v5799 = vand.u32 %v5564, 4294901760
        %v5800 = vsub.f32 %v5564, %v5799
        %5801 = vmatmul.mubr.f32.gmra.mxu0 %v5800
        %v5802 = vpop.f32.mrf.mxu0
        %v5803 = vadd.f32 %v5726, %v5802
        %v5804 = vpop.f32.mrf.mxu0
        %v5805 = vadd.f32 %v5728, %v5804
        %5806 = vdwg.mxu0
        %5807 = vmatprep.subr.mxu0 0.0
        %5808 = vmatpush1.msra.mxu0 0.0
        %5809 = vmatprep.subr.mxu0 0.0
        %5810 = vmatpush1.msra.mxu0 0.0
        %5811 = vmatprep.subr.mxu0 0.0
        %5812 = vmatpush1.msra.mxu0 0.0
        %5813 = vmatprep.subr.mxu0 0.0
        %5814 = vmatpush1.msra.mxu0 0.0
        %5815 = vmatprep.subr.mxu0 0.0
        %5816 = vmatpush1.msra.mxu0 0.0
        %5817 = vmatprep.subr.mxu0 0.0
        %5818 = vmatpush1.msra.mxu0 0.0
        %5819 = vmatprep.subr.mxu0 0.0
        %5820 = vmatpush1.msra.mxu0 0.0
        %5821 = vmatprep.subr.mxu0 0.0
        %5822 = vmatpush1.msra.mxu0 0.0
        %5823 = vmatprep.subr.mxu0 0.0
        %5824 = vmatpush1.msra.mxu0 0.0
        %5825 = vmatprep.subr.mxu0 0.0
        %5826 = vmatpush1.msra.mxu0 0.0
        %5827 = vmatprep.subr.mxu0 0.0
        %5828 = vmatpush1.msra.mxu0 0.0
        %5829 = vmatprep.subr.mxu0 0.0
        %5830 = vmatpush1.msra.mxu0 0.0
        %5831 = vmatprep.subr.mxu0 0.0
        %5832 = vmatpush1.msra.mxu0 0.0
        %5833 = vmatprep.subr.mxu0 0.0
        %5834 = vmatpush1.msra.mxu0 0.0
        %5835 = vmatprep.subr.mxu0 0.0
        %5836 = vmatpush1.msra.mxu0 0.0
        %v5837 = vand.u32 %v5568, 4294901760
        %5838 = vmatprep.subr.mxu0 %v5837
        %v5839 = vand.u32 %v5566, 4294901760
        %5840 = vmatpush1.msra.mxu0 %v5839
        %5841 = vmatprep.subr.mxu0 0.0
        %5842 = vmatpush2.msra.mxu0 0.0
        %5843 = vmatprep.subr.mxu0 0.0
        %5844 = vmatpush2.msra.mxu0 0.0
        %5845 = vmatprep.subr.mxu0 0.0
        %5846 = vmatpush2.msra.mxu0 0.0
        %5847 = vmatprep.subr.mxu0 0.0
        %5848 = vmatpush2.msra.mxu0 0.0
        %5849 = vmatprep.subr.mxu0 0.0
        %5850 = vmatpush2.msra.mxu0 0.0
        %5851 = vmatprep.subr.mxu0 0.0
        %5852 = vmatpush2.msra.mxu0 0.0
        %5853 = vmatprep.subr.mxu0 0.0
        %5854 = vmatpush2.msra.mxu0 0.0
        %5855 = vmatprep.subr.mxu0 0.0
        %5856 = vmatpush2.msra.mxu0 0.0
        %5857 = vmatprep.subr.mxu0 0.0
        %5858 = vmatpush2.msra.mxu0 0.0
        %5859 = vmatprep.subr.mxu0 0.0
        %5860 = vmatpush2.msra.mxu0 0.0
        %5861 = vmatprep.subr.mxu0 0.0
        %5862 = vmatpush2.msra.mxu0 0.0
        %5863 = vmatprep.subr.mxu0 0.0
        %5864 = vmatpush2.msra.mxu0 0.0
        %5865 = vmatprep.subr.mxu0 0.0
        %5866 = vmatpush2.msra.mxu0 0.0
        %5867 = vmatprep.subr.mxu0 0.0
        %5868 = vmatpush2.msra.mxu0 0.0
        %5869 = vmatprep.subr.mxu0 0.0
        %5870 = vmatpush2.msra.mxu0 0.0
        %5871 = vmatprep.subr.mxu0 0.0
        %5872 = vmatpush2.msra.mxu0 0.0
        %5873 = vmatprep.mubr.f32.mxu0 0.0
        %v5874 = vand.u32 %v5564, 4294901760
        %v5875 = vsub.f32 %v5564, %v5874
        %v5876 = vand.u32 %v5875, 4294901760
        %5877 = vmatmul.mubr.f32.gmra.mxu0 %v5876
        %v5878 = vpop.f32.mrf.mxu0
        %v5879 = vadd.f32 %v5803, %v5878
        %v5880 = vpop.f32.mrf.mxu0
        %v5881 = vadd.f32 %v5805, %v5880
        %5882 = vdwg.mxu0
        %5883 = vmatprep.subr.mxu0 0.0
        %5884 = vmatpush1.msra.mxu0 0.0
        %5885 = vmatprep.subr.mxu0 0.0
        %5886 = vmatpush1.msra.mxu0 0.0
        %5887 = vmatprep.subr.mxu0 0.0
        %5888 = vmatpush1.msra.mxu0 0.0
        %5889 = vmatprep.subr.mxu0 0.0
        %5890 = vmatpush1.msra.mxu0 0.0
        %5891 = vmatprep.subr.mxu0 0.0
        %5892 = vmatpush1.msra.mxu0 0.0
        %5893 = vmatprep.subr.mxu0 0.0
        %5894 = vmatpush1.msra.mxu0 0.0
        %5895 = vmatprep.subr.mxu0 0.0
        %5896 = vmatpush1.msra.mxu0 0.0
        %5897 = vmatprep.subr.mxu0 0.0
        %5898 = vmatpush1.msra.mxu0 0.0
        %5899 = vmatprep.subr.mxu0 0.0
        %5900 = vmatpush1.msra.mxu0 0.0
        %5901 = vmatprep.subr.mxu0 0.0
        %5902 = vmatpush1.msra.mxu0 0.0
        %5903 = vmatprep.subr.mxu0 0.0
        %5904 = vmatpush1.msra.mxu0 0.0
        %5905 = vmatprep.subr.mxu0 0.0
        %5906 = vmatpush1.msra.mxu0 0.0
        %5907 = vmatprep.subr.mxu0 0.0
        %5908 = vmatpush1.msra.mxu0 0.0
        %5909 = vmatprep.subr.mxu0 0.0
        %5910 = vmatpush1.msra.mxu0 0.0
        %5911 = vmatprep.subr.mxu0 0.0
        %5912 = vmatpush1.msra.mxu0 0.0
        %v5913 = vand.u32 %v5568, 4294901760
        %v5914 = vsub.f32 %v5568, %v5913
        %v5915 = vand.u32 %v5914, 4294901760
        %5916 = vmatprep.subr.mxu0 %v5915
        %v5917 = vand.u32 %v5566, 4294901760
        %v5918 = vsub.f32 %v5566, %v5917
        %v5919 = vand.u32 %v5918, 4294901760
        %5920 = vmatpush1.msra.mxu0 %v5919
        %5921 = vmatprep.subr.mxu0 0.0
        %5922 = vmatpush2.msra.mxu0 0.0
        %5923 = vmatprep.subr.mxu0 0.0
        %5924 = vmatpush2.msra.mxu0 0.0
        %5925 = vmatprep.subr.mxu0 0.0
        %5926 = vmatpush2.msra.mxu0 0.0
        %5927 = vmatprep.subr.mxu0 0.0
        %5928 = vmatpush2.msra.mxu0 0.0
        %5929 = vmatprep.subr.mxu0 0.0
        %5930 = vmatpush2.msra.mxu0 0.0
        %5931 = vmatprep.subr.mxu0 0.0
        %5932 = vmatpush2.msra.mxu0 0.0
        %5933 = vmatprep.subr.mxu0 0.0
        %5934 = vmatpush2.msra.mxu0 0.0
        %5935 = vmatprep.subr.mxu0 0.0
        %5936 = vmatpush2.msra.mxu0 0.0
        %5937 = vmatprep.subr.mxu0 0.0
        %5938 = vmatpush2.msra.mxu0 0.0
        %5939 = vmatprep.subr.mxu0 0.0
        %5940 = vmatpush2.msra.mxu0 0.0
        %5941 = vmatprep.subr.mxu0 0.0
        %5942 = vmatpush2.msra.mxu0 0.0
        %5943 = vmatprep.subr.mxu0 0.0
        %5944 = vmatpush2.msra.mxu0 0.0
        %5945 = vmatprep.subr.mxu0 0.0
        %5946 = vmatpush2.msra.mxu0 0.0
        %5947 = vmatprep.subr.mxu0 0.0
        %5948 = vmatpush2.msra.mxu0 0.0
        %5949 = vmatprep.subr.mxu0 0.0
        %5950 = vmatpush2.msra.mxu0 0.0
        %5951 = vmatprep.subr.mxu0 0.0
        %5952 = vmatpush2.msra.mxu0 0.0
        %5953 = vmatprep.mubr.f32.mxu0 0.0
        %v5954 = vand.u32 %v5564, 4294901760
        %5955 = vmatmul.mubr.f32.gmra.mxu0 %v5954
        %v5956 = vpop.f32.mrf.mxu0
        %v5957 = vadd.f32 %v5879, %v5956
        %v5958 = vpop.f32.mrf.mxu0
        %v5959 = vadd.f32 %v5881, %v5958
        %5960 = vdwg.mxu0
        %5961 = vmatprep.subr.mxu0 0.0
        %5962 = vmatpush1.msra.mxu0 0.0
        %5963 = vmatprep.subr.mxu0 0.0
        %5964 = vmatpush1.msra.mxu0 0.0
        %5965 = vmatprep.subr.mxu0 0.0
        %5966 = vmatpush1.msra.mxu0 0.0
        %5967 = vmatprep.subr.mxu0 0.0
        %5968 = vmatpush1.msra.mxu0 0.0
        %5969 = vmatprep.subr.mxu0 0.0
        %5970 = vmatpush1.msra.mxu0 0.0
        %5971 = vmatprep.subr.mxu0 0.0
        %5972 = vmatpush1.msra.mxu0 0.0
        %5973 = vmatprep.subr.mxu0 0.0
        %5974 = vmatpush1.msra.mxu0 0.0
        %5975 = vmatprep.subr.mxu0 0.0
        %5976 = vmatpush1.msra.mxu0 0.0
        %5977 = vmatprep.subr.mxu0 0.0
        %5978 = vmatpush1.msra.mxu0 0.0
        %5979 = vmatprep.subr.mxu0 0.0
        %5980 = vmatpush1.msra.mxu0 0.0
        %5981 = vmatprep.subr.mxu0 0.0
        %5982 = vmatpush1.msra.mxu0 0.0
        %5983 = vmatprep.subr.mxu0 0.0
        %5984 = vmatpush1.msra.mxu0 0.0
        %5985 = vmatprep.subr.mxu0 0.0
        %5986 = vmatpush1.msra.mxu0 0.0
        %5987 = vmatprep.subr.mxu0 0.0
        %5988 = vmatpush1.msra.mxu0 0.0
        %5989 = vmatprep.subr.mxu0 0.0
        %5990 = vmatpush1.msra.mxu0 0.0
        %v5991 = vand.u32 %v5568, 4294901760
        %5992 = vmatprep.subr.mxu0 %v5991
        %v5993 = vand.u32 %v5566, 4294901760
        %5994 = vmatpush1.msra.mxu0 %v5993
        %5995 = vmatprep.subr.mxu0 0.0
        %5996 = vmatpush2.msra.mxu0 0.0
        %5997 = vmatprep.subr.mxu0 0.0
        %5998 = vmatpush2.msra.mxu0 0.0
        %5999 = vmatprep.subr.mxu0 0.0
        %6000 = vmatpush2.msra.mxu0 0.0
        %6001 = vmatprep.subr.mxu0 0.0
        %6002 = vmatpush2.msra.mxu0 0.0
        %6003 = vmatprep.subr.mxu0 0.0
        %6004 = vmatpush2.msra.mxu0 0.0
        %6005 = vmatprep.subr.mxu0 0.0
        %6006 = vmatpush2.msra.mxu0 0.0
        %6007 = vmatprep.subr.mxu0 0.0
        %6008 = vmatpush2.msra.mxu0 0.0
        %6009 = vmatprep.subr.mxu0 0.0
        %6010 = vmatpush2.msra.mxu0 0.0
        %6011 = vmatprep.subr.mxu0 0.0
        %6012 = vmatpush2.msra.mxu0 0.0
        %6013 = vmatprep.subr.mxu0 0.0
        %6014 = vmatpush2.msra.mxu0 0.0
        %6015 = vmatprep.subr.mxu0 0.0
        %6016 = vmatpush2.msra.mxu0 0.0
        %6017 = vmatprep.subr.mxu0 0.0
        %6018 = vmatpush2.msra.mxu0 0.0
        %6019 = vmatprep.subr.mxu0 0.0
        %6020 = vmatpush2.msra.mxu0 0.0
        %6021 = vmatprep.subr.mxu0 0.0
        %6022 = vmatpush2.msra.mxu0 0.0
        %6023 = vmatprep.subr.mxu0 0.0
        %6024 = vmatpush2.msra.mxu0 0.0
        %6025 = vmatprep.subr.mxu0 0.0
        %6026 = vmatpush2.msra.mxu0 0.0
        %6027 = vmatprep.mubr.f32.mxu0 0.0
        %v6028 = vand.u32 %v5564, 4294901760
        %6029 = vmatmul.mubr.f32.gmra.mxu0 %v6028
        %v6030 = vpop.f32.mrf.mxu0
        %v6031 = vadd.f32 %v5957, %v6030
        %v6032 = vpop.f32.mrf.mxu0
        %v6033 = vadd.f32 %v5959, %v6032
        %6034 = vdwg.mxu0
        %v6035 = vadd.f32 %v5550, %v6031
        %v6036 = vadd.f32 %v5551, %v6033
        %6037 = vrot.lane.b32.xlu0 %v3075, 17
        %v6038 = vpop.permute.xlu0 %6037
        %6039 = vrot.lane.b32.xlu0 %v3079, 17
        %v6040 = vpop.permute.xlu0 %6039
        %v6041 = vsel %vm2595, %v6038, %v6040
        %v6045 = vmul.f32 %v2075, %v6038
        %v6046 = vmul.f32 %v2076, %v6041
        %v6047 = vmul.f32 %v6040, 0.0
        %s6048 = scalar_lea.vmem %s4, 32
        %v6049 = vld [vmem:[%s6048] sm:$0xf]
        %6053 = vrot.lane.b32.xlu0 %v6045, 111
        %v6054 = vpop.permute.xlu0 %6053
        %6055 = vrot.lane.b32.xlu0 %v6046, 111
        %v6056 = vpop.permute.xlu0 %6055
        %6057 = vrot.lane.b32.xlu0 %v6047, 111
        %v6058 = vpop.permute.xlu0 %6057
        %v6059 = vsel %vm2091, %v6054, %v6056
        %v6060 = vsel %vm2091, %v6056, %v6058
        %v6062 = vsel %vm607, %v6049, 0
        %v6064 = vsel %vm611, %v6059, 0
        %v6066 = vsel %vm611, %v6060, 0
        %6068 = vmatprep.subr.mxu0 0.0
        %6069 = vmatpush1.msra.mxu0 0.0
        %6070 = vmatprep.subr.mxu0 0.0
        %6071 = vmatpush1.msra.mxu0 0.0
        %6072 = vmatprep.subr.mxu0 0.0
        %6073 = vmatpush1.msra.mxu0 0.0
        %6074 = vmatprep.subr.mxu0 0.0
        %6075 = vmatpush1.msra.mxu0 0.0
        %6076 = vmatprep.subr.mxu0 0.0
        %6077 = vmatpush1.msra.mxu0 0.0
        %6078 = vmatprep.subr.mxu0 0.0
        %6079 = vmatpush1.msra.mxu0 0.0
        %6080 = vmatprep.subr.mxu0 0.0
        %6081 = vmatpush1.msra.mxu0 0.0
        %6082 = vmatprep.subr.mxu0 0.0
        %6083 = vmatpush1.msra.mxu0 0.0
        %6084 = vmatprep.subr.mxu0 0.0
        %6085 = vmatpush1.msra.mxu0 0.0
        %6086 = vmatprep.subr.mxu0 0.0
        %6087 = vmatpush1.msra.mxu0 0.0
        %6088 = vmatprep.subr.mxu0 0.0
        %6089 = vmatpush1.msra.mxu0 0.0
        %6090 = vmatprep.subr.mxu0 0.0
        %6091 = vmatpush1.msra.mxu0 0.0
        %6092 = vmatprep.subr.mxu0 0.0
        %6093 = vmatpush1.msra.mxu0 0.0
        %6094 = vmatprep.subr.mxu0 0.0
        %6095 = vmatpush1.msra.mxu0 0.0
        %6096 = vmatprep.subr.mxu0 0.0
        %6097 = vmatpush1.msra.mxu0 0.0
        %v6098 = vand.u32 %v6066, 4294901760
        %6099 = vmatprep.subr.mxu0 %v6098
        %v6100 = vand.u32 %v6064, 4294901760
        %6101 = vmatpush1.msra.mxu0 %v6100
        %6102 = vmatprep.subr.mxu0 0.0
        %6103 = vmatpush2.msra.mxu0 0.0
        %6104 = vmatprep.subr.mxu0 0.0
        %6105 = vmatpush2.msra.mxu0 0.0
        %6106 = vmatprep.subr.mxu0 0.0
        %6107 = vmatpush2.msra.mxu0 0.0
        %6108 = vmatprep.subr.mxu0 0.0
        %6109 = vmatpush2.msra.mxu0 0.0
        %6110 = vmatprep.subr.mxu0 0.0
        %6111 = vmatpush2.msra.mxu0 0.0
        %6112 = vmatprep.subr.mxu0 0.0
        %6113 = vmatpush2.msra.mxu0 0.0
        %6114 = vmatprep.subr.mxu0 0.0
        %6115 = vmatpush2.msra.mxu0 0.0
        %6116 = vmatprep.subr.mxu0 0.0
        %6117 = vmatpush2.msra.mxu0 0.0
        %6118 = vmatprep.subr.mxu0 0.0
        %6119 = vmatpush2.msra.mxu0 0.0
        %6120 = vmatprep.subr.mxu0 0.0
        %6121 = vmatpush2.msra.mxu0 0.0
        %6122 = vmatprep.subr.mxu0 0.0
        %6123 = vmatpush2.msra.mxu0 0.0
        %6124 = vmatprep.subr.mxu0 0.0
        %6125 = vmatpush2.msra.mxu0 0.0
        %6126 = vmatprep.subr.mxu0 0.0
        %6127 = vmatpush2.msra.mxu0 0.0
        %6128 = vmatprep.subr.mxu0 0.0
        %6129 = vmatpush2.msra.mxu0 0.0
        %6130 = vmatprep.subr.mxu0 0.0
        %6131 = vmatpush2.msra.mxu0 0.0
        %6132 = vmatprep.subr.mxu0 0.0
        %6133 = vmatpush2.msra.mxu0 0.0
        %6134 = vmatprep.mubr.f32.mxu0 0.0
        %v6135 = vand.u32 %v6062, 4294901760
        %v6136 = vsub.f32 %v6062, %v6135
        %v6137 = vand.u32 %v6136, 4294901760
        %v6138 = vsub.f32 %v6136, %v6137
        %v6139 = vand.u32 %v6138, 4294901760
        %6140 = vmatmul.mubr.f32.gmra.mxu0 %v6139
        %v6141 = vpop.f32.mrf.mxu0
        %v6142 = vadd.f32 0.0, %v6141
        %v6143 = vpop.f32.mrf.mxu0
        %v6144 = vadd.f32 0.0, %v6143
        %6145 = vdwg.mxu0
        %6146 = vmatprep.subr.mxu0 0.0
        %6147 = vmatpush1.msra.mxu0 0.0
        %6148 = vmatprep.subr.mxu0 0.0
        %6149 = vmatpush1.msra.mxu0 0.0
        %6150 = vmatprep.subr.mxu0 0.0
        %6151 = vmatpush1.msra.mxu0 0.0
        %6152 = vmatprep.subr.mxu0 0.0
        %6153 = vmatpush1.msra.mxu0 0.0
        %6154 = vmatprep.subr.mxu0 0.0
        %6155 = vmatpush1.msra.mxu0 0.0
        %6156 = vmatprep.subr.mxu0 0.0
        %6157 = vmatpush1.msra.mxu0 0.0
        %6158 = vmatprep.subr.mxu0 0.0
        %6159 = vmatpush1.msra.mxu0 0.0
        %6160 = vmatprep.subr.mxu0 0.0
        %6161 = vmatpush1.msra.mxu0 0.0
        %6162 = vmatprep.subr.mxu0 0.0
        %6163 = vmatpush1.msra.mxu0 0.0
        %6164 = vmatprep.subr.mxu0 0.0
        %6165 = vmatpush1.msra.mxu0 0.0
        %6166 = vmatprep.subr.mxu0 0.0
        %6167 = vmatpush1.msra.mxu0 0.0
        %6168 = vmatprep.subr.mxu0 0.0
        %6169 = vmatpush1.msra.mxu0 0.0
        %6170 = vmatprep.subr.mxu0 0.0
        %6171 = vmatpush1.msra.mxu0 0.0
        %6172 = vmatprep.subr.mxu0 0.0
        %6173 = vmatpush1.msra.mxu0 0.0
        %6174 = vmatprep.subr.mxu0 0.0
        %6175 = vmatpush1.msra.mxu0 0.0
        %v6176 = vand.u32 %v6066, 4294901760
        %v6177 = vsub.f32 %v6066, %v6176
        %v6178 = vand.u32 %v6177, 4294901760
        %v6179 = vsub.f32 %v6177, %v6178
        %v6180 = vand.u32 %v6179, 4294901760
        %6181 = vmatprep.subr.mxu0 %v6180
        %v6182 = vand.u32 %v6064, 4294901760
        %v6183 = vsub.f32 %v6064, %v6182
        %v6184 = vand.u32 %v6183, 4294901760
        %v6185 = vsub.f32 %v6183, %v6184
        %v6186 = vand.u32 %v6185, 4294901760
        %6187 = vmatpush1.msra.mxu0 %v6186
        %6188 = vmatprep.subr.mxu0 0.0
        %6189 = vmatpush2.msra.mxu0 0.0
        %6190 = vmatprep.subr.mxu0 0.0
        %6191 = vmatpush2.msra.mxu0 0.0
        %6192 = vmatprep.subr.mxu0 0.0
        %6193 = vmatpush2.msra.mxu0 0.0
        %6194 = vmatprep.subr.mxu0 0.0
        %6195 = vmatpush2.msra.mxu0 0.0
        %6196 = vmatprep.subr.mxu0 0.0
        %6197 = vmatpush2.msra.mxu0 0.0
        %6198 = vmatprep.subr.mxu0 0.0
        %6199 = vmatpush2.msra.mxu0 0.0
        %6200 = vmatprep.subr.mxu0 0.0
        %6201 = vmatpush2.msra.mxu0 0.0
        %6202 = vmatprep.subr.mxu0 0.0
        %6203 = vmatpush2.msra.mxu0 0.0
        %6204 = vmatprep.subr.mxu0 0.0
        %6205 = vmatpush2.msra.mxu0 0.0
        %6206 = vmatprep.subr.mxu0 0.0
        %6207 = vmatpush2.msra.mxu0 0.0
        %6208 = vmatprep.subr.mxu0 0.0
        %6209 = vmatpush2.msra.mxu0 0.0
        %6210 = vmatprep.subr.mxu0 0.0
        %6211 = vmatpush2.msra.mxu0 0.0
        %6212 = vmatprep.subr.mxu0 0.0
        %6213 = vmatpush2.msra.mxu0 0.0
        %6214 = vmatprep.subr.mxu0 0.0
        %6215 = vmatpush2.msra.mxu0 0.0
        %6216 = vmatprep.subr.mxu0 0.0
        %6217 = vmatpush2.msra.mxu0 0.0
        %6218 = vmatprep.subr.mxu0 0.0
        %6219 = vmatpush2.msra.mxu0 0.0
        %6220 = vmatprep.mubr.f32.mxu0 0.0
        %v6221 = vand.u32 %v6062, 4294901760
        %6222 = vmatmul.mubr.f32.gmra.mxu0 %v6221
        %v6223 = vpop.f32.mrf.mxu0
        %v6224 = vadd.f32 %v6142, %v6223
        %v6225 = vpop.f32.mrf.mxu0
        %v6226 = vadd.f32 %v6144, %v6225
        %6227 = vdwg.mxu0
        %6228 = vmatprep.subr.mxu0 0.0
        %6229 = vmatpush1.msra.mxu0 0.0
        %6230 = vmatprep.subr.mxu0 0.0
        %6231 = vmatpush1.msra.mxu0 0.0
        %6232 = vmatprep.subr.mxu0 0.0
        %6233 = vmatpush1.msra.mxu0 0.0
        %6234 = vmatprep.subr.mxu0 0.0
        %6235 = vmatpush1.msra.mxu0 0.0
        %6236 = vmatprep.subr.mxu0 0.0
        %6237 = vmatpush1.msra.mxu0 0.0
        %6238 = vmatprep.subr.mxu0 0.0
        %6239 = vmatpush1.msra.mxu0 0.0
        %6240 = vmatprep.subr.mxu0 0.0
        %6241 = vmatpush1.msra.mxu0 0.0
        %6242 = vmatprep.subr.mxu0 0.0
        %6243 = vmatpush1.msra.mxu0 0.0
        %6244 = vmatprep.subr.mxu0 0.0
        %6245 = vmatpush1.msra.mxu0 0.0
        %6246 = vmatprep.subr.mxu0 0.0
        %6247 = vmatpush1.msra.mxu0 0.0
        %6248 = vmatprep.subr.mxu0 0.0
        %6249 = vmatpush1.msra.mxu0 0.0
        %6250 = vmatprep.subr.mxu0 0.0
        %6251 = vmatpush1.msra.mxu0 0.0
        %6252 = vmatprep.subr.mxu0 0.0
        %6253 = vmatpush1.msra.mxu0 0.0
        %6254 = vmatprep.subr.mxu0 0.0
        %6255 = vmatpush1.msra.mxu0 0.0
        %6256 = vmatprep.subr.mxu0 0.0
        %6257 = vmatpush1.msra.mxu0 0.0
        %v6258 = vand.u32 %v6066, 4294901760
        %v6259 = vsub.f32 %v6066, %v6258
        %6260 = vmatprep.subr.mxu0 %v6259
        %v6261 = vand.u32 %v6064, 4294901760
        %v6262 = vsub.f32 %v6064, %v6261
        %6263 = vmatpush1.msra.mxu0 %v6262
        %6264 = vmatprep.subr.mxu0 0.0
        %6265 = vmatpush2.msra.mxu0 0.0
        %6266 = vmatprep.subr.mxu0 0.0
        %6267 = vmatpush2.msra.mxu0 0.0
        %6268 = vmatprep.subr.mxu0 0.0
        %6269 = vmatpush2.msra.mxu0 0.0
        %6270 = vmatprep.subr.mxu0 0.0
        %6271 = vmatpush2.msra.mxu0 0.0
        %6272 = vmatprep.subr.mxu0 0.0
        %6273 = vmatpush2.msra.mxu0 0.0
        %6274 = vmatprep.subr.mxu0 0.0
        %6275 = vmatpush2.msra.mxu0 0.0
        %6276 = vmatprep.subr.mxu0 0.0
        %6277 = vmatpush2.msra.mxu0 0.0
        %6278 = vmatprep.subr.mxu0 0.0
        %6279 = vmatpush2.msra.mxu0 0.0
        %6280 = vmatprep.subr.mxu0 0.0
        %6281 = vmatpush2.msra.mxu0 0.0
        %6282 = vmatprep.subr.mxu0 0.0
        %6283 = vmatpush2.msra.mxu0 0.0
        %6284 = vmatprep.subr.mxu0 0.0
        %6285 = vmatpush2.msra.mxu0 0.0
        %6286 = vmatprep.subr.mxu0 0.0
        %6287 = vmatpush2.msra.mxu0 0.0
        %6288 = vmatprep.subr.mxu0 0.0
        %6289 = vmatpush2.msra.mxu0 0.0
        %6290 = vmatprep.subr.mxu0 0.0
        %6291 = vmatpush2.msra.mxu0 0.0
        %6292 = vmatprep.subr.mxu0 0.0
        %6293 = vmatpush2.msra.mxu0 0.0
        %6294 = vmatprep.subr.mxu0 0.0
        %6295 = vmatpush2.msra.mxu0 0.0
        %6296 = vmatprep.mubr.f32.mxu0 0.0
        %v6297 = vand.u32 %v6062, 4294901760
        %v6298 = vsub.f32 %v6062, %v6297
        %6299 = vmatmul.mubr.f32.gmra.mxu0 %v6298
        %v6300 = vpop.f32.mrf.mxu0
        %v6301 = vadd.f32 %v6224, %v6300
        %v6302 = vpop.f32.mrf.mxu0
        %v6303 = vadd.f32 %v6226, %v6302
        %6304 = vdwg.mxu0
        %6305 = vmatprep.subr.mxu0 0.0
        %6306 = vmatpush1.msra.mxu0 0.0
        %6307 = vmatprep.subr.mxu0 0.0
        %6308 = vmatpush1.msra.mxu0 0.0
        %6309 = vmatprep.subr.mxu0 0.0
        %6310 = vmatpush1.msra.mxu0 0.0
        %6311 = vmatprep.subr.mxu0 0.0
        %6312 = vmatpush1.msra.mxu0 0.0
        %6313 = vmatprep.subr.mxu0 0.0
        %6314 = vmatpush1.msra.mxu0 0.0
        %6315 = vmatprep.subr.mxu0 0.0
        %6316 = vmatpush1.msra.mxu0 0.0
        %6317 = vmatprep.subr.mxu0 0.0
        %6318 = vmatpush1.msra.mxu0 0.0
        %6319 = vmatprep.subr.mxu0 0.0
        %6320 = vmatpush1.msra.mxu0 0.0
        %6321 = vmatprep.subr.mxu0 0.0
        %6322 = vmatpush1.msra.mxu0 0.0
        %6323 = vmatprep.subr.mxu0 0.0
        %6324 = vmatpush1.msra.mxu0 0.0
        %6325 = vmatprep.subr.mxu0 0.0
        %6326 = vmatpush1.msra.mxu0 0.0
        %6327 = vmatprep.subr.mxu0 0.0
        %6328 = vmatpush1.msra.mxu0 0.0
        %6329 = vmatprep.subr.mxu0 0.0
        %6330 = vmatpush1.msra.mxu0 0.0
        %6331 = vmatprep.subr.mxu0 0.0
        %6332 = vmatpush1.msra.mxu0 0.0
        %6333 = vmatprep.subr.mxu0 0.0
        %6334 = vmatpush1.msra.mxu0 0.0
        %v6335 = vand.u32 %v6066, 4294901760
        %6336 = vmatprep.subr.mxu0 %v6335
        %v6337 = vand.u32 %v6064, 4294901760
        %6338 = vmatpush1.msra.mxu0 %v6337
        %6339 = vmatprep.subr.mxu0 0.0
        %6340 = vmatpush2.msra.mxu0 0.0
        %6341 = vmatprep.subr.mxu0 0.0
        %6342 = vmatpush2.msra.mxu0 0.0
        %6343 = vmatprep.subr.mxu0 0.0
        %6344 = vmatpush2.msra.mxu0 0.0
        %6345 = vmatprep.subr.mxu0 0.0
        %6346 = vmatpush2.msra.mxu0 0.0
        %6347 = vmatprep.subr.mxu0 0.0
        %6348 = vmatpush2.msra.mxu0 0.0
        %6349 = vmatprep.subr.mxu0 0.0
        %6350 = vmatpush2.msra.mxu0 0.0
        %6351 = vmatprep.subr.mxu0 0.0
        %6352 = vmatpush2.msra.mxu0 0.0
        %6353 = vmatprep.subr.mxu0 0.0
        %6354 = vmatpush2.msra.mxu0 0.0
        %6355 = vmatprep.subr.mxu0 0.0
        %6356 = vmatpush2.msra.mxu0 0.0
        %6357 = vmatprep.subr.mxu0 0.0
        %6358 = vmatpush2.msra.mxu0 0.0
        %6359 = vmatprep.subr.mxu0 0.0
        %6360 = vmatpush2.msra.mxu0 0.0
        %6361 = vmatprep.subr.mxu0 0.0
        %6362 = vmatpush2.msra.mxu0 0.0
        %6363 = vmatprep.subr.mxu0 0.0
        %6364 = vmatpush2.msra.mxu0 0.0
        %6365 = vmatprep.subr.mxu0 0.0
        %6366 = vmatpush2.msra.mxu0 0.0
        %6367 = vmatprep.subr.mxu0 0.0
        %6368 = vmatpush2.msra.mxu0 0.0
        %6369 = vmatprep.subr.mxu0 0.0
        %6370 = vmatpush2.msra.mxu0 0.0
        %6371 = vmatprep.mubr.f32.mxu0 0.0
        %v6372 = vand.u32 %v6062, 4294901760
        %v6373 = vsub.f32 %v6062, %v6372
        %v6374 = vand.u32 %v6373, 4294901760
        %6375 = vmatmul.mubr.f32.gmra.mxu0 %v6374
        %v6376 = vpop.f32.mrf.mxu0
        %v6377 = vadd.f32 %v6301, %v6376
        %v6378 = vpop.f32.mrf.mxu0
        %v6379 = vadd.f32 %v6303, %v6378
        %6380 = vdwg.mxu0
        %6381 = vmatprep.subr.mxu0 0.0
        %6382 = vmatpush1.msra.mxu0 0.0
        %6383 = vmatprep.subr.mxu0 0.0
        %6384 = vmatpush1.msra.mxu0 0.0
        %6385 = vmatprep.subr.mxu0 0.0
        %6386 = vmatpush1.msra.mxu0 0.0
        %6387 = vmatprep.subr.mxu0 0.0
        %6388 = vmatpush1.msra.mxu0 0.0
        %6389 = vmatprep.subr.mxu0 0.0
        %6390 = vmatpush1.msra.mxu0 0.0
        %6391 = vmatprep.subr.mxu0 0.0
        %6392 = vmatpush1.msra.mxu0 0.0
        %6393 = vmatprep.subr.mxu0 0.0
        %6394 = vmatpush1.msra.mxu0 0.0
        %6395 = vmatprep.subr.mxu0 0.0
        %6396 = vmatpush1.msra.mxu0 0.0
        %6397 = vmatprep.subr.mxu0 0.0
        %6398 = vmatpush1.msra.mxu0 0.0
        %6399 = vmatprep.subr.mxu0 0.0
        %6400 = vmatpush1.msra.mxu0 0.0
        %6401 = vmatprep.subr.mxu0 0.0
        %6402 = vmatpush1.msra.mxu0 0.0
        %6403 = vmatprep.subr.mxu0 0.0
        %6404 = vmatpush1.msra.mxu0 0.0
        %6405 = vmatprep.subr.mxu0 0.0
        %6406 = vmatpush1.msra.mxu0 0.0
        %6407 = vmatprep.subr.mxu0 0.0
        %6408 = vmatpush1.msra.mxu0 0.0
        %6409 = vmatprep.subr.mxu0 0.0
        %6410 = vmatpush1.msra.mxu0 0.0
        %v6411 = vand.u32 %v6066, 4294901760
        %v6412 = vsub.f32 %v6066, %v6411
        %v6413 = vand.u32 %v6412, 4294901760
        %6414 = vmatprep.subr.mxu0 %v6413
        %v6415 = vand.u32 %v6064, 4294901760
        %v6416 = vsub.f32 %v6064, %v6415
        %v6417 = vand.u32 %v6416, 4294901760
        %6418 = vmatpush1.msra.mxu0 %v6417
        %6419 = vmatprep.subr.mxu0 0.0
        %6420 = vmatpush2.msra.mxu0 0.0
        %6421 = vmatprep.subr.mxu0 0.0
        %6422 = vmatpush2.msra.mxu0 0.0
        %6423 = vmatprep.subr.mxu0 0.0
        %6424 = vmatpush2.msra.mxu0 0.0
        %6425 = vmatprep.subr.mxu0 0.0
        %6426 = vmatpush2.msra.mxu0 0.0
        %6427 = vmatprep.subr.mxu0 0.0
        %6428 = vmatpush2.msra.mxu0 0.0
        %6429 = vmatprep.subr.mxu0 0.0
        %6430 = vmatpush2.msra.mxu0 0.0
        %6431 = vmatprep.subr.mxu0 0.0
        %6432 = vmatpush2.msra.mxu0 0.0
        %6433 = vmatprep.subr.mxu0 0.0
        %6434 = vmatpush2.msra.mxu0 0.0
        %6435 = vmatprep.subr.mxu0 0.0
        %6436 = vmatpush2.msra.mxu0 0.0
        %6437 = vmatprep.subr.mxu0 0.0
        %6438 = vmatpush2.msra.mxu0 0.0
        %6439 = vmatprep.subr.mxu0 0.0
        %6440 = vmatpush2.msra.mxu0 0.0
        %6441 = vmatprep.subr.mxu0 0.0
        %6442 = vmatpush2.msra.mxu0 0.0
        %6443 = vmatprep.subr.mxu0 0.0
        %6444 = vmatpush2.msra.mxu0 0.0
        %6445 = vmatprep.subr.mxu0 0.0
        %6446 = vmatpush2.msra.mxu0 0.0
        %6447 = vmatprep.subr.mxu0 0.0
        %6448 = vmatpush2.msra.mxu0 0.0
        %6449 = vmatprep.subr.mxu0 0.0
        %6450 = vmatpush2.msra.mxu0 0.0
        %6451 = vmatprep.mubr.f32.mxu0 0.0
        %v6452 = vand.u32 %v6062, 4294901760
        %6453 = vmatmul.mubr.f32.gmra.mxu0 %v6452
        %v6454 = vpop.f32.mrf.mxu0
        %v6455 = vadd.f32 %v6377, %v6454
        %v6456 = vpop.f32.mrf.mxu0
        %v6457 = vadd.f32 %v6379, %v6456
        %6458 = vdwg.mxu0
        %6459 = vmatprep.subr.mxu0 0.0
        %6460 = vmatpush1.msra.mxu0 0.0
        %6461 = vmatprep.subr.mxu0 0.0
        %6462 = vmatpush1.msra.mxu0 0.0
        %6463 = vmatprep.subr.mxu0 0.0
        %6464 = vmatpush1.msra.mxu0 0.0
        %6465 = vmatprep.subr.mxu0 0.0
        %6466 = vmatpush1.msra.mxu0 0.0
        %6467 = vmatprep.subr.mxu0 0.0
        %6468 = vmatpush1.msra.mxu0 0.0
        %6469 = vmatprep.subr.mxu0 0.0
        %6470 = vmatpush1.msra.mxu0 0.0
        %6471 = vmatprep.subr.mxu0 0.0
        %6472 = vmatpush1.msra.mxu0 0.0
        %6473 = vmatprep.subr.mxu0 0.0
        %6474 = vmatpush1.msra.mxu0 0.0
        %6475 = vmatprep.subr.mxu0 0.0
        %6476 = vmatpush1.msra.mxu0 0.0
        %6477 = vmatprep.subr.mxu0 0.0
        %6478 = vmatpush1.msra.mxu0 0.0
        %6479 = vmatprep.subr.mxu0 0.0
        %6480 = vmatpush1.msra.mxu0 0.0
        %6481 = vmatprep.subr.mxu0 0.0
        %6482 = vmatpush1.msra.mxu0 0.0
        %6483 = vmatprep.subr.mxu0 0.0
        %6484 = vmatpush1.msra.mxu0 0.0
        %6485 = vmatprep.subr.mxu0 0.0
        %6486 = vmatpush1.msra.mxu0 0.0
        %6487 = vmatprep.subr.mxu0 0.0
        %6488 = vmatpush1.msra.mxu0 0.0
        %v6489 = vand.u32 %v6066, 4294901760
        %6490 = vmatprep.subr.mxu0 %v6489
        %v6491 = vand.u32 %v6064, 4294901760
        %6492 = vmatpush1.msra.mxu0 %v6491
        %6493 = vmatprep.subr.mxu0 0.0
        %6494 = vmatpush2.msra.mxu0 0.0
        %6495 = vmatprep.subr.mxu0 0.0
        %6496 = vmatpush2.msra.mxu0 0.0
        %6497 = vmatprep.subr.mxu0 0.0
        %6498 = vmatpush2.msra.mxu0 0.0
        %6499 = vmatprep.subr.mxu0 0.0
        %6500 = vmatpush2.msra.mxu0 0.0
        %6501 = vmatprep.subr.mxu0 0.0
        %6502 = vmatpush2.msra.mxu0 0.0
        %6503 = vmatprep.subr.mxu0 0.0
        %6504 = vmatpush2.msra.mxu0 0.0
        %6505 = vmatprep.subr.mxu0 0.0
        %6506 = vmatpush2.msra.mxu0 0.0
        %6507 = vmatprep.subr.mxu0 0.0
        %6508 = vmatpush2.msra.mxu0 0.0
        %6509 = vmatprep.subr.mxu0 0.0
        %6510 = vmatpush2.msra.mxu0 0.0
        %6511 = vmatprep.subr.mxu0 0.0
        %6512 = vmatpush2.msra.mxu0 0.0
        %6513 = vmatprep.subr.mxu0 0.0
        %6514 = vmatpush2.msra.mxu0 0.0
        %6515 = vmatprep.subr.mxu0 0.0
        %6516 = vmatpush2.msra.mxu0 0.0
        %6517 = vmatprep.subr.mxu0 0.0
        %6518 = vmatpush2.msra.mxu0 0.0
        %6519 = vmatprep.subr.mxu0 0.0
        %6520 = vmatpush2.msra.mxu0 0.0
        %6521 = vmatprep.subr.mxu0 0.0
        %6522 = vmatpush2.msra.mxu0 0.0
        %6523 = vmatprep.subr.mxu0 0.0
        %6524 = vmatpush2.msra.mxu0 0.0
        %6525 = vmatprep.mubr.f32.mxu0 0.0
        %v6526 = vand.u32 %v6062, 4294901760
        %6527 = vmatmul.mubr.f32.gmra.mxu0 %v6526
        %v6528 = vpop.f32.mrf.mxu0
        %v6529 = vadd.f32 %v6455, %v6528
        %v6530 = vpop.f32.mrf.mxu0
        %v6531 = vadd.f32 %v6457, %v6530
        %6532 = vdwg.mxu0
        %v6533 = vadd.f32 %v6035, %v6529
        %v6534 = vadd.f32 %v6036, %v6531
        %v6535 = vld [vmem:[%s13] sm:$0xf]
        %6537 = vset.pattern.permute.xlu0 0
        %6538 = vperm.xlu0 %6537, %v6535
        %v6539 = vpop.permute.xlu0 %6538
        %v6541 = vmul.f32 %v6533, %v6539
        %v6542 = vmul.f32 %v6534, %v6539
        %v6543 = vld [vmem:[%s14] sm:$0xf]
        %6545 = vset.pattern.permute.xlu0 0
        %6546 = vperm.xlu0 %6545, %v6543
        %v6547 = vpop.permute.xlu0 %6546
        %v6549 = vadd.f32 %v6541, %v6547
        %v6550 = vadd.f32 %v6542, %v6547
        %v6551 = vmax.f32 %v6549, 0.0
        %v6552 = vmax.f32 %v6550, 0.0
        %v6553 = vadd.f32 %v6551, %v1095
        %v6554 = vadd.f32 %v6552, %v1096
        %v6555 = vld [vmem:[%s5] sm:$0xff]
        %v6556 = vld [vmem:[%s6] sm:$0xff]
        %v6558 = vsel %vm607, %v6556, 0
        %v6561 = vsel %vm611, %v6553, 0
        %v6564 = vsel %vm611, %v6554, 0
        %6566 = vmatprep.subr.mxu0 0.0
        %6567 = vmatpush1.msra.mxu0 0.0
        %6568 = vmatprep.subr.mxu0 0.0
        %6569 = vmatpush1.msra.mxu0 0.0
        %6570 = vmatprep.subr.mxu0 0.0
        %6571 = vmatpush1.msra.mxu0 0.0
        %6572 = vmatprep.subr.mxu0 0.0
        %6573 = vmatpush1.msra.mxu0 0.0
        %6574 = vmatprep.subr.mxu0 0.0
        %6575 = vmatpush1.msra.mxu0 0.0
        %6576 = vmatprep.subr.mxu0 0.0
        %6577 = vmatpush1.msra.mxu0 0.0
        %6578 = vmatprep.subr.mxu0 0.0
        %6579 = vmatpush1.msra.mxu0 0.0
        %6580 = vmatprep.subr.mxu0 0.0
        %6581 = vmatpush1.msra.mxu0 0.0
        %6582 = vmatprep.subr.mxu0 0.0
        %6583 = vmatpush1.msra.mxu0 0.0
        %6584 = vmatprep.subr.mxu0 0.0
        %6585 = vmatpush1.msra.mxu0 0.0
        %6586 = vmatprep.subr.mxu0 0.0
        %6587 = vmatpush1.msra.mxu0 0.0
        %6588 = vmatprep.subr.mxu0 0.0
        %6589 = vmatpush1.msra.mxu0 0.0
        %6590 = vmatprep.subr.mxu0 0.0
        %6591 = vmatpush1.msra.mxu0 0.0
        %6592 = vmatprep.subr.mxu0 0.0
        %6593 = vmatpush1.msra.mxu0 0.0
        %6594 = vmatprep.subr.mxu0 0.0
        %6595 = vmatpush1.msra.mxu0 0.0
        %v6596 = vand.u32 %v6564, 4294901760
        %6597 = vmatprep.subr.mxu0 %v6596
        %v6598 = vand.u32 %v6561, 4294901760
        %6599 = vmatpush1.msra.mxu0 %v6598
        %6600 = vmatprep.subr.mxu0 0.0
        %6601 = vmatpush2.msra.mxu0 0.0
        %6602 = vmatprep.subr.mxu0 0.0
        %6603 = vmatpush2.msra.mxu0 0.0
        %6604 = vmatprep.subr.mxu0 0.0
        %6605 = vmatpush2.msra.mxu0 0.0
        %6606 = vmatprep.subr.mxu0 0.0
        %6607 = vmatpush2.msra.mxu0 0.0
        %6608 = vmatprep.subr.mxu0 0.0
        %6609 = vmatpush2.msra.mxu0 0.0
        %6610 = vmatprep.subr.mxu0 0.0
        %6611 = vmatpush2.msra.mxu0 0.0
        %6612 = vmatprep.subr.mxu0 0.0
        %6613 = vmatpush2.msra.mxu0 0.0
        %6614 = vmatprep.subr.mxu0 0.0
        %6615 = vmatpush2.msra.mxu0 0.0
        %6616 = vmatprep.subr.mxu0 0.0
        %6617 = vmatpush2.msra.mxu0 0.0
        %6618 = vmatprep.subr.mxu0 0.0
        %6619 = vmatpush2.msra.mxu0 0.0
        %6620 = vmatprep.subr.mxu0 0.0
        %6621 = vmatpush2.msra.mxu0 0.0
        %6622 = vmatprep.subr.mxu0 0.0
        %6623 = vmatpush2.msra.mxu0 0.0
        %6624 = vmatprep.subr.mxu0 0.0
        %6625 = vmatpush2.msra.mxu0 0.0
        %6626 = vmatprep.subr.mxu0 0.0
        %6627 = vmatpush2.msra.mxu0 0.0
        %6628 = vmatprep.subr.mxu0 0.0
        %6629 = vmatpush2.msra.mxu0 0.0
        %6630 = vmatprep.subr.mxu0 0.0
        %6631 = vmatpush2.msra.mxu0 0.0
        %6632 = vmatprep.mubr.f32.mxu0 0.0
        %v6633 = vand.u32 %v6558, 4294901760
        %v6634 = vsub.f32 %v6558, %v6633
        %v6635 = vand.u32 %v6634, 4294901760
        %v6636 = vsub.f32 %v6634, %v6635
        %v6637 = vand.u32 %v6636, 4294901760
        %6638 = vmatmul.mubr.f32.gmra.mxu0 %v6637
        %v6639 = vpop.f32.mrf.mxu0
        %v6640 = vadd.f32 0.0, %v6639
        %v6641 = vpop.f32.mrf.mxu0
        %v6642 = vadd.f32 0.0, %v6641
        %6643 = vdwg.mxu0
        %6644 = vmatprep.subr.mxu0 0.0
        %6645 = vmatpush1.msra.mxu0 0.0
        %6646 = vmatprep.subr.mxu0 0.0
        %6647 = vmatpush1.msra.mxu0 0.0
        %6648 = vmatprep.subr.mxu0 0.0
        %6649 = vmatpush1.msra.mxu0 0.0
        %6650 = vmatprep.subr.mxu0 0.0
        %6651 = vmatpush1.msra.mxu0 0.0
        %6652 = vmatprep.subr.mxu0 0.0
        %6653 = vmatpush1.msra.mxu0 0.0
        %6654 = vmatprep.subr.mxu0 0.0
        %6655 = vmatpush1.msra.mxu0 0.0
        %6656 = vmatprep.subr.mxu0 0.0
        %6657 = vmatpush1.msra.mxu0 0.0
        %6658 = vmatprep.subr.mxu0 0.0
        %6659 = vmatpush1.msra.mxu0 0.0
        %6660 = vmatprep.subr.mxu0 0.0
        %6661 = vmatpush1.msra.mxu0 0.0
        %6662 = vmatprep.subr.mxu0 0.0
        %6663 = vmatpush1.msra.mxu0 0.0
        %6664 = vmatprep.subr.mxu0 0.0
        %6665 = vmatpush1.msra.mxu0 0.0
        %6666 = vmatprep.subr.mxu0 0.0
        %6667 = vmatpush1.msra.mxu0 0.0
        %6668 = vmatprep.subr.mxu0 0.0
        %6669 = vmatpush1.msra.mxu0 0.0
        %6670 = vmatprep.subr.mxu0 0.0
        %6671 = vmatpush1.msra.mxu0 0.0
        %6672 = vmatprep.subr.mxu0 0.0
        %6673 = vmatpush1.msra.mxu0 0.0
        %v6674 = vand.u32 %v6564, 4294901760
        %v6675 = vsub.f32 %v6564, %v6674
        %v6676 = vand.u32 %v6675, 4294901760
        %v6677 = vsub.f32 %v6675, %v6676
        %v6678 = vand.u32 %v6677, 4294901760
        %6679 = vmatprep.subr.mxu0 %v6678
        %v6680 = vand.u32 %v6561, 4294901760
        %v6681 = vsub.f32 %v6561, %v6680
        %v6682 = vand.u32 %v6681, 4294901760
        %v6683 = vsub.f32 %v6681, %v6682
        %v6684 = vand.u32 %v6683, 4294901760
        %6685 = vmatpush1.msra.mxu0 %v6684
        %6686 = vmatprep.subr.mxu0 0.0
        %6687 = vmatpush2.msra.mxu0 0.0
        %6688 = vmatprep.subr.mxu0 0.0
        %6689 = vmatpush2.msra.mxu0 0.0
        %6690 = vmatprep.subr.mxu0 0.0
        %6691 = vmatpush2.msra.mxu0 0.0
        %6692 = vmatprep.subr.mxu0 0.0
        %6693 = vmatpush2.msra.mxu0 0.0
        %6694 = vmatprep.subr.mxu0 0.0
        %6695 = vmatpush2.msra.mxu0 0.0
        %6696 = vmatprep.subr.mxu0 0.0
        %6697 = vmatpush2.msra.mxu0 0.0
        %6698 = vmatprep.subr.mxu0 0.0
        %6699 = vmatpush2.msra.mxu0 0.0
        %6700 = vmatprep.subr.mxu0 0.0
        %6701 = vmatpush2.msra.mxu0 0.0
        %6702 = vmatprep.subr.mxu0 0.0
        %6703 = vmatpush2.msra.mxu0 0.0
        %6704 = vmatprep.subr.mxu0 0.0
        %6705 = vmatpush2.msra.mxu0 0.0
        %6706 = vmatprep.subr.mxu0 0.0
        %6707 = vmatpush2.msra.mxu0 0.0
        %6708 = vmatprep.subr.mxu0 0.0
        %6709 = vmatpush2.msra.mxu0 0.0
        %6710 = vmatprep.subr.mxu0 0.0
        %6711 = vmatpush2.msra.mxu0 0.0
        %6712 = vmatprep.subr.mxu0 0.0
        %6713 = vmatpush2.msra.mxu0 0.0
        %6714 = vmatprep.subr.mxu0 0.0
        %6715 = vmatpush2.msra.mxu0 0.0
        %6716 = vmatprep.subr.mxu0 0.0
        %6717 = vmatpush2.msra.mxu0 0.0
        %6718 = vmatprep.mubr.f32.mxu0 0.0
        %v6719 = vand.u32 %v6558, 4294901760
        %6720 = vmatmul.mubr.f32.gmra.mxu0 %v6719
        %v6721 = vpop.f32.mrf.mxu0
        %v6722 = vadd.f32 %v6640, %v6721
        %v6723 = vpop.f32.mrf.mxu0
        %v6724 = vadd.f32 %v6642, %v6723
        %6725 = vdwg.mxu0
        %6726 = vmatprep.subr.mxu0 0.0
        %6727 = vmatpush1.msra.mxu0 0.0
        %6728 = vmatprep.subr.mxu0 0.0
        %6729 = vmatpush1.msra.mxu0 0.0
        %6730 = vmatprep.subr.mxu0 0.0
        %6731 = vmatpush1.msra.mxu0 0.0
        %6732 = vmatprep.subr.mxu0 0.0
        %6733 = vmatpush1.msra.mxu0 0.0
        %6734 = vmatprep.subr.mxu0 0.0
        %6735 = vmatpush1.msra.mxu0 0.0
        %6736 = vmatprep.subr.mxu0 0.0
        %6737 = vmatpush1.msra.mxu0 0.0
        %6738 = vmatprep.subr.mxu0 0.0
        %6739 = vmatpush1.msra.mxu0 0.0
        %6740 = vmatprep.subr.mxu0 0.0
        %6741 = vmatpush1.msra.mxu0 0.0
        %6742 = vmatprep.subr.mxu0 0.0
        %6743 = vmatpush1.msra.mxu0 0.0
        %6744 = vmatprep.subr.mxu0 0.0
        %6745 = vmatpush1.msra.mxu0 0.0
        %6746 = vmatprep.subr.mxu0 0.0
        %6747 = vmatpush1.msra.mxu0 0.0
        %6748 = vmatprep.subr.mxu0 0.0
        %6749 = vmatpush1.msra.mxu0 0.0
        %6750 = vmatprep.subr.mxu0 0.0
        %6751 = vmatpush1.msra.mxu0 0.0
        %6752 = vmatprep.subr.mxu0 0.0
        %6753 = vmatpush1.msra.mxu0 0.0
        %6754 = vmatprep.subr.mxu0 0.0
        %6755 = vmatpush1.msra.mxu0 0.0
        %v6756 = vand.u32 %v6564, 4294901760
        %v6757 = vsub.f32 %v6564, %v6756
        %6758 = vmatprep.subr.mxu0 %v6757
        %v6759 = vand.u32 %v6561, 4294901760
        %v6760 = vsub.f32 %v6561, %v6759
        %6761 = vmatpush1.msra.mxu0 %v6760
        %6762 = vmatprep.subr.mxu0 0.0
        %6763 = vmatpush2.msra.mxu0 0.0
        %6764 = vmatprep.subr.mxu0 0.0
        %6765 = vmatpush2.msra.mxu0 0.0
        %6766 = vmatprep.subr.mxu0 0.0
        %6767 = vmatpush2.msra.mxu0 0.0
        %6768 = vmatprep.subr.mxu0 0.0
        %6769 = vmatpush2.msra.mxu0 0.0
        %6770 = vmatprep.subr.mxu0 0.0
        %6771 = vmatpush2.msra.mxu0 0.0
        %6772 = vmatprep.subr.mxu0 0.0
        %6773 = vmatpush2.msra.mxu0 0.0
        %6774 = vmatprep.subr.mxu0 0.0
        %6775 = vmatpush2.msra.mxu0 0.0
        %6776 = vmatprep.subr.mxu0 0.0
        %6777 = vmatpush2.msra.mxu0 0.0
        %6778 = vmatprep.subr.mxu0 0.0
        %6779 = vmatpush2.msra.mxu0 0.0
        %6780 = vmatprep.subr.mxu0 0.0
        %6781 = vmatpush2.msra.mxu0 0.0
        %6782 = vmatprep.subr.mxu0 0.0
        %6783 = vmatpush2.msra.mxu0 0.0
        %6784 = vmatprep.subr.mxu0 0.0
        %6785 = vmatpush2.msra.mxu0 0.0
        %6786 = vmatprep.subr.mxu0 0.0
        %6787 = vmatpush2.msra.mxu0 0.0
        %6788 = vmatprep.subr.mxu0 0.0
        %6789 = vmatpush2.msra.mxu0 0.0
        %6790 = vmatprep.subr.mxu0 0.0
        %6791 = vmatpush2.msra.mxu0 0.0
        %6792 = vmatprep.subr.mxu0 0.0
        %6793 = vmatpush2.msra.mxu0 0.0
        %6794 = vmatprep.mubr.f32.mxu0 0.0
        %v6795 = vand.u32 %v6558, 4294901760
        %v6796 = vsub.f32 %v6558, %v6795
        %6797 = vmatmul.mubr.f32.gmra.mxu0 %v6796
        %v6798 = vpop.f32.mrf.mxu0
        %v6799 = vadd.f32 %v6722, %v6798
        %v6800 = vpop.f32.mrf.mxu0
        %v6801 = vadd.f32 %v6724, %v6800
        %6802 = vdwg.mxu0
        %6803 = vmatprep.subr.mxu0 0.0
        %6804 = vmatpush1.msra.mxu0 0.0
        %6805 = vmatprep.subr.mxu0 0.0
        %6806 = vmatpush1.msra.mxu0 0.0
        %6807 = vmatprep.subr.mxu0 0.0
        %6808 = vmatpush1.msra.mxu0 0.0
        %6809 = vmatprep.subr.mxu0 0.0
        %6810 = vmatpush1.msra.mxu0 0.0
        %6811 = vmatprep.subr.mxu0 0.0
        %6812 = vmatpush1.msra.mxu0 0.0
        %6813 = vmatprep.subr.mxu0 0.0
        %6814 = vmatpush1.msra.mxu0 0.0
        %6815 = vmatprep.subr.mxu0 0.0
        %6816 = vmatpush1.msra.mxu0 0.0
        %6817 = vmatprep.subr.mxu0 0.0
        %6818 = vmatpush1.msra.mxu0 0.0
        %6819 = vmatprep.subr.mxu0 0.0
        %6820 = vmatpush1.msra.mxu0 0.0
        %6821 = vmatprep.subr.mxu0 0.0
        %6822 = vmatpush1.msra.mxu0 0.0
        %6823 = vmatprep.subr.mxu0 0.0
        %6824 = vmatpush1.msra.mxu0 0.0
        %6825 = vmatprep.subr.mxu0 0.0
        %6826 = vmatpush1.msra.mxu0 0.0
        %6827 = vmatprep.subr.mxu0 0.0
        %6828 = vmatpush1.msra.mxu0 0.0
        %6829 = vmatprep.subr.mxu0 0.0
        %6830 = vmatpush1.msra.mxu0 0.0
        %6831 = vmatprep.subr.mxu0 0.0
        %6832 = vmatpush1.msra.mxu0 0.0
        %v6833 = vand.u32 %v6564, 4294901760
        %6834 = vmatprep.subr.mxu0 %v6833
        %v6835 = vand.u32 %v6561, 4294901760
        %6836 = vmatpush1.msra.mxu0 %v6835
        %6837 = vmatprep.subr.mxu0 0.0
        %6838 = vmatpush2.msra.mxu0 0.0
        %6839 = vmatprep.subr.mxu0 0.0
        %6840 = vmatpush2.msra.mxu0 0.0
        %6841 = vmatprep.subr.mxu0 0.0
        %6842 = vmatpush2.msra.mxu0 0.0
        %6843 = vmatprep.subr.mxu0 0.0
        %6844 = vmatpush2.msra.mxu0 0.0
        %6845 = vmatprep.subr.mxu0 0.0
        %6846 = vmatpush2.msra.mxu0 0.0
        %6847 = vmatprep.subr.mxu0 0.0
        %6848 = vmatpush2.msra.mxu0 0.0
        %6849 = vmatprep.subr.mxu0 0.0
        %6850 = vmatpush2.msra.mxu0 0.0
        %6851 = vmatprep.subr.mxu0 0.0
        %6852 = vmatpush2.msra.mxu0 0.0
        %6853 = vmatprep.subr.mxu0 0.0
        %6854 = vmatpush2.msra.mxu0 0.0
        %6855 = vmatprep.subr.mxu0 0.0
        %6856 = vmatpush2.msra.mxu0 0.0
        %6857 = vmatprep.subr.mxu0 0.0
        %6858 = vmatpush2.msra.mxu0 0.0
        %6859 = vmatprep.subr.mxu0 0.0
        %6860 = vmatpush2.msra.mxu0 0.0
        %6861 = vmatprep.subr.mxu0 0.0
        %6862 = vmatpush2.msra.mxu0 0.0
        %6863 = vmatprep.subr.mxu0 0.0
        %6864 = vmatpush2.msra.mxu0 0.0
        %6865 = vmatprep.subr.mxu0 0.0
        %6866 = vmatpush2.msra.mxu0 0.0
        %6867 = vmatprep.subr.mxu0 0.0
        %6868 = vmatpush2.msra.mxu0 0.0
        %6869 = vmatprep.mubr.f32.mxu0 0.0
        %v6870 = vand.u32 %v6558, 4294901760
        %v6871 = vsub.f32 %v6558, %v6870
        %v6872 = vand.u32 %v6871, 4294901760
        %6873 = vmatmul.mubr.f32.gmra.mxu0 %v6872
        %v6874 = vpop.f32.mrf.mxu0
        %v6875 = vadd.f32 %v6799, %v6874
        %v6876 = vpop.f32.mrf.mxu0
        %v6877 = vadd.f32 %v6801, %v6876
        %6878 = vdwg.mxu0
        %6879 = vmatprep.subr.mxu0 0.0
        %6880 = vmatpush1.msra.mxu0 0.0
        %6881 = vmatprep.subr.mxu0 0.0
        %6882 = vmatpush1.msra.mxu0 0.0
        %6883 = vmatprep.subr.mxu0 0.0
        %6884 = vmatpush1.msra.mxu0 0.0
        %6885 = vmatprep.subr.mxu0 0.0
        %6886 = vmatpush1.msra.mxu0 0.0
        %6887 = vmatprep.subr.mxu0 0.0
        %6888 = vmatpush1.msra.mxu0 0.0
        %6889 = vmatprep.subr.mxu0 0.0
        %6890 = vmatpush1.msra.mxu0 0.0
        %6891 = vmatprep.subr.mxu0 0.0
        %6892 = vmatpush1.msra.mxu0 0.0
        %6893 = vmatprep.subr.mxu0 0.0
        %6894 = vmatpush1.msra.mxu0 0.0
        %6895 = vmatprep.subr.mxu0 0.0
        %6896 = vmatpush1.msra.mxu0 0.0
        %6897 = vmatprep.subr.mxu0 0.0
        %6898 = vmatpush1.msra.mxu0 0.0
        %6899 = vmatprep.subr.mxu0 0.0
        %6900 = vmatpush1.msra.mxu0 0.0
        %6901 = vmatprep.subr.mxu0 0.0
        %6902 = vmatpush1.msra.mxu0 0.0
        %6903 = vmatprep.subr.mxu0 0.0
        %6904 = vmatpush1.msra.mxu0 0.0
        %6905 = vmatprep.subr.mxu0 0.0
        %6906 = vmatpush1.msra.mxu0 0.0
        %6907 = vmatprep.subr.mxu0 0.0
        %6908 = vmatpush1.msra.mxu0 0.0
        %v6909 = vand.u32 %v6564, 4294901760
        %v6910 = vsub.f32 %v6564, %v6909
        %v6911 = vand.u32 %v6910, 4294901760
        %6912 = vmatprep.subr.mxu0 %v6911
        %v6913 = vand.u32 %v6561, 4294901760
        %v6914 = vsub.f32 %v6561, %v6913
        %v6915 = vand.u32 %v6914, 4294901760
        %6916 = vmatpush1.msra.mxu0 %v6915
        %6917 = vmatprep.subr.mxu0 0.0
        %6918 = vmatpush2.msra.mxu0 0.0
        %6919 = vmatprep.subr.mxu0 0.0
        %6920 = vmatpush2.msra.mxu0 0.0
        %6921 = vmatprep.subr.mxu0 0.0
        %6922 = vmatpush2.msra.mxu0 0.0
        %6923 = vmatprep.subr.mxu0 0.0
        %6924 = vmatpush2.msra.mxu0 0.0
        %6925 = vmatprep.subr.mxu0 0.0
        %6926 = vmatpush2.msra.mxu0 0.0
        %6927 = vmatprep.subr.mxu0 0.0
        %6928 = vmatpush2.msra.mxu0 0.0
        %6929 = vmatprep.subr.mxu0 0.0
        %6930 = vmatpush2.msra.mxu0 0.0
        %6931 = vmatprep.subr.mxu0 0.0
        %6932 = vmatpush2.msra.mxu0 0.0
        %6933 = vmatprep.subr.mxu0 0.0
        %6934 = vmatpush2.msra.mxu0 0.0
        %6935 = vmatprep.subr.mxu0 0.0
        %6936 = vmatpush2.msra.mxu0 0.0
        %6937 = vmatprep.subr.mxu0 0.0
        %6938 = vmatpush2.msra.mxu0 0.0
        %6939 = vmatprep.subr.mxu0 0.0
        %6940 = vmatpush2.msra.mxu0 0.0
        %6941 = vmatprep.subr.mxu0 0.0
        %6942 = vmatpush2.msra.mxu0 0.0
        %6943 = vmatprep.subr.mxu0 0.0
        %6944 = vmatpush2.msra.mxu0 0.0
        %6945 = vmatprep.subr.mxu0 0.0
        %6946 = vmatpush2.msra.mxu0 0.0
        %6947 = vmatprep.subr.mxu0 0.0
        %6948 = vmatpush2.msra.mxu0 0.0
        %6949 = vmatprep.mubr.f32.mxu0 0.0
        %v6950 = vand.u32 %v6558, 4294901760
        %6951 = vmatmul.mubr.f32.gmra.mxu0 %v6950
        %v6952 = vpop.f32.mrf.mxu0
        %v6953 = vadd.f32 %v6875, %v6952
        %v6954 = vpop.f32.mrf.mxu0
        %v6955 = vadd.f32 %v6877, %v6954
        %6956 = vdwg.mxu0
        %6957 = vmatprep.subr.mxu0 0.0
        %6958 = vmatpush1.msra.mxu0 0.0
        %6959 = vmatprep.subr.mxu0 0.0
        %6960 = vmatpush1.msra.mxu0 0.0
        %6961 = vmatprep.subr.mxu0 0.0
        %6962 = vmatpush1.msra.mxu0 0.0
        %6963 = vmatprep.subr.mxu0 0.0
        %6964 = vmatpush1.msra.mxu0 0.0
        %6965 = vmatprep.subr.mxu0 0.0
        %6966 = vmatpush1.msra.mxu0 0.0
        %6967 = vmatprep.subr.mxu0 0.0
        %6968 = vmatpush1.msra.mxu0 0.0
        %6969 = vmatprep.subr.mxu0 0.0
        %6970 = vmatpush1.msra.mxu0 0.0
        %6971 = vmatprep.subr.mxu0 0.0
        %6972 = vmatpush1.msra.mxu0 0.0
        %6973 = vmatprep.subr.mxu0 0.0
        %6974 = vmatpush1.msra.mxu0 0.0
        %6975 = vmatprep.subr.mxu0 0.0
        %6976 = vmatpush1.msra.mxu0 0.0
        %6977 = vmatprep.subr.mxu0 0.0
        %6978 = vmatpush1.msra.mxu0 0.0
        %6979 = vmatprep.subr.mxu0 0.0
        %6980 = vmatpush1.msra.mxu0 0.0
        %6981 = vmatprep.subr.mxu0 0.0
        %6982 = vmatpush1.msra.mxu0 0.0
        %6983 = vmatprep.subr.mxu0 0.0
        %6984 = vmatpush1.msra.mxu0 0.0
        %6985 = vmatprep.subr.mxu0 0.0
        %6986 = vmatpush1.msra.mxu0 0.0
        %v6987 = vand.u32 %v6564, 4294901760
        %6988 = vmatprep.subr.mxu0 %v6987
        %v6989 = vand.u32 %v6561, 4294901760
        %6990 = vmatpush1.msra.mxu0 %v6989
        %6991 = vmatprep.subr.mxu0 0.0
        %6992 = vmatpush2.msra.mxu0 0.0
        %6993 = vmatprep.subr.mxu0 0.0
        %6994 = vmatpush2.msra.mxu0 0.0
        %6995 = vmatprep.subr.mxu0 0.0
        %6996 = vmatpush2.msra.mxu0 0.0
        %6997 = vmatprep.subr.mxu0 0.0
        %6998 = vmatpush2.msra.mxu0 0.0
        %6999 = vmatprep.subr.mxu0 0.0
        %7000 = vmatpush2.msra.mxu0 0.0
        %7001 = vmatprep.subr.mxu0 0.0
        %7002 = vmatpush2.msra.mxu0 0.0
        %7003 = vmatprep.subr.mxu0 0.0
        %7004 = vmatpush2.msra.mxu0 0.0
        %7005 = vmatprep.subr.mxu0 0.0
        %7006 = vmatpush2.msra.mxu0 0.0
        %7007 = vmatprep.subr.mxu0 0.0
        %7008 = vmatpush2.msra.mxu0 0.0
        %7009 = vmatprep.subr.mxu0 0.0
        %7010 = vmatpush2.msra.mxu0 0.0
        %7011 = vmatprep.subr.mxu0 0.0
        %7012 = vmatpush2.msra.mxu0 0.0
        %7013 = vmatprep.subr.mxu0 0.0
        %7014 = vmatpush2.msra.mxu0 0.0
        %7015 = vmatprep.subr.mxu0 0.0
        %7016 = vmatpush2.msra.mxu0 0.0
        %7017 = vmatprep.subr.mxu0 0.0
        %7018 = vmatpush2.msra.mxu0 0.0
        %7019 = vmatprep.subr.mxu0 0.0
        %7020 = vmatpush2.msra.mxu0 0.0
        %7021 = vmatprep.subr.mxu0 0.0
        %7022 = vmatpush2.msra.mxu0 0.0
        %7023 = vmatprep.mubr.f32.mxu0 0.0
        %v7024 = vand.u32 %v6558, 4294901760
        %7025 = vmatmul.mubr.f32.gmra.mxu0 %v7024
        %v7026 = vpop.f32.mrf.mxu0
        %v7027 = vadd.f32 %v6953, %v7026
        %v7028 = vpop.f32.mrf.mxu0
        %v7029 = vadd.f32 %v6955, %v7028
        %7030 = vdwg.mxu0
        %v7032 = vsel %vm607, %v6555, 0
        %v7035 = vsel %vm611, %v1582, 0
        %v7038 = vsel %vm611, %v1583, 0
        %7040 = vmatprep.subr.mxu0 0.0
        %7041 = vmatpush1.msra.mxu0 0.0
        %7042 = vmatprep.subr.mxu0 0.0
        %7043 = vmatpush1.msra.mxu0 0.0
        %7044 = vmatprep.subr.mxu0 0.0
        %7045 = vmatpush1.msra.mxu0 0.0
        %7046 = vmatprep.subr.mxu0 0.0
        %7047 = vmatpush1.msra.mxu0 0.0
        %7048 = vmatprep.subr.mxu0 0.0
        %7049 = vmatpush1.msra.mxu0 0.0
        %7050 = vmatprep.subr.mxu0 0.0
        %7051 = vmatpush1.msra.mxu0 0.0
        %7052 = vmatprep.subr.mxu0 0.0
        %7053 = vmatpush1.msra.mxu0 0.0
        %7054 = vmatprep.subr.mxu0 0.0
        %7055 = vmatpush1.msra.mxu0 0.0
        %7056 = vmatprep.subr.mxu0 0.0
        %7057 = vmatpush1.msra.mxu0 0.0
        %7058 = vmatprep.subr.mxu0 0.0
        %7059 = vmatpush1.msra.mxu0 0.0
        %7060 = vmatprep.subr.mxu0 0.0
        %7061 = vmatpush1.msra.mxu0 0.0
        %7062 = vmatprep.subr.mxu0 0.0
        %7063 = vmatpush1.msra.mxu0 0.0
        %7064 = vmatprep.subr.mxu0 0.0
        %7065 = vmatpush1.msra.mxu0 0.0
        %7066 = vmatprep.subr.mxu0 0.0
        %7067 = vmatpush1.msra.mxu0 0.0
        %7068 = vmatprep.subr.mxu0 0.0
        %7069 = vmatpush1.msra.mxu0 0.0
        %v7070 = vand.u32 %v7038, 4294901760
        %7071 = vmatprep.subr.mxu0 %v7070
        %v7072 = vand.u32 %v7035, 4294901760
        %7073 = vmatpush1.msra.mxu0 %v7072
        %7074 = vmatprep.subr.mxu0 0.0
        %7075 = vmatpush2.msra.mxu0 0.0
        %7076 = vmatprep.subr.mxu0 0.0
        %7077 = vmatpush2.msra.mxu0 0.0
        %7078 = vmatprep.subr.mxu0 0.0
        %7079 = vmatpush2.msra.mxu0 0.0
        %7080 = vmatprep.subr.mxu0 0.0
        %7081 = vmatpush2.msra.mxu0 0.0
        %7082 = vmatprep.subr.mxu0 0.0
        %7083 = vmatpush2.msra.mxu0 0.0
        %7084 = vmatprep.subr.mxu0 0.0
        %7085 = vmatpush2.msra.mxu0 0.0
        %7086 = vmatprep.subr.mxu0 0.0
        %7087 = vmatpush2.msra.mxu0 0.0
        %7088 = vmatprep.subr.mxu0 0.0
        %7089 = vmatpush2.msra.mxu0 0.0
        %7090 = vmatprep.subr.mxu0 0.0
        %7091 = vmatpush2.msra.mxu0 0.0
        %7092 = vmatprep.subr.mxu0 0.0
        %7093 = vmatpush2.msra.mxu0 0.0
        %7094 = vmatprep.subr.mxu0 0.0
        %7095 = vmatpush2.msra.mxu0 0.0
        %7096 = vmatprep.subr.mxu0 0.0
        %7097 = vmatpush2.msra.mxu0 0.0
        %7098 = vmatprep.subr.mxu0 0.0
        %7099 = vmatpush2.msra.mxu0 0.0
        %7100 = vmatprep.subr.mxu0 0.0
        %7101 = vmatpush2.msra.mxu0 0.0
        %7102 = vmatprep.subr.mxu0 0.0
        %7103 = vmatpush2.msra.mxu0 0.0
        %7104 = vmatprep.subr.mxu0 0.0
        %7105 = vmatpush2.msra.mxu0 0.0
        %7106 = vmatprep.mubr.f32.mxu0 0.0
        %v7107 = vand.u32 %v7032, 4294901760
        %v7108 = vsub.f32 %v7032, %v7107
        %v7109 = vand.u32 %v7108, 4294901760
        %v7110 = vsub.f32 %v7108, %v7109
        %v7111 = vand.u32 %v7110, 4294901760
        %7112 = vmatmul.mubr.f32.gmra.mxu0 %v7111
        %v7113 = vpop.f32.mrf.mxu0
        %v7114 = vadd.f32 %v7027, %v7113
        %v7115 = vpop.f32.mrf.mxu0
        %v7116 = vadd.f32 %v7029, %v7115
        %7117 = vdwg.mxu0
        %7118 = vmatprep.subr.mxu0 0.0
        %7119 = vmatpush1.msra.mxu0 0.0
        %7120 = vmatprep.subr.mxu0 0.0
        %7121 = vmatpush1.msra.mxu0 0.0
        %7122 = vmatprep.subr.mxu0 0.0
        %7123 = vmatpush1.msra.mxu0 0.0
        %7124 = vmatprep.subr.mxu0 0.0
        %7125 = vmatpush1.msra.mxu0 0.0
        %7126 = vmatprep.subr.mxu0 0.0
        %7127 = vmatpush1.msra.mxu0 0.0
        %7128 = vmatprep.subr.mxu0 0.0
        %7129 = vmatpush1.msra.mxu0 0.0
        %7130 = vmatprep.subr.mxu0 0.0
        %7131 = vmatpush1.msra.mxu0 0.0
        %7132 = vmatprep.subr.mxu0 0.0
        %7133 = vmatpush1.msra.mxu0 0.0
        %7134 = vmatprep.subr.mxu0 0.0
        %7135 = vmatpush1.msra.mxu0 0.0
        %7136 = vmatprep.subr.mxu0 0.0
        %7137 = vmatpush1.msra.mxu0 0.0
        %7138 = vmatprep.subr.mxu0 0.0
        %7139 = vmatpush1.msra.mxu0 0.0
        %7140 = vmatprep.subr.mxu0 0.0
        %7141 = vmatpush1.msra.mxu0 0.0
        %7142 = vmatprep.subr.mxu0 0.0
        %7143 = vmatpush1.msra.mxu0 0.0
        %7144 = vmatprep.subr.mxu0 0.0
        %7145 = vmatpush1.msra.mxu0 0.0
        %7146 = vmatprep.subr.mxu0 0.0
        %7147 = vmatpush1.msra.mxu0 0.0
        %v7148 = vand.u32 %v7038, 4294901760
        %v7149 = vsub.f32 %v7038, %v7148
        %v7150 = vand.u32 %v7149, 4294901760
        %v7151 = vsub.f32 %v7149, %v7150
        %v7152 = vand.u32 %v7151, 4294901760
        %7153 = vmatprep.subr.mxu0 %v7152
        %v7154 = vand.u32 %v7035, 4294901760
        %v7155 = vsub.f32 %v7035, %v7154
        %v7156 = vand.u32 %v7155, 4294901760
        %v7157 = vsub.f32 %v7155, %v7156
        %v7158 = vand.u32 %v7157, 4294901760
        %7159 = vmatpush1.msra.mxu0 %v7158
        %7160 = vmatprep.subr.mxu0 0.0
        %7161 = vmatpush2.msra.mxu0 0.0
        %7162 = vmatprep.subr.mxu0 0.0
        %7163 = vmatpush2.msra.mxu0 0.0
        %7164 = vmatprep.subr.mxu0 0.0
        %7165 = vmatpush2.msra.mxu0 0.0
        %7166 = vmatprep.subr.mxu0 0.0
        %7167 = vmatpush2.msra.mxu0 0.0
        %7168 = vmatprep.subr.mxu0 0.0
        %7169 = vmatpush2.msra.mxu0 0.0
        %7170 = vmatprep.subr.mxu0 0.0
        %7171 = vmatpush2.msra.mxu0 0.0
        %7172 = vmatprep.subr.mxu0 0.0
        %7173 = vmatpush2.msra.mxu0 0.0
        %7174 = vmatprep.subr.mxu0 0.0
        %7175 = vmatpush2.msra.mxu0 0.0
        %7176 = vmatprep.subr.mxu0 0.0
        %7177 = vmatpush2.msra.mxu0 0.0
        %7178 = vmatprep.subr.mxu0 0.0
        %7179 = vmatpush2.msra.mxu0 0.0
        %7180 = vmatprep.subr.mxu0 0.0
        %7181 = vmatpush2.msra.mxu0 0.0
        %7182 = vmatprep.subr.mxu0 0.0
        %7183 = vmatpush2.msra.mxu0 0.0
        %7184 = vmatprep.subr.mxu0 0.0
        %7185 = vmatpush2.msra.mxu0 0.0
        %7186 = vmatprep.subr.mxu0 0.0
        %7187 = vmatpush2.msra.mxu0 0.0
        %7188 = vmatprep.subr.mxu0 0.0
        %7189 = vmatpush2.msra.mxu0 0.0
        %7190 = vmatprep.subr.mxu0 0.0
        %7191 = vmatpush2.msra.mxu0 0.0
        %7192 = vmatprep.mubr.f32.mxu0 0.0
        %v7193 = vand.u32 %v7032, 4294901760
        %7194 = vmatmul.mubr.f32.gmra.mxu0 %v7193
        %v7195 = vpop.f32.mrf.mxu0
        %v7196 = vadd.f32 %v7114, %v7195
        %v7197 = vpop.f32.mrf.mxu0
        %v7198 = vadd.f32 %v7116, %v7197
        %7199 = vdwg.mxu0
        %7200 = vmatprep.subr.mxu0 0.0
        %7201 = vmatpush1.msra.mxu0 0.0
        %7202 = vmatprep.subr.mxu0 0.0
        %7203 = vmatpush1.msra.mxu0 0.0
        %7204 = vmatprep.subr.mxu0 0.0
        %7205 = vmatpush1.msra.mxu0 0.0
        %7206 = vmatprep.subr.mxu0 0.0
        %7207 = vmatpush1.msra.mxu0 0.0
        %7208 = vmatprep.subr.mxu0 0.0
        %7209 = vmatpush1.msra.mxu0 0.0
        %7210 = vmatprep.subr.mxu0 0.0
        %7211 = vmatpush1.msra.mxu0 0.0
        %7212 = vmatprep.subr.mxu0 0.0
        %7213 = vmatpush1.msra.mxu0 0.0
        %7214 = vmatprep.subr.mxu0 0.0
        %7215 = vmatpush1.msra.mxu0 0.0
        %7216 = vmatprep.subr.mxu0 0.0
        %7217 = vmatpush1.msra.mxu0 0.0
        %7218 = vmatprep.subr.mxu0 0.0
        %7219 = vmatpush1.msra.mxu0 0.0
        %7220 = vmatprep.subr.mxu0 0.0
        %7221 = vmatpush1.msra.mxu0 0.0
        %7222 = vmatprep.subr.mxu0 0.0
        %7223 = vmatpush1.msra.mxu0 0.0
        %7224 = vmatprep.subr.mxu0 0.0
        %7225 = vmatpush1.msra.mxu0 0.0
        %7226 = vmatprep.subr.mxu0 0.0
        %7227 = vmatpush1.msra.mxu0 0.0
        %7228 = vmatprep.subr.mxu0 0.0
        %7229 = vmatpush1.msra.mxu0 0.0
        %v7230 = vand.u32 %v7038, 4294901760
        %v7231 = vsub.f32 %v7038, %v7230
        %7232 = vmatprep.subr.mxu0 %v7231
        %v7233 = vand.u32 %v7035, 4294901760
        %v7234 = vsub.f32 %v7035, %v7233
        %7235 = vmatpush1.msra.mxu0 %v7234
        %7236 = vmatprep.subr.mxu0 0.0
        %7237 = vmatpush2.msra.mxu0 0.0
        %7238 = vmatprep.subr.mxu0 0.0
        %7239 = vmatpush2.msra.mxu0 0.0
        %7240 = vmatprep.subr.mxu0 0.0
        %7241 = vmatpush2.msra.mxu0 0.0
        %7242 = vmatprep.subr.mxu0 0.0
        %7243 = vmatpush2.msra.mxu0 0.0
        %7244 = vmatprep.subr.mxu0 0.0
        %7245 = vmatpush2.msra.mxu0 0.0
        %7246 = vmatprep.subr.mxu0 0.0
        %7247 = vmatpush2.msra.mxu0 0.0
        %7248 = vmatprep.subr.mxu0 0.0
        %7249 = vmatpush2.msra.mxu0 0.0
        %7250 = vmatprep.subr.mxu0 0.0
        %7251 = vmatpush2.msra.mxu0 0.0
        %7252 = vmatprep.subr.mxu0 0.0
        %7253 = vmatpush2.msra.mxu0 0.0
        %7254 = vmatprep.subr.mxu0 0.0
        %7255 = vmatpush2.msra.mxu0 0.0
        %7256 = vmatprep.subr.mxu0 0.0
        %7257 = vmatpush2.msra.mxu0 0.0
        %7258 = vmatprep.subr.mxu0 0.0
        %7259 = vmatpush2.msra.mxu0 0.0
        %7260 = vmatprep.subr.mxu0 0.0
        %7261 = vmatpush2.msra.mxu0 0.0
        %7262 = vmatprep.subr.mxu0 0.0
        %7263 = vmatpush2.msra.mxu0 0.0
        %7264 = vmatprep.subr.mxu0 0.0
        %7265 = vmatpush2.msra.mxu0 0.0
        %7266 = vmatprep.subr.mxu0 0.0
        %7267 = vmatpush2.msra.mxu0 0.0
        %7268 = vmatprep.mubr.f32.mxu0 0.0
        %v7269 = vand.u32 %v7032, 4294901760
        %v7270 = vsub.f32 %v7032, %v7269
        %7271 = vmatmul.mubr.f32.gmra.mxu0 %v7270
        %v7272 = vpop.f32.mrf.mxu0
        %v7273 = vadd.f32 %v7196, %v7272
        %v7274 = vpop.f32.mrf.mxu0
        %v7275 = vadd.f32 %v7198, %v7274
        %7276 = vdwg.mxu0
        %7277 = vmatprep.subr.mxu0 0.0
        %7278 = vmatpush1.msra.mxu0 0.0
        %7279 = vmatprep.subr.mxu0 0.0
        %7280 = vmatpush1.msra.mxu0 0.0
        %7281 = vmatprep.subr.mxu0 0.0
        %7282 = vmatpush1.msra.mxu0 0.0
        %7283 = vmatprep.subr.mxu0 0.0
        %7284 = vmatpush1.msra.mxu0 0.0
        %7285 = vmatprep.subr.mxu0 0.0
        %7286 = vmatpush1.msra.mxu0 0.0
        %7287 = vmatprep.subr.mxu0 0.0
        %7288 = vmatpush1.msra.mxu0 0.0
        %7289 = vmatprep.subr.mxu0 0.0
        %7290 = vmatpush1.msra.mxu0 0.0
        %7291 = vmatprep.subr.mxu0 0.0
        %7292 = vmatpush1.msra.mxu0 0.0
        %7293 = vmatprep.subr.mxu0 0.0
        %7294 = vmatpush1.msra.mxu0 0.0
        %7295 = vmatprep.subr.mxu0 0.0
        %7296 = vmatpush1.msra.mxu0 0.0
        %7297 = vmatprep.subr.mxu0 0.0
        %7298 = vmatpush1.msra.mxu0 0.0
        %7299 = vmatprep.subr.mxu0 0.0
        %7300 = vmatpush1.msra.mxu0 0.0
        %7301 = vmatprep.subr.mxu0 0.0
        %7302 = vmatpush1.msra.mxu0 0.0
        %7303 = vmatprep.subr.mxu0 0.0
        %7304 = vmatpush1.msra.mxu0 0.0
        %7305 = vmatprep.subr.mxu0 0.0
        %7306 = vmatpush1.msra.mxu0 0.0
        %v7307 = vand.u32 %v7038, 4294901760
        %7308 = vmatprep.subr.mxu0 %v7307
        %v7309 = vand.u32 %v7035, 4294901760
        %7310 = vmatpush1.msra.mxu0 %v7309
        %7311 = vmatprep.subr.mxu0 0.0
        %7312 = vmatpush2.msra.mxu0 0.0
        %7313 = vmatprep.subr.mxu0 0.0
        %7314 = vmatpush2.msra.mxu0 0.0
        %7315 = vmatprep.subr.mxu0 0.0
        %7316 = vmatpush2.msra.mxu0 0.0
        %7317 = vmatprep.subr.mxu0 0.0
        %7318 = vmatpush2.msra.mxu0 0.0
        %7319 = vmatprep.subr.mxu0 0.0
        %7320 = vmatpush2.msra.mxu0 0.0
        %7321 = vmatprep.subr.mxu0 0.0
        %7322 = vmatpush2.msra.mxu0 0.0
        %7323 = vmatprep.subr.mxu0 0.0
        %7324 = vmatpush2.msra.mxu0 0.0
        %7325 = vmatprep.subr.mxu0 0.0
        %7326 = vmatpush2.msra.mxu0 0.0
        %7327 = vmatprep.subr.mxu0 0.0
        %7328 = vmatpush2.msra.mxu0 0.0
        %7329 = vmatprep.subr.mxu0 0.0
        %7330 = vmatpush2.msra.mxu0 0.0
        %7331 = vmatprep.subr.mxu0 0.0
        %7332 = vmatpush2.msra.mxu0 0.0
        %7333 = vmatprep.subr.mxu0 0.0
        %7334 = vmatpush2.msra.mxu0 0.0
        %7335 = vmatprep.subr.mxu0 0.0
        %7336 = vmatpush2.msra.mxu0 0.0
        %7337 = vmatprep.subr.mxu0 0.0
        %7338 = vmatpush2.msra.mxu0 0.0
        %7339 = vmatprep.subr.mxu0 0.0
        %7340 = vmatpush2.msra.mxu0 0.0
        %7341 = vmatprep.subr.mxu0 0.0
        %7342 = vmatpush2.msra.mxu0 0.0
        %7343 = vmatprep.mubr.f32.mxu0 0.0
        %v7344 = vand.u32 %v7032, 4294901760
        %v7345 = vsub.f32 %v7032, %v7344
        %v7346 = vand.u32 %v7345, 4294901760
        %7347 = vmatmul.mubr.f32.gmra.mxu0 %v7346
        %v7348 = vpop.f32.mrf.mxu0
        %v7349 = vadd.f32 %v7273, %v7348
        %v7350 = vpop.f32.mrf.mxu0
        %v7351 = vadd.f32 %v7275, %v7350
        %7352 = vdwg.mxu0
        %7353 = vmatprep.subr.mxu0 0.0
        %7354 = vmatpush1.msra.mxu0 0.0
        %7355 = vmatprep.subr.mxu0 0.0
        %7356 = vmatpush1.msra.mxu0 0.0
        %7357 = vmatprep.subr.mxu0 0.0
        %7358 = vmatpush1.msra.mxu0 0.0
        %7359 = vmatprep.subr.mxu0 0.0
        %7360 = vmatpush1.msra.mxu0 0.0
        %7361 = vmatprep.subr.mxu0 0.0
        %7362 = vmatpush1.msra.mxu0 0.0
        %7363 = vmatprep.subr.mxu0 0.0
        %7364 = vmatpush1.msra.mxu0 0.0
        %7365 = vmatprep.subr.mxu0 0.0
        %7366 = vmatpush1.msra.mxu0 0.0
        %7367 = vmatprep.subr.mxu0 0.0
        %7368 = vmatpush1.msra.mxu0 0.0
        %7369 = vmatprep.subr.mxu0 0.0
        %7370 = vmatpush1.msra.mxu0 0.0
        %7371 = vmatprep.subr.mxu0 0.0
        %7372 = vmatpush1.msra.mxu0 0.0
        %7373 = vmatprep.subr.mxu0 0.0
        %7374 = vmatpush1.msra.mxu0 0.0
        %7375 = vmatprep.subr.mxu0 0.0
        %7376 = vmatpush1.msra.mxu0 0.0
        %7377 = vmatprep.subr.mxu0 0.0
        %7378 = vmatpush1.msra.mxu0 0.0
        %7379 = vmatprep.subr.mxu0 0.0
        %7380 = vmatpush1.msra.mxu0 0.0
        %7381 = vmatprep.subr.mxu0 0.0
        %7382 = vmatpush1.msra.mxu0 0.0
        %v7383 = vand.u32 %v7038, 4294901760
        %v7384 = vsub.f32 %v7038, %v7383
        %v7385 = vand.u32 %v7384, 4294901760
        %7386 = vmatprep.subr.mxu0 %v7385
        %v7387 = vand.u32 %v7035, 4294901760
        %v7388 = vsub.f32 %v7035, %v7387
        %v7389 = vand.u32 %v7388, 4294901760
        %7390 = vmatpush1.msra.mxu0 %v7389
        %7391 = vmatprep.subr.mxu0 0.0
        %7392 = vmatpush2.msra.mxu0 0.0
        %7393 = vmatprep.subr.mxu0 0.0
        %7394 = vmatpush2.msra.mxu0 0.0
        %7395 = vmatprep.subr.mxu0 0.0
        %7396 = vmatpush2.msra.mxu0 0.0
        %7397 = vmatprep.subr.mxu0 0.0
        %7398 = vmatpush2.msra.mxu0 0.0
        %7399 = vmatprep.subr.mxu0 0.0
        %7400 = vmatpush2.msra.mxu0 0.0
        %7401 = vmatprep.subr.mxu0 0.0
        %7402 = vmatpush2.msra.mxu0 0.0
        %7403 = vmatprep.subr.mxu0 0.0
        %7404 = vmatpush2.msra.mxu0 0.0
        %7405 = vmatprep.subr.mxu0 0.0
        %7406 = vmatpush2.msra.mxu0 0.0
        %7407 = vmatprep.subr.mxu0 0.0
        %7408 = vmatpush2.msra.mxu0 0.0
        %7409 = vmatprep.subr.mxu0 0.0
        %7410 = vmatpush2.msra.mxu0 0.0
        %7411 = vmatprep.subr.mxu0 0.0
        %7412 = vmatpush2.msra.mxu0 0.0
        %7413 = vmatprep.subr.mxu0 0.0
        %7414 = vmatpush2.msra.mxu0 0.0
        %7415 = vmatprep.subr.mxu0 0.0
        %7416 = vmatpush2.msra.mxu0 0.0
        %7417 = vmatprep.subr.mxu0 0.0
        %7418 = vmatpush2.msra.mxu0 0.0
        %7419 = vmatprep.subr.mxu0 0.0
        %7420 = vmatpush2.msra.mxu0 0.0
        %7421 = vmatprep.subr.mxu0 0.0
        %7422 = vmatpush2.msra.mxu0 0.0
        %7423 = vmatprep.mubr.f32.mxu0 0.0
        %v7424 = vand.u32 %v7032, 4294901760
        %7425 = vmatmul.mubr.f32.gmra.mxu0 %v7424
        %v7426 = vpop.f32.mrf.mxu0
        %v7427 = vadd.f32 %v7349, %v7426
        %v7428 = vpop.f32.mrf.mxu0
        %v7429 = vadd.f32 %v7351, %v7428
        %7430 = vdwg.mxu0
        %7431 = vmatprep.subr.mxu0 0.0
        %7432 = vmatpush1.msra.mxu0 0.0
        %7433 = vmatprep.subr.mxu0 0.0
        %7434 = vmatpush1.msra.mxu0 0.0
        %7435 = vmatprep.subr.mxu0 0.0
        %7436 = vmatpush1.msra.mxu0 0.0
        %7437 = vmatprep.subr.mxu0 0.0
        %7438 = vmatpush1.msra.mxu0 0.0
        %7439 = vmatprep.subr.mxu0 0.0
        %7440 = vmatpush1.msra.mxu0 0.0
        %7441 = vmatprep.subr.mxu0 0.0
        %7442 = vmatpush1.msra.mxu0 0.0
        %7443 = vmatprep.subr.mxu0 0.0
        %7444 = vmatpush1.msra.mxu0 0.0
        %7445 = vmatprep.subr.mxu0 0.0
        %7446 = vmatpush1.msra.mxu0 0.0
        %7447 = vmatprep.subr.mxu0 0.0
        %7448 = vmatpush1.msra.mxu0 0.0
        %7449 = vmatprep.subr.mxu0 0.0
        %7450 = vmatpush1.msra.mxu0 0.0
        %7451 = vmatprep.subr.mxu0 0.0
        %7452 = vmatpush1.msra.mxu0 0.0
        %7453 = vmatprep.subr.mxu0 0.0
        %7454 = vmatpush1.msra.mxu0 0.0
        %7455 = vmatprep.subr.mxu0 0.0
        %7456 = vmatpush1.msra.mxu0 0.0
        %7457 = vmatprep.subr.mxu0 0.0
        %7458 = vmatpush1.msra.mxu0 0.0
        %7459 = vmatprep.subr.mxu0 0.0
        %7460 = vmatpush1.msra.mxu0 0.0
        %v7461 = vand.u32 %v7038, 4294901760
        %7462 = vmatprep.subr.mxu0 %v7461
        %v7463 = vand.u32 %v7035, 4294901760
        %7464 = vmatpush1.msra.mxu0 %v7463
        %7465 = vmatprep.subr.mxu0 0.0
        %7466 = vmatpush2.msra.mxu0 0.0
        %7467 = vmatprep.subr.mxu0 0.0
        %7468 = vmatpush2.msra.mxu0 0.0
        %7469 = vmatprep.subr.mxu0 0.0
        %7470 = vmatpush2.msra.mxu0 0.0
        %7471 = vmatprep.subr.mxu0 0.0
        %7472 = vmatpush2.msra.mxu0 0.0
        %7473 = vmatprep.subr.mxu0 0.0
        %7474 = vmatpush2.msra.mxu0 0.0
        %7475 = vmatprep.subr.mxu0 0.0
        %7476 = vmatpush2.msra.mxu0 0.0
        %7477 = vmatprep.subr.mxu0 0.0
        %7478 = vmatpush2.msra.mxu0 0.0
        %7479 = vmatprep.subr.mxu0 0.0
        %7480 = vmatpush2.msra.mxu0 0.0
        %7481 = vmatprep.subr.mxu0 0.0
        %7482 = vmatpush2.msra.mxu0 0.0
        %7483 = vmatprep.subr.mxu0 0.0
        %7484 = vmatpush2.msra.mxu0 0.0
        %7485 = vmatprep.subr.mxu0 0.0
        %7486 = vmatpush2.msra.mxu0 0.0
        %7487 = vmatprep.subr.mxu0 0.0
        %7488 = vmatpush2.msra.mxu0 0.0
        %7489 = vmatprep.subr.mxu0 0.0
        %7490 = vmatpush2.msra.mxu0 0.0
        %7491 = vmatprep.subr.mxu0 0.0
        %7492 = vmatpush2.msra.mxu0 0.0
        %7493 = vmatprep.subr.mxu0 0.0
        %7494 = vmatpush2.msra.mxu0 0.0
        %7495 = vmatprep.subr.mxu0 0.0
        %7496 = vmatpush2.msra.mxu0 0.0
        %7497 = vmatprep.mubr.f32.mxu0 0.0
        %v7498 = vand.u32 %v7032, 4294901760
        %7499 = vmatmul.mubr.f32.gmra.mxu0 %v7498
        %v7500 = vpop.f32.mrf.mxu0
        %v7501 = vadd.f32 %v7427, %v7500
        %v7502 = vpop.f32.mrf.mxu0
        %v7503 = vadd.f32 %v7429, %v7502
        %7504 = vdwg.mxu0
        %v7505 = vld [vmem:[%s15] sm:$0xff]
        %7507 = vset.pattern.permute.xlu0 0
        %7508 = vperm.xlu0 %7507, %v7505
        %v7509 = vpop.permute.xlu0 %7508
        %v7511 = vmul.f32 %v7501, %v7509
        %v7512 = vmul.f32 %v7503, %v7509
        %v7513 = vld [vmem:[%s16] sm:$0xff]
        %7515 = vset.pattern.permute.xlu0 0
        %7516 = vperm.xlu0 %7515, %v7513
        %v7517 = vpop.permute.xlu0 %7516
        %v7519 = vadd.f32 %v7511, %v7517
        %v7520 = vadd.f32 %v7512, %v7517
        %v7521 = vmax.f32 %v7519, 0.0
        %v7522 = vmax.f32 %v7520, 0.0
        %7523 = vst [vmem:[%s595] sm:$0xff] %v7521
        %7524 = vst [vmem:[%s595 + $0x8] sm:$0xff] %v7522
        %s7525 = sand.u32 %s445, 1
        %s7526 = scalar_lea.sflag [#allocation3], %s7525
        %s7527 = sand.u32 %s445, 1
        %s7528 = smul.addr %s7527, 16
        %s7529 = scalar_lea.vmem [#allocation2], %s7528
        // Predicated region
        $region97: #{tpu_custom_call.1} parent=95 // pred_check
          %p7530 = pneg %p455
        $region98: #{tpu_custom_call.1} parent=95 // pred_check_branch
          %7532 = sbr.rel (%p7530) target = $region100
        $region99: #{tpu_custom_call.1} parent=95 // pred_region
          %s7534 = ssub.s32 256, 256
          %7535 = vsyncadd %s7526, %s7534
          %s7536 = smul.addr %s33, 2
          %s7537 = smul.addr %s7536, 128
          %s7538 = scalar_lea.hbm %s19, %s7537
          %s7540 = sshll.u32 %s7529, 4
          %s7541 = int_to_ptr.vmem [resolvable:$true] %s7540
          %7543 = dma.vmem_to_hbm [thread:$0]  %s7541, 256, %s7538, %s7526
        $region100: #{tpu_custom_call.1} parent=95 // pred_fallthru
          _
      $region96: #{tpu_custom_call.1} parent=5 // pred_fallthru
        _
      %p7544 = scmp.le.s32.totalorder 2, %s28
      // Predicated region
      $region101: #{tpu_custom_call.1} parent=5 // pred_check
        %p7545 = pneg %p7544
      $region102: #{tpu_custom_call.1} parent=5 // pred_check_branch
        %7547 = sbr.rel (%p7545) target = $region104
      $region103: #{tpu_custom_call.1} parent=5 // pred_region
        %s7548 = ssub.s32 %s28, 2
        // Predicated region
        $region105: #{tpu_custom_call.1} parent=103 // pred_check
          %p7549 = pneg %p461
        $region106: #{tpu_custom_call.1} parent=103 // pred_check_branch
          %7551 = sbr.rel (%p7549) target = $region108
        $region107: #{tpu_custom_call.1} parent=103 // pred_region
          %s7552 = sand.u32 %s446, 1
          %s7553 = scalar_lea.sflag [#allocation3], %s7552
          %s7554 = sand.u32 %s446, 1
          %s7555 = smul.addr %s7554, 16
          %s7556 = scalar_lea.vmem [#allocation2], %s7555
          %7557 = dma.done %s7553, 256
        $region108: #{tpu_custom_call.1} parent=103 // pred_fallthru
          _
      $region104: #{tpu_custom_call.1} parent=5 // pred_fallthru
        _
    $region6: #{tpu_custom_call.1} parent=1 // loop_footer
      %s32 = sadd.s32 1, %s28
    $region7: #{tpu_custom_call.1} parent=1 // loop_footer_branch
      %27 = sbr.rel target = $region3
    $region8: #{tpu_custom_call.1} parent=1 // loop_exit
      _
    %7558 = vsyncpa [#allocation3], 1
    %s7559 = scalar_lea.sflag [#allocation3], 1
    %7560 = vsyncpa %s7559, 1

</llo_original>
